<compile_context>
chip_gen: v6e
topology: v6e:2x2x1
jax: 0.10.0
libtpu: 0.0.40
codegen_flags: <defaults>
</compile_context>

<pallas_src>
import numpy as np
import jax
import jax.numpy as jnp
from jax.experimental import pallas as pl
from jax.experimental.pallas import tpu as pltpu


# ----------------------------- Pallas kernel --------------------------------
def lenet5_kernel(x_ref, w1_ref, b1_ref, w2_ref, b2_ref, wfc1_ref, bfc1_ref,
                  wfc2_ref, bfc2_ref, wfc3_ref, bfc3_ref, out_ref):
    f32 = jnp.float32
    bf16 = jnp.bfloat16
    tb = out_ref.shape[1]                    # samples per grid step

    x = x_ref[0]                             # (25*tb, 512) bf16 im2col slab

    # conv1 (1x1, 1->6) + relu on the VPU; avg-pool1 + conv2 folded into the
    # block-diagonal w2_ref (one 128x16 block per 2x2 pool2 window slot):
    # 6 accumulating (25*tb, 512) @ (512, 64) bf16 matmuls, f32 accumulation.
    acc = jnp.zeros((x.shape[0], 64), f32)
    for c in range(6):
        h_c = jnp.maximum(x * w1_ref[c] + b1_ref[c], 0.0)
        acc = acc + jnp.dot(h_c.astype(bf16), w2_ref[c],
                            preferred_element_type=f32)
    z = jnp.maximum(acc + b2_ref[...], 0.0).astype(bf16)    # (25*tb, 64)

    # avg-pool2 (x0.25) + flatten + fc1 folded into wfc1_ref (25, 64, 128):
    # rows of z are (pooled position s, sample) and the four pool2 window
    # slots live in the 64 lanes, so fc1 is 25 accumulating aligned-row-slice
    # matmuls -- no packing scratch, no partial-lane stores.
    f1 = jnp.zeros((tb, 128), f32)
    for s in range(25):
        f1 = f1 + jnp.dot(z[s * tb:(s + 1) * tb, :], wfc1_ref[s],
                          preferred_element_type=f32)
    f1 = jnp.maximum(f1 + bfc1_ref[...], 0.0).astype(bf16)          # (tb, 128)

    f2 = jnp.maximum(jnp.dot(f1, wfc2_ref[...], preferred_element_type=f32)
                     + bfc2_ref[...], 0.0).astype(bf16)             # (tb, 128)
    z3 = (jnp.dot(f2, wfc3_ref[...], preferred_element_type=f32)
          + bfc3_ref[...])                                          # (tb, 128)

    # log_softmax over the (padded) class axis; padded lanes carry -1e9 bias.
    m = jnp.max(z3, axis=-1, keepdims=True)
    lse = jnp.log(jnp.sum(jnp.exp(z3 - m), axis=-1, keepdims=True)) + m
    out_ref[0] = z3 - lse


# --------------------------- constant index table ----------------------------
def _build_im2col_index():
    """idx[s, w, q]: flat 28x28 input pixel feeding pooled position s,
    pool2-window slot w, lane q = (kh*5+kw)*4 + (pool1-window slot)."""
    idx = np.zeros((25, 4, 100), dtype=np.int32)
    for s in range(25):
        io, jo = divmod(s, 5)
        for w in range(4):
            a2, b2 = divmod(w, 2)
            i = 2 * io + a2                      # conv2 output pixel (10x10)
            j = 2 * jo + b2
            for kh in range(5):
                for kw in range(5):
                    for aa in range(2):
                        for bb in range(2):
                            q = (kh * 5 + kw) * 4 + (aa * 2 + bb)
                            pi = 2 * (i + kh) + aa
                            pj = 2 * (j + kw) + bb
                            idx[s, w, q] = pi * 28 + pj
    return idx


def _round_up(a, b):
    return ((a + b - 1) // b) * b


def _bf16_elementwise_ok():
    """bf16 VPU ALUs exist on v6e/v7x; keep conv1 elementwise f32 on v5e/older."""
    try:
        kind = jax.devices()[0].device_kind.lower()
    except Exception:
        return False
    return not any(old in kind for old in ("v2", "v3", "v4", "v5"))


# ------------------------------- wrapper -------------------------------------
def lenet5_forward(x, params, batch_tile=128):
    n = x.shape[0]
    f32, bf16 = jnp.float32, jnp.bfloat16

    tb = max(8, min(int(batch_tile), _round_up(n, 8)))
    tb = _round_up(tb, 8)                        # sublane alignment
    npad = _round_up(n, tb)
    g = npad // tb

    ew_bf16 = _bf16_elementwise_ok()
    cdt = bf16 if ew_bf16 else f32               # conv1 elementwise dtype

    # im2col slab, bf16 and lane-dense: rows (s, sample), lanes w*128 + q.
    # TODO(synk): build the slab in-kernel from raw (tb, 784) pixels with
    # strided copies to remove the remaining wrapper-side HBM expansion.
    idx = _build_im2col_index()                                  # (25, 4, 100)
    xflat = x.reshape(n, 784).astype(bf16)
    xg = jnp.take(xflat, jnp.asarray(idx.reshape(-1)), axis=1)
    xg = xg.reshape(n, 25, 4, 100)
    xg = jnp.pad(xg, ((0, npad - n), (0, 0), (0, 0), (0, 28)))   # lanes -> 128
    xg = xg.reshape(npad, 25, 512)
    xg = (xg.reshape(g, tb, 25, 512).transpose(0, 2, 1, 3)
            .reshape(g, 25 * tb, 512))

    # conv1 scalars broadcast across the 512 lanes (elementwise dtype).
    w1b = jnp.tile(params["w1"].reshape(6, 1).astype(cdt), (1, 512))
    b1b = jnp.tile(params["b1"].reshape(6, 1).astype(cdt), (1, 512))

    # conv2 weight with avg-pool1 folded in (x0.25), block-diagonal over the
    # 4 pool2 window slots so the conv2 output is 64 lanes wide.
    w2r = jnp.transpose(params["w2"], (1, 2, 3, 0)).reshape(6, 25, 16)
    w2q = jnp.repeat(w2r.astype(f32), 4, axis=1) * 0.25          # (6, 100, 16)
    w2q = jnp.pad(w2q, ((0, 0), (0, 28), (0, 0)))                # (6, 128, 16)
    w2bd = jnp.einsum("wv,cqo->cwqvo", jnp.eye(4, dtype=f32), w2q)
    w2bd = w2bd.reshape(6, 512, 64).astype(bf16)                 # (6, 512, 64)
    b2t = jnp.tile(params["b2"].reshape(1, 16).astype(f32), (1, 4))   # (1, 64)

    # fc1 with avg-pool2 (x0.25) and flatten folded in: one (64, 128) block
    # per pooled position s (output columns padded 120 -> 128).
    fw1r = params["fw1"].reshape(120, 16, 25)
    wfc1s = 0.25 * jnp.transpose(fw1r.astype(f32), (2, 1, 0))    # (25, 16, 120)
    wfc1s = jnp.tile(wfc1s, (1, 4, 1))                           # (25, 64, 120)
    wfc1s = jnp.pad(wfc1s, ((0, 0), (0, 0), (0, 8))).astype(bf16)
    bfc1 = jnp.pad(params["fb1"].reshape(1, 120).astype(f32), ((0, 0), (0, 8)))

    # fc2 / fc3 padded to 128-lane multiples; class padding gets a -1e9 bias.
    wfc2 = jnp.pad(params["fw2"].T.astype(f32), ((0, 8), (0, 44))).astype(bf16)
    bfc2 = jnp.pad(params["fb2"].reshape(1, 84).astype(f32), ((0, 0), (0, 44)))
    wfc3 = jnp.pad(params["fw3"].T.astype(f32), ((0, 44), (0, 118))).astype(bf16)
    bfc3 = jnp.concatenate([params["fb3"].reshape(1, 10).astype(f32),
                            jnp.full((1, 118), -1e9, f32)], axis=1)

    weights = [w1b, b1b, w2bd, b2t, wfc1s, bfc1, wfc2, bfc2, wfc3, bfc3]

    def full_spec(arr):
        nd = arr.ndim
        return pl.BlockSpec(arr.shape, lambda i, nd=nd: (0,) * nd)

    in_specs = ([pl.BlockSpec((1, 25 * tb, 512), lambda i: (i, 0, 0))]
                + [full_spec(a) for a in weights])

    # v5e's default scoped VMEM limit is only 16 MiB; raise it explicitly.
    # bf16 path (v6e/v7x) needs ~15 MiB at TB=128, f32 path (v5e) ~25-30 MiB.
    vmem_limit = (40 if ew_bf16 else 64) * 1024 * 1024

    out = pl.pallas_call(
        lenet5_kernel,
        out_shape=jax.ShapeDtypeStruct((g, tb, 128), jnp.float32),
        grid=(g,),
        in_specs=in_specs,
        out_specs=pl.BlockSpec((1, tb, 128), lambda i: (i, 0, 0)),
        compiler_params=pltpu.CompilerParams(
            dimension_semantics=("parallel",),
            vmem_limit_bytes=vmem_limit),
    )(xg, *weights)

    return out.reshape(npad, 128)[:n, :10]


# --------------------------- deterministic params ----------------------------
def init_params(key):
    ks = jax.random.split(key, 10)

    def u(k, shape, fan_in):
        bound = 1.0 / np.sqrt(fan_in)
        return jax.random.uniform(k, shape, jnp.float32, -bound, bound)

    return {
        "w1": u(ks[0], (6, 1, 1, 1), 1),
        "b1": u(ks[1], (6,), 1),
        "w2": u(ks[2], (16, 6, 5, 5), 6 * 25),
        "b2": u(ks[3], (16,), 6 * 25),
        "fw1": u(ks[4], (120, 400), 400),
        "fb1": u(ks[5], (120,), 400),
        "fw2": u(ks[6], (84, 120), 120),
        "fb2": u(ks[7], (84,), 120),
        "fw3": u(ks[8], (10, 84), 84),
        "fb3": u(ks[9], (10,), 84),
    }


# ---------------------------- pure-JAX reference -----------------------------
def lenet5_reference(x, p):
    h = jax.lax.conv_general_dilated(x, p["w1"], (1, 1), "VALID")
    h = jnp.maximum(h + p["b1"][None, :, None, None], 0.0)
    h = h.reshape(x.shape[0], 6, 14, 2, 14, 2).mean(axis=(3, 5))
    h = jax.lax.conv_general_dilated(h, p["w2"], (1, 1), "VALID")
    h = jnp.maximum(h + p["b2"][None, :, None, None], 0.0)
    h = h.reshape(x.shape[0], 16, 5, 2, 5, 2).mean(axis=(3, 5))
    h = h.reshape(x.shape[0], 400)
    h = jnp.maximum(h @ p["fw1"].T + p["fb1"], 0.0)
    h = jnp.maximum(h @ p["fw2"].T + p["fb2"], 0.0)
    h = h @ p["fw3"].T + p["fb3"]
    return jax.nn.log_softmax(h, axis=-1)


if __name__ == "__main__":
    key = jax.random.PRNGKey(0)
    pkey, xkey = jax.random.split(key)
    params = init_params(pkey)
    # Input spatial size must be 28x28 so that flatten -> 400 matches fc1.
    x = jax.random.normal(xkey, (2, 1, 28, 28), jnp.float32)

    out = lenet5_forward(x, params)
    out = jax.block_until_ready(out)

    ref = lenet5_reference(x, params)
    assert out.shape == (2, 10)
    # bf16 im2col slab + bf16 MXU inputs (f32 accumulation) vs f32 reference:
    # differences stay at the ~1e-2 level; 5e-2 still catches real bugs.
    max_err = float(jnp.max(jnp.abs(out - ref)))
    assert max_err < 5e-2, f"mismatch vs reference: {max_err}"
    print("KERNEL_OK")
</pallas_src>

<mosaic_0001>
module attributes {stable_mosaic.version = 11 : i64} {
  func.func @lenet5_kernel(%arg0: i32, %arg1: memref<1x200x512xbf16, #tpu.memory_space<vmem>>, %arg2: memref<6x512xbf16, #tpu.memory_space<vmem>>, %arg3: memref<6x512xbf16, #tpu.memory_space<vmem>>, %arg4: memref<6x512x64xbf16, #tpu.memory_space<vmem>>, %arg5: memref<1x64xf32, #tpu.memory_space<vmem>>, %arg6: memref<25x64x128xbf16, #tpu.memory_space<vmem>>, %arg7: memref<1x128xf32, #tpu.memory_space<vmem>>, %arg8: memref<128x128xbf16, #tpu.memory_space<vmem>>, %arg9: memref<1x128xf32, #tpu.memory_space<vmem>>, %arg10: memref<128x128xbf16, #tpu.memory_space<vmem>>, %arg11: memref<1x128xf32, #tpu.memory_space<vmem>>, %arg12: memref<1x8x128xf32, #tpu.memory_space<vmem>>) attributes {dimension_semantics = [#tpu.dimension_semantics<parallel>], iteration_bounds = array<i64: 1>, scalar_prefetch = 0 : i64, scratch_operands = 0 : i64, tpu.core_type = #tpu.core_type<tc>, window_params = [{transform_indices = @transform_0, window_bounds = array<i64: 1, 200, 512>}, {pipeline_mode = #tpu.pipeline_mode<synchronous>, transform_indices = @transform_1, window_bounds = array<i64: 6, 512>}, {pipeline_mode = #tpu.pipeline_mode<synchronous>, transform_indices = @transform_2, window_bounds = array<i64: 6, 512>}, {pipeline_mode = #tpu.pipeline_mode<synchronous>, transform_indices = @transform_3, window_bounds = array<i64: 6, 512, 64>}, {pipeline_mode = #tpu.pipeline_mode<synchronous>, transform_indices = @transform_4, window_bounds = array<i64: 1, 64>}, {pipeline_mode = #tpu.pipeline_mode<synchronous>, transform_indices = @transform_5, window_bounds = array<i64: 25, 64, 128>}, {pipeline_mode = #tpu.pipeline_mode<synchronous>, transform_indices = @transform_6, window_bounds = array<i64: 1, 128>}, {pipeline_mode = #tpu.pipeline_mode<synchronous>, transform_indices = @transform_7, window_bounds = array<i64: 128, 128>}, {pipeline_mode = #tpu.pipeline_mode<synchronous>, transform_indices = @transform_8, window_bounds = array<i64: 1, 128>}, {pipeline_mode = #tpu.pipeline_mode<synchronous>, transform_indices = @transform_9, window_bounds = array<i64: 128, 128>}, {pipeline_mode = #tpu.pipeline_mode<synchronous>, transform_indices = @transform_10, window_bounds = array<i64: 1, 128>}, {transform_indices = @transform_11, window_bounds = array<i64: 1, 8, 128>}]} {
    %c0 = arith.constant 0 : index
    %c0_0 = arith.constant 0 : index
    %c0_1 = arith.constant 0 : index
    %0 = vector.load %arg1[%c0, %c0_0, %c0_1] : memref<1x200x512xbf16, #tpu.memory_space<vmem>>, vector<1x200x512xbf16>
    %1 = vector.shape_cast %0 : vector<1x200x512xbf16> to vector<200x512xbf16>
    %cst = arith.constant 0.000000e+00 : f32
    %2 = vector.broadcast %cst : f32 to vector<200x64xf32>
    %c0_2 = arith.constant 0 : index
    %c0_3 = arith.constant 0 : index
    %3 = vector.load %arg2[%c0_2, %c0_3] : memref<6x512xbf16, #tpu.memory_space<vmem>>, vector<1x512xbf16>
    %4 = vector.shape_cast %3 : vector<1x512xbf16> to vector<512xbf16>
    %5 = vector.shape_cast %4 : vector<512xbf16> to vector<1x512xbf16>
    %6 = vector.broadcast %5 : vector<1x512xbf16> to vector<200x512xbf16>
    %7 = arith.mulf %1, %6 : vector<200x512xbf16>
    %c0_4 = arith.constant 0 : index
    %c0_5 = arith.constant 0 : index
    %8 = vector.load %arg3[%c0_4, %c0_5] : memref<6x512xbf16, #tpu.memory_space<vmem>>, vector<1x512xbf16>
    %9 = vector.shape_cast %8 : vector<1x512xbf16> to vector<512xbf16>
    %10 = vector.shape_cast %9 : vector<512xbf16> to vector<1x512xbf16>
    %11 = vector.broadcast %10 : vector<1x512xbf16> to vector<200x512xbf16>
    %12 = arith.addf %7, %11 : vector<200x512xbf16>
    %cst_6 = arith.constant 0.000000e+00 : bf16
    %13 = vector.broadcast %cst_6 : bf16 to vector<200x512xbf16>
    %14 = arith.maximumf %12, %13 : vector<200x512xbf16>
    %c0_7 = arith.constant 0 : index
    %c0_8 = arith.constant 0 : index
    %c0_9 = arith.constant 0 : index
    %15 = vector.load %arg4[%c0_7, %c0_8, %c0_9] : memref<6x512x64xbf16, #tpu.memory_space<vmem>>, vector<1x512x64xbf16>
    %16 = vector.shape_cast %15 : vector<1x512x64xbf16> to vector<512x64xbf16>
    %cst_10 = arith.constant dense<0.000000e+00> : vector<200x64xf32>
    %17 = tpu.matmul %14, %16, %cst_10 {dimension_numbers = #tpu.dot_dimension_numbers<[1], [0], [0], [1], [0, 0, 1, 1], [], []>} : vector<200x512xbf16>, vector<512x64xbf16>, vector<200x64xf32> -> vector<200x64xf32>
    %18 = arith.addf %2, %17 : vector<200x64xf32>
    %c1 = arith.constant 1 : index
    %c0_11 = arith.constant 0 : index
    %19 = vector.load %arg2[%c1, %c0_11] : memref<6x512xbf16, #tpu.memory_space<vmem>>, vector<1x512xbf16>
    %20 = vector.shape_cast %19 : vector<1x512xbf16> to vector<512xbf16>
    %21 = vector.shape_cast %20 : vector<512xbf16> to vector<1x512xbf16>
    %22 = vector.broadcast %21 : vector<1x512xbf16> to vector<200x512xbf16>
    %23 = arith.mulf %1, %22 : vector<200x512xbf16>
    %c1_12 = arith.constant 1 : index
    %c0_13 = arith.constant 0 : index
    %24 = vector.load %arg3[%c1_12, %c0_13] : memref<6x512xbf16, #tpu.memory_space<vmem>>, vector<1x512xbf16>
    %25 = vector.shape_cast %24 : vector<1x512xbf16> to vector<512xbf16>
    %26 = vector.shape_cast %25 : vector<512xbf16> to vector<1x512xbf16>
    %27 = vector.broadcast %26 : vector<1x512xbf16> to vector<200x512xbf16>
    %28 = arith.addf %23, %27 : vector<200x512xbf16>
    %cst_14 = arith.constant 0.000000e+00 : bf16
    %29 = vector.broadcast %cst_14 : bf16 to vector<200x512xbf16>
    %30 = arith.maximumf %28, %29 : vector<200x512xbf16>
    %c1_15 = arith.constant 1 : index
    %c0_16 = arith.constant 0 : index
    %c0_17 = arith.constant 0 : index
    %31 = vector.load %arg4[%c1_15, %c0_16, %c0_17] : memref<6x512x64xbf16, #tpu.memory_space<vmem>>, vector<1x512x64xbf16>
    %32 = vector.shape_cast %31 : vector<1x512x64xbf16> to vector<512x64xbf16>
    %cst_18 = arith.constant dense<0.000000e+00> : vector<200x64xf32>
    %33 = tpu.matmul %30, %32, %cst_18 {dimension_numbers = #tpu.dot_dimension_numbers<[1], [0], [0], [1], [0, 0, 1, 1], [], []>} : vector<200x512xbf16>, vector<512x64xbf16>, vector<200x64xf32> -> vector<200x64xf32>
    %34 = arith.addf %18, %33 : vector<200x64xf32>
    %c2 = arith.constant 2 : index
    %c0_19 = arith.constant 0 : index
    %35 = vector.load %arg2[%c2, %c0_19] : memref<6x512xbf16, #tpu.memory_space<vmem>>, vector<1x512xbf16>
    %36 = vector.shape_cast %35 : vector<1x512xbf16> to vector<512xbf16>
    %37 = vector.shape_cast %36 : vector<512xbf16> to vector<1x512xbf16>
    %38 = vector.broadcast %37 : vector<1x512xbf16> to vector<200x512xbf16>
    %39 = arith.mulf %1, %38 : vector<200x512xbf16>
    %c2_20 = arith.constant 2 : index
    %c0_21 = arith.constant 0 : index
    %40 = vector.load %arg3[%c2_20, %c0_21] : memref<6x512xbf16, #tpu.memory_space<vmem>>, vector<1x512xbf16>
    %41 = vector.shape_cast %40 : vector<1x512xbf16> to vector<512xbf16>
    %42 = vector.shape_cast %41 : vector<512xbf16> to vector<1x512xbf16>
    %43 = vector.broadcast %42 : vector<1x512xbf16> to vector<200x512xbf16>
    %44 = arith.addf %39, %43 : vector<200x512xbf16>
    %cst_22 = arith.constant 0.000000e+00 : bf16
    %45 = vector.broadcast %cst_22 : bf16 to vector<200x512xbf16>
    %46 = arith.maximumf %44, %45 : vector<200x512xbf16>
    %c2_23 = arith.constant 2 : index
    %c0_24 = arith.constant 0 : index
    %c0_25 = arith.constant 0 : index
    %47 = vector.load %arg4[%c2_23, %c0_24, %c0_25] : memref<6x512x64xbf16, #tpu.memory_space<vmem>>, vector<1x512x64xbf16>
    %48 = vector.shape_cast %47 : vector<1x512x64xbf16> to vector<512x64xbf16>
    %cst_26 = arith.constant dense<0.000000e+00> : vector<200x64xf32>
    %49 = tpu.matmul %46, %48, %cst_26 {dimension_numbers = #tpu.dot_dimension_numbers<[1], [0], [0], [1], [0, 0, 1, 1], [], []>} : vector<200x512xbf16>, vector<512x64xbf16>, vector<200x64xf32> -> vector<200x64xf32>
    %50 = arith.addf %34, %49 : vector<200x64xf32>
    %c3 = arith.constant 3 : index
    %c0_27 = arith.constant 0 : index
    %51 = vector.load %arg2[%c3, %c0_27] : memref<6x512xbf16, #tpu.memory_space<vmem>>, vector<1x512xbf16>
    %52 = vector.shape_cast %51 : vector<1x512xbf16> to vector<512xbf16>
    %53 = vector.shape_cast %52 : vector<512xbf16> to vector<1x512xbf16>
    %54 = vector.broadcast %53 : vector<1x512xbf16> to vector<200x512xbf16>
    %55 = arith.mulf %1, %54 : vector<200x512xbf16>
    %c3_28 = arith.constant 3 : index
    %c0_29 = arith.constant 0 : index
    %56 = vector.load %arg3[%c3_28, %c0_29] : memref<6x512xbf16, #tpu.memory_space<vmem>>, vector<1x512xbf16>
    %57 = vector.shape_cast %56 : vector<1x512xbf16> to vector<512xbf16>
    %58 = vector.shape_cast %57 : vector<512xbf16> to vector<1x512xbf16>
    %59 = vector.broadcast %58 : vector<1x512xbf16> to vector<200x512xbf16>
    %60 = arith.addf %55, %59 : vector<200x512xbf16>
    %cst_30 = arith.constant 0.000000e+00 : bf16
    %61 = vector.broadcast %cst_30 : bf16 to vector<200x512xbf16>
    %62 = arith.maximumf %60, %61 : vector<200x512xbf16>
    %c3_31 = arith.constant 3 : index
    %c0_32 = arith.constant 0 : index
    %c0_33 = arith.constant 0 : index
    %63 = vector.load %arg4[%c3_31, %c0_32, %c0_33] : memref<6x512x64xbf16, #tpu.memory_space<vmem>>, vector<1x512x64xbf16>
    %64 = vector.shape_cast %63 : vector<1x512x64xbf16> to vector<512x64xbf16>
    %cst_34 = arith.constant dense<0.000000e+00> : vector<200x64xf32>
    %65 = tpu.matmul %62, %64, %cst_34 {dimension_numbers = #tpu.dot_dimension_numbers<[1], [0], [0], [1], [0, 0, 1, 1], [], []>} : vector<200x512xbf16>, vector<512x64xbf16>, vector<200x64xf32> -> vector<200x64xf32>
    %66 = arith.addf %50, %65 : vector<200x64xf32>
    %c4 = arith.constant 4 : index
    %c0_35 = arith.constant 0 : index
    %67 = vector.load %arg2[%c4, %c0_35] : memref<6x512xbf16, #tpu.memory_space<vmem>>, vector<1x512xbf16>
    %68 = vector.shape_cast %67 : vector<1x512xbf16> to vector<512xbf16>
    %69 = vector.shape_cast %68 : vector<512xbf16> to vector<1x512xbf16>
    %70 = vector.broadcast %69 : vector<1x512xbf16> to vector<200x512xbf16>
    %71 = arith.mulf %1, %70 : vector<200x512xbf16>
    %c4_36 = arith.constant 4 : index
    %c0_37 = arith.constant 0 : index
    %72 = vector.load %arg3[%c4_36, %c0_37] : memref<6x512xbf16, #tpu.memory_space<vmem>>, vector<1x512xbf16>
    %73 = vector.shape_cast %72 : vector<1x512xbf16> to vector<512xbf16>
    %74 = vector.shape_cast %73 : vector<512xbf16> to vector<1x512xbf16>
    %75 = vector.broadcast %74 : vector<1x512xbf16> to vector<200x512xbf16>
    %76 = arith.addf %71, %75 : vector<200x512xbf16>
    %cst_38 = arith.constant 0.000000e+00 : bf16
    %77 = vector.broadcast %cst_38 : bf16 to vector<200x512xbf16>
    %78 = arith.maximumf %76, %77 : vector<200x512xbf16>
    %c4_39 = arith.constant 4 : index
    %c0_40 = arith.constant 0 : index
    %c0_41 = arith.constant 0 : index
    %79 = vector.load %arg4[%c4_39, %c0_40, %c0_41] : memref<6x512x64xbf16, #tpu.memory_space<vmem>>, vector<1x512x64xbf16>
    %80 = vector.shape_cast %79 : vector<1x512x64xbf16> to vector<512x64xbf16>
    %cst_42 = arith.constant dense<0.000000e+00> : vector<200x64xf32>
    %81 = tpu.matmul %78, %80, %cst_42 {dimension_numbers = #tpu.dot_dimension_numbers<[1], [0], [0], [1], [0, 0, 1, 1], [], []>} : vector<200x512xbf16>, vector<512x64xbf16>, vector<200x64xf32> -> vector<200x64xf32>
    %82 = arith.addf %66, %81 : vector<200x64xf32>
    %c5 = arith.constant 5 : index
    %c0_43 = arith.constant 0 : index
    %83 = vector.load %arg2[%c5, %c0_43] : memref<6x512xbf16, #tpu.memory_space<vmem>>, vector<1x512xbf16>
    %84 = vector.shape_cast %83 : vector<1x512xbf16> to vector<512xbf16>
    %85 = vector.shape_cast %84 : vector<512xbf16> to vector<1x512xbf16>
    %86 = vector.broadcast %85 : vector<1x512xbf16> to vector<200x512xbf16>
    %87 = arith.mulf %1, %86 : vector<200x512xbf16>
    %c5_44 = arith.constant 5 : index
    %c0_45 = arith.constant 0 : index
    %88 = vector.load %arg3[%c5_44, %c0_45] : memref<6x512xbf16, #tpu.memory_space<vmem>>, vector<1x512xbf16>
    %89 = vector.shape_cast %88 : vector<1x512xbf16> to vector<512xbf16>
    %90 = vector.shape_cast %89 : vector<512xbf16> to vector<1x512xbf16>
    %91 = vector.broadcast %90 : vector<1x512xbf16> to vector<200x512xbf16>
    %92 = arith.addf %87, %91 : vector<200x512xbf16>
    %cst_46 = arith.constant 0.000000e+00 : bf16
    %93 = vector.broadcast %cst_46 : bf16 to vector<200x512xbf16>
    %94 = arith.maximumf %92, %93 : vector<200x512xbf16>
    %c5_47 = arith.constant 5 : index
    %c0_48 = arith.constant 0 : index
    %c0_49 = arith.constant 0 : index
    %95 = vector.load %arg4[%c5_47, %c0_48, %c0_49] : memref<6x512x64xbf16, #tpu.memory_space<vmem>>, vector<1x512x64xbf16>
    %96 = vector.shape_cast %95 : vector<1x512x64xbf16> to vector<512x64xbf16>
    %cst_50 = arith.constant dense<0.000000e+00> : vector<200x64xf32>
    %97 = tpu.matmul %94, %96, %cst_50 {dimension_numbers = #tpu.dot_dimension_numbers<[1], [0], [0], [1], [0, 0, 1, 1], [], []>} : vector<200x512xbf16>, vector<512x64xbf16>, vector<200x64xf32> -> vector<200x64xf32>
    %98 = arith.addf %82, %97 : vector<200x64xf32>
    %c0_51 = arith.constant 0 : index
    %c0_52 = arith.constant 0 : index
    %99 = vector.load %arg5[%c0_51, %c0_52] : memref<1x64xf32, #tpu.memory_space<vmem>>, vector<1x64xf32>
    %100 = vector.broadcast %99 : vector<1x64xf32> to vector<200x64xf32>
    %101 = arith.addf %98, %100 : vector<200x64xf32>
    %cst_53 = arith.constant 0.000000e+00 : f32
    %102 = vector.broadcast %cst_53 : f32 to vector<200x64xf32>
    %103 = arith.maximumf %101, %102 : vector<200x64xf32>
    %104 = arith.truncf %103 : vector<200x64xf32> to vector<200x64xbf16>
    %cst_54 = arith.constant 0.000000e+00 : f32
    %105 = vector.broadcast %cst_54 : f32 to vector<8x128xf32>
    %106 = vector.extract_strided_slice %104 {offsets = [0, 0], sizes = [8, 64], strides = [1, 1]} : vector<200x64xbf16> to vector<8x64xbf16>
    %c0_55 = arith.constant 0 : index
    %c0_56 = arith.constant 0 : index
    %c0_57 = arith.constant 0 : index
    %107 = vector.load %arg6[%c0_55, %c0_56, %c0_57] : memref<25x64x128xbf16, #tpu.memory_space<vmem>>, vector<1x64x128xbf16>
    %108 = vector.shape_cast %107 : vector<1x64x128xbf16> to vector<64x128xbf16>
    %cst_58 = arith.constant dense<0.000000e+00> : vector<8x128xf32>
    %109 = tpu.matmul %106, %108, %cst_58 {dimension_numbers = #tpu.dot_dimension_numbers<[1], [0], [0], [1], [0, 0, 1, 1], [], []>} : vector<8x64xbf16>, vector<64x128xbf16>, vector<8x128xf32> -> vector<8x128xf32>
    %110 = arith.addf %105, %109 : vector<8x128xf32>
    %111 = vector.extract_strided_slice %104 {offsets = [8, 0], sizes = [8, 64], strides = [1, 1]} : vector<200x64xbf16> to vector<8x64xbf16>
    %c1_59 = arith.constant 1 : index
    %c0_60 = arith.constant 0 : index
    %c0_61 = arith.constant 0 : index
    %112 = vector.load %arg6[%c1_59, %c0_60, %c0_61] : memref<25x64x128xbf16, #tpu.memory_space<vmem>>, vector<1x64x128xbf16>
    %113 = vector.shape_cast %112 : vector<1x64x128xbf16> to vector<64x128xbf16>
    %cst_62 = arith.constant dense<0.000000e+00> : vector<8x128xf32>
    %114 = tpu.matmul %111, %113, %cst_62 {dimension_numbers = #tpu.dot_dimension_numbers<[1], [0], [0], [1], [0, 0, 1, 1], [], []>} : vector<8x64xbf16>, vector<64x128xbf16>, vector<8x128xf32> -> vector<8x128xf32>
    %115 = arith.addf %110, %114 : vector<8x128xf32>
    %116 = vector.extract_strided_slice %104 {offsets = [16, 0], sizes = [8, 64], strides = [1, 1]} : vector<200x64xbf16> to vector<8x64xbf16>
    %c2_63 = arith.constant 2 : index
    %c0_64 = arith.constant 0 : index
    %c0_65 = arith.constant 0 : index
    %117 = vector.load %arg6[%c2_63, %c0_64, %c0_65] : memref<25x64x128xbf16, #tpu.memory_space<vmem>>, vector<1x64x128xbf16>
    %118 = vector.shape_cast %117 : vector<1x64x128xbf16> to vector<64x128xbf16>
    %cst_66 = arith.constant dense<0.000000e+00> : vector<8x128xf32>
    %119 = tpu.matmul %116, %118, %cst_66 {dimension_numbers = #tpu.dot_dimension_numbers<[1], [0], [0], [1], [0, 0, 1, 1], [], []>} : vector<8x64xbf16>, vector<64x128xbf16>, vector<8x128xf32> -> vector<8x128xf32>
    %120 = arith.addf %115, %119 : vector<8x128xf32>
    %121 = vector.extract_strided_slice %104 {offsets = [24, 0], sizes = [8, 64], strides = [1, 1]} : vector<200x64xbf16> to vector<8x64xbf16>
    %c3_67 = arith.constant 3 : index
    %c0_68 = arith.constant 0 : index
    %c0_69 = arith.constant 0 : index
    %122 = vector.load %arg6[%c3_67, %c0_68, %c0_69] : memref<25x64x128xbf16, #tpu.memory_space<vmem>>, vector<1x64x128xbf16>
    %123 = vector.shape_cast %122 : vector<1x64x128xbf16> to vector<64x128xbf16>
    %cst_70 = arith.constant dense<0.000000e+00> : vector<8x128xf32>
    %124 = tpu.matmul %121, %123, %cst_70 {dimension_numbers = #tpu.dot_dimension_numbers<[1], [0], [0], [1], [0, 0, 1, 1], [], []>} : vector<8x64xbf16>, vector<64x128xbf16>, vector<8x128xf32> -> vector<8x128xf32>
    %125 = arith.addf %120, %124 : vector<8x128xf32>
    %126 = vector.extract_strided_slice %104 {offsets = [32, 0], sizes = [8, 64], strides = [1, 1]} : vector<200x64xbf16> to vector<8x64xbf16>
    %c4_71 = arith.constant 4 : index
    %c0_72 = arith.constant 0 : index
    %c0_73 = arith.constant 0 : index
    %127 = vector.load %arg6[%c4_71, %c0_72, %c0_73] : memref<25x64x128xbf16, #tpu.memory_space<vmem>>, vector<1x64x128xbf16>
    %128 = vector.shape_cast %127 : vector<1x64x128xbf16> to vector<64x128xbf16>
    %cst_74 = arith.constant dense<0.000000e+00> : vector<8x128xf32>
    %129 = tpu.matmul %126, %128, %cst_74 {dimension_numbers = #tpu.dot_dimension_numbers<[1], [0], [0], [1], [0, 0, 1, 1], [], []>} : vector<8x64xbf16>, vector<64x128xbf16>, vector<8x128xf32> -> vector<8x128xf32>
    %130 = arith.addf %125, %129 : vector<8x128xf32>
    %131 = vector.extract_strided_slice %104 {offsets = [40, 0], sizes = [8, 64], strides = [1, 1]} : vector<200x64xbf16> to vector<8x64xbf16>
    %c5_75 = arith.constant 5 : index
    %c0_76 = arith.constant 0 : index
    %c0_77 = arith.constant 0 : index
    %132 = vector.load %arg6[%c5_75, %c0_76, %c0_77] : memref<25x64x128xbf16, #tpu.memory_space<vmem>>, vector<1x64x128xbf16>
    %133 = vector.shape_cast %132 : vector<1x64x128xbf16> to vector<64x128xbf16>
    %cst_78 = arith.constant dense<0.000000e+00> : vector<8x128xf32>
    %134 = tpu.matmul %131, %133, %cst_78 {dimension_numbers = #tpu.dot_dimension_numbers<[1], [0], [0], [1], [0, 0, 1, 1], [], []>} : vector<8x64xbf16>, vector<64x128xbf16>, vector<8x128xf32> -> vector<8x128xf32>
    %135 = arith.addf %130, %134 : vector<8x128xf32>
    %136 = vector.extract_strided_slice %104 {offsets = [48, 0], sizes = [8, 64], strides = [1, 1]} : vector<200x64xbf16> to vector<8x64xbf16>
    %c6 = arith.constant 6 : index
    %c0_79 = arith.constant 0 : index
    %c0_80 = arith.constant 0 : index
    %137 = vector.load %arg6[%c6, %c0_79, %c0_80] : memref<25x64x128xbf16, #tpu.memory_space<vmem>>, vector<1x64x128xbf16>
    %138 = vector.shape_cast %137 : vector<1x64x128xbf16> to vector<64x128xbf16>
    %cst_81 = arith.constant dense<0.000000e+00> : vector<8x128xf32>
    %139 = tpu.matmul %136, %138, %cst_81 {dimension_numbers = #tpu.dot_dimension_numbers<[1], [0], [0], [1], [0, 0, 1, 1], [], []>} : vector<8x64xbf16>, vector<64x128xbf16>, vector<8x128xf32> -> vector<8x128xf32>
    %140 = arith.addf %135, %139 : vector<8x128xf32>
    %141 = vector.extract_strided_slice %104 {offsets = [56, 0], sizes = [8, 64], strides = [1, 1]} : vector<200x64xbf16> to vector<8x64xbf16>
    %c7 = arith.constant 7 : index
    %c0_82 = arith.constant 0 : index
    %c0_83 = arith.constant 0 : index
    %142 = vector.load %arg6[%c7, %c0_82, %c0_83] : memref<25x64x128xbf16, #tpu.memory_space<vmem>>, vector<1x64x128xbf16>
    %143 = vector.shape_cast %142 : vector<1x64x128xbf16> to vector<64x128xbf16>
    %cst_84 = arith.constant dense<0.000000e+00> : vector<8x128xf32>
    %144 = tpu.matmul %141, %143, %cst_84 {dimension_numbers = #tpu.dot_dimension_numbers<[1], [0], [0], [1], [0, 0, 1, 1], [], []>} : vector<8x64xbf16>, vector<64x128xbf16>, vector<8x128xf32> -> vector<8x128xf32>
    %145 = arith.addf %140, %144 : vector<8x128xf32>
    %146 = vector.extract_strided_slice %104 {offsets = [64, 0], sizes = [8, 64], strides = [1, 1]} : vector<200x64xbf16> to vector<8x64xbf16>
    %c8 = arith.constant 8 : index
    %c0_85 = arith.constant 0 : index
    %c0_86 = arith.constant 0 : index
    %147 = vector.load %arg6[%c8, %c0_85, %c0_86] : memref<25x64x128xbf16, #tpu.memory_space<vmem>>, vector<1x64x128xbf16>
    %148 = vector.shape_cast %147 : vector<1x64x128xbf16> to vector<64x128xbf16>
    %cst_87 = arith.constant dense<0.000000e+00> : vector<8x128xf32>
    %149 = tpu.matmul %146, %148, %cst_87 {dimension_numbers = #tpu.dot_dimension_numbers<[1], [0], [0], [1], [0, 0, 1, 1], [], []>} : vector<8x64xbf16>, vector<64x128xbf16>, vector<8x128xf32> -> vector<8x128xf32>
    %150 = arith.addf %145, %149 : vector<8x128xf32>
    %151 = vector.extract_strided_slice %104 {offsets = [72, 0], sizes = [8, 64], strides = [1, 1]} : vector<200x64xbf16> to vector<8x64xbf16>
    %c9 = arith.constant 9 : index
    %c0_88 = arith.constant 0 : index
    %c0_89 = arith.constant 0 : index
    %152 = vector.load %arg6[%c9, %c0_88, %c0_89] : memref<25x64x128xbf16, #tpu.memory_space<vmem>>, vector<1x64x128xbf16>
    %153 = vector.shape_cast %152 : vector<1x64x128xbf16> to vector<64x128xbf16>
    %cst_90 = arith.constant dense<0.000000e+00> : vector<8x128xf32>
    %154 = tpu.matmul %151, %153, %cst_90 {dimension_numbers = #tpu.dot_dimension_numbers<[1], [0], [0], [1], [0, 0, 1, 1], [], []>} : vector<8x64xbf16>, vector<64x128xbf16>, vector<8x128xf32> -> vector<8x128xf32>
    %155 = arith.addf %150, %154 : vector<8x128xf32>
    %156 = vector.extract_strided_slice %104 {offsets = [80, 0], sizes = [8, 64], strides = [1, 1]} : vector<200x64xbf16> to vector<8x64xbf16>
    %c10 = arith.constant 10 : index
    %c0_91 = arith.constant 0 : index
    %c0_92 = arith.constant 0 : index
    %157 = vector.load %arg6[%c10, %c0_91, %c0_92] : memref<25x64x128xbf16, #tpu.memory_space<vmem>>, vector<1x64x128xbf16>
    %158 = vector.shape_cast %157 : vector<1x64x128xbf16> to vector<64x128xbf16>
    %cst_93 = arith.constant dense<0.000000e+00> : vector<8x128xf32>
    %159 = tpu.matmul %156, %158, %cst_93 {dimension_numbers = #tpu.dot_dimension_numbers<[1], [0], [0], [1], [0, 0, 1, 1], [], []>} : vector<8x64xbf16>, vector<64x128xbf16>, vector<8x128xf32> -> vector<8x128xf32>
    %160 = arith.addf %155, %159 : vector<8x128xf32>
    %161 = vector.extract_strided_slice %104 {offsets = [88, 0], sizes = [8, 64], strides = [1, 1]} : vector<200x64xbf16> to vector<8x64xbf16>
    %c11 = arith.constant 11 : index
    %c0_94 = arith.constant 0 : index
    %c0_95 = arith.constant 0 : index
    %162 = vector.load %arg6[%c11, %c0_94, %c0_95] : memref<25x64x128xbf16, #tpu.memory_space<vmem>>, vector<1x64x128xbf16>
    %163 = vector.shape_cast %162 : vector<1x64x128xbf16> to vector<64x128xbf16>
    %cst_96 = arith.constant dense<0.000000e+00> : vector<8x128xf32>
    %164 = tpu.matmul %161, %163, %cst_96 {dimension_numbers = #tpu.dot_dimension_numbers<[1], [0], [0], [1], [0, 0, 1, 1], [], []>} : vector<8x64xbf16>, vector<64x128xbf16>, vector<8x128xf32> -> vector<8x128xf32>
    %165 = arith.addf %160, %164 : vector<8x128xf32>
    %166 = vector.extract_strided_slice %104 {offsets = [96, 0], sizes = [8, 64], strides = [1, 1]} : vector<200x64xbf16> to vector<8x64xbf16>
    %c12 = arith.constant 12 : index
    %c0_97 = arith.constant 0 : index
    %c0_98 = arith.constant 0 : index
    %167 = vector.load %arg6[%c12, %c0_97, %c0_98] : memref<25x64x128xbf16, #tpu.memory_space<vmem>>, vector<1x64x128xbf16>
    %168 = vector.shape_cast %167 : vector<1x64x128xbf16> to vector<64x128xbf16>
    %cst_99 = arith.constant dense<0.000000e+00> : vector<8x128xf32>
    %169 = tpu.matmul %166, %168, %cst_99 {dimension_numbers = #tpu.dot_dimension_numbers<[1], [0], [0], [1], [0, 0, 1, 1], [], []>} : vector<8x64xbf16>, vector<64x128xbf16>, vector<8x128xf32> -> vector<8x128xf32>
    %170 = arith.addf %165, %169 : vector<8x128xf32>
    %171 = vector.extract_strided_slice %104 {offsets = [104, 0], sizes = [8, 64], strides = [1, 1]} : vector<200x64xbf16> to vector<8x64xbf16>
    %c13 = arith.constant 13 : index
    %c0_100 = arith.constant 0 : index
    %c0_101 = arith.constant 0 : index
    %172 = vector.load %arg6[%c13, %c0_100, %c0_101] : memref<25x64x128xbf16, #tpu.memory_space<vmem>>, vector<1x64x128xbf16>
    %173 = vector.shape_cast %172 : vector<1x64x128xbf16> to vector<64x128xbf16>
    %cst_102 = arith.constant dense<0.000000e+00> : vector<8x128xf32>
    %174 = tpu.matmul %171, %173, %cst_102 {dimension_numbers = #tpu.dot_dimension_numbers<[1], [0], [0], [1], [0, 0, 1, 1], [], []>} : vector<8x64xbf16>, vector<64x128xbf16>, vector<8x128xf32> -> vector<8x128xf32>
    %175 = arith.addf %170, %174 : vector<8x128xf32>
    %176 = vector.extract_strided_slice %104 {offsets = [112, 0], sizes = [8, 64], strides = [1, 1]} : vector<200x64xbf16> to vector<8x64xbf16>
    %c14 = arith.constant 14 : index
    %c0_103 = arith.constant 0 : index
    %c0_104 = arith.constant 0 : index
    %177 = vector.load %arg6[%c14, %c0_103, %c0_104] : memref<25x64x128xbf16, #tpu.memory_space<vmem>>, vector<1x64x128xbf16>
    %178 = vector.shape_cast %177 : vector<1x64x128xbf16> to vector<64x128xbf16>
    %cst_105 = arith.constant dense<0.000000e+00> : vector<8x128xf32>
    %179 = tpu.matmul %176, %178, %cst_105 {dimension_numbers = #tpu.dot_dimension_numbers<[1], [0], [0], [1], [0, 0, 1, 1], [], []>} : vector<8x64xbf16>, vector<64x128xbf16>, vector<8x128xf32> -> vector<8x128xf32>
    %180 = arith.addf %175, %179 : vector<8x128xf32>
    %181 = vector.extract_strided_slice %104 {offsets = [120, 0], sizes = [8, 64], strides = [1, 1]} : vector<200x64xbf16> to vector<8x64xbf16>
    %c15 = arith.constant 15 : index
    %c0_106 = arith.constant 0 : index
    %c0_107 = arith.constant 0 : index
    %182 = vector.load %arg6[%c15, %c0_106, %c0_107] : memref<25x64x128xbf16, #tpu.memory_space<vmem>>, vector<1x64x128xbf16>
    %183 = vector.shape_cast %182 : vector<1x64x128xbf16> to vector<64x128xbf16>
    %cst_108 = arith.constant dense<0.000000e+00> : vector<8x128xf32>
    %184 = tpu.matmul %181, %183, %cst_108 {dimension_numbers = #tpu.dot_dimension_numbers<[1], [0], [0], [1], [0, 0, 1, 1], [], []>} : vector<8x64xbf16>, vector<64x128xbf16>, vector<8x128xf32> -> vector<8x128xf32>
    %185 = arith.addf %180, %184 : vector<8x128xf32>
    %186 = vector.extract_strided_slice %104 {offsets = [128, 0], sizes = [8, 64], strides = [1, 1]} : vector<200x64xbf16> to vector<8x64xbf16>
    %c16 = arith.constant 16 : index
    %c0_109 = arith.constant 0 : index
    %c0_110 = arith.constant 0 : index
    %187 = vector.load %arg6[%c16, %c0_109, %c0_110] : memref<25x64x128xbf16, #tpu.memory_space<vmem>>, vector<1x64x128xbf16>
    %188 = vector.shape_cast %187 : vector<1x64x128xbf16> to vector<64x128xbf16>
    %cst_111 = arith.constant dense<0.000000e+00> : vector<8x128xf32>
    %189 = tpu.matmul %186, %188, %cst_111 {dimension_numbers = #tpu.dot_dimension_numbers<[1], [0], [0], [1], [0, 0, 1, 1], [], []>} : vector<8x64xbf16>, vector<64x128xbf16>, vector<8x128xf32> -> vector<8x128xf32>
    %190 = arith.addf %185, %189 : vector<8x128xf32>
    %191 = vector.extract_strided_slice %104 {offsets = [136, 0], sizes = [8, 64], strides = [1, 1]} : vector<200x64xbf16> to vector<8x64xbf16>
    %c17 = arith.constant 17 : index
    %c0_112 = arith.constant 0 : index
    %c0_113 = arith.constant 0 : index
    %192 = vector.load %arg6[%c17, %c0_112, %c0_113] : memref<25x64x128xbf16, #tpu.memory_space<vmem>>, vector<1x64x128xbf16>
    %193 = vector.shape_cast %192 : vector<1x64x128xbf16> to vector<64x128xbf16>
    %cst_114 = arith.constant dense<0.000000e+00> : vector<8x128xf32>
    %194 = tpu.matmul %191, %193, %cst_114 {dimension_numbers = #tpu.dot_dimension_numbers<[1], [0], [0], [1], [0, 0, 1, 1], [], []>} : vector<8x64xbf16>, vector<64x128xbf16>, vector<8x128xf32> -> vector<8x128xf32>
    %195 = arith.addf %190, %194 : vector<8x128xf32>
    %196 = vector.extract_strided_slice %104 {offsets = [144, 0], sizes = [8, 64], strides = [1, 1]} : vector<200x64xbf16> to vector<8x64xbf16>
    %c18 = arith.constant 18 : index
    %c0_115 = arith.constant 0 : index
    %c0_116 = arith.constant 0 : index
    %197 = vector.load %arg6[%c18, %c0_115, %c0_116] : memref<25x64x128xbf16, #tpu.memory_space<vmem>>, vector<1x64x128xbf16>
    %198 = vector.shape_cast %197 : vector<1x64x128xbf16> to vector<64x128xbf16>
    %cst_117 = arith.constant dense<0.000000e+00> : vector<8x128xf32>
    %199 = tpu.matmul %196, %198, %cst_117 {dimension_numbers = #tpu.dot_dimension_numbers<[1], [0], [0], [1], [0, 0, 1, 1], [], []>} : vector<8x64xbf16>, vector<64x128xbf16>, vector<8x128xf32> -> vector<8x128xf32>
    %200 = arith.addf %195, %199 : vector<8x128xf32>
    %201 = vector.extract_strided_slice %104 {offsets = [152, 0], sizes = [8, 64], strides = [1, 1]} : vector<200x64xbf16> to vector<8x64xbf16>
    %c19 = arith.constant 19 : index
    %c0_118 = arith.constant 0 : index
    %c0_119 = arith.constant 0 : index
    %202 = vector.load %arg6[%c19, %c0_118, %c0_119] : memref<25x64x128xbf16, #tpu.memory_space<vmem>>, vector<1x64x128xbf16>
    %203 = vector.shape_cast %202 : vector<1x64x128xbf16> to vector<64x128xbf16>
    %cst_120 = arith.constant dense<0.000000e+00> : vector<8x128xf32>
    %204 = tpu.matmul %201, %203, %cst_120 {dimension_numbers = #tpu.dot_dimension_numbers<[1], [0], [0], [1], [0, 0, 1, 1], [], []>} : vector<8x64xbf16>, vector<64x128xbf16>, vector<8x128xf32> -> vector<8x128xf32>
    %205 = arith.addf %200, %204 : vector<8x128xf32>
    %206 = vector.extract_strided_slice %104 {offsets = [160, 0], sizes = [8, 64], strides = [1, 1]} : vector<200x64xbf16> to vector<8x64xbf16>
    %c20 = arith.constant 20 : index
    %c0_121 = arith.constant 0 : index
    %c0_122 = arith.constant 0 : index
    %207 = vector.load %arg6[%c20, %c0_121, %c0_122] : memref<25x64x128xbf16, #tpu.memory_space<vmem>>, vector<1x64x128xbf16>
    %208 = vector.shape_cast %207 : vector<1x64x128xbf16> to vector<64x128xbf16>
    %cst_123 = arith.constant dense<0.000000e+00> : vector<8x128xf32>
    %209 = tpu.matmul %206, %208, %cst_123 {dimension_numbers = #tpu.dot_dimension_numbers<[1], [0], [0], [1], [0, 0, 1, 1], [], []>} : vector<8x64xbf16>, vector<64x128xbf16>, vector<8x128xf32> -> vector<8x128xf32>
    %210 = arith.addf %205, %209 : vector<8x128xf32>
    %211 = vector.extract_strided_slice %104 {offsets = [168, 0], sizes = [8, 64], strides = [1, 1]} : vector<200x64xbf16> to vector<8x64xbf16>
    %c21 = arith.constant 21 : index
    %c0_124 = arith.constant 0 : index
    %c0_125 = arith.constant 0 : index
    %212 = vector.load %arg6[%c21, %c0_124, %c0_125] : memref<25x64x128xbf16, #tpu.memory_space<vmem>>, vector<1x64x128xbf16>
    %213 = vector.shape_cast %212 : vector<1x64x128xbf16> to vector<64x128xbf16>
    %cst_126 = arith.constant dense<0.000000e+00> : vector<8x128xf32>
    %214 = tpu.matmul %211, %213, %cst_126 {dimension_numbers = #tpu.dot_dimension_numbers<[1], [0], [0], [1], [0, 0, 1, 1], [], []>} : vector<8x64xbf16>, vector<64x128xbf16>, vector<8x128xf32> -> vector<8x128xf32>
    %215 = arith.addf %210, %214 : vector<8x128xf32>
    %216 = vector.extract_strided_slice %104 {offsets = [176, 0], sizes = [8, 64], strides = [1, 1]} : vector<200x64xbf16> to vector<8x64xbf16>
    %c22 = arith.constant 22 : index
    %c0_127 = arith.constant 0 : index
    %c0_128 = arith.constant 0 : index
    %217 = vector.load %arg6[%c22, %c0_127, %c0_128] : memref<25x64x128xbf16, #tpu.memory_space<vmem>>, vector<1x64x128xbf16>
    %218 = vector.shape_cast %217 : vector<1x64x128xbf16> to vector<64x128xbf16>
    %cst_129 = arith.constant dense<0.000000e+00> : vector<8x128xf32>
    %219 = tpu.matmul %216, %218, %cst_129 {dimension_numbers = #tpu.dot_dimension_numbers<[1], [0], [0], [1], [0, 0, 1, 1], [], []>} : vector<8x64xbf16>, vector<64x128xbf16>, vector<8x128xf32> -> vector<8x128xf32>
    %220 = arith.addf %215, %219 : vector<8x128xf32>
    %221 = vector.extract_strided_slice %104 {offsets = [184, 0], sizes = [8, 64], strides = [1, 1]} : vector<200x64xbf16> to vector<8x64xbf16>
    %c23 = arith.constant 23 : index
    %c0_130 = arith.constant 0 : index
    %c0_131 = arith.constant 0 : index
    %222 = vector.load %arg6[%c23, %c0_130, %c0_131] : memref<25x64x128xbf16, #tpu.memory_space<vmem>>, vector<1x64x128xbf16>
    %223 = vector.shape_cast %222 : vector<1x64x128xbf16> to vector<64x128xbf16>
    %cst_132 = arith.constant dense<0.000000e+00> : vector<8x128xf32>
    %224 = tpu.matmul %221, %223, %cst_132 {dimension_numbers = #tpu.dot_dimension_numbers<[1], [0], [0], [1], [0, 0, 1, 1], [], []>} : vector<8x64xbf16>, vector<64x128xbf16>, vector<8x128xf32> -> vector<8x128xf32>
    %225 = arith.addf %220, %224 : vector<8x128xf32>
    %226 = vector.extract_strided_slice %104 {offsets = [192, 0], sizes = [8, 64], strides = [1, 1]} : vector<200x64xbf16> to vector<8x64xbf16>
    %c24 = arith.constant 24 : index
    %c0_133 = arith.constant 0 : index
    %c0_134 = arith.constant 0 : index
    %227 = vector.load %arg6[%c24, %c0_133, %c0_134] : memref<25x64x128xbf16, #tpu.memory_space<vmem>>, vector<1x64x128xbf16>
    %228 = vector.shape_cast %227 : vector<1x64x128xbf16> to vector<64x128xbf16>
    %cst_135 = arith.constant dense<0.000000e+00> : vector<8x128xf32>
    %229 = tpu.matmul %226, %228, %cst_135 {dimension_numbers = #tpu.dot_dimension_numbers<[1], [0], [0], [1], [0, 0, 1, 1], [], []>} : vector<8x64xbf16>, vector<64x128xbf16>, vector<8x128xf32> -> vector<8x128xf32>
    %230 = arith.addf %225, %229 : vector<8x128xf32>
    %c0_136 = arith.constant 0 : index
    %c0_137 = arith.constant 0 : index
    %231 = vector.load %arg7[%c0_136, %c0_137] : memref<1x128xf32, #tpu.memory_space<vmem>>, vector<1x128xf32>
    %232 = vector.broadcast %231 : vector<1x128xf32> to vector<8x128xf32>
    %233 = arith.addf %230, %232 : vector<8x128xf32>
    %cst_138 = arith.constant 0.000000e+00 : f32
    %234 = vector.broadcast %cst_138 : f32 to vector<8x128xf32>
    %235 = arith.maximumf %233, %234 : vector<8x128xf32>
    %236 = arith.truncf %235 : vector<8x128xf32> to vector<8x128xbf16>
    %c0_139 = arith.constant 0 : index
    %c0_140 = arith.constant 0 : index
    %237 = vector.load %arg8[%c0_139, %c0_140] : memref<128x128xbf16, #tpu.memory_space<vmem>>, vector<128x128xbf16>
    %cst_141 = arith.constant dense<0.000000e+00> : vector<8x128xf32>
    %238 = tpu.matmul %236, %237, %cst_141 {dimension_numbers = #tpu.dot_dimension_numbers<[1], [0], [0], [1], [0, 0, 1, 1], [], []>} : vector<8x128xbf16>, vector<128x128xbf16>, vector<8x128xf32> -> vector<8x128xf32>
    %c0_142 = arith.constant 0 : index
    %c0_143 = arith.constant 0 : index
    %239 = vector.load %arg9[%c0_142, %c0_143] : memref<1x128xf32, #tpu.memory_space<vmem>>, vector<1x128xf32>
    %240 = vector.broadcast %239 : vector<1x128xf32> to vector<8x128xf32>
    %241 = arith.addf %238, %240 : vector<8x128xf32>
    %cst_144 = arith.constant 0.000000e+00 : f32
    %242 = vector.broadcast %cst_144 : f32 to vector<8x128xf32>
    %243 = arith.maximumf %241, %242 : vector<8x128xf32>
    %244 = arith.truncf %243 : vector<8x128xf32> to vector<8x128xbf16>
    %c0_145 = arith.constant 0 : index
    %c0_146 = arith.constant 0 : index
    %245 = vector.load %arg10[%c0_145, %c0_146] : memref<128x128xbf16, #tpu.memory_space<vmem>>, vector<128x128xbf16>
    %cst_147 = arith.constant dense<0.000000e+00> : vector<8x128xf32>
    %246 = tpu.matmul %244, %245, %cst_147 {dimension_numbers = #tpu.dot_dimension_numbers<[1], [0], [0], [1], [0, 0, 1, 1], [], []>} : vector<8x128xbf16>, vector<128x128xbf16>, vector<8x128xf32> -> vector<8x128xf32>
    %c0_148 = arith.constant 0 : index
    %c0_149 = arith.constant 0 : index
    %247 = vector.load %arg11[%c0_148, %c0_149] : memref<1x128xf32, #tpu.memory_space<vmem>>, vector<1x128xf32>
    %248 = vector.broadcast %247 : vector<1x128xf32> to vector<8x128xf32>
    %249 = arith.addf %246, %248 : vector<8x128xf32>
    %cst_150 = arith.constant dense<0xFF800000> : vector<8xf32>
    %250 = vector.multi_reduction <maximumf>, %249, %cst_150 [1] : vector<8x128xf32> to vector<8xf32>
    %251 = vector.shape_cast %250 : vector<8xf32> to vector<8x1xf32>
    %252 = vector.broadcast %251 : vector<8x1xf32> to vector<8x128xf32>
    %253 = arith.subf %249, %252 : vector<8x128xf32>
    %254 = math.exp %253 : vector<8x128xf32>
    %cst_151 = arith.constant dense<0.000000e+00> : vector<8xf32>
    %255 = vector.multi_reduction <add>, %254, %cst_151 [1] : vector<8x128xf32> to vector<8xf32>
    %256 = vector.shape_cast %255 : vector<8xf32> to vector<8x1xf32>
    %257 = math.log %256 : vector<8x1xf32>
    %258 = arith.addf %257, %251 : vector<8x1xf32>
    %259 = vector.broadcast %258 : vector<8x1xf32> to vector<8x128xf32>
    %260 = arith.subf %249, %259 : vector<8x128xf32>
    %c0_152 = arith.constant 0 : index
    %c0_153 = arith.constant 0 : index
    %c0_154 = arith.constant 0 : index
    %261 = vector.load %arg12[%c0_152, %c0_153, %c0_154] : memref<1x8x128xf32, #tpu.memory_space<vmem>>, vector<1x8x128xf32>
    %262 = vector.shape_cast %261 : vector<1x8x128xf32> to vector<8x128xf32>
    %263 = vector.shape_cast %260 : vector<8x128xf32> to vector<1x8x128xf32>
    tpu.vector_store %arg12[%c0_152, %c0_153, %c0_154], %263 {strides = array<i32>} : memref<1x8x128xf32, #tpu.memory_space<vmem>>, vector<1x8x128xf32>,
    return
  }
  func.func @transform_0(%arg0: i32) -> (i32, i32, i32) {
    %c0_i32 = arith.constant 0 : i32
    %c0_i32_0 = arith.constant 0 : i32
    %c0_i32_1 = arith.constant 0 : i32
    return %arg0, %c0_i32, %c0_i32_0 : i32, i32, i32
  }
  func.func @transform_1(%arg0: i32) -> (i32, i32) {
    %c0_i32 = arith.constant 0 : i32
    %c0_i32_0 = arith.constant 0 : i32
    %c0_i32_1 = arith.constant 0 : i32
    return %c0_i32, %c0_i32_0 : i32, i32
  }
  func.func @transform_2(%arg0: i32) -> (i32, i32) {
    %c0_i32 = arith.constant 0 : i32
    %c0_i32_0 = arith.constant 0 : i32
    %c0_i32_1 = arith.constant 0 : i32
    return %c0_i32, %c0_i32_0 : i32, i32
  }
  func.func @transform_3(%arg0: i32) -> (i32, i32, i32) {
    %c0_i32 = arith.constant 0 : i32
    %c0_i32_0 = arith.constant 0 : i32
    %c0_i32_1 = arith.constant 0 : i32
    %c0_i32_2 = arith.constant 0 : i32
    return %c0_i32, %c0_i32_0, %c0_i32_1 : i32, i32, i32
  }
  func.func @transform_4(%arg0: i32) -> (i32, i32) {
    %c0_i32 = arith.constant 0 : i32
    %c0_i32_0 = arith.constant 0 : i32
    %c0_i32_1 = arith.constant 0 : i32
    return %c0_i32, %c0_i32_0 : i32, i32
  }
  func.func @transform_5(%arg0: i32) -> (i32, i32, i32) {
    %c0_i32 = arith.constant 0 : i32
    %c0_i32_0 = arith.constant 0 : i32
    %c0_i32_1 = arith.constant 0 : i32
    %c0_i32_2 = arith.constant 0 : i32
    return %c0_i32, %c0_i32_0, %c0_i32_1 : i32, i32, i32
  }
  func.func @transform_6(%arg0: i32) -> (i32, i32) {
    %c0_i32 = arith.constant 0 : i32
    %c0_i32_0 = arith.constant 0 : i32
    %c0_i32_1 = arith.constant 0 : i32
    return %c0_i32, %c0_i32_0 : i32, i32
  }
  func.func @transform_7(%arg0: i32) -> (i32, i32) {
    %c0_i32 = arith.constant 0 : i32
    %c0_i32_0 = arith.constant 0 : i32
    %c0_i32_1 = arith.constant 0 : i32
    return %c0_i32, %c0_i32_0 : i32, i32
  }
  func.func @transform_8(%arg0: i32) -> (i32, i32) {
    %c0_i32 = arith.constant 0 : i32
    %c0_i32_0 = arith.constant 0 : i32
    %c0_i32_1 = arith.constant 0 : i32
    return %c0_i32, %c0_i32_0 : i32, i32
  }
  func.func @transform_9(%arg0: i32) -> (i32, i32) {
    %c0_i32 = arith.constant 0 : i32
    %c0_i32_0 = arith.constant 0 : i32
    %c0_i32_1 = arith.constant 0 : i32
    return %c0_i32, %c0_i32_0 : i32, i32
  }
  func.func @transform_10(%arg0: i32) -> (i32, i32) {
    %c0_i32 = arith.constant 0 : i32
    %c0_i32_0 = arith.constant 0 : i32
    %c0_i32_1 = arith.constant 0 : i32
    return %c0_i32, %c0_i32_0 : i32, i32
  }
  func.func @transform_11(%arg0: i32) -> (i32, i32, i32) {
    %c0_i32 = arith.constant 0 : i32
    %c0_i32_0 = arith.constant 0 : i32
    %c0_i32_1 = arith.constant 0 : i32
    return %arg0, %c0_i32, %c0_i32_0 : i32, i32, i32
  }
}

</mosaic_0001>

<llo_original>
// kernel: tpu_custom_call.1
$region0: #{tpu_custom_call.1}
  #allocation0 [shape = 'u32[]', space=smem, size = 0x4, offset = 0x4, fixed_abs, tag = 'smem constant byte address 0x4 - core index']
  #allocation1 [shape = 'u32[144,128]{1,0:T(1,128)}', space=vmem, size = 0x12000, scoped, tag = 'internal scratch']
  %s0 = inlined_call_operand.vmem [shape: bf16[1,200,512], index: 0, kind: input, shape index: {}]
  %s1 = inlined_call_operand.vmem [shape: bf16[6,512], index: 1, kind: input, shape index: {}]
  %s2 = inlined_call_operand.vmem [shape: bf16[6,512], index: 2, kind: input, shape index: {}]
  %s3 = inlined_call_operand.vmem [shape: bf16[6,512,64], index: 3, kind: input, shape index: {}]
  %s4 = inlined_call_operand.vmem [shape: f32[1,64], index: 4, kind: input, shape index: {}]
  %s5 = inlined_call_operand.vmem [shape: bf16[25,64,128], index: 5, kind: input, shape index: {}]
  %s6 = inlined_call_operand.vmem [shape: f32[1,128], index: 6, kind: input, shape index: {}]
  %s7 = inlined_call_operand.vmem [shape: bf16[128,128], index: 7, kind: input, shape index: {}]
  %s8 = inlined_call_operand.vmem [shape: f32[1,128], index: 8, kind: input, shape index: {}]
  %s9 = inlined_call_operand.vmem [shape: bf16[128,128], index: 9, kind: input, shape index: {}]
  %s10 = inlined_call_operand.vmem [shape: f32[1,128], index: 10, kind: input, shape index: {}]
  %s11 = inlined_call_operand.hbm [shape: f32[1,8,128], index: 11, kind: output, shape index: {}]
  %s12 = sld [smem:[#allocation0]]
  $region54: #{tpu_custom_call.1} parent=0
    _
  %s14 = ssub.s32 1, %s12
  %s15 = scalar_select 0, %s14, %s12
  $region1: #{tpu_custom_call.1} parent=0
    #allocation2 [shape = 'u8[4096]{0}', space=vmem, size = 0x1000, scoped, tag = 'output window, operand 0, single buffered']
    #allocation3 [shape = 's32[1]{0}', space=sflag, size = 0x4, scoped, tag = 'scoped memory for tpu_custom_call.1']
    %16 = vsyncpa [#allocation3], 0
    // Predicated region
    $region2: #{tpu_custom_call.1} parent=1 // pred_check
      _
    $region3: #{tpu_custom_call.1} parent=1 // pred_check_branch
      %18 = sbr.rel (0) target = $region5
    $region4: #{tpu_custom_call.1} parent=1 // pred_region
      _
    $region5: #{tpu_custom_call.1} parent=1 // pred_fallthru
      _
    // Predicated region
    $region6: #{tpu_custom_call.1} parent=1 // pred_check
      _
    $region7: #{tpu_custom_call.1} parent=1 // pred_check_branch
      %20 = sbr.rel (0) target = $region9
    $region8: #{tpu_custom_call.1} parent=1 // pred_region
      _
    $region9: #{tpu_custom_call.1} parent=1 // pred_fallthru
      _
    // Predicated region
    $region10: #{tpu_custom_call.1} parent=1 // pred_check
      _
    $region11: #{tpu_custom_call.1} parent=1 // pred_check_branch
      %22 = sbr.rel (0) target = $region13
    $region12: #{tpu_custom_call.1} parent=1 // pred_region
      _
    $region13: #{tpu_custom_call.1} parent=1 // pred_fallthru
      _
    // Predicated region
    $region14: #{tpu_custom_call.1} parent=1 // pred_check
      _
    $region15: #{tpu_custom_call.1} parent=1 // pred_check_branch
      %24 = sbr.rel (0) target = $region17
    $region16: #{tpu_custom_call.1} parent=1 // pred_region
      _
    $region17: #{tpu_custom_call.1} parent=1 // pred_fallthru
      _
    // Predicated region
    $region18: #{tpu_custom_call.1} parent=1 // pred_check
      _
    $region19: #{tpu_custom_call.1} parent=1 // pred_check_branch
      %26 = sbr.rel (0) target = $region21
    $region20: #{tpu_custom_call.1} parent=1 // pred_region
      _
    $region21: #{tpu_custom_call.1} parent=1 // pred_fallthru
      _
    // Predicated region
    $region22: #{tpu_custom_call.1} parent=1 // pred_check
      _
    $region23: #{tpu_custom_call.1} parent=1 // pred_check_branch
      %28 = sbr.rel (0) target = $region25
    $region24: #{tpu_custom_call.1} parent=1 // pred_region
      _
    $region25: #{tpu_custom_call.1} parent=1 // pred_fallthru
      _
    // Predicated region
    $region26: #{tpu_custom_call.1} parent=1 // pred_check
      _
    $region27: #{tpu_custom_call.1} parent=1 // pred_check_branch
      %30 = sbr.rel (0) target = $region29
    $region28: #{tpu_custom_call.1} parent=1 // pred_region
      _
    $region29: #{tpu_custom_call.1} parent=1 // pred_fallthru
      _
    // Predicated region
    $region30: #{tpu_custom_call.1} parent=1 // pred_check
      _
    $region31: #{tpu_custom_call.1} parent=1 // pred_check_branch
      %32 = sbr.rel (0) target = $region33
    $region32: #{tpu_custom_call.1} parent=1 // pred_region
      _
    $region33: #{tpu_custom_call.1} parent=1 // pred_fallthru
      _
    // Predicated region
    $region34: #{tpu_custom_call.1} parent=1 // pred_check
      _
    $region35: #{tpu_custom_call.1} parent=1 // pred_check_branch
      %34 = sbr.rel (0) target = $region37
    $region36: #{tpu_custom_call.1} parent=1 // pred_region
      _
    $region37: #{tpu_custom_call.1} parent=1 // pred_fallthru
      _
    // Predicated region
    $region38: #{tpu_custom_call.1} parent=1 // pred_check
      _
    $region39: #{tpu_custom_call.1} parent=1 // pred_check_branch
      %36 = sbr.rel (0) target = $region41
    $region40: #{tpu_custom_call.1} parent=1 // pred_region
      _
    $region41: #{tpu_custom_call.1} parent=1 // pred_fallthru
      _
    // Predicated region
    $region42: #{tpu_custom_call.1} parent=1 // pred_check
      _
    $region43: #{tpu_custom_call.1} parent=1 // pred_check_branch
      %38 = sbr.rel (0) target = $region45
    $region44: #{tpu_custom_call.1} parent=1 // pred_region
      _
    $region45: #{tpu_custom_call.1} parent=1 // pred_fallthru
      _
    %v40 = vld [vmem:[%s0] sm:$0xff]
    %v41 = vld [vmem:[%s0 + $0x8] sm:$0xff]
    %v42 = vld [vmem:[%s0 + $0x10] sm:$0xff]
    %v43 = vld [vmem:[%s0 + $0x18] sm:$0xff]
    %v44 = vld [vmem:[%s0 + $0x20] sm:$0xff]
    %v45 = vld [vmem:[%s0 + $0x28] sm:$0xff]
    %v46 = vld [vmem:[%s0 + $0x30] sm:$0xff]
    %v47 = vld [vmem:[%s0 + $0x38] sm:$0xff]
    %v48 = vld [vmem:[%s0 + $0x40] sm:$0xff]
    %v49 = vld [vmem:[%s0 + $0x48] sm:$0xff]
    %v50 = vld [vmem:[%s0 + $0x50] sm:$0xff]
    %v51 = vld [vmem:[%s0 + $0x58] sm:$0xff]
    %v52 = vld [vmem:[%s0 + $0x60] sm:$0xff]
    %v53 = vld [vmem:[%s0 + $0x68] sm:$0xff]
    %v54 = vld [vmem:[%s0 + $0x70] sm:$0xff]
    %v55 = vld [vmem:[%s0 + $0x78] sm:$0xff]
    %v56 = vld [vmem:[%s0 + $0x80] sm:$0xff]
    %v57 = vld [vmem:[%s0 + $0x88] sm:$0xff]
    %v58 = vld [vmem:[%s0 + $0x90] sm:$0xff]
    %v59 = vld [vmem:[%s0 + $0x98] sm:$0xff]
    %v60 = vld [vmem:[%s0 + $0xa0] sm:$0xff]
    %v61 = vld [vmem:[%s0 + $0xa8] sm:$0xff]
    %v62 = vld [vmem:[%s0 + $0xb0] sm:$0xff]
    %v63 = vld [vmem:[%s0 + $0xb8] sm:$0xff]
    %v64 = vld [vmem:[%s0 + $0xc0] sm:$0xff]
    %v65 = vld [vmem:[%s0 + $0xc8] sm:$0xff]
    %v66 = vld [vmem:[%s0 + $0xd0] sm:$0xff]
    %v67 = vld [vmem:[%s0 + $0xd8] sm:$0xff]
    %v68 = vld [vmem:[%s0 + $0xe0] sm:$0xff]
    %v69 = vld [vmem:[%s0 + $0xe8] sm:$0xff]
    %v70 = vld [vmem:[%s0 + $0xf0] sm:$0xff]
    %v71 = vld [vmem:[%s0 + $0xf8] sm:$0xff]
    %v72 = vld [vmem:[%s0 + $0x100] sm:$0xff]
    %v73 = vld [vmem:[%s0 + $0x108] sm:$0xff]
    %v74 = vld [vmem:[%s0 + $0x110] sm:$0xff]
    %v75 = vld [vmem:[%s0 + $0x118] sm:$0xff]
    %v76 = vld [vmem:[%s0 + $0x120] sm:$0xff]
    %v77 = vld [vmem:[%s0 + $0x128] sm:$0xff]
    %v78 = vld [vmem:[%s0 + $0x130] sm:$0xff]
    %v79 = vld [vmem:[%s0 + $0x138] sm:$0xff]
    %v80 = vld [vmem:[%s0 + $0x140] sm:$0xff]
    %v81 = vld [vmem:[%s0 + $0x148] sm:$0xff]
    %v82 = vld [vmem:[%s0 + $0x150] sm:$0xff]
    %v83 = vld [vmem:[%s0 + $0x158] sm:$0xff]
    %v84 = vld [vmem:[%s0 + $0x160] sm:$0xff]
    %v85 = vld [vmem:[%s0 + $0x168] sm:$0xff]
    %v86 = vld [vmem:[%s0 + $0x170] sm:$0xff]
    %v87 = vld [vmem:[%s0 + $0x178] sm:$0xff]
    %v88 = vld [vmem:[%s0 + $0x180] sm:$0xff]
    %v89 = vld [vmem:[%s0 + $0x188] sm:$0xff]
    %v90 = vld [vmem:[%s1] sm:$0x11]
    %v91 = vld [vmem:[%s1 + $0x8] sm:$0x11]
    %v94 = vunpack.c.l.b16 %v90
    %v95 = vunpack.c.h.b16 %v90
    %v96 = vunpack.c.l.b16 %v91
    %v97 = vunpack.c.h.b16 %v91
    %v98 = vpack.c.b16 %v94, %v94
    %v99 = vpack.c.b16 %v95, %v95
    %v100 = vpack.c.b16 %v96, %v96
    %v101 = vpack.c.b16 %v97, %v97
    %v103 = vpack.i.b16 %v98, %v98
    %v105 = vlaneseq
    %v106 = vshrl.u32 %v105, 7
    %v107 = vsub.s32 0, %v106
    %v108 = vrot.slane %v103, %v107
    %v110 = vpack.i.b16 %v99, %v99
    %v112 = vlaneseq
    %v113 = vshrl.u32 %v112, 7
    %v114 = vsub.s32 0, %v113
    %v115 = vrot.slane %v110, %v114
    %v117 = vpack.i.b16 %v100, %v100
    %v119 = vlaneseq
    %v120 = vshrl.u32 %v119, 7
    %v121 = vsub.s32 0, %v120
    %v122 = vrot.slane %v117, %v121
    %v124 = vpack.i.b16 %v101, %v101
    %v126 = vlaneseq
    %v127 = vshrl.u32 %v126, 7
    %v128 = vsub.s32 0, %v127
    %v129 = vrot.slane %v124, %v128
    %v134 = vunpack.c.l.b16 %v108
    %v135 = vunpack.c.l.b16 %v115
    %v136 = vunpack.c.l.b16 %v122
    %v137 = vunpack.c.l.b16 %v129
    %v138 = vpack.c.b16 %v135, %v134
    %v139 = vpack.c.b16 %v137, %v136
    %v142 = vmul.bf16 %v40, %v138
    %v143 = vmul.bf16 %v41, %v139
    %v144 = vmul.bf16 %v42, %v138
    %v145 = vmul.bf16 %v43, %v139
    %v146 = vmul.bf16 %v44, %v138
    %v147 = vmul.bf16 %v45, %v139
    %v148 = vmul.bf16 %v46, %v138
    %v149 = vmul.bf16 %v47, %v139
    %v150 = vmul.bf16 %v48, %v138
    %v151 = vmul.bf16 %v49, %v139
    %v152 = vmul.bf16 %v50, %v138
    %v153 = vmul.bf16 %v51, %v139
    %v154 = vmul.bf16 %v52, %v138
    %v155 = vmul.bf16 %v53, %v139
    %v156 = vmul.bf16 %v54, %v138
    %v157 = vmul.bf16 %v55, %v139
    %v158 = vmul.bf16 %v56, %v138
    %v159 = vmul.bf16 %v57, %v139
    %v160 = vmul.bf16 %v58, %v138
    %v161 = vmul.bf16 %v59, %v139
    %v162 = vmul.bf16 %v60, %v138
    %v163 = vmul.bf16 %v61, %v139
    %v164 = vmul.bf16 %v62, %v138
    %v165 = vmul.bf16 %v63, %v139
    %v166 = vmul.bf16 %v64, %v138
    %v167 = vmul.bf16 %v65, %v139
    %v168 = vmul.bf16 %v66, %v138
    %v169 = vmul.bf16 %v67, %v139
    %v170 = vmul.bf16 %v68, %v138
    %v171 = vmul.bf16 %v69, %v139
    %v172 = vmul.bf16 %v70, %v138
    %v173 = vmul.bf16 %v71, %v139
    %v174 = vmul.bf16 %v72, %v138
    %v175 = vmul.bf16 %v73, %v139
    %v176 = vmul.bf16 %v74, %v138
    %v177 = vmul.bf16 %v75, %v139
    %v178 = vmul.bf16 %v76, %v138
    %v179 = vmul.bf16 %v77, %v139
    %v180 = vmul.bf16 %v78, %v138
    %v181 = vmul.bf16 %v79, %v139
    %v182 = vmul.bf16 %v80, %v138
    %v183 = vmul.bf16 %v81, %v139
    %v184 = vmul.bf16 %v82, %v138
    %v185 = vmul.bf16 %v83, %v139
    %v186 = vmul.bf16 %v84, %v138
    %v187 = vmul.bf16 %v85, %v139
    %v188 = vmul.bf16 %v86, %v138
    %v189 = vmul.bf16 %v87, %v139
    %v190 = vmul.bf16 %v88, %v138
    %v191 = vmul.bf16 %v89, %v139
    %v192 = vld [vmem:[%s2] sm:$0x11]
    %v193 = vld [vmem:[%s2 + $0x8] sm:$0x11]
    %v196 = vunpack.c.l.b16 %v192
    %v197 = vunpack.c.h.b16 %v192
    %v198 = vunpack.c.l.b16 %v193
    %v199 = vunpack.c.h.b16 %v193
    %v200 = vpack.c.b16 %v196, %v196
    %v201 = vpack.c.b16 %v197, %v197
    %v202 = vpack.c.b16 %v198, %v198
    %v203 = vpack.c.b16 %v199, %v199
    %v205 = vpack.i.b16 %v200, %v200
    %v207 = vlaneseq
    %v208 = vshrl.u32 %v207, 7
    %v209 = vsub.s32 0, %v208
    %v210 = vrot.slane %v205, %v209
    %v212 = vpack.i.b16 %v201, %v201
    %v214 = vlaneseq
    %v215 = vshrl.u32 %v214, 7
    %v216 = vsub.s32 0, %v215
    %v217 = vrot.slane %v212, %v216
    %v219 = vpack.i.b16 %v202, %v202
    %v221 = vlaneseq
    %v222 = vshrl.u32 %v221, 7
    %v223 = vsub.s32 0, %v222
    %v224 = vrot.slane %v219, %v223
    %v226 = vpack.i.b16 %v203, %v203
    %v228 = vlaneseq
    %v229 = vshrl.u32 %v228, 7
    %v230 = vsub.s32 0, %v229
    %v231 = vrot.slane %v226, %v230
    %v236 = vunpack.c.l.b16 %v210
    %v237 = vunpack.c.l.b16 %v217
    %v238 = vunpack.c.l.b16 %v224
    %v239 = vunpack.c.l.b16 %v231
    %v240 = vpack.c.b16 %v237, %v236
    %v241 = vpack.c.b16 %v239, %v238
    %v244 = vadd.bf16 %v142, %v240
    %v245 = vadd.bf16 %v143, %v241
    %v246 = vadd.bf16 %v144, %v240
    %v247 = vadd.bf16 %v145, %v241
    %v248 = vadd.bf16 %v146, %v240
    %v249 = vadd.bf16 %v147, %v241
    %v250 = vadd.bf16 %v148, %v240
    %v251 = vadd.bf16 %v149, %v241
    %v252 = vadd.bf16 %v150, %v240
    %v253 = vadd.bf16 %v151, %v241
    %v254 = vadd.bf16 %v152, %v240
    %v255 = vadd.bf16 %v153, %v241
    %v256 = vadd.bf16 %v154, %v240
    %v257 = vadd.bf16 %v155, %v241
    %v258 = vadd.bf16 %v156, %v240
    %v259 = vadd.bf16 %v157, %v241
    %v260 = vadd.bf16 %v158, %v240
    %v261 = vadd.bf16 %v159, %v241
    %v262 = vadd.bf16 %v160, %v240
    %v263 = vadd.bf16 %v161, %v241
    %v264 = vadd.bf16 %v162, %v240
    %v265 = vadd.bf16 %v163, %v241
    %v266 = vadd.bf16 %v164, %v240
    %v267 = vadd.bf16 %v165, %v241
    %v268 = vadd.bf16 %v166, %v240
    %v269 = vadd.bf16 %v167, %v241
    %v270 = vadd.bf16 %v168, %v240
    %v271 = vadd.bf16 %v169, %v241
    %v272 = vadd.bf16 %v170, %v240
    %v273 = vadd.bf16 %v171, %v241
    %v274 = vadd.bf16 %v172, %v240
    %v275 = vadd.bf16 %v173, %v241
    %v276 = vadd.bf16 %v174, %v240
    %v277 = vadd.bf16 %v175, %v241
    %v278 = vadd.bf16 %v176, %v240
    %v279 = vadd.bf16 %v177, %v241
    %v280 = vadd.bf16 %v178, %v240
    %v281 = vadd.bf16 %v179, %v241
    %v282 = vadd.bf16 %v180, %v240
    %v283 = vadd.bf16 %v181, %v241
    %v284 = vadd.bf16 %v182, %v240
    %v285 = vadd.bf16 %v183, %v241
    %v286 = vadd.bf16 %v184, %v240
    %v287 = vadd.bf16 %v185, %v241
    %v288 = vadd.bf16 %v186, %v240
    %v289 = vadd.bf16 %v187, %v241
    %v290 = vadd.bf16 %v188, %v240
    %v291 = vadd.bf16 %v189, %v241
    %v292 = vadd.bf16 %v190, %v240
    %v293 = vadd.bf16 %v191, %v241
    %v294 = vmax.bf16 %v244, 0
    %v295 = vmax.bf16 %v245, 0
    %v296 = vmax.bf16 %v246, 0
    %v297 = vmax.bf16 %v247, 0
    %v298 = vmax.bf16 %v248, 0
    %v299 = vmax.bf16 %v249, 0
    %v300 = vmax.bf16 %v250, 0
    %v301 = vmax.bf16 %v251, 0
    %v302 = vmax.bf16 %v252, 0
    %v303 = vmax.bf16 %v253, 0
    %v304 = vmax.bf16 %v254, 0
    %v305 = vmax.bf16 %v255, 0
    %v306 = vmax.bf16 %v256, 0
    %v307 = vmax.bf16 %v257, 0
    %v308 = vmax.bf16 %v258, 0
    %v309 = vmax.bf16 %v259, 0
    %v310 = vmax.bf16 %v260, 0
    %v311 = vmax.bf16 %v261, 0
    %v312 = vmax.bf16 %v262, 0
    %v313 = vmax.bf16 %v263, 0
    %v314 = vmax.bf16 %v264, 0
    %v315 = vmax.bf16 %v265, 0
    %v316 = vmax.bf16 %v266, 0
    %v317 = vmax.bf16 %v267, 0
    %v318 = vmax.bf16 %v268, 0
    %v319 = vmax.bf16 %v269, 0
    %v320 = vmax.bf16 %v270, 0
    %v321 = vmax.bf16 %v271, 0
    %v322 = vmax.bf16 %v272, 0
    %v323 = vmax.bf16 %v273, 0
    %v324 = vmax.bf16 %v274, 0
    %v325 = vmax.bf16 %v275, 0
    %v326 = vmax.bf16 %v276, 0
    %v327 = vmax.bf16 %v277, 0
    %v328 = vmax.bf16 %v278, 0
    %v329 = vmax.bf16 %v279, 0
    %v330 = vmax.bf16 %v280, 0
    %v331 = vmax.bf16 %v281, 0
    %v332 = vmax.bf16 %v282, 0
    %v333 = vmax.bf16 %v283, 0
    %v334 = vmax.bf16 %v284, 0
    %v335 = vmax.bf16 %v285, 0
    %v336 = vmax.bf16 %v286, 0
    %v337 = vmax.bf16 %v287, 0
    %v338 = vmax.bf16 %v288, 0
    %v339 = vmax.bf16 %v289, 0
    %v340 = vmax.bf16 %v290, 0
    %v341 = vmax.bf16 %v291, 0
    %v342 = vmax.bf16 %v292, 0
    %v343 = vmax.bf16 %v293, 0
    %v344 = vld [vmem:[%s3] sm:$0xf]
    %v345 = vld [vmem:[%s3 + $0x4] sm:$0xf]
    %v346 = vld [vmem:[%s3 + $0x8] sm:$0xf]
    %v347 = vld [vmem:[%s3 + $0xc] sm:$0xf]
    %v348 = vld [vmem:[%s3 + $0x10] sm:$0xf]
    %v349 = vld [vmem:[%s3 + $0x14] sm:$0xf]
    %v350 = vld [vmem:[%s3 + $0x18] sm:$0xf]
    %v351 = vld [vmem:[%s3 + $0x1c] sm:$0xf]
    %v352 = vld [vmem:[%s3 + $0x20] sm:$0xf]
    %v353 = vld [vmem:[%s3 + $0x24] sm:$0xf]
    %v354 = vld [vmem:[%s3 + $0x28] sm:$0xf]
    %v355 = vld [vmem:[%s3 + $0x2c] sm:$0xf]
    %v356 = vld [vmem:[%s3 + $0x30] sm:$0xf]
    %v357 = vld [vmem:[%s3 + $0x34] sm:$0xf]
    %v358 = vld [vmem:[%s3 + $0x38] sm:$0xf]
    %v359 = vld [vmem:[%s3 + $0x3c] sm:$0xf]
    %v360 = vld [vmem:[%s3 + $0x40] sm:$0xf]
    %v361 = vld [vmem:[%s3 + $0x44] sm:$0xf]
    %v362 = vld [vmem:[%s3 + $0x48] sm:$0xf]
    %v363 = vld [vmem:[%s3 + $0x4c] sm:$0xf]
    %v364 = vld [vmem:[%s3 + $0x50] sm:$0xf]
    %v365 = vld [vmem:[%s3 + $0x54] sm:$0xf]
    %v366 = vld [vmem:[%s3 + $0x58] sm:$0xf]
    %v367 = vld [vmem:[%s3 + $0x5c] sm:$0xf]
    %v368 = vld [vmem:[%s3 + $0x60] sm:$0xf]
    %v369 = vld [vmem:[%s3 + $0x64] sm:$0xf]
    %v370 = vld [vmem:[%s3 + $0x68] sm:$0xf]
    %v371 = vld [vmem:[%s3 + $0x6c] sm:$0xf]
    %v372 = vld [vmem:[%s3 + $0x70] sm:$0xf]
    %v373 = vld [vmem:[%s3 + $0x74] sm:$0xf]
    %v374 = vld [vmem:[%s3 + $0x78] sm:$0xf]
    %v375 = vld [vmem:[%s3 + $0x7c] sm:$0xf]
    %v376 = vld [vmem:[%s3 + $0x80] sm:$0xf]
    %v377 = vld [vmem:[%s3 + $0x84] sm:$0xf]
    %v378 = vld [vmem:[%s3 + $0x88] sm:$0xf]
    %v379 = vld [vmem:[%s3 + $0x8c] sm:$0xf]
    %v380 = vld [vmem:[%s3 + $0x90] sm:$0xf]
    %v381 = vld [vmem:[%s3 + $0x94] sm:$0xf]
    %v382 = vld [vmem:[%s3 + $0x98] sm:$0xf]
    %v383 = vld [vmem:[%s3 + $0x9c] sm:$0xf]
    %v384 = vld [vmem:[%s3 + $0xa0] sm:$0xf]
    %v385 = vld [vmem:[%s3 + $0xa4] sm:$0xf]
    %v386 = vld [vmem:[%s3 + $0xa8] sm:$0xf]
    %v387 = vld [vmem:[%s3 + $0xac] sm:$0xf]
    %v388 = vld [vmem:[%s3 + $0xb0] sm:$0xf]
    %v389 = vld [vmem:[%s3 + $0xb4] sm:$0xf]
    %v390 = vld [vmem:[%s3 + $0xb8] sm:$0xf]
    %v391 = vld [vmem:[%s3 + $0xbc] sm:$0xf]
    %v392 = vld [vmem:[%s3 + $0xc0] sm:$0xf]
    %v393 = vld [vmem:[%s3 + $0xc4] sm:$0xf]
    %v394 = vld [vmem:[%s3 + $0xc8] sm:$0xf]
    %v395 = vld [vmem:[%s3 + $0xcc] sm:$0xf]
    %v396 = vld [vmem:[%s3 + $0xd0] sm:$0xf]
    %v397 = vld [vmem:[%s3 + $0xd4] sm:$0xf]
    %v398 = vld [vmem:[%s3 + $0xd8] sm:$0xf]
    %v399 = vld [vmem:[%s3 + $0xdc] sm:$0xf]
    %v400 = vld [vmem:[%s3 + $0xe0] sm:$0xf]
    %v401 = vld [vmem:[%s3 + $0xe4] sm:$0xf]
    %v402 = vld [vmem:[%s3 + $0xe8] sm:$0xf]
    %v403 = vld [vmem:[%s3 + $0xec] sm:$0xf]
    %v404 = vld [vmem:[%s3 + $0xf0] sm:$0xf]
    %v405 = vld [vmem:[%s3 + $0xf4] sm:$0xf]
    %v406 = vld [vmem:[%s3 + $0xf8] sm:$0xf]
    %v407 = vld [vmem:[%s3 + $0xfc] sm:$0xf]
    %v408 = vshrl.u32 %v98, 16
    %v409 = vpack.i.b16 %v408, %v408
    %v411 = vlaneseq
    %v412 = vshrl.u32 %v411, 7
    %v413 = vsub.s32 0, %v412
    %v414 = vrot.slane %v409, %v413
    %v415 = vshrl.u32 %v99, 16
    %v416 = vpack.i.b16 %v415, %v415
    %v418 = vlaneseq
    %v419 = vshrl.u32 %v418, 7
    %v420 = vsub.s32 0, %v419
    %v421 = vrot.slane %v416, %v420
    %v422 = vshrl.u32 %v100, 16
    %v423 = vpack.i.b16 %v422, %v422
    %v425 = vlaneseq
    %v426 = vshrl.u32 %v425, 7
    %v427 = vsub.s32 0, %v426
    %v428 = vrot.slane %v423, %v427
    %v429 = vshrl.u32 %v101, 16
    %v430 = vpack.i.b16 %v429, %v429
    %v432 = vlaneseq
    %v433 = vshrl.u32 %v432, 7
    %v434 = vsub.s32 0, %v433
    %v435 = vrot.slane %v430, %v434
    %v440 = vunpack.c.l.b16 %v414
    %v441 = vunpack.c.l.b16 %v421
    %v442 = vunpack.c.l.b16 %v428
    %v443 = vunpack.c.l.b16 %v435
    %v444 = vpack.c.b16 %v441, %v440
    %v445 = vpack.c.b16 %v443, %v442
    %v448 = vmul.bf16 %v40, %v444
    %v449 = vmul.bf16 %v41, %v445
    %v450 = vmul.bf16 %v42, %v444
    %v451 = vmul.bf16 %v43, %v445
    %v452 = vmul.bf16 %v44, %v444
    %v453 = vmul.bf16 %v45, %v445
    %v454 = vmul.bf16 %v46, %v444
    %v455 = vmul.bf16 %v47, %v445
    %v456 = vmul.bf16 %v48, %v444
    %v457 = vmul.bf16 %v49, %v445
    %v458 = vmul.bf16 %v50, %v444
    %v459 = vmul.bf16 %v51, %v445
    %v460 = vmul.bf16 %v52, %v444
    %v461 = vmul.bf16 %v53, %v445
    %v462 = vmul.bf16 %v54, %v444
    %v463 = vmul.bf16 %v55, %v445
    %v464 = vmul.bf16 %v56, %v444
    %v465 = vmul.bf16 %v57, %v445
    %v466 = vmul.bf16 %v58, %v444
    %v467 = vmul.bf16 %v59, %v445
    %v468 = vmul.bf16 %v60, %v444
    %v469 = vmul.bf16 %v61, %v445
    %v470 = vmul.bf16 %v62, %v444
    %v471 = vmul.bf16 %v63, %v445
    %v472 = vmul.bf16 %v64, %v444
    %v473 = vmul.bf16 %v65, %v445
    %v474 = vmul.bf16 %v66, %v444
    %v475 = vmul.bf16 %v67, %v445
    %v476 = vmul.bf16 %v68, %v444
    %v477 = vmul.bf16 %v69, %v445
    %v478 = vmul.bf16 %v70, %v444
    %v479 = vmul.bf16 %v71, %v445
    %v480 = vmul.bf16 %v72, %v444
    %v481 = vmul.bf16 %v73, %v445
    %v482 = vmul.bf16 %v74, %v444
    %v483 = vmul.bf16 %v75, %v445
    %v484 = vmul.bf16 %v76, %v444
    %v485 = vmul.bf16 %v77, %v445
    %v486 = vmul.bf16 %v78, %v444
    %v487 = vmul.bf16 %v79, %v445
    %v488 = vmul.bf16 %v80, %v444
    %v489 = vmul.bf16 %v81, %v445
    %v490 = vmul.bf16 %v82, %v444
    %v491 = vmul.bf16 %v83, %v445
    %v492 = vmul.bf16 %v84, %v444
    %v493 = vmul.bf16 %v85, %v445
    %v494 = vmul.bf16 %v86, %v444
    %v495 = vmul.bf16 %v87, %v445
    %v496 = vmul.bf16 %v88, %v444
    %v497 = vmul.bf16 %v89, %v445
    %v498 = vshrl.u32 %v200, 16
    %v499 = vpack.i.b16 %v498, %v498
    %v501 = vlaneseq
    %v502 = vshrl.u32 %v501, 7
    %v503 = vsub.s32 0, %v502
    %v504 = vrot.slane %v499, %v503
    %v505 = vshrl.u32 %v201, 16
    %v506 = vpack.i.b16 %v505, %v505
    %v508 = vlaneseq
    %v509 = vshrl.u32 %v508, 7
    %v510 = vsub.s32 0, %v509
    %v511 = vrot.slane %v506, %v510
    %v512 = vshrl.u32 %v202, 16
    %v513 = vpack.i.b16 %v512, %v512
    %v515 = vlaneseq
    %v516 = vshrl.u32 %v515, 7
    %v517 = vsub.s32 0, %v516
    %v518 = vrot.slane %v513, %v517
    %v519 = vshrl.u32 %v203, 16
    %v520 = vpack.i.b16 %v519, %v519
    %v522 = vlaneseq
    %v523 = vshrl.u32 %v522, 7
    %v524 = vsub.s32 0, %v523
    %v525 = vrot.slane %v520, %v524
    %v530 = vunpack.c.l.b16 %v504
    %v531 = vunpack.c.l.b16 %v511
    %v532 = vunpack.c.l.b16 %v518
    %v533 = vunpack.c.l.b16 %v525
    %v534 = vpack.c.b16 %v531, %v530
    %v535 = vpack.c.b16 %v533, %v532
    %v538 = vadd.bf16 %v448, %v534
    %v539 = vadd.bf16 %v449, %v535
    %v540 = vadd.bf16 %v450, %v534
    %v541 = vadd.bf16 %v451, %v535
    %v542 = vadd.bf16 %v452, %v534
    %v543 = vadd.bf16 %v453, %v535
    %v544 = vadd.bf16 %v454, %v534
    %v545 = vadd.bf16 %v455, %v535
    %v546 = vadd.bf16 %v456, %v534
    %v547 = vadd.bf16 %v457, %v535
    %v548 = vadd.bf16 %v458, %v534
    %v549 = vadd.bf16 %v459, %v535
    %v550 = vadd.bf16 %v460, %v534
    %v551 = vadd.bf16 %v461, %v535
    %v552 = vadd.bf16 %v462, %v534
    %v553 = vadd.bf16 %v463, %v535
    %v554 = vadd.bf16 %v464, %v534
    %v555 = vadd.bf16 %v465, %v535
    %v556 = vadd.bf16 %v466, %v534
    %v557 = vadd.bf16 %v467, %v535
    %v558 = vadd.bf16 %v468, %v534
    %v559 = vadd.bf16 %v469, %v535
    %v560 = vadd.bf16 %v470, %v534
    %v561 = vadd.bf16 %v471, %v535
    %v562 = vadd.bf16 %v472, %v534
    %v563 = vadd.bf16 %v473, %v535
    %v564 = vadd.bf16 %v474, %v534
    %v565 = vadd.bf16 %v475, %v535
    %v566 = vadd.bf16 %v476, %v534
    %v567 = vadd.bf16 %v477, %v535
    %v568 = vadd.bf16 %v478, %v534
    %v569 = vadd.bf16 %v479, %v535
    %v570 = vadd.bf16 %v480, %v534
    %v571 = vadd.bf16 %v481, %v535
    %v572 = vadd.bf16 %v482, %v534
    %v573 = vadd.bf16 %v483, %v535
    %v574 = vadd.bf16 %v484, %v534
    %v575 = vadd.bf16 %v485, %v535
    %v576 = vadd.bf16 %v486, %v534
    %v577 = vadd.bf16 %v487, %v535
    %v578 = vadd.bf16 %v488, %v534
    %v579 = vadd.bf16 %v489, %v535
    %v580 = vadd.bf16 %v490, %v534
    %v581 = vadd.bf16 %v491, %v535
    %v582 = vadd.bf16 %v492, %v534
    %v583 = vadd.bf16 %v493, %v535
    %v584 = vadd.bf16 %v494, %v534
    %v585 = vadd.bf16 %v495, %v535
    %v586 = vadd.bf16 %v496, %v534
    %v587 = vadd.bf16 %v497, %v535
    %v588 = vmax.bf16 %v538, 0
    %v589 = vmax.bf16 %v539, 0
    %v590 = vmax.bf16 %v540, 0
    %v591 = vmax.bf16 %v541, 0
    %v592 = vmax.bf16 %v542, 0
    %v593 = vmax.bf16 %v543, 0
    %v594 = vmax.bf16 %v544, 0
    %v595 = vmax.bf16 %v545, 0
    %v596 = vmax.bf16 %v546, 0
    %v597 = vmax.bf16 %v547, 0
    %v598 = vmax.bf16 %v548, 0
    %v599 = vmax.bf16 %v549, 0
    %v600 = vmax.bf16 %v550, 0
    %v601 = vmax.bf16 %v551, 0
    %v602 = vmax.bf16 %v552, 0
    %v603 = vmax.bf16 %v553, 0
    %v604 = vmax.bf16 %v554, 0
    %v605 = vmax.bf16 %v555, 0
    %v606 = vmax.bf16 %v556, 0
    %v607 = vmax.bf16 %v557, 0
    %v608 = vmax.bf16 %v558, 0
    %v609 = vmax.bf16 %v559, 0
    %v610 = vmax.bf16 %v560, 0
    %v611 = vmax.bf16 %v561, 0
    %v612 = vmax.bf16 %v562, 0
    %v613 = vmax.bf16 %v563, 0
    %v614 = vmax.bf16 %v564, 0
    %v615 = vmax.bf16 %v565, 0
    %v616 = vmax.bf16 %v566, 0
    %v617 = vmax.bf16 %v567, 0
    %v618 = vmax.bf16 %v568, 0
    %v619 = vmax.bf16 %v569, 0
    %v620 = vmax.bf16 %v570, 0
    %v621 = vmax.bf16 %v571, 0
    %v622 = vmax.bf16 %v572, 0
    %v623 = vmax.bf16 %v573, 0
    %v624 = vmax.bf16 %v574, 0
    %v625 = vmax.bf16 %v575, 0
    %v626 = vmax.bf16 %v576, 0
    %v627 = vmax.bf16 %v577, 0
    %v628 = vmax.bf16 %v578, 0
    %v629 = vmax.bf16 %v579, 0
    %v630 = vmax.bf16 %v580, 0
    %v631 = vmax.bf16 %v581, 0
    %v632 = vmax.bf16 %v582, 0
    %v633 = vmax.bf16 %v583, 0
    %v634 = vmax.bf16 %v584, 0
    %v635 = vmax.bf16 %v585, 0
    %v636 = vmax.bf16 %v586, 0
    %v637 = vmax.bf16 %v587, 0
    %s638 = scalar_lea.vmem %s3, 256
    %v639 = vld [vmem:[%s638] sm:$0xf]
    %v640 = vld [vmem:[%s638 + $0x4] sm:$0xf]
    %v641 = vld [vmem:[%s638 + $0x8] sm:$0xf]
    %v642 = vld [vmem:[%s638 + $0xc] sm:$0xf]
    %v643 = vld [vmem:[%s638 + $0x10] sm:$0xf]
    %v644 = vld [vmem:[%s638 + $0x14] sm:$0xf]
    %v645 = vld [vmem:[%s638 + $0x18] sm:$0xf]
    %v646 = vld [vmem:[%s638 + $0x1c] sm:$0xf]
    %v647 = vld [vmem:[%s638 + $0x20] sm:$0xf]
    %v648 = vld [vmem:[%s638 + $0x24] sm:$0xf]
    %v649 = vld [vmem:[%s638 + $0x28] sm:$0xf]
    %v650 = vld [vmem:[%s638 + $0x2c] sm:$0xf]
    %v651 = vld [vmem:[%s638 + $0x30] sm:$0xf]
    %v652 = vld [vmem:[%s638 + $0x34] sm:$0xf]
    %v653 = vld [vmem:[%s638 + $0x38] sm:$0xf]
    %v654 = vld [vmem:[%s638 + $0x3c] sm:$0xf]
    %v655 = vld [vmem:[%s638 + $0x40] sm:$0xf]
    %v656 = vld [vmem:[%s638 + $0x44] sm:$0xf]
    %v657 = vld [vmem:[%s638 + $0x48] sm:$0xf]
    %v658 = vld [vmem:[%s638 + $0x4c] sm:$0xf]
    %v659 = vld [vmem:[%s638 + $0x50] sm:$0xf]
    %v660 = vld [vmem:[%s638 + $0x54] sm:$0xf]
    %v661 = vld [vmem:[%s638 + $0x58] sm:$0xf]
    %v662 = vld [vmem:[%s638 + $0x5c] sm:$0xf]
    %v663 = vld [vmem:[%s638 + $0x60] sm:$0xf]
    %v664 = vld [vmem:[%s638 + $0x64] sm:$0xf]
    %v665 = vld [vmem:[%s638 + $0x68] sm:$0xf]
    %v666 = vld [vmem:[%s638 + $0x6c] sm:$0xf]
    %v667 = vld [vmem:[%s638 + $0x70] sm:$0xf]
    %v668 = vld [vmem:[%s638 + $0x74] sm:$0xf]
    %v669 = vld [vmem:[%s638 + $0x78] sm:$0xf]
    %v670 = vld [vmem:[%s638 + $0x7c] sm:$0xf]
    %v671 = vld [vmem:[%s638 + $0x80] sm:$0xf]
    %v672 = vld [vmem:[%s638 + $0x84] sm:$0xf]
    %v673 = vld [vmem:[%s638 + $0x88] sm:$0xf]
    %v674 = vld [vmem:[%s638 + $0x8c] sm:$0xf]
    %v675 = vld [vmem:[%s638 + $0x90] sm:$0xf]
    %v676 = vld [vmem:[%s638 + $0x94] sm:$0xf]
    %v677 = vld [vmem:[%s638 + $0x98] sm:$0xf]
    %v678 = vld [vmem:[%s638 + $0x9c] sm:$0xf]
    %v679 = vld [vmem:[%s638 + $0xa0] sm:$0xf]
    %v680 = vld [vmem:[%s638 + $0xa4] sm:$0xf]
    %v681 = vld [vmem:[%s638 + $0xa8] sm:$0xf]
    %v682 = vld [vmem:[%s638 + $0xac] sm:$0xf]
    %v683 = vld [vmem:[%s638 + $0xb0] sm:$0xf]
    %v684 = vld [vmem:[%s638 + $0xb4] sm:$0xf]
    %v685 = vld [vmem:[%s638 + $0xb8] sm:$0xf]
    %v686 = vld [vmem:[%s638 + $0xbc] sm:$0xf]
    %v687 = vld [vmem:[%s638 + $0xc0] sm:$0xf]
    %v688 = vld [vmem:[%s638 + $0xc4] sm:$0xf]
    %v689 = vld [vmem:[%s638 + $0xc8] sm:$0xf]
    %v690 = vld [vmem:[%s638 + $0xcc] sm:$0xf]
    %v691 = vld [vmem:[%s638 + $0xd0] sm:$0xf]
    %v692 = vld [vmem:[%s638 + $0xd4] sm:$0xf]
    %v693 = vld [vmem:[%s638 + $0xd8] sm:$0xf]
    %v694 = vld [vmem:[%s638 + $0xdc] sm:$0xf]
    %v695 = vld [vmem:[%s638 + $0xe0] sm:$0xf]
    %v696 = vld [vmem:[%s638 + $0xe4] sm:$0xf]
    %v697 = vld [vmem:[%s638 + $0xe8] sm:$0xf]
    %v698 = vld [vmem:[%s638 + $0xec] sm:$0xf]
    %v699 = vld [vmem:[%s638 + $0xf0] sm:$0xf]
    %v700 = vld [vmem:[%s638 + $0xf4] sm:$0xf]
    %v701 = vld [vmem:[%s638 + $0xf8] sm:$0xf]
    %v702 = vld [vmem:[%s638 + $0xfc] sm:$0xf]
    %v753 = vunpack.c.l.b16 %v588
    %v754 = vunpack.c.h.b16 %v588
    %v755 = vunpack.c.l.b16 %v589
    %v756 = vunpack.c.h.b16 %v589
    %v757 = vunpack.c.l.b16 %v590
    %v758 = vunpack.c.h.b16 %v590
    %v759 = vunpack.c.l.b16 %v591
    %v760 = vunpack.c.h.b16 %v591
    %v761 = vunpack.c.l.b16 %v592
    %v762 = vunpack.c.h.b16 %v592
    %v763 = vunpack.c.l.b16 %v593
    %v764 = vunpack.c.h.b16 %v593
    %v765 = vunpack.c.l.b16 %v594
    %v766 = vunpack.c.h.b16 %v594
    %v767 = vunpack.c.l.b16 %v595
    %v768 = vunpack.c.h.b16 %v595
    %v769 = vunpack.c.l.b16 %v596
    %v770 = vunpack.c.h.b16 %v596
    %v771 = vunpack.c.l.b16 %v597
    %v772 = vunpack.c.h.b16 %v597
    %v773 = vunpack.c.l.b16 %v598
    %v774 = vunpack.c.h.b16 %v598
    %v775 = vunpack.c.l.b16 %v599
    %v776 = vunpack.c.h.b16 %v599
    %v777 = vunpack.c.l.b16 %v600
    %v778 = vunpack.c.h.b16 %v600
    %v779 = vunpack.c.l.b16 %v601
    %v780 = vunpack.c.h.b16 %v601
    %v781 = vunpack.c.l.b16 %v602
    %v782 = vunpack.c.h.b16 %v602
    %v783 = vunpack.c.l.b16 %v603
    %v784 = vunpack.c.h.b16 %v603
    %v785 = vunpack.c.l.b16 %v604
    %v786 = vunpack.c.h.b16 %v604
    %v787 = vunpack.c.l.b16 %v605
    %v788 = vunpack.c.h.b16 %v605
    %v789 = vunpack.c.l.b16 %v606
    %v790 = vunpack.c.h.b16 %v606
    %v791 = vunpack.c.l.b16 %v607
    %v792 = vunpack.c.h.b16 %v607
    %v793 = vunpack.c.l.b16 %v608
    %v794 = vunpack.c.h.b16 %v608
    %v795 = vunpack.c.l.b16 %v609
    %v796 = vunpack.c.h.b16 %v609
    %v797 = vunpack.c.l.b16 %v610
    %v798 = vunpack.c.h.b16 %v610
    %v799 = vunpack.c.l.b16 %v611
    %v800 = vunpack.c.h.b16 %v611
    %v801 = vunpack.c.l.b16 %v612
    %v802 = vunpack.c.h.b16 %v612
    %v803 = vunpack.c.l.b16 %v613
    %v804 = vunpack.c.h.b16 %v613
    %v805 = vunpack.c.l.b16 %v614
    %v806 = vunpack.c.h.b16 %v614
    %v807 = vunpack.c.l.b16 %v615
    %v808 = vunpack.c.h.b16 %v615
    %v809 = vunpack.c.l.b16 %v616
    %v810 = vunpack.c.h.b16 %v616
    %v811 = vunpack.c.l.b16 %v617
    %v812 = vunpack.c.h.b16 %v617
    %v813 = vunpack.c.l.b16 %v618
    %v814 = vunpack.c.h.b16 %v618
    %v815 = vunpack.c.l.b16 %v619
    %v816 = vunpack.c.h.b16 %v619
    %v817 = vunpack.c.l.b16 %v620
    %v818 = vunpack.c.h.b16 %v620
    %v819 = vunpack.c.l.b16 %v621
    %v820 = vunpack.c.h.b16 %v621
    %v821 = vunpack.c.l.b16 %v622
    %v822 = vunpack.c.h.b16 %v622
    %v823 = vunpack.c.l.b16 %v623
    %v824 = vunpack.c.h.b16 %v623
    %v825 = vunpack.c.l.b16 %v624
    %v826 = vunpack.c.h.b16 %v624
    %v827 = vunpack.c.l.b16 %v625
    %v828 = vunpack.c.h.b16 %v625
    %v829 = vunpack.c.l.b16 %v626
    %v830 = vunpack.c.h.b16 %v626
    %v831 = vunpack.c.l.b16 %v627
    %v832 = vunpack.c.h.b16 %v627
    %v833 = vunpack.c.l.b16 %v628
    %v834 = vunpack.c.h.b16 %v628
    %v835 = vunpack.c.l.b16 %v629
    %v836 = vunpack.c.h.b16 %v629
    %v837 = vunpack.c.l.b16 %v630
    %v838 = vunpack.c.h.b16 %v630
    %v839 = vunpack.c.l.b16 %v631
    %v840 = vunpack.c.h.b16 %v631
    %v841 = vunpack.c.l.b16 %v632
    %v842 = vunpack.c.h.b16 %v632
    %v843 = vunpack.c.l.b16 %v633
    %v844 = vunpack.c.h.b16 %v633
    %v845 = vunpack.c.l.b16 %v634
    %v846 = vunpack.c.h.b16 %v634
    %v847 = vunpack.c.l.b16 %v635
    %v848 = vunpack.c.h.b16 %v635
    %v849 = vunpack.c.l.b16 %v636
    %v850 = vunpack.c.h.b16 %v636
    %v851 = vunpack.c.l.b16 %v637
    %v852 = vunpack.c.h.b16 %v637
    %v853 = vpack.c.b16 %v757, %v753
    %v854 = vpack.c.b16 %v758, %v754
    %v855 = vpack.c.b16 %v759, %v755
    %v856 = vpack.c.b16 %v760, %v756
    %v857 = vpack.c.b16 %v765, %v761
    %v858 = vpack.c.b16 %v766, %v762
    %v859 = vpack.c.b16 %v767, %v763
    %v860 = vpack.c.b16 %v768, %v764
    %v861 = vpack.c.b16 %v773, %v769
    %v862 = vpack.c.b16 %v774, %v770
    %v863 = vpack.c.b16 %v775, %v771
    %v864 = vpack.c.b16 %v776, %v772
    %v865 = vpack.c.b16 %v781, %v777
    %v866 = vpack.c.b16 %v782, %v778
    %v867 = vpack.c.b16 %v783, %v779
    %v868 = vpack.c.b16 %v784, %v780
    %v869 = vpack.c.b16 %v789, %v785
    %v870 = vpack.c.b16 %v790, %v786
    %v871 = vpack.c.b16 %v791, %v787
    %v872 = vpack.c.b16 %v792, %v788
    %v873 = vpack.c.b16 %v797, %v793
    %v874 = vpack.c.b16 %v798, %v794
    %v875 = vpack.c.b16 %v799, %v795
    %v876 = vpack.c.b16 %v800, %v796
    %v877 = vpack.c.b16 %v805, %v801
    %v878 = vpack.c.b16 %v806, %v802
    %v879 = vpack.c.b16 %v807, %v803
    %v880 = vpack.c.b16 %v808, %v804
    %v881 = vpack.c.b16 %v813, %v809
    %v882 = vpack.c.b16 %v814, %v810
    %v883 = vpack.c.b16 %v815, %v811
    %v884 = vpack.c.b16 %v816, %v812
    %v885 = vpack.c.b16 %v821, %v817
    %v886 = vpack.c.b16 %v822, %v818
    %v887 = vpack.c.b16 %v823, %v819
    %v888 = vpack.c.b16 %v824, %v820
    %v889 = vpack.c.b16 %v829, %v825
    %v890 = vpack.c.b16 %v830, %v826
    %v891 = vpack.c.b16 %v831, %v827
    %v892 = vpack.c.b16 %v832, %v828
    %v893 = vpack.c.b16 %v837, %v833
    %v894 = vpack.c.b16 %v838, %v834
    %v895 = vpack.c.b16 %v839, %v835
    %v896 = vpack.c.b16 %v840, %v836
    %v897 = vpack.c.b16 %v845, %v841
    %v898 = vpack.c.b16 %v846, %v842
    %v899 = vpack.c.b16 %v847, %v843
    %v900 = vpack.c.b16 %v848, %v844
    %v901 = vpack.c.b16 %v849, %v849
    %v902 = vpack.c.b16 %v850, %v850
    %v903 = vpack.c.b16 %v851, %v851
    %v904 = vpack.c.b16 %v852, %v852
    %v1021 = vunpack.c.l.b16 %v639
    %v1022 = vunpack.c.l.b16 %v640
    %v1023 = vunpack.c.l.b16 %v641
    %v1024 = vunpack.c.l.b16 %v642
    %v1025 = vunpack.c.l.b16 %v643
    %v1026 = vunpack.c.l.b16 %v644
    %v1027 = vunpack.c.l.b16 %v645
    %v1028 = vunpack.c.l.b16 %v646
    %v1029 = vunpack.c.l.b16 %v647
    %v1030 = vunpack.c.l.b16 %v648
    %v1031 = vunpack.c.l.b16 %v649
    %v1032 = vunpack.c.l.b16 %v650
    %v1033 = vunpack.c.l.b16 %v651
    %v1034 = vunpack.c.l.b16 %v652
    %v1035 = vunpack.c.l.b16 %v653
    %v1036 = vunpack.c.l.b16 %v654
    %v1037 = vunpack.c.l.b16 %v655
    %v1038 = vunpack.c.l.b16 %v656
    %v1039 = vunpack.c.l.b16 %v657
    %v1040 = vunpack.c.l.b16 %v658
    %v1041 = vunpack.c.l.b16 %v659
    %v1042 = vunpack.c.l.b16 %v660
    %v1043 = vunpack.c.l.b16 %v661
    %v1044 = vunpack.c.l.b16 %v662
    %v1045 = vunpack.c.l.b16 %v663
    %v1046 = vunpack.c.l.b16 %v664
    %v1047 = vunpack.c.l.b16 %v665
    %v1048 = vunpack.c.l.b16 %v666
    %v1049 = vunpack.c.l.b16 %v667
    %v1050 = vunpack.c.l.b16 %v668
    %v1051 = vunpack.c.l.b16 %v669
    %v1052 = vunpack.c.l.b16 %v670
    %v1053 = vunpack.c.l.b16 %v671
    %v1054 = vunpack.c.l.b16 %v672
    %v1055 = vunpack.c.l.b16 %v673
    %v1056 = vunpack.c.l.b16 %v674
    %v1057 = vunpack.c.l.b16 %v675
    %v1058 = vunpack.c.l.b16 %v676
    %v1059 = vunpack.c.l.b16 %v677
    %v1060 = vunpack.c.l.b16 %v678
    %v1061 = vunpack.c.l.b16 %v679
    %v1062 = vunpack.c.l.b16 %v680
    %v1063 = vunpack.c.l.b16 %v681
    %v1064 = vunpack.c.l.b16 %v682
    %v1065 = vunpack.c.l.b16 %v683
    %v1066 = vunpack.c.l.b16 %v684
    %v1067 = vunpack.c.l.b16 %v685
    %v1068 = vunpack.c.l.b16 %v686
    %v1069 = vunpack.c.l.b16 %v687
    %v1070 = vunpack.c.l.b16 %v688
    %v1071 = vunpack.c.l.b16 %v689
    %v1072 = vunpack.c.l.b16 %v690
    %v1073 = vunpack.c.l.b16 %v691
    %v1074 = vunpack.c.l.b16 %v692
    %v1075 = vunpack.c.l.b16 %v693
    %v1076 = vunpack.c.l.b16 %v694
    %v1077 = vunpack.c.l.b16 %v695
    %v1078 = vunpack.c.l.b16 %v696
    %v1079 = vunpack.c.l.b16 %v697
    %v1080 = vunpack.c.l.b16 %v698
    %v1081 = vunpack.c.l.b16 %v699
    %v1082 = vunpack.c.l.b16 %v700
    %v1083 = vunpack.c.l.b16 %v701
    %v1084 = vunpack.c.l.b16 %v702
    %v1085 = vpack.c.b16 %v1022, %v1021
    %v1086 = vpack.c.b16 %v1024, %v1023
    %v1087 = vpack.c.b16 %v1026, %v1025
    %v1088 = vpack.c.b16 %v1028, %v1027
    %v1089 = vpack.c.b16 %v1030, %v1029
    %v1090 = vpack.c.b16 %v1032, %v1031
    %v1091 = vpack.c.b16 %v1034, %v1033
    %v1092 = vpack.c.b16 %v1036, %v1035
    %v1093 = vpack.c.b16 %v1038, %v1037
    %v1094 = vpack.c.b16 %v1040, %v1039
    %v1095 = vpack.c.b16 %v1042, %v1041
    %v1096 = vpack.c.b16 %v1044, %v1043
    %v1097 = vpack.c.b16 %v1046, %v1045
    %v1098 = vpack.c.b16 %v1048, %v1047
    %v1099 = vpack.c.b16 %v1050, %v1049
    %v1100 = vpack.c.b16 %v1052, %v1051
    %v1101 = vpack.c.b16 %v1054, %v1053
    %v1102 = vpack.c.b16 %v1056, %v1055
    %v1103 = vpack.c.b16 %v1058, %v1057
    %v1104 = vpack.c.b16 %v1060, %v1059
    %v1105 = vpack.c.b16 %v1062, %v1061
    %v1106 = vpack.c.b16 %v1064, %v1063
    %v1107 = vpack.c.b16 %v1066, %v1065
    %v1108 = vpack.c.b16 %v1068, %v1067
    %v1109 = vpack.c.b16 %v1070, %v1069
    %v1110 = vpack.c.b16 %v1072, %v1071
    %v1111 = vpack.c.b16 %v1074, %v1073
    %v1112 = vpack.c.b16 %v1076, %v1075
    %v1113 = vpack.c.b16 %v1078, %v1077
    %v1114 = vpack.c.b16 %v1080, %v1079
    %v1115 = vpack.c.b16 %v1082, %v1081
    %v1116 = vpack.c.b16 %v1084, %v1083
    %1149 = vmatprep.subr.bf16.mxu0 0
    %1150 = vmatpush1.bf16.msra.mxu0 %v1092
    %1151 = vmatprep.subr.bf16.mxu0 0
    %1152 = vmatpush1.bf16.msra.mxu0 %v1091
    %1153 = vmatprep.subr.bf16.mxu0 0
    %1154 = vmatpush1.bf16.msra.mxu0 %v1090
    %1155 = vmatprep.subr.bf16.mxu0 0
    %1156 = vmatpush1.bf16.msra.mxu0 %v1089
    %1157 = vmatprep.subr.bf16.mxu0 0
    %1158 = vmatpush1.bf16.msra.mxu0 %v1088
    %1159 = vmatprep.subr.bf16.mxu0 0
    %1160 = vmatpush1.bf16.msra.mxu0 %v1087
    %1161 = vmatprep.subr.bf16.mxu0 0
    %1162 = vmatpush1.bf16.msra.mxu0 %v1086
    %1163 = vmatprep.subr.bf16.mxu0 0
    %1164 = vmatpush1.bf16.msra.mxu0 %v1085
    %1165 = vmatprep.subr.bf16.mxu0 0
    %1166 = vmatpush2.bf16.msra.mxu0 %v1100
    %1167 = vmatprep.subr.bf16.mxu0 0
    %1168 = vmatpush2.bf16.msra.mxu0 %v1099
    %1169 = vmatprep.subr.bf16.mxu0 0
    %1170 = vmatpush2.bf16.msra.mxu0 %v1098
    %1171 = vmatprep.subr.bf16.mxu0 0
    %1172 = vmatpush2.bf16.msra.mxu0 %v1097
    %1173 = vmatprep.subr.bf16.mxu0 0
    %1174 = vmatpush2.bf16.msra.mxu0 %v1096
    %1175 = vmatprep.subr.bf16.mxu0 0
    %1176 = vmatpush2.bf16.msra.mxu0 %v1095
    %1177 = vmatprep.subr.bf16.mxu0 0
    %1178 = vmatpush2.bf16.msra.mxu0 %v1094
    %1179 = vmatprep.subr.bf16.mxu0 0
    %1180 = vmatpush2.bf16.msra.mxu0 %v1093
    %1181 = vmatprep.mubr.bf16.mxu0 %v854
    %1182 = vmatmul.mubr.bf16.gmra.mxu0 %v853
    %v1183 = vpop.f32.mrf.mxu0
    %v1184 = vadd.f32 0.0, %v1183
    %v1185 = vpop.f32.mrf.mxu0
    %v1186 = vpop.f32.mrf.mxu0
    %v1187 = vadd.f32 0.0, %v1186
    %v1188 = vpop.f32.mrf.mxu0
    %1189 = vmatprep.mubr.bf16.mxu0 %v858
    %1190 = vmatmul.mubr.bf16.gmra.mxu0 %v857
    %v1191 = vpop.f32.mrf.mxu0
    %v1192 = vadd.f32 0.0, %v1191
    %v1193 = vpop.f32.mrf.mxu0
    %v1194 = vpop.f32.mrf.mxu0
    %v1195 = vadd.f32 0.0, %v1194
    %v1196 = vpop.f32.mrf.mxu0
    %1197 = vmatprep.mubr.bf16.mxu0 %v862
    %1198 = vmatmul.mubr.bf16.gmra.mxu0 %v861
    %v1199 = vpop.f32.mrf.mxu0
    %v1200 = vadd.f32 0.0, %v1199
    %v1201 = vpop.f32.mrf.mxu0
    %v1202 = vpop.f32.mrf.mxu0
    %v1203 = vadd.f32 0.0, %v1202
    %v1204 = vpop.f32.mrf.mxu0
    %1205 = vmatprep.mubr.bf16.mxu0 %v866
    %1206 = vmatmul.mubr.bf16.gmra.mxu0 %v865
    %v1207 = vpop.f32.mrf.mxu0
    %v1208 = vadd.f32 0.0, %v1207
    %v1209 = vpop.f32.mrf.mxu0
    %v1210 = vpop.f32.mrf.mxu0
    %v1211 = vadd.f32 0.0, %v1210
    %v1212 = vpop.f32.mrf.mxu0
    %1213 = vmatprep.mubr.bf16.mxu0 %v870
    %1214 = vmatmul.mubr.bf16.gmra.mxu0 %v869
    %v1215 = vpop.f32.mrf.mxu0
    %v1216 = vadd.f32 0.0, %v1215
    %v1217 = vpop.f32.mrf.mxu0
    %v1218 = vpop.f32.mrf.mxu0
    %v1219 = vadd.f32 0.0, %v1218
    %v1220 = vpop.f32.mrf.mxu0
    %1221 = vmatprep.mubr.bf16.mxu0 %v874
    %1222 = vmatmul.mubr.bf16.gmra.mxu0 %v873
    %v1223 = vpop.f32.mrf.mxu0
    %v1224 = vadd.f32 0.0, %v1223
    %v1225 = vpop.f32.mrf.mxu0
    %v1226 = vpop.f32.mrf.mxu0
    %v1227 = vadd.f32 0.0, %v1226
    %v1228 = vpop.f32.mrf.mxu0
    %1229 = vmatprep.mubr.bf16.mxu0 %v878
    %1230 = vmatmul.mubr.bf16.gmra.mxu0 %v877
    %v1231 = vpop.f32.mrf.mxu0
    %v1232 = vadd.f32 0.0, %v1231
    %v1233 = vpop.f32.mrf.mxu0
    %v1234 = vpop.f32.mrf.mxu0
    %v1235 = vadd.f32 0.0, %v1234
    %v1236 = vpop.f32.mrf.mxu0
    %1237 = vmatprep.mubr.bf16.mxu0 %v882
    %1238 = vmatmul.mubr.bf16.gmra.mxu0 %v881
    %v1239 = vpop.f32.mrf.mxu0
    %v1240 = vadd.f32 0.0, %v1239
    %v1241 = vpop.f32.mrf.mxu0
    %v1242 = vpop.f32.mrf.mxu0
    %v1243 = vadd.f32 0.0, %v1242
    %v1244 = vpop.f32.mrf.mxu0
    %1245 = vmatprep.mubr.bf16.mxu0 %v886
    %1246 = vmatmul.mubr.bf16.gmra.mxu0 %v885
    %v1247 = vpop.f32.mrf.mxu0
    %v1248 = vadd.f32 0.0, %v1247
    %v1249 = vpop.f32.mrf.mxu0
    %v1250 = vpop.f32.mrf.mxu0
    %v1251 = vadd.f32 0.0, %v1250
    %v1252 = vpop.f32.mrf.mxu0
    %1253 = vmatprep.mubr.bf16.mxu0 %v890
    %1254 = vmatmul.mubr.bf16.gmra.mxu0 %v889
    %v1255 = vpop.f32.mrf.mxu0
    %v1256 = vadd.f32 0.0, %v1255
    %v1257 = vpop.f32.mrf.mxu0
    %v1258 = vpop.f32.mrf.mxu0
    %v1259 = vadd.f32 0.0, %v1258
    %v1260 = vpop.f32.mrf.mxu0
    %1261 = vmatprep.mubr.bf16.mxu0 %v894
    %1262 = vmatmul.mubr.bf16.gmra.mxu0 %v893
    %v1263 = vpop.f32.mrf.mxu0
    %v1264 = vadd.f32 0.0, %v1263
    %v1265 = vpop.f32.mrf.mxu0
    %v1266 = vpop.f32.mrf.mxu0
    %v1267 = vadd.f32 0.0, %v1266
    %v1268 = vpop.f32.mrf.mxu0
    %1269 = vmatprep.mubr.bf16.mxu0 %v898
    %1270 = vmatmul.mubr.bf16.gmra.mxu0 %v897
    %v1271 = vpop.f32.mrf.mxu0
    %v1272 = vadd.f32 0.0, %v1271
    %v1273 = vpop.f32.mrf.mxu0
    %v1274 = vpop.f32.mrf.mxu0
    %v1275 = vadd.f32 0.0, %v1274
    %v1276 = vpop.f32.mrf.mxu0
    %1277 = vmatprep.mubr.bf16.mxu0 %v902
    %1278 = vmatmul.mubr.bf16.gmra.mxu0 %v901
    %v1279 = vpop.f32.mrf.mxu0
    %v1280 = vadd.f32 0.0, %v1279
    %v1281 = vpop.f32.mrf.mxu0
    %v1282 = vpop.f32.mrf.mxu0
    %v1283 = vpop.f32.mrf.mxu0
    %1284 = vdwg.mxu0
    %1285 = vmatprep.subr.bf16.mxu0 0
    %1286 = vmatpush1.bf16.msra.mxu0 %v1108
    %1287 = vmatprep.subr.bf16.mxu0 0
    %1288 = vmatpush1.bf16.msra.mxu0 %v1107
    %1289 = vmatprep.subr.bf16.mxu0 0
    %1290 = vmatpush1.bf16.msra.mxu0 %v1106
    %1291 = vmatprep.subr.bf16.mxu0 0
    %1292 = vmatpush1.bf16.msra.mxu0 %v1105
    %1293 = vmatprep.subr.bf16.mxu0 0
    %1294 = vmatpush1.bf16.msra.mxu0 %v1104
    %1295 = vmatprep.subr.bf16.mxu0 0
    %1296 = vmatpush1.bf16.msra.mxu0 %v1103
    %1297 = vmatprep.subr.bf16.mxu0 0
    %1298 = vmatpush1.bf16.msra.mxu0 %v1102
    %1299 = vmatprep.subr.bf16.mxu0 0
    %1300 = vmatpush1.bf16.msra.mxu0 %v1101
    %1301 = vmatprep.subr.bf16.mxu0 0
    %1302 = vmatpush2.bf16.msra.mxu0 %v1116
    %1303 = vmatprep.subr.bf16.mxu0 0
    %1304 = vmatpush2.bf16.msra.mxu0 %v1115
    %1305 = vmatprep.subr.bf16.mxu0 0
    %1306 = vmatpush2.bf16.msra.mxu0 %v1114
    %1307 = vmatprep.subr.bf16.mxu0 0
    %1308 = vmatpush2.bf16.msra.mxu0 %v1113
    %1309 = vmatprep.subr.bf16.mxu0 0
    %1310 = vmatpush2.bf16.msra.mxu0 %v1112
    %1311 = vmatprep.subr.bf16.mxu0 0
    %1312 = vmatpush2.bf16.msra.mxu0 %v1111
    %1313 = vmatprep.subr.bf16.mxu0 0
    %1314 = vmatpush2.bf16.msra.mxu0 %v1110
    %1315 = vmatprep.subr.bf16.mxu0 0
    %1316 = vmatpush2.bf16.msra.mxu0 %v1109
    %1317 = vmatprep.mubr.bf16.mxu0 %v856
    %1318 = vmatmul.mubr.bf16.gmra.mxu0 %v855
    %v1319 = vpop.f32.mrf.mxu0
    %v1320 = vadd.f32 %v1184, %v1319
    %v1321 = vpop.f32.mrf.mxu0
    %v1322 = vpop.f32.mrf.mxu0
    %v1323 = vadd.f32 %v1187, %v1322
    %v1324 = vpop.f32.mrf.mxu0
    %1325 = vmatprep.mubr.bf16.mxu0 %v860
    %1326 = vmatmul.mubr.bf16.gmra.mxu0 %v859
    %v1327 = vpop.f32.mrf.mxu0
    %v1328 = vadd.f32 %v1192, %v1327
    %v1329 = vpop.f32.mrf.mxu0
    %v1330 = vpop.f32.mrf.mxu0
    %v1331 = vadd.f32 %v1195, %v1330
    %v1332 = vpop.f32.mrf.mxu0
    %1333 = vmatprep.mubr.bf16.mxu0 %v864
    %1334 = vmatmul.mubr.bf16.gmra.mxu0 %v863
    %v1335 = vpop.f32.mrf.mxu0
    %v1336 = vadd.f32 %v1200, %v1335
    %v1337 = vpop.f32.mrf.mxu0
    %v1338 = vpop.f32.mrf.mxu0
    %v1339 = vadd.f32 %v1203, %v1338
    %v1340 = vpop.f32.mrf.mxu0
    %1341 = vmatprep.mubr.bf16.mxu0 %v868
    %1342 = vmatmul.mubr.bf16.gmra.mxu0 %v867
    %v1343 = vpop.f32.mrf.mxu0
    %v1344 = vadd.f32 %v1208, %v1343
    %v1345 = vpop.f32.mrf.mxu0
    %v1346 = vpop.f32.mrf.mxu0
    %v1347 = vadd.f32 %v1211, %v1346
    %v1348 = vpop.f32.mrf.mxu0
    %1349 = vmatprep.mubr.bf16.mxu0 %v872
    %1350 = vmatmul.mubr.bf16.gmra.mxu0 %v871
    %v1351 = vpop.f32.mrf.mxu0
    %v1352 = vadd.f32 %v1216, %v1351
    %v1353 = vpop.f32.mrf.mxu0
    %v1354 = vpop.f32.mrf.mxu0
    %v1355 = vadd.f32 %v1219, %v1354
    %v1356 = vpop.f32.mrf.mxu0
    %1357 = vmatprep.mubr.bf16.mxu0 %v876
    %1358 = vmatmul.mubr.bf16.gmra.mxu0 %v875
    %v1359 = vpop.f32.mrf.mxu0
    %v1360 = vadd.f32 %v1224, %v1359
    %v1361 = vpop.f32.mrf.mxu0
    %v1362 = vpop.f32.mrf.mxu0
    %v1363 = vadd.f32 %v1227, %v1362
    %v1364 = vpop.f32.mrf.mxu0
    %1365 = vmatprep.mubr.bf16.mxu0 %v880
    %1366 = vmatmul.mubr.bf16.gmra.mxu0 %v879
    %v1367 = vpop.f32.mrf.mxu0
    %v1368 = vadd.f32 %v1232, %v1367
    %v1369 = vpop.f32.mrf.mxu0
    %v1370 = vpop.f32.mrf.mxu0
    %v1371 = vadd.f32 %v1235, %v1370
    %v1372 = vpop.f32.mrf.mxu0
    %1373 = vmatprep.mubr.bf16.mxu0 %v884
    %1374 = vmatmul.mubr.bf16.gmra.mxu0 %v883
    %v1375 = vpop.f32.mrf.mxu0
    %v1376 = vadd.f32 %v1240, %v1375
    %v1377 = vpop.f32.mrf.mxu0
    %v1378 = vpop.f32.mrf.mxu0
    %v1379 = vadd.f32 %v1243, %v1378
    %v1380 = vpop.f32.mrf.mxu0
    %1381 = vmatprep.mubr.bf16.mxu0 %v888
    %1382 = vmatmul.mubr.bf16.gmra.mxu0 %v887
    %v1383 = vpop.f32.mrf.mxu0
    %v1384 = vadd.f32 %v1248, %v1383
    %v1385 = vpop.f32.mrf.mxu0
    %v1386 = vpop.f32.mrf.mxu0
    %v1387 = vadd.f32 %v1251, %v1386
    %v1388 = vpop.f32.mrf.mxu0
    %1389 = vmatprep.mubr.bf16.mxu0 %v892
    %1390 = vmatmul.mubr.bf16.gmra.mxu0 %v891
    %v1391 = vpop.f32.mrf.mxu0
    %v1392 = vadd.f32 %v1256, %v1391
    %v1393 = vpop.f32.mrf.mxu0
    %v1394 = vpop.f32.mrf.mxu0
    %v1395 = vadd.f32 %v1259, %v1394
    %v1396 = vpop.f32.mrf.mxu0
    %1397 = vmatprep.mubr.bf16.mxu0 %v896
    %1398 = vmatmul.mubr.bf16.gmra.mxu0 %v895
    %v1399 = vpop.f32.mrf.mxu0
    %v1400 = vadd.f32 %v1264, %v1399
    %v1401 = vpop.f32.mrf.mxu0
    %v1402 = vpop.f32.mrf.mxu0
    %v1403 = vadd.f32 %v1267, %v1402
    %v1404 = vpop.f32.mrf.mxu0
    %1405 = vmatprep.mubr.bf16.mxu0 %v900
    %1406 = vmatmul.mubr.bf16.gmra.mxu0 %v899
    %v1407 = vpop.f32.mrf.mxu0
    %v1408 = vadd.f32 %v1272, %v1407
    %v1409 = vpop.f32.mrf.mxu0
    %v1410 = vpop.f32.mrf.mxu0
    %v1411 = vadd.f32 %v1275, %v1410
    %v1412 = vpop.f32.mrf.mxu0
    %1413 = vmatprep.mubr.bf16.mxu0 %v904
    %1414 = vmatmul.mubr.bf16.gmra.mxu0 %v903
    %v1415 = vpop.f32.mrf.mxu0
    %v1416 = vadd.f32 %v1280, %v1415
    %v1417 = vpop.f32.mrf.mxu0
    %v1418 = vpop.f32.mrf.mxu0
    %v1419 = vpop.f32.mrf.mxu0
    %1420 = vdwg.mxu0
    %v1471 = vunpack.c.l.b16 %v294
    %v1472 = vunpack.c.h.b16 %v294
    %v1473 = vunpack.c.l.b16 %v295
    %v1474 = vunpack.c.h.b16 %v295
    %v1475 = vunpack.c.l.b16 %v296
    %v1476 = vunpack.c.h.b16 %v296
    %v1477 = vunpack.c.l.b16 %v297
    %v1478 = vunpack.c.h.b16 %v297
    %v1479 = vunpack.c.l.b16 %v298
    %v1480 = vunpack.c.h.b16 %v298
    %v1481 = vunpack.c.l.b16 %v299
    %v1482 = vunpack.c.h.b16 %v299
    %v1483 = vunpack.c.l.b16 %v300
    %v1484 = vunpack.c.h.b16 %v300
    %v1485 = vunpack.c.l.b16 %v301
    %v1486 = vunpack.c.h.b16 %v301
    %v1487 = vunpack.c.l.b16 %v302
    %v1488 = vunpack.c.h.b16 %v302
    %v1489 = vunpack.c.l.b16 %v303
    %v1490 = vunpack.c.h.b16 %v303
    %v1491 = vunpack.c.l.b16 %v304
    %v1492 = vunpack.c.h.b16 %v304
    %v1493 = vunpack.c.l.b16 %v305
    %v1494 = vunpack.c.h.b16 %v305
    %v1495 = vunpack.c.l.b16 %v306
    %v1496 = vunpack.c.h.b16 %v306
    %v1497 = vunpack.c.l.b16 %v307
    %v1498 = vunpack.c.h.b16 %v307
    %v1499 = vunpack.c.l.b16 %v308
    %v1500 = vunpack.c.h.b16 %v308
    %v1501 = vunpack.c.l.b16 %v309
    %v1502 = vunpack.c.h.b16 %v309
    %v1503 = vunpack.c.l.b16 %v310
    %v1504 = vunpack.c.h.b16 %v310
    %v1505 = vunpack.c.l.b16 %v311
    %v1506 = vunpack.c.h.b16 %v311
    %v1507 = vunpack.c.l.b16 %v312
    %v1508 = vunpack.c.h.b16 %v312
    %v1509 = vunpack.c.l.b16 %v313
    %v1510 = vunpack.c.h.b16 %v313
    %v1511 = vunpack.c.l.b16 %v314
    %v1512 = vunpack.c.h.b16 %v314
    %v1513 = vunpack.c.l.b16 %v315
    %v1514 = vunpack.c.h.b16 %v315
    %v1515 = vunpack.c.l.b16 %v316
    %v1516 = vunpack.c.h.b16 %v316
    %v1517 = vunpack.c.l.b16 %v317
    %v1518 = vunpack.c.h.b16 %v317
    %v1519 = vunpack.c.l.b16 %v318
    %v1520 = vunpack.c.h.b16 %v318
    %v1521 = vunpack.c.l.b16 %v319
    %v1522 = vunpack.c.h.b16 %v319
    %v1523 = vunpack.c.l.b16 %v320
    %v1524 = vunpack.c.h.b16 %v320
    %v1525 = vunpack.c.l.b16 %v321
    %v1526 = vunpack.c.h.b16 %v321
    %v1527 = vunpack.c.l.b16 %v322
    %v1528 = vunpack.c.h.b16 %v322
    %v1529 = vunpack.c.l.b16 %v323
    %v1530 = vunpack.c.h.b16 %v323
    %v1531 = vunpack.c.l.b16 %v324
    %v1532 = vunpack.c.h.b16 %v324
    %v1533 = vunpack.c.l.b16 %v325
    %v1534 = vunpack.c.h.b16 %v325
    %v1535 = vunpack.c.l.b16 %v326
    %v1536 = vunpack.c.h.b16 %v326
    %v1537 = vunpack.c.l.b16 %v327
    %v1538 = vunpack.c.h.b16 %v327
    %v1539 = vunpack.c.l.b16 %v328
    %v1540 = vunpack.c.h.b16 %v328
    %v1541 = vunpack.c.l.b16 %v329
    %v1542 = vunpack.c.h.b16 %v329
    %v1543 = vunpack.c.l.b16 %v330
    %v1544 = vunpack.c.h.b16 %v330
    %v1545 = vunpack.c.l.b16 %v331
    %v1546 = vunpack.c.h.b16 %v331
    %v1547 = vunpack.c.l.b16 %v332
    %v1548 = vunpack.c.h.b16 %v332
    %v1549 = vunpack.c.l.b16 %v333
    %v1550 = vunpack.c.h.b16 %v333
    %v1551 = vunpack.c.l.b16 %v334
    %v1552 = vunpack.c.h.b16 %v334
    %v1553 = vunpack.c.l.b16 %v335
    %v1554 = vunpack.c.h.b16 %v335
    %v1555 = vunpack.c.l.b16 %v336
    %v1556 = vunpack.c.h.b16 %v336
    %v1557 = vunpack.c.l.b16 %v337
    %v1558 = vunpack.c.h.b16 %v337
    %v1559 = vunpack.c.l.b16 %v338
    %v1560 = vunpack.c.h.b16 %v338
    %v1561 = vunpack.c.l.b16 %v339
    %v1562 = vunpack.c.h.b16 %v339
    %v1563 = vunpack.c.l.b16 %v340
    %v1564 = vunpack.c.h.b16 %v340
    %v1565 = vunpack.c.l.b16 %v341
    %v1566 = vunpack.c.h.b16 %v341
    %v1567 = vunpack.c.l.b16 %v342
    %v1568 = vunpack.c.h.b16 %v342
    %v1569 = vunpack.c.l.b16 %v343
    %v1570 = vunpack.c.h.b16 %v343
    %v1571 = vpack.c.b16 %v1475, %v1471
    %v1572 = vpack.c.b16 %v1476, %v1472
    %v1573 = vpack.c.b16 %v1477, %v1473
    %v1574 = vpack.c.b16 %v1478, %v1474
    %v1575 = vpack.c.b16 %v1483, %v1479
    %v1576 = vpack.c.b16 %v1484, %v1480
    %v1577 = vpack.c.b16 %v1485, %v1481
    %v1578 = vpack.c.b16 %v1486, %v1482
    %v1579 = vpack.c.b16 %v1491, %v1487
    %v1580 = vpack.c.b16 %v1492, %v1488
    %v1581 = vpack.c.b16 %v1493, %v1489
    %v1582 = vpack.c.b16 %v1494, %v1490
    %v1583 = vpack.c.b16 %v1499, %v1495
    %v1584 = vpack.c.b16 %v1500, %v1496
    %v1585 = vpack.c.b16 %v1501, %v1497
    %v1586 = vpack.c.b16 %v1502, %v1498
    %v1587 = vpack.c.b16 %v1507, %v1503
    %v1588 = vpack.c.b16 %v1508, %v1504
    %v1589 = vpack.c.b16 %v1509, %v1505
    %v1590 = vpack.c.b16 %v1510, %v1506
    %v1591 = vpack.c.b16 %v1515, %v1511
    %v1592 = vpack.c.b16 %v1516, %v1512
    %v1593 = vpack.c.b16 %v1517, %v1513
    %v1594 = vpack.c.b16 %v1518, %v1514
    %v1595 = vpack.c.b16 %v1523, %v1519
    %v1596 = vpack.c.b16 %v1524, %v1520
    %v1597 = vpack.c.b16 %v1525, %v1521
    %v1598 = vpack.c.b16 %v1526, %v1522
    %v1599 = vpack.c.b16 %v1531, %v1527
    %v1600 = vpack.c.b16 %v1532, %v1528
    %v1601 = vpack.c.b16 %v1533, %v1529
    %v1602 = vpack.c.b16 %v1534, %v1530
    %v1603 = vpack.c.b16 %v1539, %v1535
    %v1604 = vpack.c.b16 %v1540, %v1536
    %v1605 = vpack.c.b16 %v1541, %v1537
    %v1606 = vpack.c.b16 %v1542, %v1538
    %v1607 = vpack.c.b16 %v1547, %v1543
    %v1608 = vpack.c.b16 %v1548, %v1544
    %v1609 = vpack.c.b16 %v1549, %v1545
    %v1610 = vpack.c.b16 %v1550, %v1546
    %v1611 = vpack.c.b16 %v1555, %v1551
    %v1612 = vpack.c.b16 %v1556, %v1552
    %v1613 = vpack.c.b16 %v1557, %v1553
    %v1614 = vpack.c.b16 %v1558, %v1554
    %v1615 = vpack.c.b16 %v1563, %v1559
    %v1616 = vpack.c.b16 %v1564, %v1560
    %v1617 = vpack.c.b16 %v1565, %v1561
    %v1618 = vpack.c.b16 %v1566, %v1562
    %v1619 = vpack.c.b16 %v1567, %v1567
    %v1620 = vpack.c.b16 %v1568, %v1568
    %v1621 = vpack.c.b16 %v1569, %v1569
    %v1622 = vpack.c.b16 %v1570, %v1570
    %v1739 = vunpack.c.l.b16 %v344
    %v1740 = vunpack.c.l.b16 %v345
    %v1741 = vunpack.c.l.b16 %v346
    %v1742 = vunpack.c.l.b16 %v347
    %v1743 = vunpack.c.l.b16 %v348
    %v1744 = vunpack.c.l.b16 %v349
    %v1745 = vunpack.c.l.b16 %v350
    %v1746 = vunpack.c.l.b16 %v351
    %v1747 = vunpack.c.l.b16 %v352
    %v1748 = vunpack.c.l.b16 %v353
    %v1749 = vunpack.c.l.b16 %v354
    %v1750 = vunpack.c.l.b16 %v355
    %v1751 = vunpack.c.l.b16 %v356
    %v1752 = vunpack.c.l.b16 %v357
    %v1753 = vunpack.c.l.b16 %v358
    %v1754 = vunpack.c.l.b16 %v359
    %v1755 = vunpack.c.l.b16 %v360
    %v1756 = vunpack.c.l.b16 %v361
    %v1757 = vunpack.c.l.b16 %v362
    %v1758 = vunpack.c.l.b16 %v363
    %v1759 = vunpack.c.l.b16 %v364
    %v1760 = vunpack.c.l.b16 %v365
    %v1761 = vunpack.c.l.b16 %v366
    %v1762 = vunpack.c.l.b16 %v367
    %v1763 = vunpack.c.l.b16 %v368
    %v1764 = vunpack.c.l.b16 %v369
    %v1765 = vunpack.c.l.b16 %v370
    %v1766 = vunpack.c.l.b16 %v371
    %v1767 = vunpack.c.l.b16 %v372
    %v1768 = vunpack.c.l.b16 %v373
    %v1769 = vunpack.c.l.b16 %v374
    %v1770 = vunpack.c.l.b16 %v375
    %v1771 = vunpack.c.l.b16 %v376
    %v1772 = vunpack.c.l.b16 %v377
    %v1773 = vunpack.c.l.b16 %v378
    %v1774 = vunpack.c.l.b16 %v379
    %v1775 = vunpack.c.l.b16 %v380
    %v1776 = vunpack.c.l.b16 %v381
    %v1777 = vunpack.c.l.b16 %v382
    %v1778 = vunpack.c.l.b16 %v383
    %v1779 = vunpack.c.l.b16 %v384
    %v1780 = vunpack.c.l.b16 %v385
    %v1781 = vunpack.c.l.b16 %v386
    %v1782 = vunpack.c.l.b16 %v387
    %v1783 = vunpack.c.l.b16 %v388
    %v1784 = vunpack.c.l.b16 %v389
    %v1785 = vunpack.c.l.b16 %v390
    %v1786 = vunpack.c.l.b16 %v391
    %v1787 = vunpack.c.l.b16 %v392
    %v1788 = vunpack.c.l.b16 %v393
    %v1789 = vunpack.c.l.b16 %v394
    %v1790 = vunpack.c.l.b16 %v395
    %v1791 = vunpack.c.l.b16 %v396
    %v1792 = vunpack.c.l.b16 %v397
    %v1793 = vunpack.c.l.b16 %v398
    %v1794 = vunpack.c.l.b16 %v399
    %v1795 = vunpack.c.l.b16 %v400
    %v1796 = vunpack.c.l.b16 %v401
    %v1797 = vunpack.c.l.b16 %v402
    %v1798 = vunpack.c.l.b16 %v403
    %v1799 = vunpack.c.l.b16 %v404
    %v1800 = vunpack.c.l.b16 %v405
    %v1801 = vunpack.c.l.b16 %v406
    %v1802 = vunpack.c.l.b16 %v407
    %v1803 = vpack.c.b16 %v1740, %v1739
    %v1804 = vpack.c.b16 %v1742, %v1741
    %v1805 = vpack.c.b16 %v1744, %v1743
    %v1806 = vpack.c.b16 %v1746, %v1745
    %v1807 = vpack.c.b16 %v1748, %v1747
    %v1808 = vpack.c.b16 %v1750, %v1749
    %v1809 = vpack.c.b16 %v1752, %v1751
    %v1810 = vpack.c.b16 %v1754, %v1753
    %v1811 = vpack.c.b16 %v1756, %v1755
    %v1812 = vpack.c.b16 %v1758, %v1757
    %v1813 = vpack.c.b16 %v1760, %v1759
    %v1814 = vpack.c.b16 %v1762, %v1761
    %v1815 = vpack.c.b16 %v1764, %v1763
    %v1816 = vpack.c.b16 %v1766, %v1765
    %v1817 = vpack.c.b16 %v1768, %v1767
    %v1818 = vpack.c.b16 %v1770, %v1769
    %v1819 = vpack.c.b16 %v1772, %v1771
    %v1820 = vpack.c.b16 %v1774, %v1773
    %v1821 = vpack.c.b16 %v1776, %v1775
    %v1822 = vpack.c.b16 %v1778, %v1777
    %v1823 = vpack.c.b16 %v1780, %v1779
    %v1824 = vpack.c.b16 %v1782, %v1781
    %v1825 = vpack.c.b16 %v1784, %v1783
    %v1826 = vpack.c.b16 %v1786, %v1785
    %v1827 = vpack.c.b16 %v1788, %v1787
    %v1828 = vpack.c.b16 %v1790, %v1789
    %v1829 = vpack.c.b16 %v1792, %v1791
    %v1830 = vpack.c.b16 %v1794, %v1793
    %v1831 = vpack.c.b16 %v1796, %v1795
    %v1832 = vpack.c.b16 %v1798, %v1797
    %v1833 = vpack.c.b16 %v1800, %v1799
    %v1834 = vpack.c.b16 %v1802, %v1801
    %1867 = vmatprep.subr.bf16.mxu0 0
    %1868 = vmatpush1.bf16.msra.mxu0 %v1810
    %1869 = vmatprep.subr.bf16.mxu0 0
    %1870 = vmatpush1.bf16.msra.mxu0 %v1809
    %1871 = vmatprep.subr.bf16.mxu0 0
    %1872 = vmatpush1.bf16.msra.mxu0 %v1808
    %1873 = vmatprep.subr.bf16.mxu0 0
    %1874 = vmatpush1.bf16.msra.mxu0 %v1807
    %1875 = vmatprep.subr.bf16.mxu0 0
    %1876 = vmatpush1.bf16.msra.mxu0 %v1806
    %1877 = vmatprep.subr.bf16.mxu0 0
    %1878 = vmatpush1.bf16.msra.mxu0 %v1805
    %1879 = vmatprep.subr.bf16.mxu0 0
    %1880 = vmatpush1.bf16.msra.mxu0 %v1804
    %1881 = vmatprep.subr.bf16.mxu0 0
    %1882 = vmatpush1.bf16.msra.mxu0 %v1803
    %1883 = vmatprep.subr.bf16.mxu0 0
    %1884 = vmatpush2.bf16.msra.mxu0 %v1818
    %1885 = vmatprep.subr.bf16.mxu0 0
    %1886 = vmatpush2.bf16.msra.mxu0 %v1817
    %1887 = vmatprep.subr.bf16.mxu0 0
    %1888 = vmatpush2.bf16.msra.mxu0 %v1816
    %1889 = vmatprep.subr.bf16.mxu0 0
    %1890 = vmatpush2.bf16.msra.mxu0 %v1815
    %1891 = vmatprep.subr.bf16.mxu0 0
    %1892 = vmatpush2.bf16.msra.mxu0 %v1814
    %1893 = vmatprep.subr.bf16.mxu0 0
    %1894 = vmatpush2.bf16.msra.mxu0 %v1813
    %1895 = vmatprep.subr.bf16.mxu0 0
    %1896 = vmatpush2.bf16.msra.mxu0 %v1812
    %1897 = vmatprep.subr.bf16.mxu0 0
    %1898 = vmatpush2.bf16.msra.mxu0 %v1811
    %1899 = vmatprep.mubr.bf16.mxu0 %v1572
    %1900 = vmatmul.mubr.bf16.gmra.mxu0 %v1571
    %v1901 = vpop.f32.mrf.mxu0
    %v1902 = vadd.f32 %v1320, %v1901
    %v1903 = vpop.f32.mrf.mxu0
    %v1904 = vpop.f32.mrf.mxu0
    %v1905 = vadd.f32 %v1323, %v1904
    %v1906 = vpop.f32.mrf.mxu0
    %1907 = vmatprep.mubr.bf16.mxu0 %v1576
    %1908 = vmatmul.mubr.bf16.gmra.mxu0 %v1575
    %v1909 = vpop.f32.mrf.mxu0
    %v1910 = vadd.f32 %v1328, %v1909
    %v1911 = vpop.f32.mrf.mxu0
    %v1912 = vpop.f32.mrf.mxu0
    %v1913 = vadd.f32 %v1331, %v1912
    %v1914 = vpop.f32.mrf.mxu0
    %1915 = vmatprep.mubr.bf16.mxu0 %v1580
    %1916 = vmatmul.mubr.bf16.gmra.mxu0 %v1579
    %v1917 = vpop.f32.mrf.mxu0
    %v1918 = vadd.f32 %v1336, %v1917
    %v1919 = vpop.f32.mrf.mxu0
    %v1920 = vpop.f32.mrf.mxu0
    %v1921 = vadd.f32 %v1339, %v1920
    %v1922 = vpop.f32.mrf.mxu0
    %1923 = vmatprep.mubr.bf16.mxu0 %v1584
    %1924 = vmatmul.mubr.bf16.gmra.mxu0 %v1583
    %v1925 = vpop.f32.mrf.mxu0
    %v1926 = vadd.f32 %v1344, %v1925
    %v1927 = vpop.f32.mrf.mxu0
    %v1928 = vpop.f32.mrf.mxu0
    %v1929 = vadd.f32 %v1347, %v1928
    %v1930 = vpop.f32.mrf.mxu0
    %1931 = vmatprep.mubr.bf16.mxu0 %v1588
    %1932 = vmatmul.mubr.bf16.gmra.mxu0 %v1587
    %v1933 = vpop.f32.mrf.mxu0
    %v1934 = vadd.f32 %v1352, %v1933
    %v1935 = vpop.f32.mrf.mxu0
    %v1936 = vpop.f32.mrf.mxu0
    %v1937 = vadd.f32 %v1355, %v1936
    %v1938 = vpop.f32.mrf.mxu0
    %1939 = vmatprep.mubr.bf16.mxu0 %v1592
    %1940 = vmatmul.mubr.bf16.gmra.mxu0 %v1591
    %v1941 = vpop.f32.mrf.mxu0
    %v1942 = vadd.f32 %v1360, %v1941
    %v1943 = vpop.f32.mrf.mxu0
    %v1944 = vpop.f32.mrf.mxu0
    %v1945 = vadd.f32 %v1363, %v1944
    %v1946 = vpop.f32.mrf.mxu0
    %1947 = vmatprep.mubr.bf16.mxu0 %v1596
    %1948 = vmatmul.mubr.bf16.gmra.mxu0 %v1595
    %v1949 = vpop.f32.mrf.mxu0
    %v1950 = vadd.f32 %v1368, %v1949
    %v1951 = vpop.f32.mrf.mxu0
    %v1952 = vpop.f32.mrf.mxu0
    %v1953 = vadd.f32 %v1371, %v1952
    %v1954 = vpop.f32.mrf.mxu0
    %1955 = vmatprep.mubr.bf16.mxu0 %v1600
    %1956 = vmatmul.mubr.bf16.gmra.mxu0 %v1599
    %v1957 = vpop.f32.mrf.mxu0
    %v1958 = vadd.f32 %v1376, %v1957
    %v1959 = vpop.f32.mrf.mxu0
    %v1960 = vpop.f32.mrf.mxu0
    %v1961 = vadd.f32 %v1379, %v1960
    %v1962 = vpop.f32.mrf.mxu0
    %1963 = vmatprep.mubr.bf16.mxu0 %v1604
    %1964 = vmatmul.mubr.bf16.gmra.mxu0 %v1603
    %v1965 = vpop.f32.mrf.mxu0
    %v1966 = vadd.f32 %v1384, %v1965
    %v1967 = vpop.f32.mrf.mxu0
    %v1968 = vpop.f32.mrf.mxu0
    %v1969 = vadd.f32 %v1387, %v1968
    %v1970 = vpop.f32.mrf.mxu0
    %1971 = vmatprep.mubr.bf16.mxu0 %v1608
    %1972 = vmatmul.mubr.bf16.gmra.mxu0 %v1607
    %v1973 = vpop.f32.mrf.mxu0
    %v1974 = vadd.f32 %v1392, %v1973
    %v1975 = vpop.f32.mrf.mxu0
    %v1976 = vpop.f32.mrf.mxu0
    %v1977 = vadd.f32 %v1395, %v1976
    %v1978 = vpop.f32.mrf.mxu0
    %1979 = vmatprep.mubr.bf16.mxu0 %v1612
    %1980 = vmatmul.mubr.bf16.gmra.mxu0 %v1611
    %v1981 = vpop.f32.mrf.mxu0
    %v1982 = vadd.f32 %v1400, %v1981
    %v1983 = vpop.f32.mrf.mxu0
    %v1984 = vpop.f32.mrf.mxu0
    %v1985 = vadd.f32 %v1403, %v1984
    %v1986 = vpop.f32.mrf.mxu0
    %1987 = vmatprep.mubr.bf16.mxu0 %v1616
    %1988 = vmatmul.mubr.bf16.gmra.mxu0 %v1615
    %v1989 = vpop.f32.mrf.mxu0
    %v1990 = vadd.f32 %v1408, %v1989
    %v1991 = vpop.f32.mrf.mxu0
    %v1992 = vpop.f32.mrf.mxu0
    %v1993 = vadd.f32 %v1411, %v1992
    %v1994 = vpop.f32.mrf.mxu0
    %1995 = vmatprep.mubr.bf16.mxu0 %v1620
    %1996 = vmatmul.mubr.bf16.gmra.mxu0 %v1619
    %v1997 = vpop.f32.mrf.mxu0
    %v1998 = vadd.f32 %v1416, %v1997
    %v1999 = vpop.f32.mrf.mxu0
    %v2000 = vpop.f32.mrf.mxu0
    %v2001 = vpop.f32.mrf.mxu0
    %2002 = vdwg.mxu0
    %2003 = vmatprep.subr.bf16.mxu0 0
    %2004 = vmatpush1.bf16.msra.mxu0 %v1826
    %2005 = vmatprep.subr.bf16.mxu0 0
    %2006 = vmatpush1.bf16.msra.mxu0 %v1825
    %2007 = vmatprep.subr.bf16.mxu0 0
    %2008 = vmatpush1.bf16.msra.mxu0 %v1824
    %2009 = vmatprep.subr.bf16.mxu0 0
    %2010 = vmatpush1.bf16.msra.mxu0 %v1823
    %2011 = vmatprep.subr.bf16.mxu0 0
    %2012 = vmatpush1.bf16.msra.mxu0 %v1822
    %2013 = vmatprep.subr.bf16.mxu0 0
    %2014 = vmatpush1.bf16.msra.mxu0 %v1821
    %2015 = vmatprep.subr.bf16.mxu0 0
    %2016 = vmatpush1.bf16.msra.mxu0 %v1820
    %2017 = vmatprep.subr.bf16.mxu0 0
    %2018 = vmatpush1.bf16.msra.mxu0 %v1819
    %2019 = vmatprep.subr.bf16.mxu0 0
    %2020 = vmatpush2.bf16.msra.mxu0 %v1834
    %2021 = vmatprep.subr.bf16.mxu0 0
    %2022 = vmatpush2.bf16.msra.mxu0 %v1833
    %2023 = vmatprep.subr.bf16.mxu0 0
    %2024 = vmatpush2.bf16.msra.mxu0 %v1832
    %2025 = vmatprep.subr.bf16.mxu0 0
    %2026 = vmatpush2.bf16.msra.mxu0 %v1831
    %2027 = vmatprep.subr.bf16.mxu0 0
    %2028 = vmatpush2.bf16.msra.mxu0 %v1830
    %2029 = vmatprep.subr.bf16.mxu0 0
    %2030 = vmatpush2.bf16.msra.mxu0 %v1829
    %2031 = vmatprep.subr.bf16.mxu0 0
    %2032 = vmatpush2.bf16.msra.mxu0 %v1828
    %2033 = vmatprep.subr.bf16.mxu0 0
    %2034 = vmatpush2.bf16.msra.mxu0 %v1827
    %2035 = vmatprep.mubr.bf16.mxu0 %v1574
    %2036 = vmatmul.mubr.bf16.gmra.mxu0 %v1573
    %v2037 = vpop.f32.mrf.mxu0
    %v2038 = vadd.f32 %v1902, %v2037
    %v2039 = vpop.f32.mrf.mxu0
    %v2040 = vpop.f32.mrf.mxu0
    %v2041 = vadd.f32 %v1905, %v2040
    %v2042 = vpop.f32.mrf.mxu0
    %2043 = vmatprep.mubr.bf16.mxu0 %v1578
    %2044 = vmatmul.mubr.bf16.gmra.mxu0 %v1577
    %v2045 = vpop.f32.mrf.mxu0
    %v2046 = vadd.f32 %v1910, %v2045
    %v2047 = vpop.f32.mrf.mxu0
    %v2048 = vpop.f32.mrf.mxu0
    %v2049 = vadd.f32 %v1913, %v2048
    %v2050 = vpop.f32.mrf.mxu0
    %2051 = vmatprep.mubr.bf16.mxu0 %v1582
    %2052 = vmatmul.mubr.bf16.gmra.mxu0 %v1581
    %v2053 = vpop.f32.mrf.mxu0
    %v2054 = vadd.f32 %v1918, %v2053
    %v2055 = vpop.f32.mrf.mxu0
    %v2056 = vpop.f32.mrf.mxu0
    %v2057 = vadd.f32 %v1921, %v2056
    %v2058 = vpop.f32.mrf.mxu0
    %2059 = vmatprep.mubr.bf16.mxu0 %v1586
    %2060 = vmatmul.mubr.bf16.gmra.mxu0 %v1585
    %v2061 = vpop.f32.mrf.mxu0
    %v2062 = vadd.f32 %v1926, %v2061
    %v2063 = vpop.f32.mrf.mxu0
    %v2064 = vpop.f32.mrf.mxu0
    %v2065 = vadd.f32 %v1929, %v2064
    %v2066 = vpop.f32.mrf.mxu0
    %2067 = vmatprep.mubr.bf16.mxu0 %v1590
    %2068 = vmatmul.mubr.bf16.gmra.mxu0 %v1589
    %v2069 = vpop.f32.mrf.mxu0
    %v2070 = vadd.f32 %v1934, %v2069
    %v2071 = vpop.f32.mrf.mxu0
    %v2072 = vpop.f32.mrf.mxu0
    %v2073 = vadd.f32 %v1937, %v2072
    %v2074 = vpop.f32.mrf.mxu0
    %2075 = vmatprep.mubr.bf16.mxu0 %v1594
    %2076 = vmatmul.mubr.bf16.gmra.mxu0 %v1593
    %v2077 = vpop.f32.mrf.mxu0
    %v2078 = vadd.f32 %v1942, %v2077
    %v2079 = vpop.f32.mrf.mxu0
    %v2080 = vpop.f32.mrf.mxu0
    %v2081 = vadd.f32 %v1945, %v2080
    %v2082 = vpop.f32.mrf.mxu0
    %2083 = vmatprep.mubr.bf16.mxu0 %v1598
    %2084 = vmatmul.mubr.bf16.gmra.mxu0 %v1597
    %v2085 = vpop.f32.mrf.mxu0
    %v2086 = vadd.f32 %v1950, %v2085
    %v2087 = vpop.f32.mrf.mxu0
    %v2088 = vpop.f32.mrf.mxu0
    %v2089 = vadd.f32 %v1953, %v2088
    %v2090 = vpop.f32.mrf.mxu0
    %2091 = vmatprep.mubr.bf16.mxu0 %v1602
    %2092 = vmatmul.mubr.bf16.gmra.mxu0 %v1601
    %v2093 = vpop.f32.mrf.mxu0
    %v2094 = vadd.f32 %v1958, %v2093
    %v2095 = vpop.f32.mrf.mxu0
    %v2096 = vpop.f32.mrf.mxu0
    %v2097 = vadd.f32 %v1961, %v2096
    %v2098 = vpop.f32.mrf.mxu0
    %2099 = vmatprep.mubr.bf16.mxu0 %v1606
    %2100 = vmatmul.mubr.bf16.gmra.mxu0 %v1605
    %v2101 = vpop.f32.mrf.mxu0
    %v2102 = vadd.f32 %v1966, %v2101
    %v2103 = vpop.f32.mrf.mxu0
    %v2104 = vpop.f32.mrf.mxu0
    %v2105 = vadd.f32 %v1969, %v2104
    %v2106 = vpop.f32.mrf.mxu0
    %2107 = vmatprep.mubr.bf16.mxu0 %v1610
    %2108 = vmatmul.mubr.bf16.gmra.mxu0 %v1609
    %v2109 = vpop.f32.mrf.mxu0
    %v2110 = vadd.f32 %v1974, %v2109
    %v2111 = vpop.f32.mrf.mxu0
    %v2112 = vpop.f32.mrf.mxu0
    %v2113 = vadd.f32 %v1977, %v2112
    %v2114 = vpop.f32.mrf.mxu0
    %2115 = vmatprep.mubr.bf16.mxu0 %v1614
    %2116 = vmatmul.mubr.bf16.gmra.mxu0 %v1613
    %v2117 = vpop.f32.mrf.mxu0
    %v2118 = vadd.f32 %v1982, %v2117
    %v2119 = vpop.f32.mrf.mxu0
    %v2120 = vpop.f32.mrf.mxu0
    %v2121 = vadd.f32 %v1985, %v2120
    %v2122 = vpop.f32.mrf.mxu0
    %2123 = vmatprep.mubr.bf16.mxu0 %v1618
    %2124 = vmatmul.mubr.bf16.gmra.mxu0 %v1617
    %v2125 = vpop.f32.mrf.mxu0
    %v2126 = vadd.f32 %v1990, %v2125
    %v2127 = vpop.f32.mrf.mxu0
    %v2128 = vpop.f32.mrf.mxu0
    %v2129 = vadd.f32 %v1993, %v2128
    %v2130 = vpop.f32.mrf.mxu0
    %2131 = vmatprep.mubr.bf16.mxu0 %v1622
    %2132 = vmatmul.mubr.bf16.gmra.mxu0 %v1621
    %v2133 = vpop.f32.mrf.mxu0
    %v2134 = vadd.f32 %v1998, %v2133
    %v2135 = vpop.f32.mrf.mxu0
    %v2136 = vpop.f32.mrf.mxu0
    %v2137 = vpop.f32.mrf.mxu0
    %2138 = vdwg.mxu0
    %v2139 = vld [vmem:[%s1] sm:$0x22]
    %v2140 = vld [vmem:[%s1 + $0x8] sm:$0x22]
    %v2143 = vunpack.c.l.b16 %v2139
    %v2144 = vunpack.c.h.b16 %v2139
    %v2145 = vunpack.c.l.b16 %v2140
    %v2146 = vunpack.c.h.b16 %v2140
    %v2147 = vpack.c.b16 %v2143, %v2143
    %v2148 = vpack.c.b16 %v2144, %v2144
    %v2149 = vpack.c.b16 %v2145, %v2145
    %v2150 = vpack.c.b16 %v2146, %v2146
    %v2152 = vpack.i.b16 %v2147, %v2147
    %v2154 = vlaneseq
    %v2155 = vshrl.u32 %v2154, 7
    %v2156 = vsub.s32 1, %v2155
    %v2157 = vrot.slane %v2152, %v2156
    %v2159 = vpack.i.b16 %v2148, %v2148
    %v2161 = vlaneseq
    %v2162 = vshrl.u32 %v2161, 7
    %v2163 = vsub.s32 1, %v2162
    %v2164 = vrot.slane %v2159, %v2163
    %v2166 = vpack.i.b16 %v2149, %v2149
    %v2168 = vlaneseq
    %v2169 = vshrl.u32 %v2168, 7
    %v2170 = vsub.s32 1, %v2169
    %v2171 = vrot.slane %v2166, %v2170
    %v2173 = vpack.i.b16 %v2150, %v2150
    %v2175 = vlaneseq
    %v2176 = vshrl.u32 %v2175, 7
    %v2177 = vsub.s32 1, %v2176
    %v2178 = vrot.slane %v2173, %v2177
    %v2183 = vunpack.c.l.b16 %v2157
    %v2184 = vunpack.c.l.b16 %v2164
    %v2185 = vunpack.c.l.b16 %v2171
    %v2186 = vunpack.c.l.b16 %v2178
    %v2187 = vpack.c.b16 %v2184, %v2183
    %v2188 = vpack.c.b16 %v2186, %v2185
    %v2191 = vmul.bf16 %v40, %v2187
    %v2192 = vmul.bf16 %v41, %v2188
    %v2193 = vmul.bf16 %v42, %v2187
    %v2194 = vmul.bf16 %v43, %v2188
    %v2195 = vmul.bf16 %v44, %v2187
    %v2196 = vmul.bf16 %v45, %v2188
    %v2197 = vmul.bf16 %v46, %v2187
    %v2198 = vmul.bf16 %v47, %v2188
    %v2199 = vmul.bf16 %v48, %v2187
    %v2200 = vmul.bf16 %v49, %v2188
    %v2201 = vmul.bf16 %v50, %v2187
    %v2202 = vmul.bf16 %v51, %v2188
    %v2203 = vmul.bf16 %v52, %v2187
    %v2204 = vmul.bf16 %v53, %v2188
    %v2205 = vmul.bf16 %v54, %v2187
    %v2206 = vmul.bf16 %v55, %v2188
    %v2207 = vmul.bf16 %v56, %v2187
    %v2208 = vmul.bf16 %v57, %v2188
    %v2209 = vmul.bf16 %v58, %v2187
    %v2210 = vmul.bf16 %v59, %v2188
    %v2211 = vmul.bf16 %v60, %v2187
    %v2212 = vmul.bf16 %v61, %v2188
    %v2213 = vmul.bf16 %v62, %v2187
    %v2214 = vmul.bf16 %v63, %v2188
    %v2215 = vmul.bf16 %v64, %v2187
    %v2216 = vmul.bf16 %v65, %v2188
    %v2217 = vmul.bf16 %v66, %v2187
    %v2218 = vmul.bf16 %v67, %v2188
    %v2219 = vmul.bf16 %v68, %v2187
    %v2220 = vmul.bf16 %v69, %v2188
    %v2221 = vmul.bf16 %v70, %v2187
    %v2222 = vmul.bf16 %v71, %v2188
    %v2223 = vmul.bf16 %v72, %v2187
    %v2224 = vmul.bf16 %v73, %v2188
    %v2225 = vmul.bf16 %v74, %v2187
    %v2226 = vmul.bf16 %v75, %v2188
    %v2227 = vmul.bf16 %v76, %v2187
    %v2228 = vmul.bf16 %v77, %v2188
    %v2229 = vmul.bf16 %v78, %v2187
    %v2230 = vmul.bf16 %v79, %v2188
    %v2231 = vmul.bf16 %v80, %v2187
    %v2232 = vmul.bf16 %v81, %v2188
    %v2233 = vmul.bf16 %v82, %v2187
    %v2234 = vmul.bf16 %v83, %v2188
    %v2235 = vmul.bf16 %v84, %v2187
    %v2236 = vmul.bf16 %v85, %v2188
    %v2237 = vmul.bf16 %v86, %v2187
    %v2238 = vmul.bf16 %v87, %v2188
    %v2239 = vmul.bf16 %v88, %v2187
    %v2240 = vmul.bf16 %v89, %v2188
    %v2241 = vld [vmem:[%s2] sm:$0x22]
    %v2242 = vld [vmem:[%s2 + $0x8] sm:$0x22]
    %v2245 = vunpack.c.l.b16 %v2241
    %v2246 = vunpack.c.h.b16 %v2241
    %v2247 = vunpack.c.l.b16 %v2242
    %v2248 = vunpack.c.h.b16 %v2242
    %v2249 = vpack.c.b16 %v2245, %v2245
    %v2250 = vpack.c.b16 %v2246, %v2246
    %v2251 = vpack.c.b16 %v2247, %v2247
    %v2252 = vpack.c.b16 %v2248, %v2248
    %v2254 = vpack.i.b16 %v2249, %v2249
    %v2256 = vlaneseq
    %v2257 = vshrl.u32 %v2256, 7
    %v2258 = vsub.s32 1, %v2257
    %v2259 = vrot.slane %v2254, %v2258
    %v2261 = vpack.i.b16 %v2250, %v2250
    %v2263 = vlaneseq
    %v2264 = vshrl.u32 %v2263, 7
    %v2265 = vsub.s32 1, %v2264
    %v2266 = vrot.slane %v2261, %v2265
    %v2268 = vpack.i.b16 %v2251, %v2251
    %v2270 = vlaneseq
    %v2271 = vshrl.u32 %v2270, 7
    %v2272 = vsub.s32 1, %v2271
    %v2273 = vrot.slane %v2268, %v2272
    %v2275 = vpack.i.b16 %v2252, %v2252
    %v2277 = vlaneseq
    %v2278 = vshrl.u32 %v2277, 7
    %v2279 = vsub.s32 1, %v2278
    %v2280 = vrot.slane %v2275, %v2279
    %v2285 = vunpack.c.l.b16 %v2259
    %v2286 = vunpack.c.l.b16 %v2266
    %v2287 = vunpack.c.l.b16 %v2273
    %v2288 = vunpack.c.l.b16 %v2280
    %v2289 = vpack.c.b16 %v2286, %v2285
    %v2290 = vpack.c.b16 %v2288, %v2287
    %v2293 = vadd.bf16 %v2191, %v2289
    %v2294 = vadd.bf16 %v2192, %v2290
    %v2295 = vadd.bf16 %v2193, %v2289
    %v2296 = vadd.bf16 %v2194, %v2290
    %v2297 = vadd.bf16 %v2195, %v2289
    %v2298 = vadd.bf16 %v2196, %v2290
    %v2299 = vadd.bf16 %v2197, %v2289
    %v2300 = vadd.bf16 %v2198, %v2290
    %v2301 = vadd.bf16 %v2199, %v2289
    %v2302 = vadd.bf16 %v2200, %v2290
    %v2303 = vadd.bf16 %v2201, %v2289
    %v2304 = vadd.bf16 %v2202, %v2290
    %v2305 = vadd.bf16 %v2203, %v2289
    %v2306 = vadd.bf16 %v2204, %v2290
    %v2307 = vadd.bf16 %v2205, %v2289
    %v2308 = vadd.bf16 %v2206, %v2290
    %v2309 = vadd.bf16 %v2207, %v2289
    %v2310 = vadd.bf16 %v2208, %v2290
    %v2311 = vadd.bf16 %v2209, %v2289
    %v2312 = vadd.bf16 %v2210, %v2290
    %v2313 = vadd.bf16 %v2211, %v2289
    %v2314 = vadd.bf16 %v2212, %v2290
    %v2315 = vadd.bf16 %v2213, %v2289
    %v2316 = vadd.bf16 %v2214, %v2290
    %v2317 = vadd.bf16 %v2215, %v2289
    %v2318 = vadd.bf16 %v2216, %v2290
    %v2319 = vadd.bf16 %v2217, %v2289
    %v2320 = vadd.bf16 %v2218, %v2290
    %v2321 = vadd.bf16 %v2219, %v2289
    %v2322 = vadd.bf16 %v2220, %v2290
    %v2323 = vadd.bf16 %v2221, %v2289
    %v2324 = vadd.bf16 %v2222, %v2290
    %v2325 = vadd.bf16 %v2223, %v2289
    %v2326 = vadd.bf16 %v2224, %v2290
    %v2327 = vadd.bf16 %v2225, %v2289
    %v2328 = vadd.bf16 %v2226, %v2290
    %v2329 = vadd.bf16 %v2227, %v2289
    %v2330 = vadd.bf16 %v2228, %v2290
    %v2331 = vadd.bf16 %v2229, %v2289
    %v2332 = vadd.bf16 %v2230, %v2290
    %v2333 = vadd.bf16 %v2231, %v2289
    %v2334 = vadd.bf16 %v2232, %v2290
    %v2335 = vadd.bf16 %v2233, %v2289
    %v2336 = vadd.bf16 %v2234, %v2290
    %v2337 = vadd.bf16 %v2235, %v2289
    %v2338 = vadd.bf16 %v2236, %v2290
    %v2339 = vadd.bf16 %v2237, %v2289
    %v2340 = vadd.bf16 %v2238, %v2290
    %v2341 = vadd.bf16 %v2239, %v2289
    %v2342 = vadd.bf16 %v2240, %v2290
    %v2343 = vmax.bf16 %v2293, 0
    %v2344 = vmax.bf16 %v2294, 0
    %v2345 = vmax.bf16 %v2295, 0
    %v2346 = vmax.bf16 %v2296, 0
    %v2347 = vmax.bf16 %v2297, 0
    %v2348 = vmax.bf16 %v2298, 0
    %v2349 = vmax.bf16 %v2299, 0
    %v2350 = vmax.bf16 %v2300, 0
    %v2351 = vmax.bf16 %v2301, 0
    %v2352 = vmax.bf16 %v2302, 0
    %v2353 = vmax.bf16 %v2303, 0
    %v2354 = vmax.bf16 %v2304, 0
    %v2355 = vmax.bf16 %v2305, 0
    %v2356 = vmax.bf16 %v2306, 0
    %v2357 = vmax.bf16 %v2307, 0
    %v2358 = vmax.bf16 %v2308, 0
    %v2359 = vmax.bf16 %v2309, 0
    %v2360 = vmax.bf16 %v2310, 0
    %v2361 = vmax.bf16 %v2311, 0
    %v2362 = vmax.bf16 %v2312, 0
    %v2363 = vmax.bf16 %v2313, 0
    %v2364 = vmax.bf16 %v2314, 0
    %v2365 = vmax.bf16 %v2315, 0
    %v2366 = vmax.bf16 %v2316, 0
    %v2367 = vmax.bf16 %v2317, 0
    %v2368 = vmax.bf16 %v2318, 0
    %v2369 = vmax.bf16 %v2319, 0
    %v2370 = vmax.bf16 %v2320, 0
    %v2371 = vmax.bf16 %v2321, 0
    %v2372 = vmax.bf16 %v2322, 0
    %v2373 = vmax.bf16 %v2323, 0
    %v2374 = vmax.bf16 %v2324, 0
    %v2375 = vmax.bf16 %v2325, 0
    %v2376 = vmax.bf16 %v2326, 0
    %v2377 = vmax.bf16 %v2327, 0
    %v2378 = vmax.bf16 %v2328, 0
    %v2379 = vmax.bf16 %v2329, 0
    %v2380 = vmax.bf16 %v2330, 0
    %v2381 = vmax.bf16 %v2331, 0
    %v2382 = vmax.bf16 %v2332, 0
    %v2383 = vmax.bf16 %v2333, 0
    %v2384 = vmax.bf16 %v2334, 0
    %v2385 = vmax.bf16 %v2335, 0
    %v2386 = vmax.bf16 %v2336, 0
    %v2387 = vmax.bf16 %v2337, 0
    %v2388 = vmax.bf16 %v2338, 0
    %v2389 = vmax.bf16 %v2339, 0
    %v2390 = vmax.bf16 %v2340, 0
    %v2391 = vmax.bf16 %v2341, 0
    %v2392 = vmax.bf16 %v2342, 0
    %s2393 = scalar_lea.vmem %s3, 512
    %v2394 = vld [vmem:[%s2393] sm:$0xf]
    %v2395 = vld [vmem:[%s2393 + $0x4] sm:$0xf]
    %v2396 = vld [vmem:[%s2393 + $0x8] sm:$0xf]
    %v2397 = vld [vmem:[%s2393 + $0xc] sm:$0xf]
    %v2398 = vld [vmem:[%s2393 + $0x10] sm:$0xf]
    %v2399 = vld [vmem:[%s2393 + $0x14] sm:$0xf]
    %v2400 = vld [vmem:[%s2393 + $0x18] sm:$0xf]
    %v2401 = vld [vmem:[%s2393 + $0x1c] sm:$0xf]
    %v2402 = vld [vmem:[%s2393 + $0x20] sm:$0xf]
    %v2403 = vld [vmem:[%s2393 + $0x24] sm:$0xf]
    %v2404 = vld [vmem:[%s2393 + $0x28] sm:$0xf]
    %v2405 = vld [vmem:[%s2393 + $0x2c] sm:$0xf]
    %v2406 = vld [vmem:[%s2393 + $0x30] sm:$0xf]
    %v2407 = vld [vmem:[%s2393 + $0x34] sm:$0xf]
    %v2408 = vld [vmem:[%s2393 + $0x38] sm:$0xf]
    %v2409 = vld [vmem:[%s2393 + $0x3c] sm:$0xf]
    %v2410 = vld [vmem:[%s2393 + $0x40] sm:$0xf]
    %v2411 = vld [vmem:[%s2393 + $0x44] sm:$0xf]
    %v2412 = vld [vmem:[%s2393 + $0x48] sm:$0xf]
    %v2413 = vld [vmem:[%s2393 + $0x4c] sm:$0xf]
    %v2414 = vld [vmem:[%s2393 + $0x50] sm:$0xf]
    %v2415 = vld [vmem:[%s2393 + $0x54] sm:$0xf]
    %v2416 = vld [vmem:[%s2393 + $0x58] sm:$0xf]
    %v2417 = vld [vmem:[%s2393 + $0x5c] sm:$0xf]
    %v2418 = vld [vmem:[%s2393 + $0x60] sm:$0xf]
    %v2419 = vld [vmem:[%s2393 + $0x64] sm:$0xf]
    %v2420 = vld [vmem:[%s2393 + $0x68] sm:$0xf]
    %v2421 = vld [vmem:[%s2393 + $0x6c] sm:$0xf]
    %v2422 = vld [vmem:[%s2393 + $0x70] sm:$0xf]
    %v2423 = vld [vmem:[%s2393 + $0x74] sm:$0xf]
    %v2424 = vld [vmem:[%s2393 + $0x78] sm:$0xf]
    %v2425 = vld [vmem:[%s2393 + $0x7c] sm:$0xf]
    %v2426 = vld [vmem:[%s2393 + $0x80] sm:$0xf]
    %v2427 = vld [vmem:[%s2393 + $0x84] sm:$0xf]
    %v2428 = vld [vmem:[%s2393 + $0x88] sm:$0xf]
    %v2429 = vld [vmem:[%s2393 + $0x8c] sm:$0xf]
    %v2430 = vld [vmem:[%s2393 + $0x90] sm:$0xf]
    %v2431 = vld [vmem:[%s2393 + $0x94] sm:$0xf]
    %v2432 = vld [vmem:[%s2393 + $0x98] sm:$0xf]
    %v2433 = vld [vmem:[%s2393 + $0x9c] sm:$0xf]
    %v2434 = vld [vmem:[%s2393 + $0xa0] sm:$0xf]
    %v2435 = vld [vmem:[%s2393 + $0xa4] sm:$0xf]
    %v2436 = vld [vmem:[%s2393 + $0xa8] sm:$0xf]
    %v2437 = vld [vmem:[%s2393 + $0xac] sm:$0xf]
    %v2438 = vld [vmem:[%s2393 + $0xb0] sm:$0xf]
    %v2439 = vld [vmem:[%s2393 + $0xb4] sm:$0xf]
    %v2440 = vld [vmem:[%s2393 + $0xb8] sm:$0xf]
    %v2441 = vld [vmem:[%s2393 + $0xbc] sm:$0xf]
    %v2442 = vld [vmem:[%s2393 + $0xc0] sm:$0xf]
    %v2443 = vld [vmem:[%s2393 + $0xc4] sm:$0xf]
    %v2444 = vld [vmem:[%s2393 + $0xc8] sm:$0xf]
    %v2445 = vld [vmem:[%s2393 + $0xcc] sm:$0xf]
    %v2446 = vld [vmem:[%s2393 + $0xd0] sm:$0xf]
    %v2447 = vld [vmem:[%s2393 + $0xd4] sm:$0xf]
    %v2448 = vld [vmem:[%s2393 + $0xd8] sm:$0xf]
    %v2449 = vld [vmem:[%s2393 + $0xdc] sm:$0xf]
    %v2450 = vld [vmem:[%s2393 + $0xe0] sm:$0xf]
    %v2451 = vld [vmem:[%s2393 + $0xe4] sm:$0xf]
    %v2452 = vld [vmem:[%s2393 + $0xe8] sm:$0xf]
    %v2453 = vld [vmem:[%s2393 + $0xec] sm:$0xf]
    %v2454 = vld [vmem:[%s2393 + $0xf0] sm:$0xf]
    %v2455 = vld [vmem:[%s2393 + $0xf4] sm:$0xf]
    %v2456 = vld [vmem:[%s2393 + $0xf8] sm:$0xf]
    %v2457 = vld [vmem:[%s2393 + $0xfc] sm:$0xf]
    %v2508 = vunpack.c.l.b16 %v2343
    %v2509 = vunpack.c.h.b16 %v2343
    %v2510 = vunpack.c.l.b16 %v2344
    %v2511 = vunpack.c.h.b16 %v2344
    %v2512 = vunpack.c.l.b16 %v2345
    %v2513 = vunpack.c.h.b16 %v2345
    %v2514 = vunpack.c.l.b16 %v2346
    %v2515 = vunpack.c.h.b16 %v2346
    %v2516 = vunpack.c.l.b16 %v2347
    %v2517 = vunpack.c.h.b16 %v2347
    %v2518 = vunpack.c.l.b16 %v2348
    %v2519 = vunpack.c.h.b16 %v2348
    %v2520 = vunpack.c.l.b16 %v2349
    %v2521 = vunpack.c.h.b16 %v2349
    %v2522 = vunpack.c.l.b16 %v2350
    %v2523 = vunpack.c.h.b16 %v2350
    %v2524 = vunpack.c.l.b16 %v2351
    %v2525 = vunpack.c.h.b16 %v2351
    %v2526 = vunpack.c.l.b16 %v2352
    %v2527 = vunpack.c.h.b16 %v2352
    %v2528 = vunpack.c.l.b16 %v2353
    %v2529 = vunpack.c.h.b16 %v2353
    %v2530 = vunpack.c.l.b16 %v2354
    %v2531 = vunpack.c.h.b16 %v2354
    %v2532 = vunpack.c.l.b16 %v2355
    %v2533 = vunpack.c.h.b16 %v2355
    %v2534 = vunpack.c.l.b16 %v2356
    %v2535 = vunpack.c.h.b16 %v2356
    %v2536 = vunpack.c.l.b16 %v2357
    %v2537 = vunpack.c.h.b16 %v2357
    %v2538 = vunpack.c.l.b16 %v2358
    %v2539 = vunpack.c.h.b16 %v2358
    %v2540 = vunpack.c.l.b16 %v2359
    %v2541 = vunpack.c.h.b16 %v2359
    %v2542 = vunpack.c.l.b16 %v2360
    %v2543 = vunpack.c.h.b16 %v2360
    %v2544 = vunpack.c.l.b16 %v2361
    %v2545 = vunpack.c.h.b16 %v2361
    %v2546 = vunpack.c.l.b16 %v2362
    %v2547 = vunpack.c.h.b16 %v2362
    %v2548 = vunpack.c.l.b16 %v2363
    %v2549 = vunpack.c.h.b16 %v2363
    %v2550 = vunpack.c.l.b16 %v2364
    %v2551 = vunpack.c.h.b16 %v2364
    %v2552 = vunpack.c.l.b16 %v2365
    %v2553 = vunpack.c.h.b16 %v2365
    %v2554 = vunpack.c.l.b16 %v2366
    %v2555 = vunpack.c.h.b16 %v2366
    %v2556 = vunpack.c.l.b16 %v2367
    %v2557 = vunpack.c.h.b16 %v2367
    %v2558 = vunpack.c.l.b16 %v2368
    %v2559 = vunpack.c.h.b16 %v2368
    %v2560 = vunpack.c.l.b16 %v2369
    %v2561 = vunpack.c.h.b16 %v2369
    %v2562 = vunpack.c.l.b16 %v2370
    %v2563 = vunpack.c.h.b16 %v2370
    %v2564 = vunpack.c.l.b16 %v2371
    %v2565 = vunpack.c.h.b16 %v2371
    %v2566 = vunpack.c.l.b16 %v2372
    %v2567 = vunpack.c.h.b16 %v2372
    %v2568 = vunpack.c.l.b16 %v2373
    %v2569 = vunpack.c.h.b16 %v2373
    %v2570 = vunpack.c.l.b16 %v2374
    %v2571 = vunpack.c.h.b16 %v2374
    %v2572 = vunpack.c.l.b16 %v2375
    %v2573 = vunpack.c.h.b16 %v2375
    %v2574 = vunpack.c.l.b16 %v2376
    %v2575 = vunpack.c.h.b16 %v2376
    %v2576 = vunpack.c.l.b16 %v2377
    %v2577 = vunpack.c.h.b16 %v2377
    %v2578 = vunpack.c.l.b16 %v2378
    %v2579 = vunpack.c.h.b16 %v2378
    %v2580 = vunpack.c.l.b16 %v2379
    %v2581 = vunpack.c.h.b16 %v2379
    %v2582 = vunpack.c.l.b16 %v2380
    %v2583 = vunpack.c.h.b16 %v2380
    %v2584 = vunpack.c.l.b16 %v2381
    %v2585 = vunpack.c.h.b16 %v2381
    %v2586 = vunpack.c.l.b16 %v2382
    %v2587 = vunpack.c.h.b16 %v2382
    %v2588 = vunpack.c.l.b16 %v2383
    %v2589 = vunpack.c.h.b16 %v2383
    %v2590 = vunpack.c.l.b16 %v2384
    %v2591 = vunpack.c.h.b16 %v2384
    %v2592 = vunpack.c.l.b16 %v2385
    %v2593 = vunpack.c.h.b16 %v2385
    %v2594 = vunpack.c.l.b16 %v2386
    %v2595 = vunpack.c.h.b16 %v2386
    %v2596 = vunpack.c.l.b16 %v2387
    %v2597 = vunpack.c.h.b16 %v2387
    %v2598 = vunpack.c.l.b16 %v2388
    %v2599 = vunpack.c.h.b16 %v2388
    %v2600 = vunpack.c.l.b16 %v2389
    %v2601 = vunpack.c.h.b16 %v2389
    %v2602 = vunpack.c.l.b16 %v2390
    %v2603 = vunpack.c.h.b16 %v2390
    %v2604 = vunpack.c.l.b16 %v2391
    %v2605 = vunpack.c.h.b16 %v2391
    %v2606 = vunpack.c.l.b16 %v2392
    %v2607 = vunpack.c.h.b16 %v2392
    %v2608 = vpack.c.b16 %v2512, %v2508
    %v2609 = vpack.c.b16 %v2513, %v2509
    %v2610 = vpack.c.b16 %v2514, %v2510
    %v2611 = vpack.c.b16 %v2515, %v2511
    %v2612 = vpack.c.b16 %v2520, %v2516
    %v2613 = vpack.c.b16 %v2521, %v2517
    %v2614 = vpack.c.b16 %v2522, %v2518
    %v2615 = vpack.c.b16 %v2523, %v2519
    %v2616 = vpack.c.b16 %v2528, %v2524
    %v2617 = vpack.c.b16 %v2529, %v2525
    %v2618 = vpack.c.b16 %v2530, %v2526
    %v2619 = vpack.c.b16 %v2531, %v2527
    %v2620 = vpack.c.b16 %v2536, %v2532
    %v2621 = vpack.c.b16 %v2537, %v2533
    %v2622 = vpack.c.b16 %v2538, %v2534
    %v2623 = vpack.c.b16 %v2539, %v2535
    %v2624 = vpack.c.b16 %v2544, %v2540
    %v2625 = vpack.c.b16 %v2545, %v2541
    %v2626 = vpack.c.b16 %v2546, %v2542
    %v2627 = vpack.c.b16 %v2547, %v2543
    %v2628 = vpack.c.b16 %v2552, %v2548
    %v2629 = vpack.c.b16 %v2553, %v2549
    %v2630 = vpack.c.b16 %v2554, %v2550
    %v2631 = vpack.c.b16 %v2555, %v2551
    %v2632 = vpack.c.b16 %v2560, %v2556
    %v2633 = vpack.c.b16 %v2561, %v2557
    %v2634 = vpack.c.b16 %v2562, %v2558
    %v2635 = vpack.c.b16 %v2563, %v2559
    %v2636 = vpack.c.b16 %v2568, %v2564
    %v2637 = vpack.c.b16 %v2569, %v2565
    %v2638 = vpack.c.b16 %v2570, %v2566
    %v2639 = vpack.c.b16 %v2571, %v2567
    %v2640 = vpack.c.b16 %v2576, %v2572
    %v2641 = vpack.c.b16 %v2577, %v2573
    %v2642 = vpack.c.b16 %v2578, %v2574
    %v2643 = vpack.c.b16 %v2579, %v2575
    %v2644 = vpack.c.b16 %v2584, %v2580
    %v2645 = vpack.c.b16 %v2585, %v2581
    %v2646 = vpack.c.b16 %v2586, %v2582
    %v2647 = vpack.c.b16 %v2587, %v2583
    %v2648 = vpack.c.b16 %v2592, %v2588
    %v2649 = vpack.c.b16 %v2593, %v2589
    %v2650 = vpack.c.b16 %v2594, %v2590
    %v2651 = vpack.c.b16 %v2595, %v2591
    %v2652 = vpack.c.b16 %v2600, %v2596
    %v2653 = vpack.c.b16 %v2601, %v2597
    %v2654 = vpack.c.b16 %v2602, %v2598
    %v2655 = vpack.c.b16 %v2603, %v2599
    %v2656 = vpack.c.b16 %v2604, %v2604
    %v2657 = vpack.c.b16 %v2605, %v2605
    %v2658 = vpack.c.b16 %v2606, %v2606
    %v2659 = vpack.c.b16 %v2607, %v2607
    %v2776 = vunpack.c.l.b16 %v2394
    %v2777 = vunpack.c.l.b16 %v2395
    %v2778 = vunpack.c.l.b16 %v2396
    %v2779 = vunpack.c.l.b16 %v2397
    %v2780 = vunpack.c.l.b16 %v2398
    %v2781 = vunpack.c.l.b16 %v2399
    %v2782 = vunpack.c.l.b16 %v2400
    %v2783 = vunpack.c.l.b16 %v2401
    %v2784 = vunpack.c.l.b16 %v2402
    %v2785 = vunpack.c.l.b16 %v2403
    %v2786 = vunpack.c.l.b16 %v2404
    %v2787 = vunpack.c.l.b16 %v2405
    %v2788 = vunpack.c.l.b16 %v2406
    %v2789 = vunpack.c.l.b16 %v2407
    %v2790 = vunpack.c.l.b16 %v2408
    %v2791 = vunpack.c.l.b16 %v2409
    %v2792 = vunpack.c.l.b16 %v2410
    %v2793 = vunpack.c.l.b16 %v2411
    %v2794 = vunpack.c.l.b16 %v2412
    %v2795 = vunpack.c.l.b16 %v2413
    %v2796 = vunpack.c.l.b16 %v2414
    %v2797 = vunpack.c.l.b16 %v2415
    %v2798 = vunpack.c.l.b16 %v2416
    %v2799 = vunpack.c.l.b16 %v2417
    %v2800 = vunpack.c.l.b16 %v2418
    %v2801 = vunpack.c.l.b16 %v2419
    %v2802 = vunpack.c.l.b16 %v2420
    %v2803 = vunpack.c.l.b16 %v2421
    %v2804 = vunpack.c.l.b16 %v2422
    %v2805 = vunpack.c.l.b16 %v2423
    %v2806 = vunpack.c.l.b16 %v2424
    %v2807 = vunpack.c.l.b16 %v2425
    %v2808 = vunpack.c.l.b16 %v2426
    %v2809 = vunpack.c.l.b16 %v2427
    %v2810 = vunpack.c.l.b16 %v2428
    %v2811 = vunpack.c.l.b16 %v2429
    %v2812 = vunpack.c.l.b16 %v2430
    %v2813 = vunpack.c.l.b16 %v2431
    %v2814 = vunpack.c.l.b16 %v2432
    %v2815 = vunpack.c.l.b16 %v2433
    %v2816 = vunpack.c.l.b16 %v2434
    %v2817 = vunpack.c.l.b16 %v2435
    %v2818 = vunpack.c.l.b16 %v2436
    %v2819 = vunpack.c.l.b16 %v2437
    %v2820 = vunpack.c.l.b16 %v2438
    %v2821 = vunpack.c.l.b16 %v2439
    %v2822 = vunpack.c.l.b16 %v2440
    %v2823 = vunpack.c.l.b16 %v2441
    %v2824 = vunpack.c.l.b16 %v2442
    %v2825 = vunpack.c.l.b16 %v2443
    %v2826 = vunpack.c.l.b16 %v2444
    %v2827 = vunpack.c.l.b16 %v2445
    %v2828 = vunpack.c.l.b16 %v2446
    %v2829 = vunpack.c.l.b16 %v2447
    %v2830 = vunpack.c.l.b16 %v2448
    %v2831 = vunpack.c.l.b16 %v2449
    %v2832 = vunpack.c.l.b16 %v2450
    %v2833 = vunpack.c.l.b16 %v2451
    %v2834 = vunpack.c.l.b16 %v2452
    %v2835 = vunpack.c.l.b16 %v2453
    %v2836 = vunpack.c.l.b16 %v2454
    %v2837 = vunpack.c.l.b16 %v2455
    %v2838 = vunpack.c.l.b16 %v2456
    %v2839 = vunpack.c.l.b16 %v2457
    %v2840 = vpack.c.b16 %v2777, %v2776
    %v2841 = vpack.c.b16 %v2779, %v2778
    %v2842 = vpack.c.b16 %v2781, %v2780
    %v2843 = vpack.c.b16 %v2783, %v2782
    %v2844 = vpack.c.b16 %v2785, %v2784
    %v2845 = vpack.c.b16 %v2787, %v2786
    %v2846 = vpack.c.b16 %v2789, %v2788
    %v2847 = vpack.c.b16 %v2791, %v2790
    %v2848 = vpack.c.b16 %v2793, %v2792
    %v2849 = vpack.c.b16 %v2795, %v2794
    %v2850 = vpack.c.b16 %v2797, %v2796
    %v2851 = vpack.c.b16 %v2799, %v2798
    %v2852 = vpack.c.b16 %v2801, %v2800
    %v2853 = vpack.c.b16 %v2803, %v2802
    %v2854 = vpack.c.b16 %v2805, %v2804
    %v2855 = vpack.c.b16 %v2807, %v2806
    %v2856 = vpack.c.b16 %v2809, %v2808
    %v2857 = vpack.c.b16 %v2811, %v2810
    %v2858 = vpack.c.b16 %v2813, %v2812
    %v2859 = vpack.c.b16 %v2815, %v2814
    %v2860 = vpack.c.b16 %v2817, %v2816
    %v2861 = vpack.c.b16 %v2819, %v2818
    %v2862 = vpack.c.b16 %v2821, %v2820
    %v2863 = vpack.c.b16 %v2823, %v2822
    %v2864 = vpack.c.b16 %v2825, %v2824
    %v2865 = vpack.c.b16 %v2827, %v2826
    %v2866 = vpack.c.b16 %v2829, %v2828
    %v2867 = vpack.c.b16 %v2831, %v2830
    %v2868 = vpack.c.b16 %v2833, %v2832
    %v2869 = vpack.c.b16 %v2835, %v2834
    %v2870 = vpack.c.b16 %v2837, %v2836
    %v2871 = vpack.c.b16 %v2839, %v2838
    %2904 = vmatprep.subr.bf16.mxu0 0
    %2905 = vmatpush1.bf16.msra.mxu0 %v2847
    %2906 = vmatprep.subr.bf16.mxu0 0
    %2907 = vmatpush1.bf16.msra.mxu0 %v2846
    %2908 = vmatprep.subr.bf16.mxu0 0
    %2909 = vmatpush1.bf16.msra.mxu0 %v2845
    %2910 = vmatprep.subr.bf16.mxu0 0
    %2911 = vmatpush1.bf16.msra.mxu0 %v2844
    %2912 = vmatprep.subr.bf16.mxu0 0
    %2913 = vmatpush1.bf16.msra.mxu0 %v2843
    %2914 = vmatprep.subr.bf16.mxu0 0
    %2915 = vmatpush1.bf16.msra.mxu0 %v2842
    %2916 = vmatprep.subr.bf16.mxu0 0
    %2917 = vmatpush1.bf16.msra.mxu0 %v2841
    %2918 = vmatprep.subr.bf16.mxu0 0
    %2919 = vmatpush1.bf16.msra.mxu0 %v2840
    %2920 = vmatprep.subr.bf16.mxu0 0
    %2921 = vmatpush2.bf16.msra.mxu0 %v2855
    %2922 = vmatprep.subr.bf16.mxu0 0
    %2923 = vmatpush2.bf16.msra.mxu0 %v2854
    %2924 = vmatprep.subr.bf16.mxu0 0
    %2925 = vmatpush2.bf16.msra.mxu0 %v2853
    %2926 = vmatprep.subr.bf16.mxu0 0
    %2927 = vmatpush2.bf16.msra.mxu0 %v2852
    %2928 = vmatprep.subr.bf16.mxu0 0
    %2929 = vmatpush2.bf16.msra.mxu0 %v2851
    %2930 = vmatprep.subr.bf16.mxu0 0
    %2931 = vmatpush2.bf16.msra.mxu0 %v2850
    %2932 = vmatprep.subr.bf16.mxu0 0
    %2933 = vmatpush2.bf16.msra.mxu0 %v2849
    %2934 = vmatprep.subr.bf16.mxu0 0
    %2935 = vmatpush2.bf16.msra.mxu0 %v2848
    %2936 = vmatprep.mubr.bf16.mxu0 %v2609
    %2937 = vmatmul.mubr.bf16.gmra.mxu0 %v2608
    %v2938 = vpop.f32.mrf.mxu0
    %v2939 = vadd.f32 0.0, %v2938
    %v2940 = vpop.f32.mrf.mxu0
    %v2941 = vpop.f32.mrf.mxu0
    %v2942 = vadd.f32 0.0, %v2941
    %v2943 = vpop.f32.mrf.mxu0
    %2944 = vmatprep.mubr.bf16.mxu0 %v2613
    %2945 = vmatmul.mubr.bf16.gmra.mxu0 %v2612
    %v2946 = vpop.f32.mrf.mxu0
    %v2947 = vadd.f32 0.0, %v2946
    %v2948 = vpop.f32.mrf.mxu0
    %v2949 = vpop.f32.mrf.mxu0
    %v2950 = vadd.f32 0.0, %v2949
    %v2951 = vpop.f32.mrf.mxu0
    %2952 = vmatprep.mubr.bf16.mxu0 %v2617
    %2953 = vmatmul.mubr.bf16.gmra.mxu0 %v2616
    %v2954 = vpop.f32.mrf.mxu0
    %v2955 = vadd.f32 0.0, %v2954
    %v2956 = vpop.f32.mrf.mxu0
    %v2957 = vpop.f32.mrf.mxu0
    %v2958 = vadd.f32 0.0, %v2957
    %v2959 = vpop.f32.mrf.mxu0
    %2960 = vmatprep.mubr.bf16.mxu0 %v2621
    %2961 = vmatmul.mubr.bf16.gmra.mxu0 %v2620
    %v2962 = vpop.f32.mrf.mxu0
    %v2963 = vadd.f32 0.0, %v2962
    %v2964 = vpop.f32.mrf.mxu0
    %v2965 = vpop.f32.mrf.mxu0
    %v2966 = vadd.f32 0.0, %v2965
    %v2967 = vpop.f32.mrf.mxu0
    %2968 = vmatprep.mubr.bf16.mxu0 %v2625
    %2969 = vmatmul.mubr.bf16.gmra.mxu0 %v2624
    %v2970 = vpop.f32.mrf.mxu0
    %v2971 = vadd.f32 0.0, %v2970
    %v2972 = vpop.f32.mrf.mxu0
    %v2973 = vpop.f32.mrf.mxu0
    %v2974 = vadd.f32 0.0, %v2973
    %v2975 = vpop.f32.mrf.mxu0
    %2976 = vmatprep.mubr.bf16.mxu0 %v2629
    %2977 = vmatmul.mubr.bf16.gmra.mxu0 %v2628
    %v2978 = vpop.f32.mrf.mxu0
    %v2979 = vadd.f32 0.0, %v2978
    %v2980 = vpop.f32.mrf.mxu0
    %v2981 = vpop.f32.mrf.mxu0
    %v2982 = vadd.f32 0.0, %v2981
    %v2983 = vpop.f32.mrf.mxu0
    %2984 = vmatprep.mubr.bf16.mxu0 %v2633
    %2985 = vmatmul.mubr.bf16.gmra.mxu0 %v2632
    %v2986 = vpop.f32.mrf.mxu0
    %v2987 = vadd.f32 0.0, %v2986
    %v2988 = vpop.f32.mrf.mxu0
    %v2989 = vpop.f32.mrf.mxu0
    %v2990 = vadd.f32 0.0, %v2989
    %v2991 = vpop.f32.mrf.mxu0
    %2992 = vmatprep.mubr.bf16.mxu0 %v2637
    %2993 = vmatmul.mubr.bf16.gmra.mxu0 %v2636
    %v2994 = vpop.f32.mrf.mxu0
    %v2995 = vadd.f32 0.0, %v2994
    %v2996 = vpop.f32.mrf.mxu0
    %v2997 = vpop.f32.mrf.mxu0
    %v2998 = vadd.f32 0.0, %v2997
    %v2999 = vpop.f32.mrf.mxu0
    %3000 = vmatprep.mubr.bf16.mxu0 %v2641
    %3001 = vmatmul.mubr.bf16.gmra.mxu0 %v2640
    %v3002 = vpop.f32.mrf.mxu0
    %v3003 = vadd.f32 0.0, %v3002
    %v3004 = vpop.f32.mrf.mxu0
    %v3005 = vpop.f32.mrf.mxu0
    %v3006 = vadd.f32 0.0, %v3005
    %v3007 = vpop.f32.mrf.mxu0
    %3008 = vmatprep.mubr.bf16.mxu0 %v2645
    %3009 = vmatmul.mubr.bf16.gmra.mxu0 %v2644
    %v3010 = vpop.f32.mrf.mxu0
    %v3011 = vadd.f32 0.0, %v3010
    %v3012 = vpop.f32.mrf.mxu0
    %v3013 = vpop.f32.mrf.mxu0
    %v3014 = vadd.f32 0.0, %v3013
    %v3015 = vpop.f32.mrf.mxu0
    %3016 = vmatprep.mubr.bf16.mxu0 %v2649
    %3017 = vmatmul.mubr.bf16.gmra.mxu0 %v2648
    %v3018 = vpop.f32.mrf.mxu0
    %v3019 = vadd.f32 0.0, %v3018
    %v3020 = vpop.f32.mrf.mxu0
    %v3021 = vpop.f32.mrf.mxu0
    %v3022 = vadd.f32 0.0, %v3021
    %v3023 = vpop.f32.mrf.mxu0
    %3024 = vmatprep.mubr.bf16.mxu0 %v2653
    %3025 = vmatmul.mubr.bf16.gmra.mxu0 %v2652
    %v3026 = vpop.f32.mrf.mxu0
    %v3027 = vadd.f32 0.0, %v3026
    %v3028 = vpop.f32.mrf.mxu0
    %v3029 = vpop.f32.mrf.mxu0
    %v3030 = vadd.f32 0.0, %v3029
    %v3031 = vpop.f32.mrf.mxu0
    %3032 = vmatprep.mubr.bf16.mxu0 %v2657
    %3033 = vmatmul.mubr.bf16.gmra.mxu0 %v2656
    %v3034 = vpop.f32.mrf.mxu0
    %v3035 = vadd.f32 0.0, %v3034
    %v3036 = vpop.f32.mrf.mxu0
    %v3037 = vpop.f32.mrf.mxu0
    %v3038 = vpop.f32.mrf.mxu0
    %3039 = vdwg.mxu0
    %3040 = vmatprep.subr.bf16.mxu0 0
    %3041 = vmatpush1.bf16.msra.mxu0 %v2863
    %3042 = vmatprep.subr.bf16.mxu0 0
    %3043 = vmatpush1.bf16.msra.mxu0 %v2862
    %3044 = vmatprep.subr.bf16.mxu0 0
    %3045 = vmatpush1.bf16.msra.mxu0 %v2861
    %3046 = vmatprep.subr.bf16.mxu0 0
    %3047 = vmatpush1.bf16.msra.mxu0 %v2860
    %3048 = vmatprep.subr.bf16.mxu0 0
    %3049 = vmatpush1.bf16.msra.mxu0 %v2859
    %3050 = vmatprep.subr.bf16.mxu0 0
    %3051 = vmatpush1.bf16.msra.mxu0 %v2858
    %3052 = vmatprep.subr.bf16.mxu0 0
    %3053 = vmatpush1.bf16.msra.mxu0 %v2857
    %3054 = vmatprep.subr.bf16.mxu0 0
    %3055 = vmatpush1.bf16.msra.mxu0 %v2856
    %3056 = vmatprep.subr.bf16.mxu0 0
    %3057 = vmatpush2.bf16.msra.mxu0 %v2871
    %3058 = vmatprep.subr.bf16.mxu0 0
    %3059 = vmatpush2.bf16.msra.mxu0 %v2870
    %3060 = vmatprep.subr.bf16.mxu0 0
    %3061 = vmatpush2.bf16.msra.mxu0 %v2869
    %3062 = vmatprep.subr.bf16.mxu0 0
    %3063 = vmatpush2.bf16.msra.mxu0 %v2868
    %3064 = vmatprep.subr.bf16.mxu0 0
    %3065 = vmatpush2.bf16.msra.mxu0 %v2867
    %3066 = vmatprep.subr.bf16.mxu0 0
    %3067 = vmatpush2.bf16.msra.mxu0 %v2866
    %3068 = vmatprep.subr.bf16.mxu0 0
    %3069 = vmatpush2.bf16.msra.mxu0 %v2865
    %3070 = vmatprep.subr.bf16.mxu0 0
    %3071 = vmatpush2.bf16.msra.mxu0 %v2864
    %3072 = vmatprep.mubr.bf16.mxu0 %v2611
    %3073 = vmatmul.mubr.bf16.gmra.mxu0 %v2610
    %v3074 = vpop.f32.mrf.mxu0
    %v3075 = vadd.f32 %v2939, %v3074
    %v3076 = vpop.f32.mrf.mxu0
    %v3077 = vpop.f32.mrf.mxu0
    %v3078 = vadd.f32 %v2942, %v3077
    %v3079 = vpop.f32.mrf.mxu0
    %3080 = vmatprep.mubr.bf16.mxu0 %v2615
    %3081 = vmatmul.mubr.bf16.gmra.mxu0 %v2614
    %v3082 = vpop.f32.mrf.mxu0
    %v3083 = vadd.f32 %v2947, %v3082
    %v3084 = vpop.f32.mrf.mxu0
    %v3085 = vpop.f32.mrf.mxu0
    %v3086 = vadd.f32 %v2950, %v3085
    %v3087 = vpop.f32.mrf.mxu0
    %3088 = vmatprep.mubr.bf16.mxu0 %v2619
    %3089 = vmatmul.mubr.bf16.gmra.mxu0 %v2618
    %v3090 = vpop.f32.mrf.mxu0
    %v3091 = vadd.f32 %v2955, %v3090
    %v3092 = vpop.f32.mrf.mxu0
    %v3093 = vpop.f32.mrf.mxu0
    %v3094 = vadd.f32 %v2958, %v3093
    %v3095 = vpop.f32.mrf.mxu0
    %3096 = vmatprep.mubr.bf16.mxu0 %v2623
    %3097 = vmatmul.mubr.bf16.gmra.mxu0 %v2622
    %v3098 = vpop.f32.mrf.mxu0
    %v3099 = vadd.f32 %v2963, %v3098
    %v3100 = vpop.f32.mrf.mxu0
    %v3101 = vpop.f32.mrf.mxu0
    %v3102 = vadd.f32 %v2966, %v3101
    %v3103 = vpop.f32.mrf.mxu0
    %3104 = vmatprep.mubr.bf16.mxu0 %v2627
    %3105 = vmatmul.mubr.bf16.gmra.mxu0 %v2626
    %v3106 = vpop.f32.mrf.mxu0
    %v3107 = vadd.f32 %v2971, %v3106
    %v3108 = vpop.f32.mrf.mxu0
    %v3109 = vpop.f32.mrf.mxu0
    %v3110 = vadd.f32 %v2974, %v3109
    %v3111 = vpop.f32.mrf.mxu0
    %3112 = vmatprep.mubr.bf16.mxu0 %v2631
    %3113 = vmatmul.mubr.bf16.gmra.mxu0 %v2630
    %v3114 = vpop.f32.mrf.mxu0
    %v3115 = vadd.f32 %v2979, %v3114
    %v3116 = vpop.f32.mrf.mxu0
    %v3117 = vpop.f32.mrf.mxu0
    %v3118 = vadd.f32 %v2982, %v3117
    %v3119 = vpop.f32.mrf.mxu0
    %3120 = vmatprep.mubr.bf16.mxu0 %v2635
    %3121 = vmatmul.mubr.bf16.gmra.mxu0 %v2634
    %v3122 = vpop.f32.mrf.mxu0
    %v3123 = vadd.f32 %v2987, %v3122
    %v3124 = vpop.f32.mrf.mxu0
    %v3125 = vpop.f32.mrf.mxu0
    %v3126 = vadd.f32 %v2990, %v3125
    %v3127 = vpop.f32.mrf.mxu0
    %3128 = vmatprep.mubr.bf16.mxu0 %v2639
    %3129 = vmatmul.mubr.bf16.gmra.mxu0 %v2638
    %v3130 = vpop.f32.mrf.mxu0
    %v3131 = vadd.f32 %v2995, %v3130
    %v3132 = vpop.f32.mrf.mxu0
    %v3133 = vpop.f32.mrf.mxu0
    %v3134 = vadd.f32 %v2998, %v3133
    %v3135 = vpop.f32.mrf.mxu0
    %3136 = vmatprep.mubr.bf16.mxu0 %v2643
    %3137 = vmatmul.mubr.bf16.gmra.mxu0 %v2642
    %v3138 = vpop.f32.mrf.mxu0
    %v3139 = vadd.f32 %v3003, %v3138
    %v3140 = vpop.f32.mrf.mxu0
    %v3141 = vpop.f32.mrf.mxu0
    %v3142 = vadd.f32 %v3006, %v3141
    %v3143 = vpop.f32.mrf.mxu0
    %3144 = vmatprep.mubr.bf16.mxu0 %v2647
    %3145 = vmatmul.mubr.bf16.gmra.mxu0 %v2646
    %v3146 = vpop.f32.mrf.mxu0
    %v3147 = vadd.f32 %v3011, %v3146
    %v3148 = vpop.f32.mrf.mxu0
    %v3149 = vpop.f32.mrf.mxu0
    %v3150 = vadd.f32 %v3014, %v3149
    %v3151 = vpop.f32.mrf.mxu0
    %3152 = vmatprep.mubr.bf16.mxu0 %v2651
    %3153 = vmatmul.mubr.bf16.gmra.mxu0 %v2650
    %v3154 = vpop.f32.mrf.mxu0
    %v3155 = vadd.f32 %v3019, %v3154
    %v3156 = vpop.f32.mrf.mxu0
    %v3157 = vpop.f32.mrf.mxu0
    %v3158 = vadd.f32 %v3022, %v3157
    %v3159 = vpop.f32.mrf.mxu0
    %3160 = vmatprep.mubr.bf16.mxu0 %v2655
    %3161 = vmatmul.mubr.bf16.gmra.mxu0 %v2654
    %v3162 = vpop.f32.mrf.mxu0
    %v3163 = vadd.f32 %v3027, %v3162
    %v3164 = vpop.f32.mrf.mxu0
    %v3165 = vpop.f32.mrf.mxu0
    %v3166 = vadd.f32 %v3030, %v3165
    %v3167 = vpop.f32.mrf.mxu0
    %3168 = vmatprep.mubr.bf16.mxu0 %v2659
    %3169 = vmatmul.mubr.bf16.gmra.mxu0 %v2658
    %v3170 = vpop.f32.mrf.mxu0
    %v3171 = vadd.f32 %v3035, %v3170
    %v3172 = vpop.f32.mrf.mxu0
    %v3173 = vpop.f32.mrf.mxu0
    %v3174 = vpop.f32.mrf.mxu0
    %3175 = vdwg.mxu0
    %v3176 = vadd.f32 %v2038, %v3075
    %v3177 = vadd.f32 %v2041, %v3078
    %v3178 = vadd.f32 %v2046, %v3083
    %v3179 = vadd.f32 %v2049, %v3086
    %v3180 = vadd.f32 %v2054, %v3091
    %v3181 = vadd.f32 %v2057, %v3094
    %v3182 = vadd.f32 %v2062, %v3099
    %v3183 = vadd.f32 %v2065, %v3102
    %v3184 = vadd.f32 %v2070, %v3107
    %v3185 = vadd.f32 %v2073, %v3110
    %v3186 = vadd.f32 %v2078, %v3115
    %v3187 = vadd.f32 %v2081, %v3118
    %v3188 = vadd.f32 %v2086, %v3123
    %v3189 = vadd.f32 %v2089, %v3126
    %v3190 = vadd.f32 %v2094, %v3131
    %v3191 = vadd.f32 %v2097, %v3134
    %v3192 = vadd.f32 %v2102, %v3139
    %v3193 = vadd.f32 %v2105, %v3142
    %v3194 = vadd.f32 %v2110, %v3147
    %v3195 = vadd.f32 %v2113, %v3150
    %v3196 = vadd.f32 %v2118, %v3155
    %v3197 = vadd.f32 %v2121, %v3158
    %v3198 = vadd.f32 %v2126, %v3163
    %v3199 = vadd.f32 %v2129, %v3166
    %v3200 = vadd.f32 %v2134, %v3171
    %v3201 = vshrl.u32 %v2147, 16
    %v3202 = vpack.i.b16 %v3201, %v3201
    %v3204 = vlaneseq
    %v3205 = vshrl.u32 %v3204, 7
    %v3206 = vsub.s32 1, %v3205
    %v3207 = vrot.slane %v3202, %v3206
    %v3208 = vshrl.u32 %v2148, 16
    %v3209 = vpack.i.b16 %v3208, %v3208
    %v3211 = vlaneseq
    %v3212 = vshrl.u32 %v3211, 7
    %v3213 = vsub.s32 1, %v3212
    %v3214 = vrot.slane %v3209, %v3213
    %v3215 = vshrl.u32 %v2149, 16
    %v3216 = vpack.i.b16 %v3215, %v3215
    %v3218 = vlaneseq
    %v3219 = vshrl.u32 %v3218, 7
    %v3220 = vsub.s32 1, %v3219
    %v3221 = vrot.slane %v3216, %v3220
    %v3222 = vshrl.u32 %v2150, 16
    %v3223 = vpack.i.b16 %v3222, %v3222
    %v3225 = vlaneseq
    %v3226 = vshrl.u32 %v3225, 7
    %v3227 = vsub.s32 1, %v3226
    %v3228 = vrot.slane %v3223, %v3227
    %v3233 = vunpack.c.l.b16 %v3207
    %v3234 = vunpack.c.l.b16 %v3214
    %v3235 = vunpack.c.l.b16 %v3221
    %v3236 = vunpack.c.l.b16 %v3228
    %v3237 = vpack.c.b16 %v3234, %v3233
    %v3238 = vpack.c.b16 %v3236, %v3235
    %v3241 = vmul.bf16 %v40, %v3237
    %v3242 = vmul.bf16 %v41, %v3238
    %v3243 = vmul.bf16 %v42, %v3237
    %v3244 = vmul.bf16 %v43, %v3238
    %v3245 = vmul.bf16 %v44, %v3237
    %v3246 = vmul.bf16 %v45, %v3238
    %v3247 = vmul.bf16 %v46, %v3237
    %v3248 = vmul.bf16 %v47, %v3238
    %v3249 = vmul.bf16 %v48, %v3237
    %v3250 = vmul.bf16 %v49, %v3238
    %v3251 = vmul.bf16 %v50, %v3237
    %v3252 = vmul.bf16 %v51, %v3238
    %v3253 = vmul.bf16 %v52, %v3237
    %v3254 = vmul.bf16 %v53, %v3238
    %v3255 = vmul.bf16 %v54, %v3237
    %v3256 = vmul.bf16 %v55, %v3238
    %v3257 = vmul.bf16 %v56, %v3237
    %v3258 = vmul.bf16 %v57, %v3238
    %v3259 = vmul.bf16 %v58, %v3237
    %v3260 = vmul.bf16 %v59, %v3238
    %v3261 = vmul.bf16 %v60, %v3237
    %v3262 = vmul.bf16 %v61, %v3238
    %v3263 = vmul.bf16 %v62, %v3237
    %v3264 = vmul.bf16 %v63, %v3238
    %v3265 = vmul.bf16 %v64, %v3237
    %v3266 = vmul.bf16 %v65, %v3238
    %v3267 = vmul.bf16 %v66, %v3237
    %v3268 = vmul.bf16 %v67, %v3238
    %v3269 = vmul.bf16 %v68, %v3237
    %v3270 = vmul.bf16 %v69, %v3238
    %v3271 = vmul.bf16 %v70, %v3237
    %v3272 = vmul.bf16 %v71, %v3238
    %v3273 = vmul.bf16 %v72, %v3237
    %v3274 = vmul.bf16 %v73, %v3238
    %v3275 = vmul.bf16 %v74, %v3237
    %v3276 = vmul.bf16 %v75, %v3238
    %v3277 = vmul.bf16 %v76, %v3237
    %v3278 = vmul.bf16 %v77, %v3238
    %v3279 = vmul.bf16 %v78, %v3237
    %v3280 = vmul.bf16 %v79, %v3238
    %v3281 = vmul.bf16 %v80, %v3237
    %v3282 = vmul.bf16 %v81, %v3238
    %v3283 = vmul.bf16 %v82, %v3237
    %v3284 = vmul.bf16 %v83, %v3238
    %v3285 = vmul.bf16 %v84, %v3237
    %v3286 = vmul.bf16 %v85, %v3238
    %v3287 = vmul.bf16 %v86, %v3237
    %v3288 = vmul.bf16 %v87, %v3238
    %v3289 = vmul.bf16 %v88, %v3237
    %v3290 = vmul.bf16 %v89, %v3238
    %v3291 = vshrl.u32 %v2249, 16
    %v3292 = vpack.i.b16 %v3291, %v3291
    %v3294 = vlaneseq
    %v3295 = vshrl.u32 %v3294, 7
    %v3296 = vsub.s32 1, %v3295
    %v3297 = vrot.slane %v3292, %v3296
    %v3298 = vshrl.u32 %v2250, 16
    %v3299 = vpack.i.b16 %v3298, %v3298
    %v3301 = vlaneseq
    %v3302 = vshrl.u32 %v3301, 7
    %v3303 = vsub.s32 1, %v3302
    %v3304 = vrot.slane %v3299, %v3303
    %v3305 = vshrl.u32 %v2251, 16
    %v3306 = vpack.i.b16 %v3305, %v3305
    %v3308 = vlaneseq
    %v3309 = vshrl.u32 %v3308, 7
    %v3310 = vsub.s32 1, %v3309
    %v3311 = vrot.slane %v3306, %v3310
    %v3312 = vshrl.u32 %v2252, 16
    %v3313 = vpack.i.b16 %v3312, %v3312
    %v3315 = vlaneseq
    %v3316 = vshrl.u32 %v3315, 7
    %v3317 = vsub.s32 1, %v3316
    %v3318 = vrot.slane %v3313, %v3317
    %v3323 = vunpack.c.l.b16 %v3297
    %v3324 = vunpack.c.l.b16 %v3304
    %v3325 = vunpack.c.l.b16 %v3311
    %v3326 = vunpack.c.l.b16 %v3318
    %v3327 = vpack.c.b16 %v3324, %v3323
    %v3328 = vpack.c.b16 %v3326, %v3325
    %v3331 = vadd.bf16 %v3241, %v3327
    %v3332 = vadd.bf16 %v3242, %v3328
    %v3333 = vadd.bf16 %v3243, %v3327
    %v3334 = vadd.bf16 %v3244, %v3328
    %v3335 = vadd.bf16 %v3245, %v3327
    %v3336 = vadd.bf16 %v3246, %v3328
    %v3337 = vadd.bf16 %v3247, %v3327
    %v3338 = vadd.bf16 %v3248, %v3328
    %v3339 = vadd.bf16 %v3249, %v3327
    %v3340 = vadd.bf16 %v3250, %v3328
    %v3341 = vadd.bf16 %v3251, %v3327
    %v3342 = vadd.bf16 %v3252, %v3328
    %v3343 = vadd.bf16 %v3253, %v3327
    %v3344 = vadd.bf16 %v3254, %v3328
    %v3345 = vadd.bf16 %v3255, %v3327
    %v3346 = vadd.bf16 %v3256, %v3328
    %v3347 = vadd.bf16 %v3257, %v3327
    %v3348 = vadd.bf16 %v3258, %v3328
    %v3349 = vadd.bf16 %v3259, %v3327
    %v3350 = vadd.bf16 %v3260, %v3328
    %v3351 = vadd.bf16 %v3261, %v3327
    %v3352 = vadd.bf16 %v3262, %v3328
    %v3353 = vadd.bf16 %v3263, %v3327
    %v3354 = vadd.bf16 %v3264, %v3328
    %v3355 = vadd.bf16 %v3265, %v3327
    %v3356 = vadd.bf16 %v3266, %v3328
    %v3357 = vadd.bf16 %v3267, %v3327
    %v3358 = vadd.bf16 %v3268, %v3328
    %v3359 = vadd.bf16 %v3269, %v3327
    %v3360 = vadd.bf16 %v3270, %v3328
    %v3361 = vadd.bf16 %v3271, %v3327
    %v3362 = vadd.bf16 %v3272, %v3328
    %v3363 = vadd.bf16 %v3273, %v3327
    %v3364 = vadd.bf16 %v3274, %v3328
    %v3365 = vadd.bf16 %v3275, %v3327
    %v3366 = vadd.bf16 %v3276, %v3328
    %v3367 = vadd.bf16 %v3277, %v3327
    %v3368 = vadd.bf16 %v3278, %v3328
    %v3369 = vadd.bf16 %v3279, %v3327
    %v3370 = vadd.bf16 %v3280, %v3328
    %v3371 = vadd.bf16 %v3281, %v3327
    %v3372 = vadd.bf16 %v3282, %v3328
    %v3373 = vadd.bf16 %v3283, %v3327
    %v3374 = vadd.bf16 %v3284, %v3328
    %v3375 = vadd.bf16 %v3285, %v3327
    %v3376 = vadd.bf16 %v3286, %v3328
    %v3377 = vadd.bf16 %v3287, %v3327
    %v3378 = vadd.bf16 %v3288, %v3328
    %v3379 = vadd.bf16 %v3289, %v3327
    %v3380 = vadd.bf16 %v3290, %v3328
    %v3381 = vmax.bf16 %v3331, 0
    %v3382 = vmax.bf16 %v3332, 0
    %v3383 = vmax.bf16 %v3333, 0
    %v3384 = vmax.bf16 %v3334, 0
    %v3385 = vmax.bf16 %v3335, 0
    %v3386 = vmax.bf16 %v3336, 0
    %v3387 = vmax.bf16 %v3337, 0
    %v3388 = vmax.bf16 %v3338, 0
    %v3389 = vmax.bf16 %v3339, 0
    %v3390 = vmax.bf16 %v3340, 0
    %v3391 = vmax.bf16 %v3341, 0
    %v3392 = vmax.bf16 %v3342, 0
    %v3393 = vmax.bf16 %v3343, 0
    %v3394 = vmax.bf16 %v3344, 0
    %v3395 = vmax.bf16 %v3345, 0
    %v3396 = vmax.bf16 %v3346, 0
    %v3397 = vmax.bf16 %v3347, 0
    %v3398 = vmax.bf16 %v3348, 0
    %v3399 = vmax.bf16 %v3349, 0
    %v3400 = vmax.bf16 %v3350, 0
    %v3401 = vmax.bf16 %v3351, 0
    %v3402 = vmax.bf16 %v3352, 0
    %v3403 = vmax.bf16 %v3353, 0
    %v3404 = vmax.bf16 %v3354, 0
    %v3405 = vmax.bf16 %v3355, 0
    %v3406 = vmax.bf16 %v3356, 0
    %v3407 = vmax.bf16 %v3357, 0
    %v3408 = vmax.bf16 %v3358, 0
    %v3409 = vmax.bf16 %v3359, 0
    %v3410 = vmax.bf16 %v3360, 0
    %v3411 = vmax.bf16 %v3361, 0
    %v3412 = vmax.bf16 %v3362, 0
    %v3413 = vmax.bf16 %v3363, 0
    %v3414 = vmax.bf16 %v3364, 0
    %v3415 = vmax.bf16 %v3365, 0
    %v3416 = vmax.bf16 %v3366, 0
    %v3417 = vmax.bf16 %v3367, 0
    %v3418 = vmax.bf16 %v3368, 0
    %v3419 = vmax.bf16 %v3369, 0
    %v3420 = vmax.bf16 %v3370, 0
    %v3421 = vmax.bf16 %v3371, 0
    %v3422 = vmax.bf16 %v3372, 0
    %v3423 = vmax.bf16 %v3373, 0
    %v3424 = vmax.bf16 %v3374, 0
    %v3425 = vmax.bf16 %v3375, 0
    %v3426 = vmax.bf16 %v3376, 0
    %v3427 = vmax.bf16 %v3377, 0
    %v3428 = vmax.bf16 %v3378, 0
    %v3429 = vmax.bf16 %v3379, 0
    %v3430 = vmax.bf16 %v3380, 0
    %s3431 = scalar_lea.vmem %s3, 768
    %v3432 = vld [vmem:[%s3431] sm:$0xf]
    %v3433 = vld [vmem:[%s3431 + $0x4] sm:$0xf]
    %v3434 = vld [vmem:[%s3431 + $0x8] sm:$0xf]
    %v3435 = vld [vmem:[%s3431 + $0xc] sm:$0xf]
    %v3436 = vld [vmem:[%s3431 + $0x10] sm:$0xf]
    %v3437 = vld [vmem:[%s3431 + $0x14] sm:$0xf]
    %v3438 = vld [vmem:[%s3431 + $0x18] sm:$0xf]
    %v3439 = vld [vmem:[%s3431 + $0x1c] sm:$0xf]
    %v3440 = vld [vmem:[%s3431 + $0x20] sm:$0xf]
    %v3441 = vld [vmem:[%s3431 + $0x24] sm:$0xf]
    %v3442 = vld [vmem:[%s3431 + $0x28] sm:$0xf]
    %v3443 = vld [vmem:[%s3431 + $0x2c] sm:$0xf]
    %v3444 = vld [vmem:[%s3431 + $0x30] sm:$0xf]
    %v3445 = vld [vmem:[%s3431 + $0x34] sm:$0xf]
    %v3446 = vld [vmem:[%s3431 + $0x38] sm:$0xf]
    %v3447 = vld [vmem:[%s3431 + $0x3c] sm:$0xf]
    %v3448 = vld [vmem:[%s3431 + $0x40] sm:$0xf]
    %v3449 = vld [vmem:[%s3431 + $0x44] sm:$0xf]
    %v3450 = vld [vmem:[%s3431 + $0x48] sm:$0xf]
    %v3451 = vld [vmem:[%s3431 + $0x4c] sm:$0xf]
    %v3452 = vld [vmem:[%s3431 + $0x50] sm:$0xf]
    %v3453 = vld [vmem:[%s3431 + $0x54] sm:$0xf]
    %v3454 = vld [vmem:[%s3431 + $0x58] sm:$0xf]
    %v3455 = vld [vmem:[%s3431 + $0x5c] sm:$0xf]
    %v3456 = vld [vmem:[%s3431 + $0x60] sm:$0xf]
    %v3457 = vld [vmem:[%s3431 + $0x64] sm:$0xf]
    %v3458 = vld [vmem:[%s3431 + $0x68] sm:$0xf]
    %v3459 = vld [vmem:[%s3431 + $0x6c] sm:$0xf]
    %v3460 = vld [vmem:[%s3431 + $0x70] sm:$0xf]
    %v3461 = vld [vmem:[%s3431 + $0x74] sm:$0xf]
    %v3462 = vld [vmem:[%s3431 + $0x78] sm:$0xf]
    %v3463 = vld [vmem:[%s3431 + $0x7c] sm:$0xf]
    %v3464 = vld [vmem:[%s3431 + $0x80] sm:$0xf]
    %v3465 = vld [vmem:[%s3431 + $0x84] sm:$0xf]
    %v3466 = vld [vmem:[%s3431 + $0x88] sm:$0xf]
    %v3467 = vld [vmem:[%s3431 + $0x8c] sm:$0xf]
    %v3468 = vld [vmem:[%s3431 + $0x90] sm:$0xf]
    %v3469 = vld [vmem:[%s3431 + $0x94] sm:$0xf]
    %v3470 = vld [vmem:[%s3431 + $0x98] sm:$0xf]
    %v3471 = vld [vmem:[%s3431 + $0x9c] sm:$0xf]
    %v3472 = vld [vmem:[%s3431 + $0xa0] sm:$0xf]
    %v3473 = vld [vmem:[%s3431 + $0xa4] sm:$0xf]
    %v3474 = vld [vmem:[%s3431 + $0xa8] sm:$0xf]
    %v3475 = vld [vmem:[%s3431 + $0xac] sm:$0xf]
    %v3476 = vld [vmem:[%s3431 + $0xb0] sm:$0xf]
    %v3477 = vld [vmem:[%s3431 + $0xb4] sm:$0xf]
    %v3478 = vld [vmem:[%s3431 + $0xb8] sm:$0xf]
    %v3479 = vld [vmem:[%s3431 + $0xbc] sm:$0xf]
    %v3480 = vld [vmem:[%s3431 + $0xc0] sm:$0xf]
    %v3481 = vld [vmem:[%s3431 + $0xc4] sm:$0xf]
    %v3482 = vld [vmem:[%s3431 + $0xc8] sm:$0xf]
    %v3483 = vld [vmem:[%s3431 + $0xcc] sm:$0xf]
    %v3484 = vld [vmem:[%s3431 + $0xd0] sm:$0xf]
    %v3485 = vld [vmem:[%s3431 + $0xd4] sm:$0xf]
    %v3486 = vld [vmem:[%s3431 + $0xd8] sm:$0xf]
    %v3487 = vld [vmem:[%s3431 + $0xdc] sm:$0xf]
    %v3488 = vld [vmem:[%s3431 + $0xe0] sm:$0xf]
    %v3489 = vld [vmem:[%s3431 + $0xe4] sm:$0xf]
    %v3490 = vld [vmem:[%s3431 + $0xe8] sm:$0xf]
    %v3491 = vld [vmem:[%s3431 + $0xec] sm:$0xf]
    %v3492 = vld [vmem:[%s3431 + $0xf0] sm:$0xf]
    %v3493 = vld [vmem:[%s3431 + $0xf4] sm:$0xf]
    %v3494 = vld [vmem:[%s3431 + $0xf8] sm:$0xf]
    %v3495 = vld [vmem:[%s3431 + $0xfc] sm:$0xf]
    %v3546 = vunpack.c.l.b16 %v3381
    %v3547 = vunpack.c.h.b16 %v3381
    %v3548 = vunpack.c.l.b16 %v3382
    %v3549 = vunpack.c.h.b16 %v3382
    %v3550 = vunpack.c.l.b16 %v3383
    %v3551 = vunpack.c.h.b16 %v3383
    %v3552 = vunpack.c.l.b16 %v3384
    %v3553 = vunpack.c.h.b16 %v3384
    %v3554 = vunpack.c.l.b16 %v3385
    %v3555 = vunpack.c.h.b16 %v3385
    %v3556 = vunpack.c.l.b16 %v3386
    %v3557 = vunpack.c.h.b16 %v3386
    %v3558 = vunpack.c.l.b16 %v3387
    %v3559 = vunpack.c.h.b16 %v3387
    %v3560 = vunpack.c.l.b16 %v3388
    %v3561 = vunpack.c.h.b16 %v3388
    %v3562 = vunpack.c.l.b16 %v3389
    %v3563 = vunpack.c.h.b16 %v3389
    %v3564 = vunpack.c.l.b16 %v3390
    %v3565 = vunpack.c.h.b16 %v3390
    %v3566 = vunpack.c.l.b16 %v3391
    %v3567 = vunpack.c.h.b16 %v3391
    %v3568 = vunpack.c.l.b16 %v3392
    %v3569 = vunpack.c.h.b16 %v3392
    %v3570 = vunpack.c.l.b16 %v3393
    %v3571 = vunpack.c.h.b16 %v3393
    %v3572 = vunpack.c.l.b16 %v3394
    %v3573 = vunpack.c.h.b16 %v3394
    %v3574 = vunpack.c.l.b16 %v3395
    %v3575 = vunpack.c.h.b16 %v3395
    %v3576 = vunpack.c.l.b16 %v3396
    %v3577 = vunpack.c.h.b16 %v3396
    %v3578 = vunpack.c.l.b16 %v3397
    %v3579 = vunpack.c.h.b16 %v3397
    %v3580 = vunpack.c.l.b16 %v3398
    %v3581 = vunpack.c.h.b16 %v3398
    %v3582 = vunpack.c.l.b16 %v3399
    %v3583 = vunpack.c.h.b16 %v3399
    %v3584 = vunpack.c.l.b16 %v3400
    %v3585 = vunpack.c.h.b16 %v3400
    %v3586 = vunpack.c.l.b16 %v3401
    %v3587 = vunpack.c.h.b16 %v3401
    %v3588 = vunpack.c.l.b16 %v3402
    %v3589 = vunpack.c.h.b16 %v3402
    %v3590 = vunpack.c.l.b16 %v3403
    %v3591 = vunpack.c.h.b16 %v3403
    %v3592 = vunpack.c.l.b16 %v3404
    %v3593 = vunpack.c.h.b16 %v3404
    %v3594 = vunpack.c.l.b16 %v3405
    %v3595 = vunpack.c.h.b16 %v3405
    %v3596 = vunpack.c.l.b16 %v3406
    %v3597 = vunpack.c.h.b16 %v3406
    %v3598 = vunpack.c.l.b16 %v3407
    %v3599 = vunpack.c.h.b16 %v3407
    %v3600 = vunpack.c.l.b16 %v3408
    %v3601 = vunpack.c.h.b16 %v3408
    %v3602 = vunpack.c.l.b16 %v3409
    %v3603 = vunpack.c.h.b16 %v3409
    %v3604 = vunpack.c.l.b16 %v3410
    %v3605 = vunpack.c.h.b16 %v3410
    %v3606 = vunpack.c.l.b16 %v3411
    %v3607 = vunpack.c.h.b16 %v3411
    %v3608 = vunpack.c.l.b16 %v3412
    %v3609 = vunpack.c.h.b16 %v3412
    %v3610 = vunpack.c.l.b16 %v3413
    %v3611 = vunpack.c.h.b16 %v3413
    %v3612 = vunpack.c.l.b16 %v3414
    %v3613 = vunpack.c.h.b16 %v3414
    %v3614 = vunpack.c.l.b16 %v3415
    %v3615 = vunpack.c.h.b16 %v3415
    %v3616 = vunpack.c.l.b16 %v3416
    %v3617 = vunpack.c.h.b16 %v3416
    %v3618 = vunpack.c.l.b16 %v3417
    %v3619 = vunpack.c.h.b16 %v3417
    %v3620 = vunpack.c.l.b16 %v3418
    %v3621 = vunpack.c.h.b16 %v3418
    %v3622 = vunpack.c.l.b16 %v3419
    %v3623 = vunpack.c.h.b16 %v3419
    %v3624 = vunpack.c.l.b16 %v3420
    %v3625 = vunpack.c.h.b16 %v3420
    %v3626 = vunpack.c.l.b16 %v3421
    %v3627 = vunpack.c.h.b16 %v3421
    %v3628 = vunpack.c.l.b16 %v3422
    %v3629 = vunpack.c.h.b16 %v3422
    %v3630 = vunpack.c.l.b16 %v3423
    %v3631 = vunpack.c.h.b16 %v3423
    %v3632 = vunpack.c.l.b16 %v3424
    %v3633 = vunpack.c.h.b16 %v3424
    %v3634 = vunpack.c.l.b16 %v3425
    %v3635 = vunpack.c.h.b16 %v3425
    %v3636 = vunpack.c.l.b16 %v3426
    %v3637 = vunpack.c.h.b16 %v3426
    %v3638 = vunpack.c.l.b16 %v3427
    %v3639 = vunpack.c.h.b16 %v3427
    %v3640 = vunpack.c.l.b16 %v3428
    %v3641 = vunpack.c.h.b16 %v3428
    %v3642 = vunpack.c.l.b16 %v3429
    %v3643 = vunpack.c.h.b16 %v3429
    %v3644 = vunpack.c.l.b16 %v3430
    %v3645 = vunpack.c.h.b16 %v3430
    %v3646 = vpack.c.b16 %v3550, %v3546
    %v3647 = vpack.c.b16 %v3551, %v3547
    %v3648 = vpack.c.b16 %v3552, %v3548
    %v3649 = vpack.c.b16 %v3553, %v3549
    %v3650 = vpack.c.b16 %v3558, %v3554
    %v3651 = vpack.c.b16 %v3559, %v3555
    %v3652 = vpack.c.b16 %v3560, %v3556
    %v3653 = vpack.c.b16 %v3561, %v3557
    %v3654 = vpack.c.b16 %v3566, %v3562
    %v3655 = vpack.c.b16 %v3567, %v3563
    %v3656 = vpack.c.b16 %v3568, %v3564
    %v3657 = vpack.c.b16 %v3569, %v3565
    %v3658 = vpack.c.b16 %v3574, %v3570
    %v3659 = vpack.c.b16 %v3575, %v3571
    %v3660 = vpack.c.b16 %v3576, %v3572
    %v3661 = vpack.c.b16 %v3577, %v3573
    %v3662 = vpack.c.b16 %v3582, %v3578
    %v3663 = vpack.c.b16 %v3583, %v3579
    %v3664 = vpack.c.b16 %v3584, %v3580
    %v3665 = vpack.c.b16 %v3585, %v3581
    %v3666 = vpack.c.b16 %v3590, %v3586
    %v3667 = vpack.c.b16 %v3591, %v3587
    %v3668 = vpack.c.b16 %v3592, %v3588
    %v3669 = vpack.c.b16 %v3593, %v3589
    %v3670 = vpack.c.b16 %v3598, %v3594
    %v3671 = vpack.c.b16 %v3599, %v3595
    %v3672 = vpack.c.b16 %v3600, %v3596
    %v3673 = vpack.c.b16 %v3601, %v3597
    %v3674 = vpack.c.b16 %v3606, %v3602
    %v3675 = vpack.c.b16 %v3607, %v3603
    %v3676 = vpack.c.b16 %v3608, %v3604
    %v3677 = vpack.c.b16 %v3609, %v3605
    %v3678 = vpack.c.b16 %v3614, %v3610
    %v3679 = vpack.c.b16 %v3615, %v3611
    %v3680 = vpack.c.b16 %v3616, %v3612
    %v3681 = vpack.c.b16 %v3617, %v3613
    %v3682 = vpack.c.b16 %v3622, %v3618
    %v3683 = vpack.c.b16 %v3623, %v3619
    %v3684 = vpack.c.b16 %v3624, %v3620
    %v3685 = vpack.c.b16 %v3625, %v3621
    %v3686 = vpack.c.b16 %v3630, %v3626
    %v3687 = vpack.c.b16 %v3631, %v3627
    %v3688 = vpack.c.b16 %v3632, %v3628
    %v3689 = vpack.c.b16 %v3633, %v3629
    %v3690 = vpack.c.b16 %v3638, %v3634
    %v3691 = vpack.c.b16 %v3639, %v3635
    %v3692 = vpack.c.b16 %v3640, %v3636
    %v3693 = vpack.c.b16 %v3641, %v3637
    %v3694 = vpack.c.b16 %v3642, %v3642
    %v3695 = vpack.c.b16 %v3643, %v3643
    %v3696 = vpack.c.b16 %v3644, %v3644
    %v3697 = vpack.c.b16 %v3645, %v3645
    %v3814 = vunpack.c.l.b16 %v3432
    %v3815 = vunpack.c.l.b16 %v3433
    %v3816 = vunpack.c.l.b16 %v3434
    %v3817 = vunpack.c.l.b16 %v3435
    %v3818 = vunpack.c.l.b16 %v3436
    %v3819 = vunpack.c.l.b16 %v3437
    %v3820 = vunpack.c.l.b16 %v3438
    %v3821 = vunpack.c.l.b16 %v3439
    %v3822 = vunpack.c.l.b16 %v3440
    %v3823 = vunpack.c.l.b16 %v3441
    %v3824 = vunpack.c.l.b16 %v3442
    %v3825 = vunpack.c.l.b16 %v3443
    %v3826 = vunpack.c.l.b16 %v3444
    %v3827 = vunpack.c.l.b16 %v3445
    %v3828 = vunpack.c.l.b16 %v3446
    %v3829 = vunpack.c.l.b16 %v3447
    %v3830 = vunpack.c.l.b16 %v3448
    %v3831 = vunpack.c.l.b16 %v3449
    %v3832 = vunpack.c.l.b16 %v3450
    %v3833 = vunpack.c.l.b16 %v3451
    %v3834 = vunpack.c.l.b16 %v3452
    %v3835 = vunpack.c.l.b16 %v3453
    %v3836 = vunpack.c.l.b16 %v3454
    %v3837 = vunpack.c.l.b16 %v3455
    %v3838 = vunpack.c.l.b16 %v3456
    %v3839 = vunpack.c.l.b16 %v3457
    %v3840 = vunpack.c.l.b16 %v3458
    %v3841 = vunpack.c.l.b16 %v3459
    %v3842 = vunpack.c.l.b16 %v3460
    %v3843 = vunpack.c.l.b16 %v3461
    %v3844 = vunpack.c.l.b16 %v3462
    %v3845 = vunpack.c.l.b16 %v3463
    %v3846 = vunpack.c.l.b16 %v3464
    %v3847 = vunpack.c.l.b16 %v3465
    %v3848 = vunpack.c.l.b16 %v3466
    %v3849 = vunpack.c.l.b16 %v3467
    %v3850 = vunpack.c.l.b16 %v3468
    %v3851 = vunpack.c.l.b16 %v3469
    %v3852 = vunpack.c.l.b16 %v3470
    %v3853 = vunpack.c.l.b16 %v3471
    %v3854 = vunpack.c.l.b16 %v3472
    %v3855 = vunpack.c.l.b16 %v3473
    %v3856 = vunpack.c.l.b16 %v3474
    %v3857 = vunpack.c.l.b16 %v3475
    %v3858 = vunpack.c.l.b16 %v3476
    %v3859 = vunpack.c.l.b16 %v3477
    %v3860 = vunpack.c.l.b16 %v3478
    %v3861 = vunpack.c.l.b16 %v3479
    %v3862 = vunpack.c.l.b16 %v3480
    %v3863 = vunpack.c.l.b16 %v3481
    %v3864 = vunpack.c.l.b16 %v3482
    %v3865 = vunpack.c.l.b16 %v3483
    %v3866 = vunpack.c.l.b16 %v3484
    %v3867 = vunpack.c.l.b16 %v3485
    %v3868 = vunpack.c.l.b16 %v3486
    %v3869 = vunpack.c.l.b16 %v3487
    %v3870 = vunpack.c.l.b16 %v3488
    %v3871 = vunpack.c.l.b16 %v3489
    %v3872 = vunpack.c.l.b16 %v3490
    %v3873 = vunpack.c.l.b16 %v3491
    %v3874 = vunpack.c.l.b16 %v3492
    %v3875 = vunpack.c.l.b16 %v3493
    %v3876 = vunpack.c.l.b16 %v3494
    %v3877 = vunpack.c.l.b16 %v3495
    %v3878 = vpack.c.b16 %v3815, %v3814
    %v3879 = vpack.c.b16 %v3817, %v3816
    %v3880 = vpack.c.b16 %v3819, %v3818
    %v3881 = vpack.c.b16 %v3821, %v3820
    %v3882 = vpack.c.b16 %v3823, %v3822
    %v3883 = vpack.c.b16 %v3825, %v3824
    %v3884 = vpack.c.b16 %v3827, %v3826
    %v3885 = vpack.c.b16 %v3829, %v3828
    %v3886 = vpack.c.b16 %v3831, %v3830
    %v3887 = vpack.c.b16 %v3833, %v3832
    %v3888 = vpack.c.b16 %v3835, %v3834
    %v3889 = vpack.c.b16 %v3837, %v3836
    %v3890 = vpack.c.b16 %v3839, %v3838
    %v3891 = vpack.c.b16 %v3841, %v3840
    %v3892 = vpack.c.b16 %v3843, %v3842
    %v3893 = vpack.c.b16 %v3845, %v3844
    %v3894 = vpack.c.b16 %v3847, %v3846
    %v3895 = vpack.c.b16 %v3849, %v3848
    %v3896 = vpack.c.b16 %v3851, %v3850
    %v3897 = vpack.c.b16 %v3853, %v3852
    %v3898 = vpack.c.b16 %v3855, %v3854
    %v3899 = vpack.c.b16 %v3857, %v3856
    %v3900 = vpack.c.b16 %v3859, %v3858
    %v3901 = vpack.c.b16 %v3861, %v3860
    %v3902 = vpack.c.b16 %v3863, %v3862
    %v3903 = vpack.c.b16 %v3865, %v3864
    %v3904 = vpack.c.b16 %v3867, %v3866
    %v3905 = vpack.c.b16 %v3869, %v3868
    %v3906 = vpack.c.b16 %v3871, %v3870
    %v3907 = vpack.c.b16 %v3873, %v3872
    %v3908 = vpack.c.b16 %v3875, %v3874
    %v3909 = vpack.c.b16 %v3877, %v3876
    %3942 = vmatprep.subr.bf16.mxu0 0
    %3943 = vmatpush1.bf16.msra.mxu0 %v3885
    %3944 = vmatprep.subr.bf16.mxu0 0
    %3945 = vmatpush1.bf16.msra.mxu0 %v3884
    %3946 = vmatprep.subr.bf16.mxu0 0
    %3947 = vmatpush1.bf16.msra.mxu0 %v3883
    %3948 = vmatprep.subr.bf16.mxu0 0
    %3949 = vmatpush1.bf16.msra.mxu0 %v3882
    %3950 = vmatprep.subr.bf16.mxu0 0
    %3951 = vmatpush1.bf16.msra.mxu0 %v3881
    %3952 = vmatprep.subr.bf16.mxu0 0
    %3953 = vmatpush1.bf16.msra.mxu0 %v3880
    %3954 = vmatprep.subr.bf16.mxu0 0
    %3955 = vmatpush1.bf16.msra.mxu0 %v3879
    %3956 = vmatprep.subr.bf16.mxu0 0
    %3957 = vmatpush1.bf16.msra.mxu0 %v3878
    %3958 = vmatprep.subr.bf16.mxu0 0
    %3959 = vmatpush2.bf16.msra.mxu0 %v3893
    %3960 = vmatprep.subr.bf16.mxu0 0
    %3961 = vmatpush2.bf16.msra.mxu0 %v3892
    %3962 = vmatprep.subr.bf16.mxu0 0
    %3963 = vmatpush2.bf16.msra.mxu0 %v3891
    %3964 = vmatprep.subr.bf16.mxu0 0
    %3965 = vmatpush2.bf16.msra.mxu0 %v3890
    %3966 = vmatprep.subr.bf16.mxu0 0
    %3967 = vmatpush2.bf16.msra.mxu0 %v3889
    %3968 = vmatprep.subr.bf16.mxu0 0
    %3969 = vmatpush2.bf16.msra.mxu0 %v3888
    %3970 = vmatprep.subr.bf16.mxu0 0
    %3971 = vmatpush2.bf16.msra.mxu0 %v3887
    %3972 = vmatprep.subr.bf16.mxu0 0
    %3973 = vmatpush2.bf16.msra.mxu0 %v3886
    %3974 = vmatprep.mubr.bf16.mxu0 %v3647
    %3975 = vmatmul.mubr.bf16.gmra.mxu0 %v3646
    %v3976 = vpop.f32.mrf.mxu0
    %v3977 = vadd.f32 0.0, %v3976
    %v3978 = vpop.f32.mrf.mxu0
    %v3979 = vpop.f32.mrf.mxu0
    %v3980 = vadd.f32 0.0, %v3979
    %v3981 = vpop.f32.mrf.mxu0
    %3982 = vmatprep.mubr.bf16.mxu0 %v3651
    %3983 = vmatmul.mubr.bf16.gmra.mxu0 %v3650
    %v3984 = vpop.f32.mrf.mxu0
    %v3985 = vadd.f32 0.0, %v3984
    %v3986 = vpop.f32.mrf.mxu0
    %v3987 = vpop.f32.mrf.mxu0
    %v3988 = vadd.f32 0.0, %v3987
    %v3989 = vpop.f32.mrf.mxu0
    %3990 = vmatprep.mubr.bf16.mxu0 %v3655
    %3991 = vmatmul.mubr.bf16.gmra.mxu0 %v3654
    %v3992 = vpop.f32.mrf.mxu0
    %v3993 = vadd.f32 0.0, %v3992
    %v3994 = vpop.f32.mrf.mxu0
    %v3995 = vpop.f32.mrf.mxu0
    %v3996 = vadd.f32 0.0, %v3995
    %v3997 = vpop.f32.mrf.mxu0
    %3998 = vmatprep.mubr.bf16.mxu0 %v3659
    %3999 = vmatmul.mubr.bf16.gmra.mxu0 %v3658
    %v4000 = vpop.f32.mrf.mxu0
    %v4001 = vadd.f32 0.0, %v4000
    %v4002 = vpop.f32.mrf.mxu0
    %v4003 = vpop.f32.mrf.mxu0
    %v4004 = vadd.f32 0.0, %v4003
    %v4005 = vpop.f32.mrf.mxu0
    %4006 = vmatprep.mubr.bf16.mxu0 %v3663
    %4007 = vmatmul.mubr.bf16.gmra.mxu0 %v3662
    %v4008 = vpop.f32.mrf.mxu0
    %v4009 = vadd.f32 0.0, %v4008
    %v4010 = vpop.f32.mrf.mxu0
    %v4011 = vpop.f32.mrf.mxu0
    %v4012 = vadd.f32 0.0, %v4011
    %v4013 = vpop.f32.mrf.mxu0
    %4014 = vmatprep.mubr.bf16.mxu0 %v3667
    %4015 = vmatmul.mubr.bf16.gmra.mxu0 %v3666
    %v4016 = vpop.f32.mrf.mxu0
    %v4017 = vadd.f32 0.0, %v4016
    %v4018 = vpop.f32.mrf.mxu0
    %v4019 = vpop.f32.mrf.mxu0
    %v4020 = vadd.f32 0.0, %v4019
    %v4021 = vpop.f32.mrf.mxu0
    %4022 = vmatprep.mubr.bf16.mxu0 %v3671
    %4023 = vmatmul.mubr.bf16.gmra.mxu0 %v3670
    %v4024 = vpop.f32.mrf.mxu0
    %v4025 = vadd.f32 0.0, %v4024
    %v4026 = vpop.f32.mrf.mxu0
    %v4027 = vpop.f32.mrf.mxu0
    %v4028 = vadd.f32 0.0, %v4027
    %v4029 = vpop.f32.mrf.mxu0
    %4030 = vmatprep.mubr.bf16.mxu0 %v3675
    %4031 = vmatmul.mubr.bf16.gmra.mxu0 %v3674
    %v4032 = vpop.f32.mrf.mxu0
    %v4033 = vadd.f32 0.0, %v4032
    %v4034 = vpop.f32.mrf.mxu0
    %v4035 = vpop.f32.mrf.mxu0
    %v4036 = vadd.f32 0.0, %v4035
    %v4037 = vpop.f32.mrf.mxu0
    %4038 = vmatprep.mubr.bf16.mxu0 %v3679
    %4039 = vmatmul.mubr.bf16.gmra.mxu0 %v3678
    %v4040 = vpop.f32.mrf.mxu0
    %v4041 = vadd.f32 0.0, %v4040
    %v4042 = vpop.f32.mrf.mxu0
    %v4043 = vpop.f32.mrf.mxu0
    %v4044 = vadd.f32 0.0, %v4043
    %v4045 = vpop.f32.mrf.mxu0
    %4046 = vmatprep.mubr.bf16.mxu0 %v3683
    %4047 = vmatmul.mubr.bf16.gmra.mxu0 %v3682
    %v4048 = vpop.f32.mrf.mxu0
    %v4049 = vadd.f32 0.0, %v4048
    %v4050 = vpop.f32.mrf.mxu0
    %v4051 = vpop.f32.mrf.mxu0
    %v4052 = vadd.f32 0.0, %v4051
    %v4053 = vpop.f32.mrf.mxu0
    %4054 = vmatprep.mubr.bf16.mxu0 %v3687
    %4055 = vmatmul.mubr.bf16.gmra.mxu0 %v3686
    %v4056 = vpop.f32.mrf.mxu0
    %v4057 = vadd.f32 0.0, %v4056
    %v4058 = vpop.f32.mrf.mxu0
    %v4059 = vpop.f32.mrf.mxu0
    %v4060 = vadd.f32 0.0, %v4059
    %v4061 = vpop.f32.mrf.mxu0
    %4062 = vmatprep.mubr.bf16.mxu0 %v3691
    %4063 = vmatmul.mubr.bf16.gmra.mxu0 %v3690
    %v4064 = vpop.f32.mrf.mxu0
    %v4065 = vadd.f32 0.0, %v4064
    %v4066 = vpop.f32.mrf.mxu0
    %v4067 = vpop.f32.mrf.mxu0
    %v4068 = vadd.f32 0.0, %v4067
    %v4069 = vpop.f32.mrf.mxu0
    %4070 = vmatprep.mubr.bf16.mxu0 %v3695
    %4071 = vmatmul.mubr.bf16.gmra.mxu0 %v3694
    %v4072 = vpop.f32.mrf.mxu0
    %v4073 = vadd.f32 0.0, %v4072
    %v4074 = vpop.f32.mrf.mxu0
    %v4075 = vpop.f32.mrf.mxu0
    %v4076 = vpop.f32.mrf.mxu0
    %4077 = vdwg.mxu0
    %4078 = vmatprep.subr.bf16.mxu0 0
    %4079 = vmatpush1.bf16.msra.mxu0 %v3901
    %4080 = vmatprep.subr.bf16.mxu0 0
    %4081 = vmatpush1.bf16.msra.mxu0 %v3900
    %4082 = vmatprep.subr.bf16.mxu0 0
    %4083 = vmatpush1.bf16.msra.mxu0 %v3899
    %4084 = vmatprep.subr.bf16.mxu0 0
    %4085 = vmatpush1.bf16.msra.mxu0 %v3898
    %4086 = vmatprep.subr.bf16.mxu0 0
    %4087 = vmatpush1.bf16.msra.mxu0 %v3897
    %4088 = vmatprep.subr.bf16.mxu0 0
    %4089 = vmatpush1.bf16.msra.mxu0 %v3896
    %4090 = vmatprep.subr.bf16.mxu0 0
    %4091 = vmatpush1.bf16.msra.mxu0 %v3895
    %4092 = vmatprep.subr.bf16.mxu0 0
    %4093 = vmatpush1.bf16.msra.mxu0 %v3894
    %4094 = vmatprep.subr.bf16.mxu0 0
    %4095 = vmatpush2.bf16.msra.mxu0 %v3909
    %4096 = vmatprep.subr.bf16.mxu0 0
    %4097 = vmatpush2.bf16.msra.mxu0 %v3908
    %4098 = vmatprep.subr.bf16.mxu0 0
    %4099 = vmatpush2.bf16.msra.mxu0 %v3907
    %4100 = vmatprep.subr.bf16.mxu0 0
    %4101 = vmatpush2.bf16.msra.mxu0 %v3906
    %4102 = vmatprep.subr.bf16.mxu0 0
    %4103 = vmatpush2.bf16.msra.mxu0 %v3905
    %4104 = vmatprep.subr.bf16.mxu0 0
    %4105 = vmatpush2.bf16.msra.mxu0 %v3904
    %4106 = vmatprep.subr.bf16.mxu0 0
    %4107 = vmatpush2.bf16.msra.mxu0 %v3903
    %4108 = vmatprep.subr.bf16.mxu0 0
    %4109 = vmatpush2.bf16.msra.mxu0 %v3902
    %4110 = vmatprep.mubr.bf16.mxu0 %v3649
    %4111 = vmatmul.mubr.bf16.gmra.mxu0 %v3648
    %v4112 = vpop.f32.mrf.mxu0
    %v4113 = vadd.f32 %v3977, %v4112
    %v4114 = vpop.f32.mrf.mxu0
    %v4115 = vpop.f32.mrf.mxu0
    %v4116 = vadd.f32 %v3980, %v4115
    %v4117 = vpop.f32.mrf.mxu0
    %4118 = vmatprep.mubr.bf16.mxu0 %v3653
    %4119 = vmatmul.mubr.bf16.gmra.mxu0 %v3652
    %v4120 = vpop.f32.mrf.mxu0
    %v4121 = vadd.f32 %v3985, %v4120
    %v4122 = vpop.f32.mrf.mxu0
    %v4123 = vpop.f32.mrf.mxu0
    %v4124 = vadd.f32 %v3988, %v4123
    %v4125 = vpop.f32.mrf.mxu0
    %4126 = vmatprep.mubr.bf16.mxu0 %v3657
    %4127 = vmatmul.mubr.bf16.gmra.mxu0 %v3656
    %v4128 = vpop.f32.mrf.mxu0
    %v4129 = vadd.f32 %v3993, %v4128
    %v4130 = vpop.f32.mrf.mxu0
    %v4131 = vpop.f32.mrf.mxu0
    %v4132 = vadd.f32 %v3996, %v4131
    %v4133 = vpop.f32.mrf.mxu0
    %4134 = vmatprep.mubr.bf16.mxu0 %v3661
    %4135 = vmatmul.mubr.bf16.gmra.mxu0 %v3660
    %v4136 = vpop.f32.mrf.mxu0
    %v4137 = vadd.f32 %v4001, %v4136
    %v4138 = vpop.f32.mrf.mxu0
    %v4139 = vpop.f32.mrf.mxu0
    %v4140 = vadd.f32 %v4004, %v4139
    %v4141 = vpop.f32.mrf.mxu0
    %4142 = vmatprep.mubr.bf16.mxu0 %v3665
    %4143 = vmatmul.mubr.bf16.gmra.mxu0 %v3664
    %v4144 = vpop.f32.mrf.mxu0
    %v4145 = vadd.f32 %v4009, %v4144
    %v4146 = vpop.f32.mrf.mxu0
    %v4147 = vpop.f32.mrf.mxu0
    %v4148 = vadd.f32 %v4012, %v4147
    %v4149 = vpop.f32.mrf.mxu0
    %4150 = vmatprep.mubr.bf16.mxu0 %v3669
    %4151 = vmatmul.mubr.bf16.gmra.mxu0 %v3668
    %v4152 = vpop.f32.mrf.mxu0
    %v4153 = vadd.f32 %v4017, %v4152
    %v4154 = vpop.f32.mrf.mxu0
    %v4155 = vpop.f32.mrf.mxu0
    %v4156 = vadd.f32 %v4020, %v4155
    %v4157 = vpop.f32.mrf.mxu0
    %4158 = vmatprep.mubr.bf16.mxu0 %v3673
    %4159 = vmatmul.mubr.bf16.gmra.mxu0 %v3672
    %v4160 = vpop.f32.mrf.mxu0
    %v4161 = vadd.f32 %v4025, %v4160
    %v4162 = vpop.f32.mrf.mxu0
    %v4163 = vpop.f32.mrf.mxu0
    %v4164 = vadd.f32 %v4028, %v4163
    %v4165 = vpop.f32.mrf.mxu0
    %4166 = vmatprep.mubr.bf16.mxu0 %v3677
    %4167 = vmatmul.mubr.bf16.gmra.mxu0 %v3676
    %v4168 = vpop.f32.mrf.mxu0
    %v4169 = vadd.f32 %v4033, %v4168
    %v4170 = vpop.f32.mrf.mxu0
    %v4171 = vpop.f32.mrf.mxu0
    %v4172 = vadd.f32 %v4036, %v4171
    %v4173 = vpop.f32.mrf.mxu0
    %4174 = vmatprep.mubr.bf16.mxu0 %v3681
    %4175 = vmatmul.mubr.bf16.gmra.mxu0 %v3680
    %v4176 = vpop.f32.mrf.mxu0
    %v4177 = vadd.f32 %v4041, %v4176
    %v4178 = vpop.f32.mrf.mxu0
    %v4179 = vpop.f32.mrf.mxu0
    %v4180 = vadd.f32 %v4044, %v4179
    %v4181 = vpop.f32.mrf.mxu0
    %4182 = vmatprep.mubr.bf16.mxu0 %v3685
    %4183 = vmatmul.mubr.bf16.gmra.mxu0 %v3684
    %v4184 = vpop.f32.mrf.mxu0
    %v4185 = vadd.f32 %v4049, %v4184
    %v4186 = vpop.f32.mrf.mxu0
    %v4187 = vpop.f32.mrf.mxu0
    %v4188 = vadd.f32 %v4052, %v4187
    %v4189 = vpop.f32.mrf.mxu0
    %4190 = vmatprep.mubr.bf16.mxu0 %v3689
    %4191 = vmatmul.mubr.bf16.gmra.mxu0 %v3688
    %v4192 = vpop.f32.mrf.mxu0
    %v4193 = vadd.f32 %v4057, %v4192
    %v4194 = vpop.f32.mrf.mxu0
    %v4195 = vpop.f32.mrf.mxu0
    %v4196 = vadd.f32 %v4060, %v4195
    %v4197 = vpop.f32.mrf.mxu0
    %4198 = vmatprep.mubr.bf16.mxu0 %v3693
    %4199 = vmatmul.mubr.bf16.gmra.mxu0 %v3692
    %v4200 = vpop.f32.mrf.mxu0
    %v4201 = vadd.f32 %v4065, %v4200
    %v4202 = vpop.f32.mrf.mxu0
    %v4203 = vpop.f32.mrf.mxu0
    %v4204 = vadd.f32 %v4068, %v4203
    %v4205 = vpop.f32.mrf.mxu0
    %4206 = vmatprep.mubr.bf16.mxu0 %v3697
    %4207 = vmatmul.mubr.bf16.gmra.mxu0 %v3696
    %v4208 = vpop.f32.mrf.mxu0
    %v4209 = vadd.f32 %v4073, %v4208
    %v4210 = vpop.f32.mrf.mxu0
    %v4211 = vpop.f32.mrf.mxu0
    %v4212 = vpop.f32.mrf.mxu0
    %4213 = vdwg.mxu0
    %v4214 = vadd.f32 %v3176, %v4113
    %v4215 = vadd.f32 %v3177, %v4116
    %v4216 = vadd.f32 %v3178, %v4121
    %v4217 = vadd.f32 %v3179, %v4124
    %v4218 = vadd.f32 %v3180, %v4129
    %v4219 = vadd.f32 %v3181, %v4132
    %v4220 = vadd.f32 %v3182, %v4137
    %v4221 = vadd.f32 %v3183, %v4140
    %v4222 = vadd.f32 %v3184, %v4145
    %v4223 = vadd.f32 %v3185, %v4148
    %v4224 = vadd.f32 %v3186, %v4153
    %v4225 = vadd.f32 %v3187, %v4156
    %v4226 = vadd.f32 %v3188, %v4161
    %v4227 = vadd.f32 %v3189, %v4164
    %v4228 = vadd.f32 %v3190, %v4169
    %v4229 = vadd.f32 %v3191, %v4172
    %v4230 = vadd.f32 %v3192, %v4177
    %v4231 = vadd.f32 %v3193, %v4180
    %v4232 = vadd.f32 %v3194, %v4185
    %v4233 = vadd.f32 %v3195, %v4188
    %v4234 = vadd.f32 %v3196, %v4193
    %v4235 = vadd.f32 %v3197, %v4196
    %v4236 = vadd.f32 %v3198, %v4201
    %v4237 = vadd.f32 %v3199, %v4204
    %v4238 = vadd.f32 %v3200, %v4209
    %v4239 = vld [vmem:[%s1] sm:$0x44]
    %v4240 = vld [vmem:[%s1 + $0x8] sm:$0x44]
    %v4243 = vunpack.c.l.b16 %v4239
    %v4244 = vunpack.c.h.b16 %v4239
    %v4245 = vunpack.c.l.b16 %v4240
    %v4246 = vunpack.c.h.b16 %v4240
    %v4247 = vpack.c.b16 %v4243, %v4243
    %v4248 = vpack.c.b16 %v4244, %v4244
    %v4249 = vpack.c.b16 %v4245, %v4245
    %v4250 = vpack.c.b16 %v4246, %v4246
    %v4252 = vpack.i.b16 %v4247, %v4247
    %v4254 = vlaneseq
    %v4255 = vshrl.u32 %v4254, 7
    %v4256 = vsub.s32 2, %v4255
    %v4257 = vrot.slane %v4252, %v4256
    %v4259 = vpack.i.b16 %v4248, %v4248
    %v4261 = vlaneseq
    %v4262 = vshrl.u32 %v4261, 7
    %v4263 = vsub.s32 2, %v4262
    %v4264 = vrot.slane %v4259, %v4263
    %v4266 = vpack.i.b16 %v4249, %v4249
    %v4268 = vlaneseq
    %v4269 = vshrl.u32 %v4268, 7
    %v4270 = vsub.s32 2, %v4269
    %v4271 = vrot.slane %v4266, %v4270
    %v4273 = vpack.i.b16 %v4250, %v4250
    %v4275 = vlaneseq
    %v4276 = vshrl.u32 %v4275, 7
    %v4277 = vsub.s32 2, %v4276
    %v4278 = vrot.slane %v4273, %v4277
    %v4283 = vunpack.c.l.b16 %v4257
    %v4284 = vunpack.c.l.b16 %v4264
    %v4285 = vunpack.c.l.b16 %v4271
    %v4286 = vunpack.c.l.b16 %v4278
    %v4287 = vpack.c.b16 %v4284, %v4283
    %v4288 = vpack.c.b16 %v4286, %v4285
    %v4291 = vmul.bf16 %v40, %v4287
    %v4292 = vmul.bf16 %v41, %v4288
    %v4293 = vmul.bf16 %v42, %v4287
    %v4294 = vmul.bf16 %v43, %v4288
    %v4295 = vmul.bf16 %v44, %v4287
    %v4296 = vmul.bf16 %v45, %v4288
    %v4297 = vmul.bf16 %v46, %v4287
    %v4298 = vmul.bf16 %v47, %v4288
    %v4299 = vmul.bf16 %v48, %v4287
    %v4300 = vmul.bf16 %v49, %v4288
    %v4301 = vmul.bf16 %v50, %v4287
    %v4302 = vmul.bf16 %v51, %v4288
    %v4303 = vmul.bf16 %v52, %v4287
    %v4304 = vmul.bf16 %v53, %v4288
    %v4305 = vmul.bf16 %v54, %v4287
    %v4306 = vmul.bf16 %v55, %v4288
    %v4307 = vmul.bf16 %v56, %v4287
    %v4308 = vmul.bf16 %v57, %v4288
    %v4309 = vmul.bf16 %v58, %v4287
    %v4310 = vmul.bf16 %v59, %v4288
    %v4311 = vmul.bf16 %v60, %v4287
    %v4312 = vmul.bf16 %v61, %v4288
    %v4313 = vmul.bf16 %v62, %v4287
    %v4314 = vmul.bf16 %v63, %v4288
    %v4315 = vmul.bf16 %v64, %v4287
    %v4316 = vmul.bf16 %v65, %v4288
    %v4317 = vmul.bf16 %v66, %v4287
    %v4318 = vmul.bf16 %v67, %v4288
    %v4319 = vmul.bf16 %v68, %v4287
    %v4320 = vmul.bf16 %v69, %v4288
    %v4321 = vmul.bf16 %v70, %v4287
    %v4322 = vmul.bf16 %v71, %v4288
    %v4323 = vmul.bf16 %v72, %v4287
    %v4324 = vmul.bf16 %v73, %v4288
    %v4325 = vmul.bf16 %v74, %v4287
    %v4326 = vmul.bf16 %v75, %v4288
    %v4327 = vmul.bf16 %v76, %v4287
    %v4328 = vmul.bf16 %v77, %v4288
    %v4329 = vmul.bf16 %v78, %v4287
    %v4330 = vmul.bf16 %v79, %v4288
    %v4331 = vmul.bf16 %v80, %v4287
    %v4332 = vmul.bf16 %v81, %v4288
    %v4333 = vmul.bf16 %v82, %v4287
    %v4334 = vmul.bf16 %v83, %v4288
    %v4335 = vmul.bf16 %v84, %v4287
    %v4336 = vmul.bf16 %v85, %v4288
    %v4337 = vmul.bf16 %v86, %v4287
    %v4338 = vmul.bf16 %v87, %v4288
    %v4339 = vmul.bf16 %v88, %v4287
    %v4340 = vmul.bf16 %v89, %v4288
    %v4341 = vld [vmem:[%s2] sm:$0x44]
    %v4342 = vld [vmem:[%s2 + $0x8] sm:$0x44]
    %v4345 = vunpack.c.l.b16 %v4341
    %v4346 = vunpack.c.h.b16 %v4341
    %v4347 = vunpack.c.l.b16 %v4342
    %v4348 = vunpack.c.h.b16 %v4342
    %v4349 = vpack.c.b16 %v4345, %v4345
    %v4350 = vpack.c.b16 %v4346, %v4346
    %v4351 = vpack.c.b16 %v4347, %v4347
    %v4352 = vpack.c.b16 %v4348, %v4348
    %v4354 = vpack.i.b16 %v4349, %v4349
    %v4356 = vlaneseq
    %v4357 = vshrl.u32 %v4356, 7
    %v4358 = vsub.s32 2, %v4357
    %v4359 = vrot.slane %v4354, %v4358
    %v4361 = vpack.i.b16 %v4350, %v4350
    %v4363 = vlaneseq
    %v4364 = vshrl.u32 %v4363, 7
    %v4365 = vsub.s32 2, %v4364
    %v4366 = vrot.slane %v4361, %v4365
    %v4368 = vpack.i.b16 %v4351, %v4351
    %v4370 = vlaneseq
    %v4371 = vshrl.u32 %v4370, 7
    %v4372 = vsub.s32 2, %v4371
    %v4373 = vrot.slane %v4368, %v4372
    %v4375 = vpack.i.b16 %v4352, %v4352
    %v4377 = vlaneseq
    %v4378 = vshrl.u32 %v4377, 7
    %v4379 = vsub.s32 2, %v4378
    %v4380 = vrot.slane %v4375, %v4379
    %v4385 = vunpack.c.l.b16 %v4359
    %v4386 = vunpack.c.l.b16 %v4366
    %v4387 = vunpack.c.l.b16 %v4373
    %v4388 = vunpack.c.l.b16 %v4380
    %v4389 = vpack.c.b16 %v4386, %v4385
    %v4390 = vpack.c.b16 %v4388, %v4387
    %v4393 = vadd.bf16 %v4291, %v4389
    %v4394 = vadd.bf16 %v4292, %v4390
    %v4395 = vadd.bf16 %v4293, %v4389
    %v4396 = vadd.bf16 %v4294, %v4390
    %v4397 = vadd.bf16 %v4295, %v4389
    %v4398 = vadd.bf16 %v4296, %v4390
    %v4399 = vadd.bf16 %v4297, %v4389
    %v4400 = vadd.bf16 %v4298, %v4390
    %v4401 = vadd.bf16 %v4299, %v4389
    %v4402 = vadd.bf16 %v4300, %v4390
    %v4403 = vadd.bf16 %v4301, %v4389
    %v4404 = vadd.bf16 %v4302, %v4390
    %v4405 = vadd.bf16 %v4303, %v4389
    %v4406 = vadd.bf16 %v4304, %v4390
    %v4407 = vadd.bf16 %v4305, %v4389
    %v4408 = vadd.bf16 %v4306, %v4390
    %v4409 = vadd.bf16 %v4307, %v4389
    %v4410 = vadd.bf16 %v4308, %v4390
    %v4411 = vadd.bf16 %v4309, %v4389
    %v4412 = vadd.bf16 %v4310, %v4390
    %v4413 = vadd.bf16 %v4311, %v4389
    %v4414 = vadd.bf16 %v4312, %v4390
    %v4415 = vadd.bf16 %v4313, %v4389
    %v4416 = vadd.bf16 %v4314, %v4390
    %v4417 = vadd.bf16 %v4315, %v4389
    %v4418 = vadd.bf16 %v4316, %v4390
    %v4419 = vadd.bf16 %v4317, %v4389
    %v4420 = vadd.bf16 %v4318, %v4390
    %v4421 = vadd.bf16 %v4319, %v4389
    %v4422 = vadd.bf16 %v4320, %v4390
    %v4423 = vadd.bf16 %v4321, %v4389
    %v4424 = vadd.bf16 %v4322, %v4390
    %v4425 = vadd.bf16 %v4323, %v4389
    %v4426 = vadd.bf16 %v4324, %v4390
    %v4427 = vadd.bf16 %v4325, %v4389
    %v4428 = vadd.bf16 %v4326, %v4390
    %v4429 = vadd.bf16 %v4327, %v4389
    %v4430 = vadd.bf16 %v4328, %v4390
    %v4431 = vadd.bf16 %v4329, %v4389
    %v4432 = vadd.bf16 %v4330, %v4390
    %v4433 = vadd.bf16 %v4331, %v4389
    %v4434 = vadd.bf16 %v4332, %v4390
    %v4435 = vadd.bf16 %v4333, %v4389
    %v4436 = vadd.bf16 %v4334, %v4390
    %v4437 = vadd.bf16 %v4335, %v4389
    %v4438 = vadd.bf16 %v4336, %v4390
    %v4439 = vadd.bf16 %v4337, %v4389
    %v4440 = vadd.bf16 %v4338, %v4390
    %v4441 = vadd.bf16 %v4339, %v4389
    %v4442 = vadd.bf16 %v4340, %v4390
    %v4443 = vmax.bf16 %v4393, 0
    %v4444 = vmax.bf16 %v4394, 0
    %v4445 = vmax.bf16 %v4395, 0
    %v4446 = vmax.bf16 %v4396, 0
    %v4447 = vmax.bf16 %v4397, 0
    %v4448 = vmax.bf16 %v4398, 0
    %v4449 = vmax.bf16 %v4399, 0
    %v4450 = vmax.bf16 %v4400, 0
    %v4451 = vmax.bf16 %v4401, 0
    %v4452 = vmax.bf16 %v4402, 0
    %v4453 = vmax.bf16 %v4403, 0
    %v4454 = vmax.bf16 %v4404, 0
    %v4455 = vmax.bf16 %v4405, 0
    %v4456 = vmax.bf16 %v4406, 0
    %v4457 = vmax.bf16 %v4407, 0
    %v4458 = vmax.bf16 %v4408, 0
    %v4459 = vmax.bf16 %v4409, 0
    %v4460 = vmax.bf16 %v4410, 0
    %v4461 = vmax.bf16 %v4411, 0
    %v4462 = vmax.bf16 %v4412, 0
    %v4463 = vmax.bf16 %v4413, 0
    %v4464 = vmax.bf16 %v4414, 0
    %v4465 = vmax.bf16 %v4415, 0
    %v4466 = vmax.bf16 %v4416, 0
    %v4467 = vmax.bf16 %v4417, 0
    %v4468 = vmax.bf16 %v4418, 0
    %v4469 = vmax.bf16 %v4419, 0
    %v4470 = vmax.bf16 %v4420, 0
    %v4471 = vmax.bf16 %v4421, 0
    %v4472 = vmax.bf16 %v4422, 0
    %v4473 = vmax.bf16 %v4423, 0
    %v4474 = vmax.bf16 %v4424, 0
    %v4475 = vmax.bf16 %v4425, 0
    %v4476 = vmax.bf16 %v4426, 0
    %v4477 = vmax.bf16 %v4427, 0
    %v4478 = vmax.bf16 %v4428, 0
    %v4479 = vmax.bf16 %v4429, 0
    %v4480 = vmax.bf16 %v4430, 0
    %v4481 = vmax.bf16 %v4431, 0
    %v4482 = vmax.bf16 %v4432, 0
    %v4483 = vmax.bf16 %v4433, 0
    %v4484 = vmax.bf16 %v4434, 0
    %v4485 = vmax.bf16 %v4435, 0
    %v4486 = vmax.bf16 %v4436, 0
    %v4487 = vmax.bf16 %v4437, 0
    %v4488 = vmax.bf16 %v4438, 0
    %v4489 = vmax.bf16 %v4439, 0
    %v4490 = vmax.bf16 %v4440, 0
    %v4491 = vmax.bf16 %v4441, 0
    %v4492 = vmax.bf16 %v4442, 0
    %s4493 = scalar_lea.vmem %s3, 1024
    %v4494 = vld [vmem:[%s4493] sm:$0xf]
    %v4495 = vld [vmem:[%s4493 + $0x4] sm:$0xf]
    %v4496 = vld [vmem:[%s4493 + $0x8] sm:$0xf]
    %v4497 = vld [vmem:[%s4493 + $0xc] sm:$0xf]
    %v4498 = vld [vmem:[%s4493 + $0x10] sm:$0xf]
    %v4499 = vld [vmem:[%s4493 + $0x14] sm:$0xf]
    %v4500 = vld [vmem:[%s4493 + $0x18] sm:$0xf]
    %v4501 = vld [vmem:[%s4493 + $0x1c] sm:$0xf]
    %v4502 = vld [vmem:[%s4493 + $0x20] sm:$0xf]
    %v4503 = vld [vmem:[%s4493 + $0x24] sm:$0xf]
    %v4504 = vld [vmem:[%s4493 + $0x28] sm:$0xf]
    %v4505 = vld [vmem:[%s4493 + $0x2c] sm:$0xf]
    %v4506 = vld [vmem:[%s4493 + $0x30] sm:$0xf]
    %v4507 = vld [vmem:[%s4493 + $0x34] sm:$0xf]
    %v4508 = vld [vmem:[%s4493 + $0x38] sm:$0xf]
    %v4509 = vld [vmem:[%s4493 + $0x3c] sm:$0xf]
    %v4510 = vld [vmem:[%s4493 + $0x40] sm:$0xf]
    %v4511 = vld [vmem:[%s4493 + $0x44] sm:$0xf]
    %v4512 = vld [vmem:[%s4493 + $0x48] sm:$0xf]
    %v4513 = vld [vmem:[%s4493 + $0x4c] sm:$0xf]
    %v4514 = vld [vmem:[%s4493 + $0x50] sm:$0xf]
    %v4515 = vld [vmem:[%s4493 + $0x54] sm:$0xf]
    %v4516 = vld [vmem:[%s4493 + $0x58] sm:$0xf]
    %v4517 = vld [vmem:[%s4493 + $0x5c] sm:$0xf]
    %v4518 = vld [vmem:[%s4493 + $0x60] sm:$0xf]
    %v4519 = vld [vmem:[%s4493 + $0x64] sm:$0xf]
    %v4520 = vld [vmem:[%s4493 + $0x68] sm:$0xf]
    %v4521 = vld [vmem:[%s4493 + $0x6c] sm:$0xf]
    %v4522 = vld [vmem:[%s4493 + $0x70] sm:$0xf]
    %v4523 = vld [vmem:[%s4493 + $0x74] sm:$0xf]
    %v4524 = vld [vmem:[%s4493 + $0x78] sm:$0xf]
    %v4525 = vld [vmem:[%s4493 + $0x7c] sm:$0xf]
    %v4526 = vld [vmem:[%s4493 + $0x80] sm:$0xf]
    %v4527 = vld [vmem:[%s4493 + $0x84] sm:$0xf]
    %v4528 = vld [vmem:[%s4493 + $0x88] sm:$0xf]
    %v4529 = vld [vmem:[%s4493 + $0x8c] sm:$0xf]
    %v4530 = vld [vmem:[%s4493 + $0x90] sm:$0xf]
    %v4531 = vld [vmem:[%s4493 + $0x94] sm:$0xf]
    %v4532 = vld [vmem:[%s4493 + $0x98] sm:$0xf]
    %v4533 = vld [vmem:[%s4493 + $0x9c] sm:$0xf]
    %v4534 = vld [vmem:[%s4493 + $0xa0] sm:$0xf]
    %v4535 = vld [vmem:[%s4493 + $0xa4] sm:$0xf]
    %v4536 = vld [vmem:[%s4493 + $0xa8] sm:$0xf]
    %v4537 = vld [vmem:[%s4493 + $0xac] sm:$0xf]
    %v4538 = vld [vmem:[%s4493 + $0xb0] sm:$0xf]
    %v4539 = vld [vmem:[%s4493 + $0xb4] sm:$0xf]
    %v4540 = vld [vmem:[%s4493 + $0xb8] sm:$0xf]
    %v4541 = vld [vmem:[%s4493 + $0xbc] sm:$0xf]
    %v4542 = vld [vmem:[%s4493 + $0xc0] sm:$0xf]
    %v4543 = vld [vmem:[%s4493 + $0xc4] sm:$0xf]
    %v4544 = vld [vmem:[%s4493 + $0xc8] sm:$0xf]
    %v4545 = vld [vmem:[%s4493 + $0xcc] sm:$0xf]
    %v4546 = vld [vmem:[%s4493 + $0xd0] sm:$0xf]
    %v4547 = vld [vmem:[%s4493 + $0xd4] sm:$0xf]
    %v4548 = vld [vmem:[%s4493 + $0xd8] sm:$0xf]
    %v4549 = vld [vmem:[%s4493 + $0xdc] sm:$0xf]
    %v4550 = vld [vmem:[%s4493 + $0xe0] sm:$0xf]
    %v4551 = vld [vmem:[%s4493 + $0xe4] sm:$0xf]
    %v4552 = vld [vmem:[%s4493 + $0xe8] sm:$0xf]
    %v4553 = vld [vmem:[%s4493 + $0xec] sm:$0xf]
    %v4554 = vld [vmem:[%s4493 + $0xf0] sm:$0xf]
    %v4555 = vld [vmem:[%s4493 + $0xf4] sm:$0xf]
    %v4556 = vld [vmem:[%s4493 + $0xf8] sm:$0xf]
    %v4557 = vld [vmem:[%s4493 + $0xfc] sm:$0xf]
    %v4608 = vunpack.c.l.b16 %v4443
    %v4609 = vunpack.c.h.b16 %v4443
    %v4610 = vunpack.c.l.b16 %v4444
    %v4611 = vunpack.c.h.b16 %v4444
    %v4612 = vunpack.c.l.b16 %v4445
    %v4613 = vunpack.c.h.b16 %v4445
    %v4614 = vunpack.c.l.b16 %v4446
    %v4615 = vunpack.c.h.b16 %v4446
    %v4616 = vunpack.c.l.b16 %v4447
    %v4617 = vunpack.c.h.b16 %v4447
    %v4618 = vunpack.c.l.b16 %v4448
    %v4619 = vunpack.c.h.b16 %v4448
    %v4620 = vunpack.c.l.b16 %v4449
    %v4621 = vunpack.c.h.b16 %v4449
    %v4622 = vunpack.c.l.b16 %v4450
    %v4623 = vunpack.c.h.b16 %v4450
    %v4624 = vunpack.c.l.b16 %v4451
    %v4625 = vunpack.c.h.b16 %v4451
    %v4626 = vunpack.c.l.b16 %v4452
    %v4627 = vunpack.c.h.b16 %v4452
    %v4628 = vunpack.c.l.b16 %v4453
    %v4629 = vunpack.c.h.b16 %v4453
    %v4630 = vunpack.c.l.b16 %v4454
    %v4631 = vunpack.c.h.b16 %v4454
    %v4632 = vunpack.c.l.b16 %v4455
    %v4633 = vunpack.c.h.b16 %v4455
    %v4634 = vunpack.c.l.b16 %v4456
    %v4635 = vunpack.c.h.b16 %v4456
    %v4636 = vunpack.c.l.b16 %v4457
    %v4637 = vunpack.c.h.b16 %v4457
    %v4638 = vunpack.c.l.b16 %v4458
    %v4639 = vunpack.c.h.b16 %v4458
    %v4640 = vunpack.c.l.b16 %v4459
    %v4641 = vunpack.c.h.b16 %v4459
    %v4642 = vunpack.c.l.b16 %v4460
    %v4643 = vunpack.c.h.b16 %v4460
    %v4644 = vunpack.c.l.b16 %v4461
    %v4645 = vunpack.c.h.b16 %v4461
    %v4646 = vunpack.c.l.b16 %v4462
    %v4647 = vunpack.c.h.b16 %v4462
    %v4648 = vunpack.c.l.b16 %v4463
    %v4649 = vunpack.c.h.b16 %v4463
    %v4650 = vunpack.c.l.b16 %v4464
    %v4651 = vunpack.c.h.b16 %v4464
    %v4652 = vunpack.c.l.b16 %v4465
    %v4653 = vunpack.c.h.b16 %v4465
    %v4654 = vunpack.c.l.b16 %v4466
    %v4655 = vunpack.c.h.b16 %v4466
    %v4656 = vunpack.c.l.b16 %v4467
    %v4657 = vunpack.c.h.b16 %v4467
    %v4658 = vunpack.c.l.b16 %v4468
    %v4659 = vunpack.c.h.b16 %v4468
    %v4660 = vunpack.c.l.b16 %v4469
    %v4661 = vunpack.c.h.b16 %v4469
    %v4662 = vunpack.c.l.b16 %v4470
    %v4663 = vunpack.c.h.b16 %v4470
    %v4664 = vunpack.c.l.b16 %v4471
    %v4665 = vunpack.c.h.b16 %v4471
    %v4666 = vunpack.c.l.b16 %v4472
    %v4667 = vunpack.c.h.b16 %v4472
    %v4668 = vunpack.c.l.b16 %v4473
    %v4669 = vunpack.c.h.b16 %v4473
    %v4670 = vunpack.c.l.b16 %v4474
    %v4671 = vunpack.c.h.b16 %v4474
    %v4672 = vunpack.c.l.b16 %v4475
    %v4673 = vunpack.c.h.b16 %v4475
    %v4674 = vunpack.c.l.b16 %v4476
    %v4675 = vunpack.c.h.b16 %v4476
    %v4676 = vunpack.c.l.b16 %v4477
    %v4677 = vunpack.c.h.b16 %v4477
    %v4678 = vunpack.c.l.b16 %v4478
    %v4679 = vunpack.c.h.b16 %v4478
    %v4680 = vunpack.c.l.b16 %v4479
    %v4681 = vunpack.c.h.b16 %v4479
    %v4682 = vunpack.c.l.b16 %v4480
    %v4683 = vunpack.c.h.b16 %v4480
    %v4684 = vunpack.c.l.b16 %v4481
    %v4685 = vunpack.c.h.b16 %v4481
    %v4686 = vunpack.c.l.b16 %v4482
    %v4687 = vunpack.c.h.b16 %v4482
    %v4688 = vunpack.c.l.b16 %v4483
    %v4689 = vunpack.c.h.b16 %v4483
    %v4690 = vunpack.c.l.b16 %v4484
    %v4691 = vunpack.c.h.b16 %v4484
    %v4692 = vunpack.c.l.b16 %v4485
    %v4693 = vunpack.c.h.b16 %v4485
    %v4694 = vunpack.c.l.b16 %v4486
    %v4695 = vunpack.c.h.b16 %v4486
    %v4696 = vunpack.c.l.b16 %v4487
    %v4697 = vunpack.c.h.b16 %v4487
    %v4698 = vunpack.c.l.b16 %v4488
    %v4699 = vunpack.c.h.b16 %v4488
    %v4700 = vunpack.c.l.b16 %v4489
    %v4701 = vunpack.c.h.b16 %v4489
    %v4702 = vunpack.c.l.b16 %v4490
    %v4703 = vunpack.c.h.b16 %v4490
    %v4704 = vunpack.c.l.b16 %v4491
    %v4705 = vunpack.c.h.b16 %v4491
    %v4706 = vunpack.c.l.b16 %v4492
    %v4707 = vunpack.c.h.b16 %v4492
    %v4708 = vpack.c.b16 %v4612, %v4608
    %v4709 = vpack.c.b16 %v4613, %v4609
    %v4710 = vpack.c.b16 %v4614, %v4610
    %v4711 = vpack.c.b16 %v4615, %v4611
    %v4712 = vpack.c.b16 %v4620, %v4616
    %v4713 = vpack.c.b16 %v4621, %v4617
    %v4714 = vpack.c.b16 %v4622, %v4618
    %v4715 = vpack.c.b16 %v4623, %v4619
    %v4716 = vpack.c.b16 %v4628, %v4624
    %v4717 = vpack.c.b16 %v4629, %v4625
    %v4718 = vpack.c.b16 %v4630, %v4626
    %v4719 = vpack.c.b16 %v4631, %v4627
    %v4720 = vpack.c.b16 %v4636, %v4632
    %v4721 = vpack.c.b16 %v4637, %v4633
    %v4722 = vpack.c.b16 %v4638, %v4634
    %v4723 = vpack.c.b16 %v4639, %v4635
    %v4724 = vpack.c.b16 %v4644, %v4640
    %v4725 = vpack.c.b16 %v4645, %v4641
    %v4726 = vpack.c.b16 %v4646, %v4642
    %v4727 = vpack.c.b16 %v4647, %v4643
    %v4728 = vpack.c.b16 %v4652, %v4648
    %v4729 = vpack.c.b16 %v4653, %v4649
    %v4730 = vpack.c.b16 %v4654, %v4650
    %v4731 = vpack.c.b16 %v4655, %v4651
    %v4732 = vpack.c.b16 %v4660, %v4656
    %v4733 = vpack.c.b16 %v4661, %v4657
    %v4734 = vpack.c.b16 %v4662, %v4658
    %v4735 = vpack.c.b16 %v4663, %v4659
    %v4736 = vpack.c.b16 %v4668, %v4664
    %v4737 = vpack.c.b16 %v4669, %v4665
    %v4738 = vpack.c.b16 %v4670, %v4666
    %v4739 = vpack.c.b16 %v4671, %v4667
    %v4740 = vpack.c.b16 %v4676, %v4672
    %v4741 = vpack.c.b16 %v4677, %v4673
    %v4742 = vpack.c.b16 %v4678, %v4674
    %v4743 = vpack.c.b16 %v4679, %v4675
    %v4744 = vpack.c.b16 %v4684, %v4680
    %v4745 = vpack.c.b16 %v4685, %v4681
    %v4746 = vpack.c.b16 %v4686, %v4682
    %v4747 = vpack.c.b16 %v4687, %v4683
    %v4748 = vpack.c.b16 %v4692, %v4688
    %v4749 = vpack.c.b16 %v4693, %v4689
    %v4750 = vpack.c.b16 %v4694, %v4690
    %v4751 = vpack.c.b16 %v4695, %v4691
    %v4752 = vpack.c.b16 %v4700, %v4696
    %v4753 = vpack.c.b16 %v4701, %v4697
    %v4754 = vpack.c.b16 %v4702, %v4698
    %v4755 = vpack.c.b16 %v4703, %v4699
    %v4756 = vpack.c.b16 %v4704, %v4704
    %v4757 = vpack.c.b16 %v4705, %v4705
    %v4758 = vpack.c.b16 %v4706, %v4706
    %v4759 = vpack.c.b16 %v4707, %v4707
    %v4876 = vunpack.c.l.b16 %v4494
    %v4877 = vunpack.c.l.b16 %v4495
    %v4878 = vunpack.c.l.b16 %v4496
    %v4879 = vunpack.c.l.b16 %v4497
    %v4880 = vunpack.c.l.b16 %v4498
    %v4881 = vunpack.c.l.b16 %v4499
    %v4882 = vunpack.c.l.b16 %v4500
    %v4883 = vunpack.c.l.b16 %v4501
    %v4884 = vunpack.c.l.b16 %v4502
    %v4885 = vunpack.c.l.b16 %v4503
    %v4886 = vunpack.c.l.b16 %v4504
    %v4887 = vunpack.c.l.b16 %v4505
    %v4888 = vunpack.c.l.b16 %v4506
    %v4889 = vunpack.c.l.b16 %v4507
    %v4890 = vunpack.c.l.b16 %v4508
    %v4891 = vunpack.c.l.b16 %v4509
    %v4892 = vunpack.c.l.b16 %v4510
    %v4893 = vunpack.c.l.b16 %v4511
    %v4894 = vunpack.c.l.b16 %v4512
    %v4895 = vunpack.c.l.b16 %v4513
    %v4896 = vunpack.c.l.b16 %v4514
    %v4897 = vunpack.c.l.b16 %v4515
    %v4898 = vunpack.c.l.b16 %v4516
    %v4899 = vunpack.c.l.b16 %v4517
    %v4900 = vunpack.c.l.b16 %v4518
    %v4901 = vunpack.c.l.b16 %v4519
    %v4902 = vunpack.c.l.b16 %v4520
    %v4903 = vunpack.c.l.b16 %v4521
    %v4904 = vunpack.c.l.b16 %v4522
    %v4905 = vunpack.c.l.b16 %v4523
    %v4906 = vunpack.c.l.b16 %v4524
    %v4907 = vunpack.c.l.b16 %v4525
    %v4908 = vunpack.c.l.b16 %v4526
    %v4909 = vunpack.c.l.b16 %v4527
    %v4910 = vunpack.c.l.b16 %v4528
    %v4911 = vunpack.c.l.b16 %v4529
    %v4912 = vunpack.c.l.b16 %v4530
    %v4913 = vunpack.c.l.b16 %v4531
    %v4914 = vunpack.c.l.b16 %v4532
    %v4915 = vunpack.c.l.b16 %v4533
    %v4916 = vunpack.c.l.b16 %v4534
    %v4917 = vunpack.c.l.b16 %v4535
    %v4918 = vunpack.c.l.b16 %v4536
    %v4919 = vunpack.c.l.b16 %v4537
    %v4920 = vunpack.c.l.b16 %v4538
    %v4921 = vunpack.c.l.b16 %v4539
    %v4922 = vunpack.c.l.b16 %v4540
    %v4923 = vunpack.c.l.b16 %v4541
    %v4924 = vunpack.c.l.b16 %v4542
    %v4925 = vunpack.c.l.b16 %v4543
    %v4926 = vunpack.c.l.b16 %v4544
    %v4927 = vunpack.c.l.b16 %v4545
    %v4928 = vunpack.c.l.b16 %v4546
    %v4929 = vunpack.c.l.b16 %v4547
    %v4930 = vunpack.c.l.b16 %v4548
    %v4931 = vunpack.c.l.b16 %v4549
    %v4932 = vunpack.c.l.b16 %v4550
    %v4933 = vunpack.c.l.b16 %v4551
    %v4934 = vunpack.c.l.b16 %v4552
    %v4935 = vunpack.c.l.b16 %v4553
    %v4936 = vunpack.c.l.b16 %v4554
    %v4937 = vunpack.c.l.b16 %v4555
    %v4938 = vunpack.c.l.b16 %v4556
    %v4939 = vunpack.c.l.b16 %v4557
    %v4940 = vpack.c.b16 %v4877, %v4876
    %v4941 = vpack.c.b16 %v4879, %v4878
    %v4942 = vpack.c.b16 %v4881, %v4880
    %v4943 = vpack.c.b16 %v4883, %v4882
    %v4944 = vpack.c.b16 %v4885, %v4884
    %v4945 = vpack.c.b16 %v4887, %v4886
    %v4946 = vpack.c.b16 %v4889, %v4888
    %v4947 = vpack.c.b16 %v4891, %v4890
    %v4948 = vpack.c.b16 %v4893, %v4892
    %v4949 = vpack.c.b16 %v4895, %v4894
    %v4950 = vpack.c.b16 %v4897, %v4896
    %v4951 = vpack.c.b16 %v4899, %v4898
    %v4952 = vpack.c.b16 %v4901, %v4900
    %v4953 = vpack.c.b16 %v4903, %v4902
    %v4954 = vpack.c.b16 %v4905, %v4904
    %v4955 = vpack.c.b16 %v4907, %v4906
    %v4956 = vpack.c.b16 %v4909, %v4908
    %v4957 = vpack.c.b16 %v4911, %v4910
    %v4958 = vpack.c.b16 %v4913, %v4912
    %v4959 = vpack.c.b16 %v4915, %v4914
    %v4960 = vpack.c.b16 %v4917, %v4916
    %v4961 = vpack.c.b16 %v4919, %v4918
    %v4962 = vpack.c.b16 %v4921, %v4920
    %v4963 = vpack.c.b16 %v4923, %v4922
    %v4964 = vpack.c.b16 %v4925, %v4924
    %v4965 = vpack.c.b16 %v4927, %v4926
    %v4966 = vpack.c.b16 %v4929, %v4928
    %v4967 = vpack.c.b16 %v4931, %v4930
    %v4968 = vpack.c.b16 %v4933, %v4932
    %v4969 = vpack.c.b16 %v4935, %v4934
    %v4970 = vpack.c.b16 %v4937, %v4936
    %v4971 = vpack.c.b16 %v4939, %v4938
    %5004 = vmatprep.subr.bf16.mxu0 0
    %5005 = vmatpush1.bf16.msra.mxu0 %v4947
    %5006 = vmatprep.subr.bf16.mxu0 0
    %5007 = vmatpush1.bf16.msra.mxu0 %v4946
    %5008 = vmatprep.subr.bf16.mxu0 0
    %5009 = vmatpush1.bf16.msra.mxu0 %v4945
    %5010 = vmatprep.subr.bf16.mxu0 0
    %5011 = vmatpush1.bf16.msra.mxu0 %v4944
    %5012 = vmatprep.subr.bf16.mxu0 0
    %5013 = vmatpush1.bf16.msra.mxu0 %v4943
    %5014 = vmatprep.subr.bf16.mxu0 0
    %5015 = vmatpush1.bf16.msra.mxu0 %v4942
    %5016 = vmatprep.subr.bf16.mxu0 0
    %5017 = vmatpush1.bf16.msra.mxu0 %v4941
    %5018 = vmatprep.subr.bf16.mxu0 0
    %5019 = vmatpush1.bf16.msra.mxu0 %v4940
    %5020 = vmatprep.subr.bf16.mxu0 0
    %5021 = vmatpush2.bf16.msra.mxu0 %v4955
    %5022 = vmatprep.subr.bf16.mxu0 0
    %5023 = vmatpush2.bf16.msra.mxu0 %v4954
    %5024 = vmatprep.subr.bf16.mxu0 0
    %5025 = vmatpush2.bf16.msra.mxu0 %v4953
    %5026 = vmatprep.subr.bf16.mxu0 0
    %5027 = vmatpush2.bf16.msra.mxu0 %v4952
    %5028 = vmatprep.subr.bf16.mxu0 0
    %5029 = vmatpush2.bf16.msra.mxu0 %v4951
    %5030 = vmatprep.subr.bf16.mxu0 0
    %5031 = vmatpush2.bf16.msra.mxu0 %v4950
    %5032 = vmatprep.subr.bf16.mxu0 0
    %5033 = vmatpush2.bf16.msra.mxu0 %v4949
    %5034 = vmatprep.subr.bf16.mxu0 0
    %5035 = vmatpush2.bf16.msra.mxu0 %v4948
    %5036 = vmatprep.mubr.bf16.mxu0 %v4709
    %5037 = vmatmul.mubr.bf16.gmra.mxu0 %v4708
    %v5038 = vpop.f32.mrf.mxu0
    %v5039 = vadd.f32 0.0, %v5038
    %v5040 = vpop.f32.mrf.mxu0
    %v5041 = vpop.f32.mrf.mxu0
    %v5042 = vadd.f32 0.0, %v5041
    %v5043 = vpop.f32.mrf.mxu0
    %5044 = vmatprep.mubr.bf16.mxu0 %v4713
    %5045 = vmatmul.mubr.bf16.gmra.mxu0 %v4712
    %v5046 = vpop.f32.mrf.mxu0
    %v5047 = vadd.f32 0.0, %v5046
    %v5048 = vpop.f32.mrf.mxu0
    %v5049 = vpop.f32.mrf.mxu0
    %v5050 = vadd.f32 0.0, %v5049
    %v5051 = vpop.f32.mrf.mxu0
    %5052 = vmatprep.mubr.bf16.mxu0 %v4717
    %5053 = vmatmul.mubr.bf16.gmra.mxu0 %v4716
    %v5054 = vpop.f32.mrf.mxu0
    %v5055 = vadd.f32 0.0, %v5054
    %v5056 = vpop.f32.mrf.mxu0
    %v5057 = vpop.f32.mrf.mxu0
    %v5058 = vadd.f32 0.0, %v5057
    %v5059 = vpop.f32.mrf.mxu0
    %5060 = vmatprep.mubr.bf16.mxu0 %v4721
    %5061 = vmatmul.mubr.bf16.gmra.mxu0 %v4720
    %v5062 = vpop.f32.mrf.mxu0
    %v5063 = vadd.f32 0.0, %v5062
    %v5064 = vpop.f32.mrf.mxu0
    %v5065 = vpop.f32.mrf.mxu0
    %v5066 = vadd.f32 0.0, %v5065
    %v5067 = vpop.f32.mrf.mxu0
    %5068 = vmatprep.mubr.bf16.mxu0 %v4725
    %5069 = vmatmul.mubr.bf16.gmra.mxu0 %v4724
    %v5070 = vpop.f32.mrf.mxu0
    %v5071 = vadd.f32 0.0, %v5070
    %v5072 = vpop.f32.mrf.mxu0
    %v5073 = vpop.f32.mrf.mxu0
    %v5074 = vadd.f32 0.0, %v5073
    %v5075 = vpop.f32.mrf.mxu0
    %5076 = vmatprep.mubr.bf16.mxu0 %v4729
    %5077 = vmatmul.mubr.bf16.gmra.mxu0 %v4728
    %v5078 = vpop.f32.mrf.mxu0
    %v5079 = vadd.f32 0.0, %v5078
    %v5080 = vpop.f32.mrf.mxu0
    %v5081 = vpop.f32.mrf.mxu0
    %v5082 = vadd.f32 0.0, %v5081
    %v5083 = vpop.f32.mrf.mxu0
    %5084 = vmatprep.mubr.bf16.mxu0 %v4733
    %5085 = vmatmul.mubr.bf16.gmra.mxu0 %v4732
    %v5086 = vpop.f32.mrf.mxu0
    %v5087 = vadd.f32 0.0, %v5086
    %v5088 = vpop.f32.mrf.mxu0
    %v5089 = vpop.f32.mrf.mxu0
    %v5090 = vadd.f32 0.0, %v5089
    %v5091 = vpop.f32.mrf.mxu0
    %5092 = vmatprep.mubr.bf16.mxu0 %v4737
    %5093 = vmatmul.mubr.bf16.gmra.mxu0 %v4736
    %v5094 = vpop.f32.mrf.mxu0
    %v5095 = vadd.f32 0.0, %v5094
    %v5096 = vpop.f32.mrf.mxu0
    %v5097 = vpop.f32.mrf.mxu0
    %v5098 = vadd.f32 0.0, %v5097
    %v5099 = vpop.f32.mrf.mxu0
    %5100 = vmatprep.mubr.bf16.mxu0 %v4741
    %5101 = vmatmul.mubr.bf16.gmra.mxu0 %v4740
    %v5102 = vpop.f32.mrf.mxu0
    %v5103 = vadd.f32 0.0, %v5102
    %v5104 = vpop.f32.mrf.mxu0
    %v5105 = vpop.f32.mrf.mxu0
    %v5106 = vadd.f32 0.0, %v5105
    %v5107 = vpop.f32.mrf.mxu0
    %5108 = vmatprep.mubr.bf16.mxu0 %v4745
    %5109 = vmatmul.mubr.bf16.gmra.mxu0 %v4744
    %v5110 = vpop.f32.mrf.mxu0
    %v5111 = vadd.f32 0.0, %v5110
    %v5112 = vpop.f32.mrf.mxu0
    %v5113 = vpop.f32.mrf.mxu0
    %v5114 = vadd.f32 0.0, %v5113
    %v5115 = vpop.f32.mrf.mxu0
    %5116 = vmatprep.mubr.bf16.mxu0 %v4749
    %5117 = vmatmul.mubr.bf16.gmra.mxu0 %v4748
    %v5118 = vpop.f32.mrf.mxu0
    %v5119 = vadd.f32 0.0, %v5118
    %v5120 = vpop.f32.mrf.mxu0
    %v5121 = vpop.f32.mrf.mxu0
    %v5122 = vadd.f32 0.0, %v5121
    %v5123 = vpop.f32.mrf.mxu0
    %5124 = vmatprep.mubr.bf16.mxu0 %v4753
    %5125 = vmatmul.mubr.bf16.gmra.mxu0 %v4752
    %v5126 = vpop.f32.mrf.mxu0
    %v5127 = vadd.f32 0.0, %v5126
    %v5128 = vpop.f32.mrf.mxu0
    %v5129 = vpop.f32.mrf.mxu0
    %v5130 = vadd.f32 0.0, %v5129
    %v5131 = vpop.f32.mrf.mxu0
    %5132 = vmatprep.mubr.bf16.mxu0 %v4757
    %5133 = vmatmul.mubr.bf16.gmra.mxu0 %v4756
    %v5134 = vpop.f32.mrf.mxu0
    %v5135 = vadd.f32 0.0, %v5134
    %v5136 = vpop.f32.mrf.mxu0
    %v5137 = vpop.f32.mrf.mxu0
    %v5138 = vpop.f32.mrf.mxu0
    %5139 = vdwg.mxu0
    %5140 = vmatprep.subr.bf16.mxu0 0
    %5141 = vmatpush1.bf16.msra.mxu0 %v4963
    %5142 = vmatprep.subr.bf16.mxu0 0
    %5143 = vmatpush1.bf16.msra.mxu0 %v4962
    %5144 = vmatprep.subr.bf16.mxu0 0
    %5145 = vmatpush1.bf16.msra.mxu0 %v4961
    %5146 = vmatprep.subr.bf16.mxu0 0
    %5147 = vmatpush1.bf16.msra.mxu0 %v4960
    %5148 = vmatprep.subr.bf16.mxu0 0
    %5149 = vmatpush1.bf16.msra.mxu0 %v4959
    %5150 = vmatprep.subr.bf16.mxu0 0
    %5151 = vmatpush1.bf16.msra.mxu0 %v4958
    %5152 = vmatprep.subr.bf16.mxu0 0
    %5153 = vmatpush1.bf16.msra.mxu0 %v4957
    %5154 = vmatprep.subr.bf16.mxu0 0
    %5155 = vmatpush1.bf16.msra.mxu0 %v4956
    %5156 = vmatprep.subr.bf16.mxu0 0
    %5157 = vmatpush2.bf16.msra.mxu0 %v4971
    %5158 = vmatprep.subr.bf16.mxu0 0
    %5159 = vmatpush2.bf16.msra.mxu0 %v4970
    %5160 = vmatprep.subr.bf16.mxu0 0
    %5161 = vmatpush2.bf16.msra.mxu0 %v4969
    %5162 = vmatprep.subr.bf16.mxu0 0
    %5163 = vmatpush2.bf16.msra.mxu0 %v4968
    %5164 = vmatprep.subr.bf16.mxu0 0
    %5165 = vmatpush2.bf16.msra.mxu0 %v4967
    %5166 = vmatprep.subr.bf16.mxu0 0
    %5167 = vmatpush2.bf16.msra.mxu0 %v4966
    %5168 = vmatprep.subr.bf16.mxu0 0
    %5169 = vmatpush2.bf16.msra.mxu0 %v4965
    %5170 = vmatprep.subr.bf16.mxu0 0
    %5171 = vmatpush2.bf16.msra.mxu0 %v4964
    %5172 = vmatprep.mubr.bf16.mxu0 %v4711
    %5173 = vmatmul.mubr.bf16.gmra.mxu0 %v4710
    %v5174 = vpop.f32.mrf.mxu0
    %v5175 = vadd.f32 %v5039, %v5174
    %v5176 = vpop.f32.mrf.mxu0
    %v5177 = vpop.f32.mrf.mxu0
    %v5178 = vadd.f32 %v5042, %v5177
    %v5179 = vpop.f32.mrf.mxu0
    %5180 = vmatprep.mubr.bf16.mxu0 %v4715
    %5181 = vmatmul.mubr.bf16.gmra.mxu0 %v4714
    %v5182 = vpop.f32.mrf.mxu0
    %v5183 = vadd.f32 %v5047, %v5182
    %v5184 = vpop.f32.mrf.mxu0
    %v5185 = vpop.f32.mrf.mxu0
    %v5186 = vadd.f32 %v5050, %v5185
    %v5187 = vpop.f32.mrf.mxu0
    %5188 = vmatprep.mubr.bf16.mxu0 %v4719
    %5189 = vmatmul.mubr.bf16.gmra.mxu0 %v4718
    %v5190 = vpop.f32.mrf.mxu0
    %v5191 = vadd.f32 %v5055, %v5190
    %v5192 = vpop.f32.mrf.mxu0
    %v5193 = vpop.f32.mrf.mxu0
    %v5194 = vadd.f32 %v5058, %v5193
    %v5195 = vpop.f32.mrf.mxu0
    %5196 = vmatprep.mubr.bf16.mxu0 %v4723
    %5197 = vmatmul.mubr.bf16.gmra.mxu0 %v4722
    %v5198 = vpop.f32.mrf.mxu0
    %v5199 = vadd.f32 %v5063, %v5198
    %v5200 = vpop.f32.mrf.mxu0
    %v5201 = vpop.f32.mrf.mxu0
    %v5202 = vadd.f32 %v5066, %v5201
    %v5203 = vpop.f32.mrf.mxu0
    %5204 = vmatprep.mubr.bf16.mxu0 %v4727
    %5205 = vmatmul.mubr.bf16.gmra.mxu0 %v4726
    %v5206 = vpop.f32.mrf.mxu0
    %v5207 = vadd.f32 %v5071, %v5206
    %v5208 = vpop.f32.mrf.mxu0
    %v5209 = vpop.f32.mrf.mxu0
    %v5210 = vadd.f32 %v5074, %v5209
    %v5211 = vpop.f32.mrf.mxu0
    %5212 = vmatprep.mubr.bf16.mxu0 %v4731
    %5213 = vmatmul.mubr.bf16.gmra.mxu0 %v4730
    %v5214 = vpop.f32.mrf.mxu0
    %v5215 = vadd.f32 %v5079, %v5214
    %v5216 = vpop.f32.mrf.mxu0
    %v5217 = vpop.f32.mrf.mxu0
    %v5218 = vadd.f32 %v5082, %v5217
    %v5219 = vpop.f32.mrf.mxu0
    %5220 = vmatprep.mubr.bf16.mxu0 %v4735
    %5221 = vmatmul.mubr.bf16.gmra.mxu0 %v4734
    %v5222 = vpop.f32.mrf.mxu0
    %v5223 = vadd.f32 %v5087, %v5222
    %v5224 = vpop.f32.mrf.mxu0
    %v5225 = vpop.f32.mrf.mxu0
    %v5226 = vadd.f32 %v5090, %v5225
    %v5227 = vpop.f32.mrf.mxu0
    %5228 = vmatprep.mubr.bf16.mxu0 %v4739
    %5229 = vmatmul.mubr.bf16.gmra.mxu0 %v4738
    %v5230 = vpop.f32.mrf.mxu0
    %v5231 = vadd.f32 %v5095, %v5230
    %v5232 = vpop.f32.mrf.mxu0
    %v5233 = vpop.f32.mrf.mxu0
    %v5234 = vadd.f32 %v5098, %v5233
    %v5235 = vpop.f32.mrf.mxu0
    %5236 = vmatprep.mubr.bf16.mxu0 %v4743
    %5237 = vmatmul.mubr.bf16.gmra.mxu0 %v4742
    %v5238 = vpop.f32.mrf.mxu0
    %v5239 = vadd.f32 %v5103, %v5238
    %v5240 = vpop.f32.mrf.mxu0
    %v5241 = vpop.f32.mrf.mxu0
    %v5242 = vadd.f32 %v5106, %v5241
    %v5243 = vpop.f32.mrf.mxu0
    %5244 = vmatprep.mubr.bf16.mxu0 %v4747
    %5245 = vmatmul.mubr.bf16.gmra.mxu0 %v4746
    %v5246 = vpop.f32.mrf.mxu0
    %v5247 = vadd.f32 %v5111, %v5246
    %v5248 = vpop.f32.mrf.mxu0
    %v5249 = vpop.f32.mrf.mxu0
    %v5250 = vadd.f32 %v5114, %v5249
    %v5251 = vpop.f32.mrf.mxu0
    %5252 = vmatprep.mubr.bf16.mxu0 %v4751
    %5253 = vmatmul.mubr.bf16.gmra.mxu0 %v4750
    %v5254 = vpop.f32.mrf.mxu0
    %v5255 = vadd.f32 %v5119, %v5254
    %v5256 = vpop.f32.mrf.mxu0
    %v5257 = vpop.f32.mrf.mxu0
    %v5258 = vadd.f32 %v5122, %v5257
    %v5259 = vpop.f32.mrf.mxu0
    %5260 = vmatprep.mubr.bf16.mxu0 %v4755
    %5261 = vmatmul.mubr.bf16.gmra.mxu0 %v4754
    %v5262 = vpop.f32.mrf.mxu0
    %v5263 = vadd.f32 %v5127, %v5262
    %v5264 = vpop.f32.mrf.mxu0
    %v5265 = vpop.f32.mrf.mxu0
    %v5266 = vadd.f32 %v5130, %v5265
    %v5267 = vpop.f32.mrf.mxu0
    %5268 = vmatprep.mubr.bf16.mxu0 %v4759
    %5269 = vmatmul.mubr.bf16.gmra.mxu0 %v4758
    %v5270 = vpop.f32.mrf.mxu0
    %v5271 = vadd.f32 %v5135, %v5270
    %v5272 = vpop.f32.mrf.mxu0
    %v5273 = vpop.f32.mrf.mxu0
    %v5274 = vpop.f32.mrf.mxu0
    %5275 = vdwg.mxu0
    %v5276 = vadd.f32 %v4214, %v5175
    %v5277 = vadd.f32 %v4215, %v5178
    %v5278 = vadd.f32 %v4216, %v5183
    %v5279 = vadd.f32 %v4217, %v5186
    %v5280 = vadd.f32 %v4218, %v5191
    %v5281 = vadd.f32 %v4219, %v5194
    %v5282 = vadd.f32 %v4220, %v5199
    %v5283 = vadd.f32 %v4221, %v5202
    %v5284 = vadd.f32 %v4222, %v5207
    %v5285 = vadd.f32 %v4223, %v5210
    %v5286 = vadd.f32 %v4224, %v5215
    %v5287 = vadd.f32 %v4225, %v5218
    %v5288 = vadd.f32 %v4226, %v5223
    %v5289 = vadd.f32 %v4227, %v5226
    %v5290 = vadd.f32 %v4228, %v5231
    %v5291 = vadd.f32 %v4229, %v5234
    %v5292 = vadd.f32 %v4230, %v5239
    %v5293 = vadd.f32 %v4231, %v5242
    %v5294 = vadd.f32 %v4232, %v5247
    %v5295 = vadd.f32 %v4233, %v5250
    %v5296 = vadd.f32 %v4234, %v5255
    %v5297 = vadd.f32 %v4235, %v5258
    %v5298 = vadd.f32 %v4236, %v5263
    %v5299 = vadd.f32 %v4237, %v5266
    %v5300 = vadd.f32 %v4238, %v5271
    %v5301 = vshrl.u32 %v4247, 16
    %v5302 = vpack.i.b16 %v5301, %v5301
    %v5304 = vlaneseq
    %v5305 = vshrl.u32 %v5304, 7
    %v5306 = vsub.s32 2, %v5305
    %v5307 = vrot.slane %v5302, %v5306
    %v5308 = vshrl.u32 %v4248, 16
    %v5309 = vpack.i.b16 %v5308, %v5308
    %v5311 = vlaneseq
    %v5312 = vshrl.u32 %v5311, 7
    %v5313 = vsub.s32 2, %v5312
    %v5314 = vrot.slane %v5309, %v5313
    %v5315 = vshrl.u32 %v4249, 16
    %v5316 = vpack.i.b16 %v5315, %v5315
    %v5318 = vlaneseq
    %v5319 = vshrl.u32 %v5318, 7
    %v5320 = vsub.s32 2, %v5319
    %v5321 = vrot.slane %v5316, %v5320
    %v5322 = vshrl.u32 %v4250, 16
    %v5323 = vpack.i.b16 %v5322, %v5322
    %v5325 = vlaneseq
    %v5326 = vshrl.u32 %v5325, 7
    %v5327 = vsub.s32 2, %v5326
    %v5328 = vrot.slane %v5323, %v5327
    %v5333 = vunpack.c.l.b16 %v5307
    %v5334 = vunpack.c.l.b16 %v5314
    %v5335 = vunpack.c.l.b16 %v5321
    %v5336 = vunpack.c.l.b16 %v5328
    %v5337 = vpack.c.b16 %v5334, %v5333
    %v5338 = vpack.c.b16 %v5336, %v5335
    %v5341 = vmul.bf16 %v40, %v5337
    %v5342 = vmul.bf16 %v41, %v5338
    %v5343 = vmul.bf16 %v42, %v5337
    %v5344 = vmul.bf16 %v43, %v5338
    %v5345 = vmul.bf16 %v44, %v5337
    %v5346 = vmul.bf16 %v45, %v5338
    %v5347 = vmul.bf16 %v46, %v5337
    %v5348 = vmul.bf16 %v47, %v5338
    %v5349 = vmul.bf16 %v48, %v5337
    %v5350 = vmul.bf16 %v49, %v5338
    %v5351 = vmul.bf16 %v50, %v5337
    %v5352 = vmul.bf16 %v51, %v5338
    %v5353 = vmul.bf16 %v52, %v5337
    %v5354 = vmul.bf16 %v53, %v5338
    %v5355 = vmul.bf16 %v54, %v5337
    %v5356 = vmul.bf16 %v55, %v5338
    %v5357 = vmul.bf16 %v56, %v5337
    %v5358 = vmul.bf16 %v57, %v5338
    %v5359 = vmul.bf16 %v58, %v5337
    %v5360 = vmul.bf16 %v59, %v5338
    %v5361 = vmul.bf16 %v60, %v5337
    %v5362 = vmul.bf16 %v61, %v5338
    %v5363 = vmul.bf16 %v62, %v5337
    %v5364 = vmul.bf16 %v63, %v5338
    %v5365 = vmul.bf16 %v64, %v5337
    %v5366 = vmul.bf16 %v65, %v5338
    %v5367 = vmul.bf16 %v66, %v5337
    %v5368 = vmul.bf16 %v67, %v5338
    %v5369 = vmul.bf16 %v68, %v5337
    %v5370 = vmul.bf16 %v69, %v5338
    %v5371 = vmul.bf16 %v70, %v5337
    %v5372 = vmul.bf16 %v71, %v5338
    %v5373 = vmul.bf16 %v72, %v5337
    %v5374 = vmul.bf16 %v73, %v5338
    %v5375 = vmul.bf16 %v74, %v5337
    %v5376 = vmul.bf16 %v75, %v5338
    %v5377 = vmul.bf16 %v76, %v5337
    %v5378 = vmul.bf16 %v77, %v5338
    %v5379 = vmul.bf16 %v78, %v5337
    %v5380 = vmul.bf16 %v79, %v5338
    %v5381 = vmul.bf16 %v80, %v5337
    %v5382 = vmul.bf16 %v81, %v5338
    %v5383 = vmul.bf16 %v82, %v5337
    %v5384 = vmul.bf16 %v83, %v5338
    %v5385 = vmul.bf16 %v84, %v5337
    %v5386 = vmul.bf16 %v85, %v5338
    %v5387 = vmul.bf16 %v86, %v5337
    %v5388 = vmul.bf16 %v87, %v5338
    %v5389 = vmul.bf16 %v88, %v5337
    %v5390 = vmul.bf16 %v89, %v5338
    %v5391 = vshrl.u32 %v4349, 16
    %v5392 = vpack.i.b16 %v5391, %v5391
    %v5394 = vlaneseq
    %v5395 = vshrl.u32 %v5394, 7
    %v5396 = vsub.s32 2, %v5395
    %v5397 = vrot.slane %v5392, %v5396
    %v5398 = vshrl.u32 %v4350, 16
    %v5399 = vpack.i.b16 %v5398, %v5398
    %v5401 = vlaneseq
    %v5402 = vshrl.u32 %v5401, 7
    %v5403 = vsub.s32 2, %v5402
    %v5404 = vrot.slane %v5399, %v5403
    %v5405 = vshrl.u32 %v4351, 16
    %v5406 = vpack.i.b16 %v5405, %v5405
    %v5408 = vlaneseq
    %v5409 = vshrl.u32 %v5408, 7
    %v5410 = vsub.s32 2, %v5409
    %v5411 = vrot.slane %v5406, %v5410
    %v5412 = vshrl.u32 %v4352, 16
    %v5413 = vpack.i.b16 %v5412, %v5412
    %v5415 = vlaneseq
    %v5416 = vshrl.u32 %v5415, 7
    %v5417 = vsub.s32 2, %v5416
    %v5418 = vrot.slane %v5413, %v5417
    %v5423 = vunpack.c.l.b16 %v5397
    %v5424 = vunpack.c.l.b16 %v5404
    %v5425 = vunpack.c.l.b16 %v5411
    %v5426 = vunpack.c.l.b16 %v5418
    %v5427 = vpack.c.b16 %v5424, %v5423
    %v5428 = vpack.c.b16 %v5426, %v5425
    %v5431 = vadd.bf16 %v5341, %v5427
    %v5432 = vadd.bf16 %v5342, %v5428
    %v5433 = vadd.bf16 %v5343, %v5427
    %v5434 = vadd.bf16 %v5344, %v5428
    %v5435 = vadd.bf16 %v5345, %v5427
    %v5436 = vadd.bf16 %v5346, %v5428
    %v5437 = vadd.bf16 %v5347, %v5427
    %v5438 = vadd.bf16 %v5348, %v5428
    %v5439 = vadd.bf16 %v5349, %v5427
    %v5440 = vadd.bf16 %v5350, %v5428
    %v5441 = vadd.bf16 %v5351, %v5427
    %v5442 = vadd.bf16 %v5352, %v5428
    %v5443 = vadd.bf16 %v5353, %v5427
    %v5444 = vadd.bf16 %v5354, %v5428
    %v5445 = vadd.bf16 %v5355, %v5427
    %v5446 = vadd.bf16 %v5356, %v5428
    %v5447 = vadd.bf16 %v5357, %v5427
    %v5448 = vadd.bf16 %v5358, %v5428
    %v5449 = vadd.bf16 %v5359, %v5427
    %v5450 = vadd.bf16 %v5360, %v5428
    %v5451 = vadd.bf16 %v5361, %v5427
    %v5452 = vadd.bf16 %v5362, %v5428
    %v5453 = vadd.bf16 %v5363, %v5427
    %v5454 = vadd.bf16 %v5364, %v5428
    %v5455 = vadd.bf16 %v5365, %v5427
    %v5456 = vadd.bf16 %v5366, %v5428
    %v5457 = vadd.bf16 %v5367, %v5427
    %v5458 = vadd.bf16 %v5368, %v5428
    %v5459 = vadd.bf16 %v5369, %v5427
    %v5460 = vadd.bf16 %v5370, %v5428
    %v5461 = vadd.bf16 %v5371, %v5427
    %v5462 = vadd.bf16 %v5372, %v5428
    %v5463 = vadd.bf16 %v5373, %v5427
    %v5464 = vadd.bf16 %v5374, %v5428
    %v5465 = vadd.bf16 %v5375, %v5427
    %v5466 = vadd.bf16 %v5376, %v5428
    %v5467 = vadd.bf16 %v5377, %v5427
    %v5468 = vadd.bf16 %v5378, %v5428
    %v5469 = vadd.bf16 %v5379, %v5427
    %v5470 = vadd.bf16 %v5380, %v5428
    %v5471 = vadd.bf16 %v5381, %v5427
    %v5472 = vadd.bf16 %v5382, %v5428
    %v5473 = vadd.bf16 %v5383, %v5427
    %v5474 = vadd.bf16 %v5384, %v5428
    %v5475 = vadd.bf16 %v5385, %v5427
    %v5476 = vadd.bf16 %v5386, %v5428
    %v5477 = vadd.bf16 %v5387, %v5427
    %v5478 = vadd.bf16 %v5388, %v5428
    %v5479 = vadd.bf16 %v5389, %v5427
    %v5480 = vadd.bf16 %v5390, %v5428
    %v5481 = vmax.bf16 %v5431, 0
    %v5482 = vmax.bf16 %v5432, 0
    %v5483 = vmax.bf16 %v5433, 0
    %v5484 = vmax.bf16 %v5434, 0
    %v5485 = vmax.bf16 %v5435, 0
    %v5486 = vmax.bf16 %v5436, 0
    %v5487 = vmax.bf16 %v5437, 0
    %v5488 = vmax.bf16 %v5438, 0
    %v5489 = vmax.bf16 %v5439, 0
    %v5490 = vmax.bf16 %v5440, 0
    %v5491 = vmax.bf16 %v5441, 0
    %v5492 = vmax.bf16 %v5442, 0
    %v5493 = vmax.bf16 %v5443, 0
    %v5494 = vmax.bf16 %v5444, 0
    %v5495 = vmax.bf16 %v5445, 0
    %v5496 = vmax.bf16 %v5446, 0
    %v5497 = vmax.bf16 %v5447, 0
    %v5498 = vmax.bf16 %v5448, 0
    %v5499 = vmax.bf16 %v5449, 0
    %v5500 = vmax.bf16 %v5450, 0
    %v5501 = vmax.bf16 %v5451, 0
    %v5502 = vmax.bf16 %v5452, 0
    %v5503 = vmax.bf16 %v5453, 0
    %v5504 = vmax.bf16 %v5454, 0
    %v5505 = vmax.bf16 %v5455, 0
    %v5506 = vmax.bf16 %v5456, 0
    %v5507 = vmax.bf16 %v5457, 0
    %v5508 = vmax.bf16 %v5458, 0
    %v5509 = vmax.bf16 %v5459, 0
    %v5510 = vmax.bf16 %v5460, 0
    %v5511 = vmax.bf16 %v5461, 0
    %v5512 = vmax.bf16 %v5462, 0
    %v5513 = vmax.bf16 %v5463, 0
    %v5514 = vmax.bf16 %v5464, 0
    %v5515 = vmax.bf16 %v5465, 0
    %v5516 = vmax.bf16 %v5466, 0
    %v5517 = vmax.bf16 %v5467, 0
    %v5518 = vmax.bf16 %v5468, 0
    %v5519 = vmax.bf16 %v5469, 0
    %v5520 = vmax.bf16 %v5470, 0
    %v5521 = vmax.bf16 %v5471, 0
    %v5522 = vmax.bf16 %v5472, 0
    %v5523 = vmax.bf16 %v5473, 0
    %v5524 = vmax.bf16 %v5474, 0
    %v5525 = vmax.bf16 %v5475, 0
    %v5526 = vmax.bf16 %v5476, 0
    %v5527 = vmax.bf16 %v5477, 0
    %v5528 = vmax.bf16 %v5478, 0
    %v5529 = vmax.bf16 %v5479, 0
    %v5530 = vmax.bf16 %v5480, 0
    %s5531 = scalar_lea.vmem %s3, 1280
    %v5532 = vld [vmem:[%s5531] sm:$0xf]
    %v5533 = vld [vmem:[%s5531 + $0x4] sm:$0xf]
    %v5534 = vld [vmem:[%s5531 + $0x8] sm:$0xf]
    %v5535 = vld [vmem:[%s5531 + $0xc] sm:$0xf]
    %v5536 = vld [vmem:[%s5531 + $0x10] sm:$0xf]
    %v5537 = vld [vmem:[%s5531 + $0x14] sm:$0xf]
    %v5538 = vld [vmem:[%s5531 + $0x18] sm:$0xf]
    %v5539 = vld [vmem:[%s5531 + $0x1c] sm:$0xf]
    %v5540 = vld [vmem:[%s5531 + $0x20] sm:$0xf]
    %v5541 = vld [vmem:[%s5531 + $0x24] sm:$0xf]
    %v5542 = vld [vmem:[%s5531 + $0x28] sm:$0xf]
    %v5543 = vld [vmem:[%s5531 + $0x2c] sm:$0xf]
    %v5544 = vld [vmem:[%s5531 + $0x30] sm:$0xf]
    %v5545 = vld [vmem:[%s5531 + $0x34] sm:$0xf]
    %v5546 = vld [vmem:[%s5531 + $0x38] sm:$0xf]
    %v5547 = vld [vmem:[%s5531 + $0x3c] sm:$0xf]
    %v5548 = vld [vmem:[%s5531 + $0x40] sm:$0xf]
    %v5549 = vld [vmem:[%s5531 + $0x44] sm:$0xf]
    %v5550 = vld [vmem:[%s5531 + $0x48] sm:$0xf]
    %v5551 = vld [vmem:[%s5531 + $0x4c] sm:$0xf]
    %v5552 = vld [vmem:[%s5531 + $0x50] sm:$0xf]
    %v5553 = vld [vmem:[%s5531 + $0x54] sm:$0xf]
    %v5554 = vld [vmem:[%s5531 + $0x58] sm:$0xf]
    %v5555 = vld [vmem:[%s5531 + $0x5c] sm:$0xf]
    %v5556 = vld [vmem:[%s5531 + $0x60] sm:$0xf]
    %v5557 = vld [vmem:[%s5531 + $0x64] sm:$0xf]
    %v5558 = vld [vmem:[%s5531 + $0x68] sm:$0xf]
    %v5559 = vld [vmem:[%s5531 + $0x6c] sm:$0xf]
    %v5560 = vld [vmem:[%s5531 + $0x70] sm:$0xf]
    %v5561 = vld [vmem:[%s5531 + $0x74] sm:$0xf]
    %v5562 = vld [vmem:[%s5531 + $0x78] sm:$0xf]
    %v5563 = vld [vmem:[%s5531 + $0x7c] sm:$0xf]
    %v5564 = vld [vmem:[%s5531 + $0x80] sm:$0xf]
    %v5565 = vld [vmem:[%s5531 + $0x84] sm:$0xf]
    %v5566 = vld [vmem:[%s5531 + $0x88] sm:$0xf]
    %v5567 = vld [vmem:[%s5531 + $0x8c] sm:$0xf]
    %v5568 = vld [vmem:[%s5531 + $0x90] sm:$0xf]
    %v5569 = vld [vmem:[%s5531 + $0x94] sm:$0xf]
    %v5570 = vld [vmem:[%s5531 + $0x98] sm:$0xf]
    %v5571 = vld [vmem:[%s5531 + $0x9c] sm:$0xf]
    %v5572 = vld [vmem:[%s5531 + $0xa0] sm:$0xf]
    %v5573 = vld [vmem:[%s5531 + $0xa4] sm:$0xf]
    %v5574 = vld [vmem:[%s5531 + $0xa8] sm:$0xf]
    %v5575 = vld [vmem:[%s5531 + $0xac] sm:$0xf]
    %v5576 = vld [vmem:[%s5531 + $0xb0] sm:$0xf]
    %v5577 = vld [vmem:[%s5531 + $0xb4] sm:$0xf]
    %v5578 = vld [vmem:[%s5531 + $0xb8] sm:$0xf]
    %v5579 = vld [vmem:[%s5531 + $0xbc] sm:$0xf]
    %v5580 = vld [vmem:[%s5531 + $0xc0] sm:$0xf]
    %v5581 = vld [vmem:[%s5531 + $0xc4] sm:$0xf]
    %v5582 = vld [vmem:[%s5531 + $0xc8] sm:$0xf]
    %v5583 = vld [vmem:[%s5531 + $0xcc] sm:$0xf]
    %v5584 = vld [vmem:[%s5531 + $0xd0] sm:$0xf]
    %v5585 = vld [vmem:[%s5531 + $0xd4] sm:$0xf]
    %v5586 = vld [vmem:[%s5531 + $0xd8] sm:$0xf]
    %v5587 = vld [vmem:[%s5531 + $0xdc] sm:$0xf]
    %v5588 = vld [vmem:[%s5531 + $0xe0] sm:$0xf]
    %v5589 = vld [vmem:[%s5531 + $0xe4] sm:$0xf]
    %v5590 = vld [vmem:[%s5531 + $0xe8] sm:$0xf]
    %v5591 = vld [vmem:[%s5531 + $0xec] sm:$0xf]
    %v5592 = vld [vmem:[%s5531 + $0xf0] sm:$0xf]
    %v5593 = vld [vmem:[%s5531 + $0xf4] sm:$0xf]
    %v5594 = vld [vmem:[%s5531 + $0xf8] sm:$0xf]
    %v5595 = vld [vmem:[%s5531 + $0xfc] sm:$0xf]
    %v5646 = vunpack.c.l.b16 %v5481
    %v5647 = vunpack.c.h.b16 %v5481
    %v5648 = vunpack.c.l.b16 %v5482
    %v5649 = vunpack.c.h.b16 %v5482
    %v5650 = vunpack.c.l.b16 %v5483
    %v5651 = vunpack.c.h.b16 %v5483
    %v5652 = vunpack.c.l.b16 %v5484
    %v5653 = vunpack.c.h.b16 %v5484
    %v5654 = vunpack.c.l.b16 %v5485
    %v5655 = vunpack.c.h.b16 %v5485
    %v5656 = vunpack.c.l.b16 %v5486
    %v5657 = vunpack.c.h.b16 %v5486
    %v5658 = vunpack.c.l.b16 %v5487
    %v5659 = vunpack.c.h.b16 %v5487
    %v5660 = vunpack.c.l.b16 %v5488
    %v5661 = vunpack.c.h.b16 %v5488
    %v5662 = vunpack.c.l.b16 %v5489
    %v5663 = vunpack.c.h.b16 %v5489
    %v5664 = vunpack.c.l.b16 %v5490
    %v5665 = vunpack.c.h.b16 %v5490
    %v5666 = vunpack.c.l.b16 %v5491
    %v5667 = vunpack.c.h.b16 %v5491
    %v5668 = vunpack.c.l.b16 %v5492
    %v5669 = vunpack.c.h.b16 %v5492
    %v5670 = vunpack.c.l.b16 %v5493
    %v5671 = vunpack.c.h.b16 %v5493
    %v5672 = vunpack.c.l.b16 %v5494
    %v5673 = vunpack.c.h.b16 %v5494
    %v5674 = vunpack.c.l.b16 %v5495
    %v5675 = vunpack.c.h.b16 %v5495
    %v5676 = vunpack.c.l.b16 %v5496
    %v5677 = vunpack.c.h.b16 %v5496
    %v5678 = vunpack.c.l.b16 %v5497
    %v5679 = vunpack.c.h.b16 %v5497
    %v5680 = vunpack.c.l.b16 %v5498
    %v5681 = vunpack.c.h.b16 %v5498
    %v5682 = vunpack.c.l.b16 %v5499
    %v5683 = vunpack.c.h.b16 %v5499
    %v5684 = vunpack.c.l.b16 %v5500
    %v5685 = vunpack.c.h.b16 %v5500
    %v5686 = vunpack.c.l.b16 %v5501
    %v5687 = vunpack.c.h.b16 %v5501
    %v5688 = vunpack.c.l.b16 %v5502
    %v5689 = vunpack.c.h.b16 %v5502
    %v5690 = vunpack.c.l.b16 %v5503
    %v5691 = vunpack.c.h.b16 %v5503
    %v5692 = vunpack.c.l.b16 %v5504
    %v5693 = vunpack.c.h.b16 %v5504
    %v5694 = vunpack.c.l.b16 %v5505
    %v5695 = vunpack.c.h.b16 %v5505
    %v5696 = vunpack.c.l.b16 %v5506
    %v5697 = vunpack.c.h.b16 %v5506
    %v5698 = vunpack.c.l.b16 %v5507
    %v5699 = vunpack.c.h.b16 %v5507
    %v5700 = vunpack.c.l.b16 %v5508
    %v5701 = vunpack.c.h.b16 %v5508
    %v5702 = vunpack.c.l.b16 %v5509
    %v5703 = vunpack.c.h.b16 %v5509
    %v5704 = vunpack.c.l.b16 %v5510
    %v5705 = vunpack.c.h.b16 %v5510
    %v5706 = vunpack.c.l.b16 %v5511
    %v5707 = vunpack.c.h.b16 %v5511
    %v5708 = vunpack.c.l.b16 %v5512
    %v5709 = vunpack.c.h.b16 %v5512
    %v5710 = vunpack.c.l.b16 %v5513
    %v5711 = vunpack.c.h.b16 %v5513
    %v5712 = vunpack.c.l.b16 %v5514
    %v5713 = vunpack.c.h.b16 %v5514
    %v5714 = vunpack.c.l.b16 %v5515
    %v5715 = vunpack.c.h.b16 %v5515
    %v5716 = vunpack.c.l.b16 %v5516
    %v5717 = vunpack.c.h.b16 %v5516
    %v5718 = vunpack.c.l.b16 %v5517
    %v5719 = vunpack.c.h.b16 %v5517
    %v5720 = vunpack.c.l.b16 %v5518
    %v5721 = vunpack.c.h.b16 %v5518
    %v5722 = vunpack.c.l.b16 %v5519
    %v5723 = vunpack.c.h.b16 %v5519
    %v5724 = vunpack.c.l.b16 %v5520
    %v5725 = vunpack.c.h.b16 %v5520
    %v5726 = vunpack.c.l.b16 %v5521
    %v5727 = vunpack.c.h.b16 %v5521
    %v5728 = vunpack.c.l.b16 %v5522
    %v5729 = vunpack.c.h.b16 %v5522
    %v5730 = vunpack.c.l.b16 %v5523
    %v5731 = vunpack.c.h.b16 %v5523
    %v5732 = vunpack.c.l.b16 %v5524
    %v5733 = vunpack.c.h.b16 %v5524
    %v5734 = vunpack.c.l.b16 %v5525
    %v5735 = vunpack.c.h.b16 %v5525
    %v5736 = vunpack.c.l.b16 %v5526
    %v5737 = vunpack.c.h.b16 %v5526
    %v5738 = vunpack.c.l.b16 %v5527
    %v5739 = vunpack.c.h.b16 %v5527
    %v5740 = vunpack.c.l.b16 %v5528
    %v5741 = vunpack.c.h.b16 %v5528
    %v5742 = vunpack.c.l.b16 %v5529
    %v5743 = vunpack.c.h.b16 %v5529
    %v5744 = vunpack.c.l.b16 %v5530
    %v5745 = vunpack.c.h.b16 %v5530
    %v5746 = vpack.c.b16 %v5650, %v5646
    %v5747 = vpack.c.b16 %v5651, %v5647
    %v5748 = vpack.c.b16 %v5652, %v5648
    %v5749 = vpack.c.b16 %v5653, %v5649
    %v5750 = vpack.c.b16 %v5658, %v5654
    %v5751 = vpack.c.b16 %v5659, %v5655
    %v5752 = vpack.c.b16 %v5660, %v5656
    %v5753 = vpack.c.b16 %v5661, %v5657
    %v5754 = vpack.c.b16 %v5666, %v5662
    %v5755 = vpack.c.b16 %v5667, %v5663
    %v5756 = vpack.c.b16 %v5668, %v5664
    %v5757 = vpack.c.b16 %v5669, %v5665
    %v5758 = vpack.c.b16 %v5674, %v5670
    %v5759 = vpack.c.b16 %v5675, %v5671
    %v5760 = vpack.c.b16 %v5676, %v5672
    %v5761 = vpack.c.b16 %v5677, %v5673
    %v5762 = vpack.c.b16 %v5682, %v5678
    %v5763 = vpack.c.b16 %v5683, %v5679
    %v5764 = vpack.c.b16 %v5684, %v5680
    %v5765 = vpack.c.b16 %v5685, %v5681
    %v5766 = vpack.c.b16 %v5690, %v5686
    %v5767 = vpack.c.b16 %v5691, %v5687
    %v5768 = vpack.c.b16 %v5692, %v5688
    %v5769 = vpack.c.b16 %v5693, %v5689
    %v5770 = vpack.c.b16 %v5698, %v5694
    %v5771 = vpack.c.b16 %v5699, %v5695
    %v5772 = vpack.c.b16 %v5700, %v5696
    %v5773 = vpack.c.b16 %v5701, %v5697
    %v5774 = vpack.c.b16 %v5706, %v5702
    %v5775 = vpack.c.b16 %v5707, %v5703
    %v5776 = vpack.c.b16 %v5708, %v5704
    %v5777 = vpack.c.b16 %v5709, %v5705
    %v5778 = vpack.c.b16 %v5714, %v5710
    %v5779 = vpack.c.b16 %v5715, %v5711
    %v5780 = vpack.c.b16 %v5716, %v5712
    %v5781 = vpack.c.b16 %v5717, %v5713
    %v5782 = vpack.c.b16 %v5722, %v5718
    %v5783 = vpack.c.b16 %v5723, %v5719
    %v5784 = vpack.c.b16 %v5724, %v5720
    %v5785 = vpack.c.b16 %v5725, %v5721
    %v5786 = vpack.c.b16 %v5730, %v5726
    %v5787 = vpack.c.b16 %v5731, %v5727
    %v5788 = vpack.c.b16 %v5732, %v5728
    %v5789 = vpack.c.b16 %v5733, %v5729
    %v5790 = vpack.c.b16 %v5738, %v5734
    %v5791 = vpack.c.b16 %v5739, %v5735
    %v5792 = vpack.c.b16 %v5740, %v5736
    %v5793 = vpack.c.b16 %v5741, %v5737
    %v5794 = vpack.c.b16 %v5742, %v5742
    %v5795 = vpack.c.b16 %v5743, %v5743
    %v5796 = vpack.c.b16 %v5744, %v5744
    %v5797 = vpack.c.b16 %v5745, %v5745
    %v5914 = vunpack.c.l.b16 %v5532
    %v5915 = vunpack.c.l.b16 %v5533
    %v5916 = vunpack.c.l.b16 %v5534
    %v5917 = vunpack.c.l.b16 %v5535
    %v5918 = vunpack.c.l.b16 %v5536
    %v5919 = vunpack.c.l.b16 %v5537
    %v5920 = vunpack.c.l.b16 %v5538
    %v5921 = vunpack.c.l.b16 %v5539
    %v5922 = vunpack.c.l.b16 %v5540
    %v5923 = vunpack.c.l.b16 %v5541
    %v5924 = vunpack.c.l.b16 %v5542
    %v5925 = vunpack.c.l.b16 %v5543
    %v5926 = vunpack.c.l.b16 %v5544
    %v5927 = vunpack.c.l.b16 %v5545
    %v5928 = vunpack.c.l.b16 %v5546
    %v5929 = vunpack.c.l.b16 %v5547
    %v5930 = vunpack.c.l.b16 %v5548
    %v5931 = vunpack.c.l.b16 %v5549
    %v5932 = vunpack.c.l.b16 %v5550
    %v5933 = vunpack.c.l.b16 %v5551
    %v5934 = vunpack.c.l.b16 %v5552
    %v5935 = vunpack.c.l.b16 %v5553
    %v5936 = vunpack.c.l.b16 %v5554
    %v5937 = vunpack.c.l.b16 %v5555
    %v5938 = vunpack.c.l.b16 %v5556
    %v5939 = vunpack.c.l.b16 %v5557
    %v5940 = vunpack.c.l.b16 %v5558
    %v5941 = vunpack.c.l.b16 %v5559
    %v5942 = vunpack.c.l.b16 %v5560
    %v5943 = vunpack.c.l.b16 %v5561
    %v5944 = vunpack.c.l.b16 %v5562
    %v5945 = vunpack.c.l.b16 %v5563
    %v5946 = vunpack.c.l.b16 %v5564
    %v5947 = vunpack.c.l.b16 %v5565
    %v5948 = vunpack.c.l.b16 %v5566
    %v5949 = vunpack.c.l.b16 %v5567
    %v5950 = vunpack.c.l.b16 %v5568
    %v5951 = vunpack.c.l.b16 %v5569
    %v5952 = vunpack.c.l.b16 %v5570
    %v5953 = vunpack.c.l.b16 %v5571
    %v5954 = vunpack.c.l.b16 %v5572
    %v5955 = vunpack.c.l.b16 %v5573
    %v5956 = vunpack.c.l.b16 %v5574
    %v5957 = vunpack.c.l.b16 %v5575
    %v5958 = vunpack.c.l.b16 %v5576
    %v5959 = vunpack.c.l.b16 %v5577
    %v5960 = vunpack.c.l.b16 %v5578
    %v5961 = vunpack.c.l.b16 %v5579
    %v5962 = vunpack.c.l.b16 %v5580
    %v5963 = vunpack.c.l.b16 %v5581
    %v5964 = vunpack.c.l.b16 %v5582
    %v5965 = vunpack.c.l.b16 %v5583
    %v5966 = vunpack.c.l.b16 %v5584
    %v5967 = vunpack.c.l.b16 %v5585
    %v5968 = vunpack.c.l.b16 %v5586
    %v5969 = vunpack.c.l.b16 %v5587
    %v5970 = vunpack.c.l.b16 %v5588
    %v5971 = vunpack.c.l.b16 %v5589
    %v5972 = vunpack.c.l.b16 %v5590
    %v5973 = vunpack.c.l.b16 %v5591
    %v5974 = vunpack.c.l.b16 %v5592
    %v5975 = vunpack.c.l.b16 %v5593
    %v5976 = vunpack.c.l.b16 %v5594
    %v5977 = vunpack.c.l.b16 %v5595
    %v5978 = vpack.c.b16 %v5915, %v5914
    %v5979 = vpack.c.b16 %v5917, %v5916
    %v5980 = vpack.c.b16 %v5919, %v5918
    %v5981 = vpack.c.b16 %v5921, %v5920
    %v5982 = vpack.c.b16 %v5923, %v5922
    %v5983 = vpack.c.b16 %v5925, %v5924
    %v5984 = vpack.c.b16 %v5927, %v5926
    %v5985 = vpack.c.b16 %v5929, %v5928
    %v5986 = vpack.c.b16 %v5931, %v5930
    %v5987 = vpack.c.b16 %v5933, %v5932
    %v5988 = vpack.c.b16 %v5935, %v5934
    %v5989 = vpack.c.b16 %v5937, %v5936
    %v5990 = vpack.c.b16 %v5939, %v5938
    %v5991 = vpack.c.b16 %v5941, %v5940
    %v5992 = vpack.c.b16 %v5943, %v5942
    %v5993 = vpack.c.b16 %v5945, %v5944
    %v5994 = vpack.c.b16 %v5947, %v5946
    %v5995 = vpack.c.b16 %v5949, %v5948
    %v5996 = vpack.c.b16 %v5951, %v5950
    %v5997 = vpack.c.b16 %v5953, %v5952
    %v5998 = vpack.c.b16 %v5955, %v5954
    %v5999 = vpack.c.b16 %v5957, %v5956
    %v6000 = vpack.c.b16 %v5959, %v5958
    %v6001 = vpack.c.b16 %v5961, %v5960
    %v6002 = vpack.c.b16 %v5963, %v5962
    %v6003 = vpack.c.b16 %v5965, %v5964
    %v6004 = vpack.c.b16 %v5967, %v5966
    %v6005 = vpack.c.b16 %v5969, %v5968
    %v6006 = vpack.c.b16 %v5971, %v5970
    %v6007 = vpack.c.b16 %v5973, %v5972
    %v6008 = vpack.c.b16 %v5975, %v5974
    %v6009 = vpack.c.b16 %v5977, %v5976
    %6042 = vmatprep.subr.bf16.mxu0 0
    %6043 = vmatpush1.bf16.msra.mxu0 %v5985
    %6044 = vmatprep.subr.bf16.mxu0 0
    %6045 = vmatpush1.bf16.msra.mxu0 %v5984
    %6046 = vmatprep.subr.bf16.mxu0 0
    %6047 = vmatpush1.bf16.msra.mxu0 %v5983
    %6048 = vmatprep.subr.bf16.mxu0 0
    %6049 = vmatpush1.bf16.msra.mxu0 %v5982
    %6050 = vmatprep.subr.bf16.mxu0 0
    %6051 = vmatpush1.bf16.msra.mxu0 %v5981
    %6052 = vmatprep.subr.bf16.mxu0 0
    %6053 = vmatpush1.bf16.msra.mxu0 %v5980
    %6054 = vmatprep.subr.bf16.mxu0 0
    %6055 = vmatpush1.bf16.msra.mxu0 %v5979
    %6056 = vmatprep.subr.bf16.mxu0 0
    %6057 = vmatpush1.bf16.msra.mxu0 %v5978
    %6058 = vmatprep.subr.bf16.mxu0 0
    %6059 = vmatpush2.bf16.msra.mxu0 %v5993
    %6060 = vmatprep.subr.bf16.mxu0 0
    %6061 = vmatpush2.bf16.msra.mxu0 %v5992
    %6062 = vmatprep.subr.bf16.mxu0 0
    %6063 = vmatpush2.bf16.msra.mxu0 %v5991
    %6064 = vmatprep.subr.bf16.mxu0 0
    %6065 = vmatpush2.bf16.msra.mxu0 %v5990
    %6066 = vmatprep.subr.bf16.mxu0 0
    %6067 = vmatpush2.bf16.msra.mxu0 %v5989
    %6068 = vmatprep.subr.bf16.mxu0 0
    %6069 = vmatpush2.bf16.msra.mxu0 %v5988
    %6070 = vmatprep.subr.bf16.mxu0 0
    %6071 = vmatpush2.bf16.msra.mxu0 %v5987
    %6072 = vmatprep.subr.bf16.mxu0 0
    %6073 = vmatpush2.bf16.msra.mxu0 %v5986
    %6074 = vmatprep.mubr.bf16.mxu0 %v5747
    %6075 = vmatmul.mubr.bf16.gmra.mxu0 %v5746
    %v6076 = vpop.f32.mrf.mxu0
    %v6077 = vadd.f32 0.0, %v6076
    %v6078 = vpop.f32.mrf.mxu0
    %v6079 = vpop.f32.mrf.mxu0
    %v6080 = vadd.f32 0.0, %v6079
    %v6081 = vpop.f32.mrf.mxu0
    %6082 = vmatprep.mubr.bf16.mxu0 %v5751
    %6083 = vmatmul.mubr.bf16.gmra.mxu0 %v5750
    %v6084 = vpop.f32.mrf.mxu0
    %v6085 = vadd.f32 0.0, %v6084
    %v6086 = vpop.f32.mrf.mxu0
    %v6087 = vpop.f32.mrf.mxu0
    %v6088 = vadd.f32 0.0, %v6087
    %v6089 = vpop.f32.mrf.mxu0
    %6090 = vmatprep.mubr.bf16.mxu0 %v5755
    %6091 = vmatmul.mubr.bf16.gmra.mxu0 %v5754
    %v6092 = vpop.f32.mrf.mxu0
    %v6093 = vadd.f32 0.0, %v6092
    %v6094 = vpop.f32.mrf.mxu0
    %v6095 = vpop.f32.mrf.mxu0
    %v6096 = vadd.f32 0.0, %v6095
    %v6097 = vpop.f32.mrf.mxu0
    %6098 = vmatprep.mubr.bf16.mxu0 %v5759
    %6099 = vmatmul.mubr.bf16.gmra.mxu0 %v5758
    %v6100 = vpop.f32.mrf.mxu0
    %v6101 = vadd.f32 0.0, %v6100
    %v6102 = vpop.f32.mrf.mxu0
    %v6103 = vpop.f32.mrf.mxu0
    %v6104 = vadd.f32 0.0, %v6103
    %v6105 = vpop.f32.mrf.mxu0
    %6106 = vmatprep.mubr.bf16.mxu0 %v5763
    %6107 = vmatmul.mubr.bf16.gmra.mxu0 %v5762
    %v6108 = vpop.f32.mrf.mxu0
    %v6109 = vadd.f32 0.0, %v6108
    %v6110 = vpop.f32.mrf.mxu0
    %v6111 = vpop.f32.mrf.mxu0
    %v6112 = vadd.f32 0.0, %v6111
    %v6113 = vpop.f32.mrf.mxu0
    %6114 = vmatprep.mubr.bf16.mxu0 %v5767
    %6115 = vmatmul.mubr.bf16.gmra.mxu0 %v5766
    %v6116 = vpop.f32.mrf.mxu0
    %v6117 = vadd.f32 0.0, %v6116
    %v6118 = vpop.f32.mrf.mxu0
    %v6119 = vpop.f32.mrf.mxu0
    %v6120 = vadd.f32 0.0, %v6119
    %v6121 = vpop.f32.mrf.mxu0
    %6122 = vmatprep.mubr.bf16.mxu0 %v5771
    %6123 = vmatmul.mubr.bf16.gmra.mxu0 %v5770
    %v6124 = vpop.f32.mrf.mxu0
    %v6125 = vadd.f32 0.0, %v6124
    %v6126 = vpop.f32.mrf.mxu0
    %v6127 = vpop.f32.mrf.mxu0
    %v6128 = vadd.f32 0.0, %v6127
    %v6129 = vpop.f32.mrf.mxu0
    %6130 = vmatprep.mubr.bf16.mxu0 %v5775
    %6131 = vmatmul.mubr.bf16.gmra.mxu0 %v5774
    %v6132 = vpop.f32.mrf.mxu0
    %v6133 = vadd.f32 0.0, %v6132
    %v6134 = vpop.f32.mrf.mxu0
    %v6135 = vpop.f32.mrf.mxu0
    %v6136 = vadd.f32 0.0, %v6135
    %v6137 = vpop.f32.mrf.mxu0
    %6138 = vmatprep.mubr.bf16.mxu0 %v5779
    %6139 = vmatmul.mubr.bf16.gmra.mxu0 %v5778
    %v6140 = vpop.f32.mrf.mxu0
    %v6141 = vadd.f32 0.0, %v6140
    %v6142 = vpop.f32.mrf.mxu0
    %v6143 = vpop.f32.mrf.mxu0
    %v6144 = vadd.f32 0.0, %v6143
    %v6145 = vpop.f32.mrf.mxu0
    %6146 = vmatprep.mubr.bf16.mxu0 %v5783
    %6147 = vmatmul.mubr.bf16.gmra.mxu0 %v5782
    %v6148 = vpop.f32.mrf.mxu0
    %v6149 = vadd.f32 0.0, %v6148
    %v6150 = vpop.f32.mrf.mxu0
    %v6151 = vpop.f32.mrf.mxu0
    %v6152 = vadd.f32 0.0, %v6151
    %v6153 = vpop.f32.mrf.mxu0
    %6154 = vmatprep.mubr.bf16.mxu0 %v5787
    %6155 = vmatmul.mubr.bf16.gmra.mxu0 %v5786
    %v6156 = vpop.f32.mrf.mxu0
    %v6157 = vadd.f32 0.0, %v6156
    %v6158 = vpop.f32.mrf.mxu0
    %v6159 = vpop.f32.mrf.mxu0
    %v6160 = vadd.f32 0.0, %v6159
    %v6161 = vpop.f32.mrf.mxu0
    %6162 = vmatprep.mubr.bf16.mxu0 %v5791
    %6163 = vmatmul.mubr.bf16.gmra.mxu0 %v5790
    %v6164 = vpop.f32.mrf.mxu0
    %v6165 = vadd.f32 0.0, %v6164
    %v6166 = vpop.f32.mrf.mxu0
    %v6167 = vpop.f32.mrf.mxu0
    %v6168 = vadd.f32 0.0, %v6167
    %v6169 = vpop.f32.mrf.mxu0
    %6170 = vmatprep.mubr.bf16.mxu0 %v5795
    %6171 = vmatmul.mubr.bf16.gmra.mxu0 %v5794
    %v6172 = vpop.f32.mrf.mxu0
    %v6173 = vadd.f32 0.0, %v6172
    %v6174 = vpop.f32.mrf.mxu0
    %v6175 = vpop.f32.mrf.mxu0
    %v6176 = vpop.f32.mrf.mxu0
    %6177 = vdwg.mxu0
    %6178 = vmatprep.subr.bf16.mxu0 0
    %6179 = vmatpush1.bf16.msra.mxu0 %v6001
    %6180 = vmatprep.subr.bf16.mxu0 0
    %6181 = vmatpush1.bf16.msra.mxu0 %v6000
    %6182 = vmatprep.subr.bf16.mxu0 0
    %6183 = vmatpush1.bf16.msra.mxu0 %v5999
    %6184 = vmatprep.subr.bf16.mxu0 0
    %6185 = vmatpush1.bf16.msra.mxu0 %v5998
    %6186 = vmatprep.subr.bf16.mxu0 0
    %6187 = vmatpush1.bf16.msra.mxu0 %v5997
    %6188 = vmatprep.subr.bf16.mxu0 0
    %6189 = vmatpush1.bf16.msra.mxu0 %v5996
    %6190 = vmatprep.subr.bf16.mxu0 0
    %6191 = vmatpush1.bf16.msra.mxu0 %v5995
    %6192 = vmatprep.subr.bf16.mxu0 0
    %6193 = vmatpush1.bf16.msra.mxu0 %v5994
    %6194 = vmatprep.subr.bf16.mxu0 0
    %6195 = vmatpush2.bf16.msra.mxu0 %v6009
    %6196 = vmatprep.subr.bf16.mxu0 0
    %6197 = vmatpush2.bf16.msra.mxu0 %v6008
    %6198 = vmatprep.subr.bf16.mxu0 0
    %6199 = vmatpush2.bf16.msra.mxu0 %v6007
    %6200 = vmatprep.subr.bf16.mxu0 0
    %6201 = vmatpush2.bf16.msra.mxu0 %v6006
    %6202 = vmatprep.subr.bf16.mxu0 0
    %6203 = vmatpush2.bf16.msra.mxu0 %v6005
    %6204 = vmatprep.subr.bf16.mxu0 0
    %6205 = vmatpush2.bf16.msra.mxu0 %v6004
    %6206 = vmatprep.subr.bf16.mxu0 0
    %6207 = vmatpush2.bf16.msra.mxu0 %v6003
    %6208 = vmatprep.subr.bf16.mxu0 0
    %6209 = vmatpush2.bf16.msra.mxu0 %v6002
    %6210 = vmatprep.mubr.bf16.mxu0 %v5749
    %6211 = vmatmul.mubr.bf16.gmra.mxu0 %v5748
    %v6212 = vpop.f32.mrf.mxu0
    %v6213 = vadd.f32 %v6077, %v6212
    %v6214 = vpop.f32.mrf.mxu0
    %v6215 = vpop.f32.mrf.mxu0
    %v6216 = vadd.f32 %v6080, %v6215
    %v6217 = vpop.f32.mrf.mxu0
    %6218 = vmatprep.mubr.bf16.mxu0 %v5753
    %6219 = vmatmul.mubr.bf16.gmra.mxu0 %v5752
    %v6220 = vpop.f32.mrf.mxu0
    %v6221 = vadd.f32 %v6085, %v6220
    %v6222 = vpop.f32.mrf.mxu0
    %v6223 = vpop.f32.mrf.mxu0
    %v6224 = vadd.f32 %v6088, %v6223
    %v6225 = vpop.f32.mrf.mxu0
    %6226 = vmatprep.mubr.bf16.mxu0 %v5757
    %6227 = vmatmul.mubr.bf16.gmra.mxu0 %v5756
    %v6228 = vpop.f32.mrf.mxu0
    %v6229 = vadd.f32 %v6093, %v6228
    %v6230 = vpop.f32.mrf.mxu0
    %v6231 = vpop.f32.mrf.mxu0
    %v6232 = vadd.f32 %v6096, %v6231
    %v6233 = vpop.f32.mrf.mxu0
    %6234 = vmatprep.mubr.bf16.mxu0 %v5761
    %6235 = vmatmul.mubr.bf16.gmra.mxu0 %v5760
    %v6236 = vpop.f32.mrf.mxu0
    %v6237 = vadd.f32 %v6101, %v6236
    %v6238 = vpop.f32.mrf.mxu0
    %v6239 = vpop.f32.mrf.mxu0
    %v6240 = vadd.f32 %v6104, %v6239
    %v6241 = vpop.f32.mrf.mxu0
    %6242 = vmatprep.mubr.bf16.mxu0 %v5765
    %6243 = vmatmul.mubr.bf16.gmra.mxu0 %v5764
    %v6244 = vpop.f32.mrf.mxu0
    %v6245 = vadd.f32 %v6109, %v6244
    %v6246 = vpop.f32.mrf.mxu0
    %v6247 = vpop.f32.mrf.mxu0
    %v6248 = vadd.f32 %v6112, %v6247
    %v6249 = vpop.f32.mrf.mxu0
    %6250 = vmatprep.mubr.bf16.mxu0 %v5769
    %6251 = vmatmul.mubr.bf16.gmra.mxu0 %v5768
    %v6252 = vpop.f32.mrf.mxu0
    %v6253 = vadd.f32 %v6117, %v6252
    %v6254 = vpop.f32.mrf.mxu0
    %v6255 = vpop.f32.mrf.mxu0
    %v6256 = vadd.f32 %v6120, %v6255
    %v6257 = vpop.f32.mrf.mxu0
    %6258 = vmatprep.mubr.bf16.mxu0 %v5773
    %6259 = vmatmul.mubr.bf16.gmra.mxu0 %v5772
    %v6260 = vpop.f32.mrf.mxu0
    %v6261 = vadd.f32 %v6125, %v6260
    %v6262 = vpop.f32.mrf.mxu0
    %v6263 = vpop.f32.mrf.mxu0
    %v6264 = vadd.f32 %v6128, %v6263
    %v6265 = vpop.f32.mrf.mxu0
    %6266 = vmatprep.mubr.bf16.mxu0 %v5777
    %6267 = vmatmul.mubr.bf16.gmra.mxu0 %v5776
    %v6268 = vpop.f32.mrf.mxu0
    %v6269 = vadd.f32 %v6133, %v6268
    %v6270 = vpop.f32.mrf.mxu0
    %v6271 = vpop.f32.mrf.mxu0
    %v6272 = vadd.f32 %v6136, %v6271
    %v6273 = vpop.f32.mrf.mxu0
    %6274 = vmatprep.mubr.bf16.mxu0 %v5781
    %6275 = vmatmul.mubr.bf16.gmra.mxu0 %v5780
    %v6276 = vpop.f32.mrf.mxu0
    %v6277 = vadd.f32 %v6141, %v6276
    %v6278 = vpop.f32.mrf.mxu0
    %v6279 = vpop.f32.mrf.mxu0
    %v6280 = vadd.f32 %v6144, %v6279
    %v6281 = vpop.f32.mrf.mxu0
    %6282 = vmatprep.mubr.bf16.mxu0 %v5785
    %6283 = vmatmul.mubr.bf16.gmra.mxu0 %v5784
    %v6284 = vpop.f32.mrf.mxu0
    %v6285 = vadd.f32 %v6149, %v6284
    %v6286 = vpop.f32.mrf.mxu0
    %v6287 = vpop.f32.mrf.mxu0
    %v6288 = vadd.f32 %v6152, %v6287
    %v6289 = vpop.f32.mrf.mxu0
    %6290 = vmatprep.mubr.bf16.mxu0 %v5789
    %6291 = vmatmul.mubr.bf16.gmra.mxu0 %v5788
    %v6292 = vpop.f32.mrf.mxu0
    %v6293 = vadd.f32 %v6157, %v6292
    %v6294 = vpop.f32.mrf.mxu0
    %v6295 = vpop.f32.mrf.mxu0
    %v6296 = vadd.f32 %v6160, %v6295
    %v6297 = vpop.f32.mrf.mxu0
    %6298 = vmatprep.mubr.bf16.mxu0 %v5793
    %6299 = vmatmul.mubr.bf16.gmra.mxu0 %v5792
    %v6300 = vpop.f32.mrf.mxu0
    %v6301 = vadd.f32 %v6165, %v6300
    %v6302 = vpop.f32.mrf.mxu0
    %v6303 = vpop.f32.mrf.mxu0
    %v6304 = vadd.f32 %v6168, %v6303
    %v6305 = vpop.f32.mrf.mxu0
    %6306 = vmatprep.mubr.bf16.mxu0 %v5797
    %6307 = vmatmul.mubr.bf16.gmra.mxu0 %v5796
    %v6308 = vpop.f32.mrf.mxu0
    %v6309 = vadd.f32 %v6173, %v6308
    %v6310 = vpop.f32.mrf.mxu0
    %v6311 = vpop.f32.mrf.mxu0
    %v6312 = vpop.f32.mrf.mxu0
    %6313 = vdwg.mxu0
    %v6314 = vadd.f32 %v5276, %v6213
    %v6315 = vadd.f32 %v5277, %v6216
    %v6316 = vadd.f32 %v5278, %v6221
    %v6317 = vadd.f32 %v5279, %v6224
    %v6318 = vadd.f32 %v5280, %v6229
    %v6319 = vadd.f32 %v5281, %v6232
    %v6320 = vadd.f32 %v5282, %v6237
    %v6321 = vadd.f32 %v5283, %v6240
    %v6322 = vadd.f32 %v5284, %v6245
    %v6323 = vadd.f32 %v5285, %v6248
    %v6324 = vadd.f32 %v5286, %v6253
    %v6325 = vadd.f32 %v5287, %v6256
    %v6326 = vadd.f32 %v5288, %v6261
    %v6327 = vadd.f32 %v5289, %v6264
    %v6328 = vadd.f32 %v5290, %v6269
    %v6329 = vadd.f32 %v5291, %v6272
    %v6330 = vadd.f32 %v5292, %v6277
    %v6331 = vadd.f32 %v5293, %v6280
    %v6332 = vadd.f32 %v5294, %v6285
    %v6333 = vadd.f32 %v5295, %v6288
    %v6334 = vadd.f32 %v5296, %v6293
    %v6335 = vadd.f32 %v5297, %v6296
    %v6336 = vadd.f32 %v5298, %v6301
    %v6337 = vadd.f32 %v5299, %v6304
    %v6338 = vadd.f32 %v5300, %v6309
    %v6339 = vld [vmem:[%s4] sm:$0x1]
    %v6341 = vlaneseq
    %v6342 = vshrl.u32 %v6341, 7
    %v6343 = vsub.s32 0, %v6342
    %v6344 = vrot.slane %v6339, %v6343
    %v6346 = vadd.f32 %v6314, %v6344
    %v6347 = vadd.f32 %v6315, %v6344
    %v6348 = vadd.f32 %v6316, %v6344
    %v6349 = vadd.f32 %v6317, %v6344
    %v6350 = vadd.f32 %v6318, %v6344
    %v6351 = vadd.f32 %v6319, %v6344
    %v6352 = vadd.f32 %v6320, %v6344
    %v6353 = vadd.f32 %v6321, %v6344
    %v6354 = vadd.f32 %v6322, %v6344
    %v6355 = vadd.f32 %v6323, %v6344
    %v6356 = vadd.f32 %v6324, %v6344
    %v6357 = vadd.f32 %v6325, %v6344
    %v6358 = vadd.f32 %v6326, %v6344
    %v6359 = vadd.f32 %v6327, %v6344
    %v6360 = vadd.f32 %v6328, %v6344
    %v6361 = vadd.f32 %v6329, %v6344
    %v6362 = vadd.f32 %v6330, %v6344
    %v6363 = vadd.f32 %v6331, %v6344
    %v6364 = vadd.f32 %v6332, %v6344
    %v6365 = vadd.f32 %v6333, %v6344
    %v6366 = vadd.f32 %v6334, %v6344
    %v6367 = vadd.f32 %v6335, %v6344
    %v6368 = vadd.f32 %v6336, %v6344
    %v6369 = vadd.f32 %v6337, %v6344
    %v6370 = vadd.f32 %v6338, %v6344
    %v6371 = vmax.f32 %v6346, 0.0
    %v6372 = vmax.f32 %v6347, 0.0
    %v6373 = vmax.f32 %v6348, 0.0
    %v6374 = vmax.f32 %v6349, 0.0
    %v6375 = vmax.f32 %v6350, 0.0
    %v6376 = vmax.f32 %v6351, 0.0
    %v6377 = vmax.f32 %v6352, 0.0
    %v6378 = vmax.f32 %v6353, 0.0
    %v6379 = vmax.f32 %v6354, 0.0
    %v6380 = vmax.f32 %v6355, 0.0
    %v6381 = vmax.f32 %v6356, 0.0
    %v6382 = vmax.f32 %v6357, 0.0
    %v6383 = vmax.f32 %v6358, 0.0
    %v6384 = vmax.f32 %v6359, 0.0
    %v6385 = vmax.f32 %v6360, 0.0
    %v6386 = vmax.f32 %v6361, 0.0
    %v6387 = vmax.f32 %v6362, 0.0
    %v6388 = vmax.f32 %v6363, 0.0
    %v6389 = vmax.f32 %v6364, 0.0
    %v6390 = vmax.f32 %v6365, 0.0
    %v6391 = vmax.f32 %v6366, 0.0
    %v6392 = vmax.f32 %v6367, 0.0
    %v6393 = vmax.f32 %v6368, 0.0
    %v6394 = vmax.f32 %v6369, 0.0
    %v6395 = vmax.f32 %v6370, 0.0
    %v6396 = vpack.c.bf16 %v6372, %v6371
    %v6397 = vpack.c.bf16 %v6374, %v6373
    %v6398 = vpack.c.bf16 %v6376, %v6375
    %v6399 = vpack.c.bf16 %v6378, %v6377
    %v6400 = vpack.c.bf16 %v6380, %v6379
    %v6401 = vpack.c.bf16 %v6382, %v6381
    %v6402 = vpack.c.bf16 %v6384, %v6383
    %v6403 = vpack.c.bf16 %v6386, %v6385
    %v6404 = vpack.c.bf16 %v6388, %v6387
    %v6405 = vpack.c.bf16 %v6390, %v6389
    %v6406 = vpack.c.bf16 %v6392, %v6391
    %v6407 = vpack.c.bf16 %v6394, %v6393
    %v6408 = vpack.c.bf16 %v6395, %v6395
    %v6409 = vld [vmem:[%s5] sm:$0xf]
    %v6410 = vld [vmem:[%s5 + $0x4] sm:$0xf]
    %v6411 = vld [vmem:[%s5 + $0x8] sm:$0xf]
    %v6412 = vld [vmem:[%s5 + $0xc] sm:$0xf]
    %v6413 = vld [vmem:[%s5 + $0x10] sm:$0xf]
    %v6414 = vld [vmem:[%s5 + $0x14] sm:$0xf]
    %v6415 = vld [vmem:[%s5 + $0x18] sm:$0xf]
    %v6416 = vld [vmem:[%s5 + $0x1c] sm:$0xf]
    %s6417 = scalar_lea.vmem %s5, 32
    %v6418 = vld [vmem:[%s6417] sm:$0xf]
    %v6419 = vld [vmem:[%s6417 + $0x4] sm:$0xf]
    %v6420 = vld [vmem:[%s6417 + $0x8] sm:$0xf]
    %v6421 = vld [vmem:[%s6417 + $0xc] sm:$0xf]
    %v6422 = vld [vmem:[%s6417 + $0x10] sm:$0xf]
    %v6423 = vld [vmem:[%s6417 + $0x14] sm:$0xf]
    %v6424 = vld [vmem:[%s6417 + $0x18] sm:$0xf]
    %v6425 = vld [vmem:[%s6417 + $0x1c] sm:$0xf]
    %v6427 = vrot.slane %v6396, 4
    %v6436 = vunpack.c.l.b16 %v6418
    %v6437 = vunpack.c.l.b16 %v6419
    %v6438 = vunpack.c.l.b16 %v6420
    %v6439 = vunpack.c.l.b16 %v6421
    %v6440 = vunpack.c.l.b16 %v6422
    %v6441 = vunpack.c.l.b16 %v6423
    %v6442 = vunpack.c.l.b16 %v6424
    %v6443 = vunpack.c.l.b16 %v6425
    %v6444 = vpack.c.b16 %v6437, %v6436
    %v6445 = vpack.c.b16 %v6439, %v6438
    %v6446 = vpack.c.b16 %v6441, %v6440
    %v6447 = vpack.c.b16 %v6443, %v6442
    %vm6452 = vcmask 523264
    %v6454 = vsel %vm6452, %v6427, 0
    %6456 = vmatprep.subr.bf16.mxu0 0
    %6457 = vmatpush1.bf16.msra.mxu0 0
    %6458 = vmatprep.subr.bf16.mxu0 0
    %6459 = vmatpush1.bf16.msra.mxu0 0
    %6460 = vmatprep.subr.bf16.mxu0 0
    %6461 = vmatpush1.bf16.msra.mxu0 0
    %6462 = vmatprep.subr.bf16.mxu0 0
    %6463 = vmatpush1.bf16.msra.mxu0 0
    %6464 = vmatprep.subr.bf16.mxu0 0
    %6465 = vmatpush1.bf16.msra.mxu0 %v6447
    %6466 = vmatprep.subr.bf16.mxu0 0
    %6467 = vmatpush1.bf16.msra.mxu0 %v6446
    %6468 = vmatprep.subr.bf16.mxu0 0
    %6469 = vmatpush1.bf16.msra.mxu0 %v6445
    %6470 = vmatprep.subr.bf16.mxu0 0
    %6471 = vmatpush1.bf16.msra.mxu0 %v6444
    %6472 = vmatprep.subr.bf16.mxu0 0
    %6473 = vmatpush2.bf16.msra.mxu0 0
    %6474 = vmatprep.subr.bf16.mxu0 0
    %6475 = vmatpush2.bf16.msra.mxu0 0
    %6476 = vmatprep.subr.bf16.mxu0 0
    %6477 = vmatpush2.bf16.msra.mxu0 0
    %6478 = vmatprep.subr.bf16.mxu0 0
    %6479 = vmatpush2.bf16.msra.mxu0 0
    %6480 = vmatprep.subr.bf16.mxu0 0
    %6481 = vmatpush2.bf16.msra.mxu0 0
    %6482 = vmatprep.subr.bf16.mxu0 0
    %6483 = vmatpush2.bf16.msra.mxu0 0
    %6484 = vmatprep.subr.bf16.mxu0 0
    %6485 = vmatpush2.bf16.msra.mxu0 0
    %6486 = vmatprep.subr.bf16.mxu0 0
    %6487 = vmatpush2.bf16.msra.mxu0 0
    %6488 = vmatprep.mubr.bf16.mxu0 0
    %6489 = vmatmul.mubr.bf16.gmra.mxu0 %v6454
    %v6490 = vpop.f32.mrf.mxu0
    %v6491 = vadd.f32 0.0, %v6490
    %v6492 = vpop.f32.mrf.mxu0
    %v6493 = vpop.f32.mrf.mxu0
    %v6494 = vpop.f32.mrf.mxu0
    %6495 = vdwg.mxu0
    %v6504 = vunpack.c.l.b16 %v6409
    %v6505 = vunpack.c.l.b16 %v6410
    %v6506 = vunpack.c.l.b16 %v6411
    %v6507 = vunpack.c.l.b16 %v6412
    %v6508 = vunpack.c.l.b16 %v6413
    %v6509 = vunpack.c.l.b16 %v6414
    %v6510 = vunpack.c.l.b16 %v6415
    %v6511 = vunpack.c.l.b16 %v6416
    %v6512 = vpack.c.b16 %v6505, %v6504
    %v6513 = vpack.c.b16 %v6507, %v6506
    %v6514 = vpack.c.b16 %v6509, %v6508
    %v6515 = vpack.c.b16 %v6511, %v6510
    %v6521 = vsel %vm6452, %v6396, 0
    %6523 = vmatprep.subr.bf16.mxu0 0
    %6524 = vmatpush1.bf16.msra.mxu0 0
    %6525 = vmatprep.subr.bf16.mxu0 0
    %6526 = vmatpush1.bf16.msra.mxu0 0
    %6527 = vmatprep.subr.bf16.mxu0 0
    %6528 = vmatpush1.bf16.msra.mxu0 0
    %6529 = vmatprep.subr.bf16.mxu0 0
    %6530 = vmatpush1.bf16.msra.mxu0 0
    %6531 = vmatprep.subr.bf16.mxu0 0
    %6532 = vmatpush1.bf16.msra.mxu0 %v6515
    %6533 = vmatprep.subr.bf16.mxu0 0
    %6534 = vmatpush1.bf16.msra.mxu0 %v6514
    %6535 = vmatprep.subr.bf16.mxu0 0
    %6536 = vmatpush1.bf16.msra.mxu0 %v6513
    %6537 = vmatprep.subr.bf16.mxu0 0
    %6538 = vmatpush1.bf16.msra.mxu0 %v6512
    %6539 = vmatprep.subr.bf16.mxu0 0
    %6540 = vmatpush2.bf16.msra.mxu0 0
    %6541 = vmatprep.subr.bf16.mxu0 0
    %6542 = vmatpush2.bf16.msra.mxu0 0
    %6543 = vmatprep.subr.bf16.mxu0 0
    %6544 = vmatpush2.bf16.msra.mxu0 0
    %6545 = vmatprep.subr.bf16.mxu0 0
    %6546 = vmatpush2.bf16.msra.mxu0 0
    %6547 = vmatprep.subr.bf16.mxu0 0
    %6548 = vmatpush2.bf16.msra.mxu0 0
    %6549 = vmatprep.subr.bf16.mxu0 0
    %6550 = vmatpush2.bf16.msra.mxu0 0
    %6551 = vmatprep.subr.bf16.mxu0 0
    %6552 = vmatpush2.bf16.msra.mxu0 0
    %6553 = vmatprep.subr.bf16.mxu0 0
    %6554 = vmatpush2.bf16.msra.mxu0 0
    %6555 = vmatprep.mubr.bf16.mxu0 0
    %6556 = vmatmul.mubr.bf16.gmra.mxu0 %v6521
    %v6557 = vpop.f32.mrf.mxu0
    %v6558 = vadd.f32 %v6491, %v6557
    %v6559 = vpop.f32.mrf.mxu0
    %v6560 = vpop.f32.mrf.mxu0
    %v6561 = vpop.f32.mrf.mxu0
    %6562 = vdwg.mxu0
    %s6563 = scalar_lea.vmem %s5, 64
    %v6564 = vld [vmem:[%s6563] sm:$0xf]
    %v6565 = vld [vmem:[%s6563 + $0x4] sm:$0xf]
    %v6566 = vld [vmem:[%s6563 + $0x8] sm:$0xf]
    %v6567 = vld [vmem:[%s6563 + $0xc] sm:$0xf]
    %v6568 = vld [vmem:[%s6563 + $0x10] sm:$0xf]
    %v6569 = vld [vmem:[%s6563 + $0x14] sm:$0xf]
    %v6570 = vld [vmem:[%s6563 + $0x18] sm:$0xf]
    %v6571 = vld [vmem:[%s6563 + $0x1c] sm:$0xf]
    %v6580 = vunpack.c.l.b16 %v6564
    %v6581 = vunpack.c.l.b16 %v6565
    %v6582 = vunpack.c.l.b16 %v6566
    %v6583 = vunpack.c.l.b16 %v6567
    %v6584 = vunpack.c.l.b16 %v6568
    %v6585 = vunpack.c.l.b16 %v6569
    %v6586 = vunpack.c.l.b16 %v6570
    %v6587 = vunpack.c.l.b16 %v6571
    %v6588 = vpack.c.b16 %v6581, %v6580
    %v6589 = vpack.c.b16 %v6583, %v6582
    %v6590 = vpack.c.b16 %v6585, %v6584
    %v6591 = vpack.c.b16 %v6587, %v6586
    %v6597 = vsel %vm6452, %v6397, 0
    %6599 = vmatprep.subr.bf16.mxu0 0
    %6600 = vmatpush1.bf16.msra.mxu0 0
    %6601 = vmatprep.subr.bf16.mxu0 0
    %6602 = vmatpush1.bf16.msra.mxu0 0
    %6603 = vmatprep.subr.bf16.mxu0 0
    %6604 = vmatpush1.bf16.msra.mxu0 0
    %6605 = vmatprep.subr.bf16.mxu0 0
    %6606 = vmatpush1.bf16.msra.mxu0 0
    %6607 = vmatprep.subr.bf16.mxu0 0
    %6608 = vmatpush1.bf16.msra.mxu0 %v6591
    %6609 = vmatprep.subr.bf16.mxu0 0
    %6610 = vmatpush1.bf16.msra.mxu0 %v6590
    %6611 = vmatprep.subr.bf16.mxu0 0
    %6612 = vmatpush1.bf16.msra.mxu0 %v6589
    %6613 = vmatprep.subr.bf16.mxu0 0
    %6614 = vmatpush1.bf16.msra.mxu0 %v6588
    %6615 = vmatprep.subr.bf16.mxu0 0
    %6616 = vmatpush2.bf16.msra.mxu0 0
    %6617 = vmatprep.subr.bf16.mxu0 0
    %6618 = vmatpush2.bf16.msra.mxu0 0
    %6619 = vmatprep.subr.bf16.mxu0 0
    %6620 = vmatpush2.bf16.msra.mxu0 0
    %6621 = vmatprep.subr.bf16.mxu0 0
    %6622 = vmatpush2.bf16.msra.mxu0 0
    %6623 = vmatprep.subr.bf16.mxu0 0
    %6624 = vmatpush2.bf16.msra.mxu0 0
    %6625 = vmatprep.subr.bf16.mxu0 0
    %6626 = vmatpush2.bf16.msra.mxu0 0
    %6627 = vmatprep.subr.bf16.mxu0 0
    %6628 = vmatpush2.bf16.msra.mxu0 0
    %6629 = vmatprep.subr.bf16.mxu0 0
    %6630 = vmatpush2.bf16.msra.mxu0 0
    %6631 = vmatprep.mubr.bf16.mxu0 0
    %6632 = vmatmul.mubr.bf16.gmra.mxu0 %v6597
    %v6633 = vpop.f32.mrf.mxu0
    %v6634 = vadd.f32 0.0, %v6633
    %v6635 = vpop.f32.mrf.mxu0
    %v6636 = vpop.f32.mrf.mxu0
    %v6637 = vpop.f32.mrf.mxu0
    %6638 = vdwg.mxu0
    %v6639 = vadd.f32 %v6558, %v6634
    %s6640 = scalar_lea.vmem %s5, 96
    %v6641 = vld [vmem:[%s6640] sm:$0xf]
    %v6642 = vld [vmem:[%s6640 + $0x4] sm:$0xf]
    %v6643 = vld [vmem:[%s6640 + $0x8] sm:$0xf]
    %v6644 = vld [vmem:[%s6640 + $0xc] sm:$0xf]
    %v6645 = vld [vmem:[%s6640 + $0x10] sm:$0xf]
    %v6646 = vld [vmem:[%s6640 + $0x14] sm:$0xf]
    %v6647 = vld [vmem:[%s6640 + $0x18] sm:$0xf]
    %v6648 = vld [vmem:[%s6640 + $0x1c] sm:$0xf]
    %v6650 = vrot.slane %v6397, 4
    %v6659 = vunpack.c.l.b16 %v6641
    %v6660 = vunpack.c.l.b16 %v6642
    %v6661 = vunpack.c.l.b16 %v6643
    %v6662 = vunpack.c.l.b16 %v6644
    %v6663 = vunpack.c.l.b16 %v6645
    %v6664 = vunpack.c.l.b16 %v6646
    %v6665 = vunpack.c.l.b16 %v6647
    %v6666 = vunpack.c.l.b16 %v6648
    %v6667 = vpack.c.b16 %v6660, %v6659
    %v6668 = vpack.c.b16 %v6662, %v6661
    %v6669 = vpack.c.b16 %v6664, %v6663
    %v6670 = vpack.c.b16 %v6666, %v6665
    %v6676 = vsel %vm6452, %v6650, 0
    %6678 = vmatprep.subr.bf16.mxu0 0
    %6679 = vmatpush1.bf16.msra.mxu0 0
    %6680 = vmatprep.subr.bf16.mxu0 0
    %6681 = vmatpush1.bf16.msra.mxu0 0
    %6682 = vmatprep.subr.bf16.mxu0 0
    %6683 = vmatpush1.bf16.msra.mxu0 0
    %6684 = vmatprep.subr.bf16.mxu0 0
    %6685 = vmatpush1.bf16.msra.mxu0 0
    %6686 = vmatprep.subr.bf16.mxu0 0
    %6687 = vmatpush1.bf16.msra.mxu0 %v6670
    %6688 = vmatprep.subr.bf16.mxu0 0
    %6689 = vmatpush1.bf16.msra.mxu0 %v6669
    %6690 = vmatprep.subr.bf16.mxu0 0
    %6691 = vmatpush1.bf16.msra.mxu0 %v6668
    %6692 = vmatprep.subr.bf16.mxu0 0
    %6693 = vmatpush1.bf16.msra.mxu0 %v6667
    %6694 = vmatprep.subr.bf16.mxu0 0
    %6695 = vmatpush2.bf16.msra.mxu0 0
    %6696 = vmatprep.subr.bf16.mxu0 0
    %6697 = vmatpush2.bf16.msra.mxu0 0
    %6698 = vmatprep.subr.bf16.mxu0 0
    %6699 = vmatpush2.bf16.msra.mxu0 0
    %6700 = vmatprep.subr.bf16.mxu0 0
    %6701 = vmatpush2.bf16.msra.mxu0 0
    %6702 = vmatprep.subr.bf16.mxu0 0
    %6703 = vmatpush2.bf16.msra.mxu0 0
    %6704 = vmatprep.subr.bf16.mxu0 0
    %6705 = vmatpush2.bf16.msra.mxu0 0
    %6706 = vmatprep.subr.bf16.mxu0 0
    %6707 = vmatpush2.bf16.msra.mxu0 0
    %6708 = vmatprep.subr.bf16.mxu0 0
    %6709 = vmatpush2.bf16.msra.mxu0 0
    %6710 = vmatprep.mubr.bf16.mxu0 0
    %6711 = vmatmul.mubr.bf16.gmra.mxu0 %v6676
    %v6712 = vpop.f32.mrf.mxu0
    %v6713 = vadd.f32 0.0, %v6712
    %v6714 = vpop.f32.mrf.mxu0
    %v6715 = vpop.f32.mrf.mxu0
    %v6716 = vpop.f32.mrf.mxu0
    %6717 = vdwg.mxu0
    %v6718 = vadd.f32 %v6639, %v6713
    %s6719 = scalar_lea.vmem %s5, 128
    %v6720 = vld [vmem:[%s6719] sm:$0xf]
    %v6721 = vld [vmem:[%s6719 + $0x4] sm:$0xf]
    %v6722 = vld [vmem:[%s6719 + $0x8] sm:$0xf]
    %v6723 = vld [vmem:[%s6719 + $0xc] sm:$0xf]
    %v6724 = vld [vmem:[%s6719 + $0x10] sm:$0xf]
    %v6725 = vld [vmem:[%s6719 + $0x14] sm:$0xf]
    %v6726 = vld [vmem:[%s6719 + $0x18] sm:$0xf]
    %v6727 = vld [vmem:[%s6719 + $0x1c] sm:$0xf]
    %v6736 = vunpack.c.l.b16 %v6720
    %v6737 = vunpack.c.l.b16 %v6721
    %v6738 = vunpack.c.l.b16 %v6722
    %v6739 = vunpack.c.l.b16 %v6723
    %v6740 = vunpack.c.l.b16 %v6724
    %v6741 = vunpack.c.l.b16 %v6725
    %v6742 = vunpack.c.l.b16 %v6726
    %v6743 = vunpack.c.l.b16 %v6727
    %v6744 = vpack.c.b16 %v6737, %v6736
    %v6745 = vpack.c.b16 %v6739, %v6738
    %v6746 = vpack.c.b16 %v6741, %v6740
    %v6747 = vpack.c.b16 %v6743, %v6742
    %v6753 = vsel %vm6452, %v6398, 0
    %6755 = vmatprep.subr.bf16.mxu0 0
    %6756 = vmatpush1.bf16.msra.mxu0 0
    %6757 = vmatprep.subr.bf16.mxu0 0
    %6758 = vmatpush1.bf16.msra.mxu0 0
    %6759 = vmatprep.subr.bf16.mxu0 0
    %6760 = vmatpush1.bf16.msra.mxu0 0
    %6761 = vmatprep.subr.bf16.mxu0 0
    %6762 = vmatpush1.bf16.msra.mxu0 0
    %6763 = vmatprep.subr.bf16.mxu0 0
    %6764 = vmatpush1.bf16.msra.mxu0 %v6747
    %6765 = vmatprep.subr.bf16.mxu0 0
    %6766 = vmatpush1.bf16.msra.mxu0 %v6746
    %6767 = vmatprep.subr.bf16.mxu0 0
    %6768 = vmatpush1.bf16.msra.mxu0 %v6745
    %6769 = vmatprep.subr.bf16.mxu0 0
    %6770 = vmatpush1.bf16.msra.mxu0 %v6744
    %6771 = vmatprep.subr.bf16.mxu0 0
    %6772 = vmatpush2.bf16.msra.mxu0 0
    %6773 = vmatprep.subr.bf16.mxu0 0
    %6774 = vmatpush2.bf16.msra.mxu0 0
    %6775 = vmatprep.subr.bf16.mxu0 0
    %6776 = vmatpush2.bf16.msra.mxu0 0
    %6777 = vmatprep.subr.bf16.mxu0 0
    %6778 = vmatpush2.bf16.msra.mxu0 0
    %6779 = vmatprep.subr.bf16.mxu0 0
    %6780 = vmatpush2.bf16.msra.mxu0 0
    %6781 = vmatprep.subr.bf16.mxu0 0
    %6782 = vmatpush2.bf16.msra.mxu0 0
    %6783 = vmatprep.subr.bf16.mxu0 0
    %6784 = vmatpush2.bf16.msra.mxu0 0
    %6785 = vmatprep.subr.bf16.mxu0 0
    %6786 = vmatpush2.bf16.msra.mxu0 0
    %6787 = vmatprep.mubr.bf16.mxu0 0
    %6788 = vmatmul.mubr.bf16.gmra.mxu0 %v6753
    %v6789 = vpop.f32.mrf.mxu0
    %v6790 = vadd.f32 0.0, %v6789
    %v6791 = vpop.f32.mrf.mxu0
    %v6792 = vpop.f32.mrf.mxu0
    %v6793 = vpop.f32.mrf.mxu0
    %6794 = vdwg.mxu0
    %v6795 = vadd.f32 %v6718, %v6790
    %s6796 = scalar_lea.vmem %s5, 160
    %v6797 = vld [vmem:[%s6796] sm:$0xf]
    %v6798 = vld [vmem:[%s6796 + $0x4] sm:$0xf]
    %v6799 = vld [vmem:[%s6796 + $0x8] sm:$0xf]
    %v6800 = vld [vmem:[%s6796 + $0xc] sm:$0xf]
    %v6801 = vld [vmem:[%s6796 + $0x10] sm:$0xf]
    %v6802 = vld [vmem:[%s6796 + $0x14] sm:$0xf]
    %v6803 = vld [vmem:[%s6796 + $0x18] sm:$0xf]
    %v6804 = vld [vmem:[%s6796 + $0x1c] sm:$0xf]
    %v6806 = vrot.slane %v6398, 4
    %v6815 = vunpack.c.l.b16 %v6797
    %v6816 = vunpack.c.l.b16 %v6798
    %v6817 = vunpack.c.l.b16 %v6799
    %v6818 = vunpack.c.l.b16 %v6800
    %v6819 = vunpack.c.l.b16 %v6801
    %v6820 = vunpack.c.l.b16 %v6802
    %v6821 = vunpack.c.l.b16 %v6803
    %v6822 = vunpack.c.l.b16 %v6804
    %v6823 = vpack.c.b16 %v6816, %v6815
    %v6824 = vpack.c.b16 %v6818, %v6817
    %v6825 = vpack.c.b16 %v6820, %v6819
    %v6826 = vpack.c.b16 %v6822, %v6821
    %v6832 = vsel %vm6452, %v6806, 0
    %6834 = vmatprep.subr.bf16.mxu0 0
    %6835 = vmatpush1.bf16.msra.mxu0 0
    %6836 = vmatprep.subr.bf16.mxu0 0
    %6837 = vmatpush1.bf16.msra.mxu0 0
    %6838 = vmatprep.subr.bf16.mxu0 0
    %6839 = vmatpush1.bf16.msra.mxu0 0
    %6840 = vmatprep.subr.bf16.mxu0 0
    %6841 = vmatpush1.bf16.msra.mxu0 0
    %6842 = vmatprep.subr.bf16.mxu0 0
    %6843 = vmatpush1.bf16.msra.mxu0 %v6826
    %6844 = vmatprep.subr.bf16.mxu0 0
    %6845 = vmatpush1.bf16.msra.mxu0 %v6825
    %6846 = vmatprep.subr.bf16.mxu0 0
    %6847 = vmatpush1.bf16.msra.mxu0 %v6824
    %6848 = vmatprep.subr.bf16.mxu0 0
    %6849 = vmatpush1.bf16.msra.mxu0 %v6823
    %6850 = vmatprep.subr.bf16.mxu0 0
    %6851 = vmatpush2.bf16.msra.mxu0 0
    %6852 = vmatprep.subr.bf16.mxu0 0
    %6853 = vmatpush2.bf16.msra.mxu0 0
    %6854 = vmatprep.subr.bf16.mxu0 0
    %6855 = vmatpush2.bf16.msra.mxu0 0
    %6856 = vmatprep.subr.bf16.mxu0 0
    %6857 = vmatpush2.bf16.msra.mxu0 0
    %6858 = vmatprep.subr.bf16.mxu0 0
    %6859 = vmatpush2.bf16.msra.mxu0 0
    %6860 = vmatprep.subr.bf16.mxu0 0
    %6861 = vmatpush2.bf16.msra.mxu0 0
    %6862 = vmatprep.subr.bf16.mxu0 0
    %6863 = vmatpush2.bf16.msra.mxu0 0
    %6864 = vmatprep.subr.bf16.mxu0 0
    %6865 = vmatpush2.bf16.msra.mxu0 0
    %6866 = vmatprep.mubr.bf16.mxu0 0
    %6867 = vmatmul.mubr.bf16.gmra.mxu0 %v6832
    %v6868 = vpop.f32.mrf.mxu0
    %v6869 = vadd.f32 0.0, %v6868
    %v6870 = vpop.f32.mrf.mxu0
    %v6871 = vpop.f32.mrf.mxu0
    %v6872 = vpop.f32.mrf.mxu0
    %6873 = vdwg.mxu0
    %v6874 = vadd.f32 %v6795, %v6869
    %s6875 = scalar_lea.vmem %s5, 192
    %v6876 = vld [vmem:[%s6875] sm:$0xf]
    %v6877 = vld [vmem:[%s6875 + $0x4] sm:$0xf]
    %v6878 = vld [vmem:[%s6875 + $0x8] sm:$0xf]
    %v6879 = vld [vmem:[%s6875 + $0xc] sm:$0xf]
    %v6880 = vld [vmem:[%s6875 + $0x10] sm:$0xf]
    %v6881 = vld [vmem:[%s6875 + $0x14] sm:$0xf]
    %v6882 = vld [vmem:[%s6875 + $0x18] sm:$0xf]
    %v6883 = vld [vmem:[%s6875 + $0x1c] sm:$0xf]
    %v6892 = vunpack.c.l.b16 %v6876
    %v6893 = vunpack.c.l.b16 %v6877
    %v6894 = vunpack.c.l.b16 %v6878
    %v6895 = vunpack.c.l.b16 %v6879
    %v6896 = vunpack.c.l.b16 %v6880
    %v6897 = vunpack.c.l.b16 %v6881
    %v6898 = vunpack.c.l.b16 %v6882
    %v6899 = vunpack.c.l.b16 %v6883
    %v6900 = vpack.c.b16 %v6893, %v6892
    %v6901 = vpack.c.b16 %v6895, %v6894
    %v6902 = vpack.c.b16 %v6897, %v6896
    %v6903 = vpack.c.b16 %v6899, %v6898
    %v6909 = vsel %vm6452, %v6399, 0
    %6911 = vmatprep.subr.bf16.mxu0 0
    %6912 = vmatpush1.bf16.msra.mxu0 0
    %6913 = vmatprep.subr.bf16.mxu0 0
    %6914 = vmatpush1.bf16.msra.mxu0 0
    %6915 = vmatprep.subr.bf16.mxu0 0
    %6916 = vmatpush1.bf16.msra.mxu0 0
    %6917 = vmatprep.subr.bf16.mxu0 0
    %6918 = vmatpush1.bf16.msra.mxu0 0
    %6919 = vmatprep.subr.bf16.mxu0 0
    %6920 = vmatpush1.bf16.msra.mxu0 %v6903
    %6921 = vmatprep.subr.bf16.mxu0 0
    %6922 = vmatpush1.bf16.msra.mxu0 %v6902
    %6923 = vmatprep.subr.bf16.mxu0 0
    %6924 = vmatpush1.bf16.msra.mxu0 %v6901
    %6925 = vmatprep.subr.bf16.mxu0 0
    %6926 = vmatpush1.bf16.msra.mxu0 %v6900
    %6927 = vmatprep.subr.bf16.mxu0 0
    %6928 = vmatpush2.bf16.msra.mxu0 0
    %6929 = vmatprep.subr.bf16.mxu0 0
    %6930 = vmatpush2.bf16.msra.mxu0 0
    %6931 = vmatprep.subr.bf16.mxu0 0
    %6932 = vmatpush2.bf16.msra.mxu0 0
    %6933 = vmatprep.subr.bf16.mxu0 0
    %6934 = vmatpush2.bf16.msra.mxu0 0
    %6935 = vmatprep.subr.bf16.mxu0 0
    %6936 = vmatpush2.bf16.msra.mxu0 0
    %6937 = vmatprep.subr.bf16.mxu0 0
    %6938 = vmatpush2.bf16.msra.mxu0 0
    %6939 = vmatprep.subr.bf16.mxu0 0
    %6940 = vmatpush2.bf16.msra.mxu0 0
    %6941 = vmatprep.subr.bf16.mxu0 0
    %6942 = vmatpush2.bf16.msra.mxu0 0
    %6943 = vmatprep.mubr.bf16.mxu0 0
    %6944 = vmatmul.mubr.bf16.gmra.mxu0 %v6909
    %v6945 = vpop.f32.mrf.mxu0
    %v6946 = vadd.f32 0.0, %v6945
    %v6947 = vpop.f32.mrf.mxu0
    %v6948 = vpop.f32.mrf.mxu0
    %v6949 = vpop.f32.mrf.mxu0
    %6950 = vdwg.mxu0
    %v6951 = vadd.f32 %v6874, %v6946
    %s6952 = scalar_lea.vmem %s5, 224
    %v6953 = vld [vmem:[%s6952] sm:$0xf]
    %v6954 = vld [vmem:[%s6952 + $0x4] sm:$0xf]
    %v6955 = vld [vmem:[%s6952 + $0x8] sm:$0xf]
    %v6956 = vld [vmem:[%s6952 + $0xc] sm:$0xf]
    %v6957 = vld [vmem:[%s6952 + $0x10] sm:$0xf]
    %v6958 = vld [vmem:[%s6952 + $0x14] sm:$0xf]
    %v6959 = vld [vmem:[%s6952 + $0x18] sm:$0xf]
    %v6960 = vld [vmem:[%s6952 + $0x1c] sm:$0xf]
    %v6962 = vrot.slane %v6399, 4
    %v6971 = vunpack.c.l.b16 %v6953
    %v6972 = vunpack.c.l.b16 %v6954
    %v6973 = vunpack.c.l.b16 %v6955
    %v6974 = vunpack.c.l.b16 %v6956
    %v6975 = vunpack.c.l.b16 %v6957
    %v6976 = vunpack.c.l.b16 %v6958
    %v6977 = vunpack.c.l.b16 %v6959
    %v6978 = vunpack.c.l.b16 %v6960
    %v6979 = vpack.c.b16 %v6972, %v6971
    %v6980 = vpack.c.b16 %v6974, %v6973
    %v6981 = vpack.c.b16 %v6976, %v6975
    %v6982 = vpack.c.b16 %v6978, %v6977
    %v6988 = vsel %vm6452, %v6962, 0
    %6990 = vmatprep.subr.bf16.mxu0 0
    %6991 = vmatpush1.bf16.msra.mxu0 0
    %6992 = vmatprep.subr.bf16.mxu0 0
    %6993 = vmatpush1.bf16.msra.mxu0 0
    %6994 = vmatprep.subr.bf16.mxu0 0
    %6995 = vmatpush1.bf16.msra.mxu0 0
    %6996 = vmatprep.subr.bf16.mxu0 0
    %6997 = vmatpush1.bf16.msra.mxu0 0
    %6998 = vmatprep.subr.bf16.mxu0 0
    %6999 = vmatpush1.bf16.msra.mxu0 %v6982
    %7000 = vmatprep.subr.bf16.mxu0 0
    %7001 = vmatpush1.bf16.msra.mxu0 %v6981
    %7002 = vmatprep.subr.bf16.mxu0 0
    %7003 = vmatpush1.bf16.msra.mxu0 %v6980
    %7004 = vmatprep.subr.bf16.mxu0 0
    %7005 = vmatpush1.bf16.msra.mxu0 %v6979
    %7006 = vmatprep.subr.bf16.mxu0 0
    %7007 = vmatpush2.bf16.msra.mxu0 0
    %7008 = vmatprep.subr.bf16.mxu0 0
    %7009 = vmatpush2.bf16.msra.mxu0 0
    %7010 = vmatprep.subr.bf16.mxu0 0
    %7011 = vmatpush2.bf16.msra.mxu0 0
    %7012 = vmatprep.subr.bf16.mxu0 0
    %7013 = vmatpush2.bf16.msra.mxu0 0
    %7014 = vmatprep.subr.bf16.mxu0 0
    %7015 = vmatpush2.bf16.msra.mxu0 0
    %7016 = vmatprep.subr.bf16.mxu0 0
    %7017 = vmatpush2.bf16.msra.mxu0 0
    %7018 = vmatprep.subr.bf16.mxu0 0
    %7019 = vmatpush2.bf16.msra.mxu0 0
    %7020 = vmatprep.subr.bf16.mxu0 0
    %7021 = vmatpush2.bf16.msra.mxu0 0
    %7022 = vmatprep.mubr.bf16.mxu0 0
    %7023 = vmatmul.mubr.bf16.gmra.mxu0 %v6988
    %v7024 = vpop.f32.mrf.mxu0
    %v7025 = vadd.f32 0.0, %v7024
    %v7026 = vpop.f32.mrf.mxu0
    %v7027 = vpop.f32.mrf.mxu0
    %v7028 = vpop.f32.mrf.mxu0
    %7029 = vdwg.mxu0
    %v7030 = vadd.f32 %v6951, %v7025
    %s7031 = scalar_lea.vmem %s5, 256
    %v7032 = vld [vmem:[%s7031] sm:$0xf]
    %v7033 = vld [vmem:[%s7031 + $0x4] sm:$0xf]
    %v7034 = vld [vmem:[%s7031 + $0x8] sm:$0xf]
    %v7035 = vld [vmem:[%s7031 + $0xc] sm:$0xf]
    %v7036 = vld [vmem:[%s7031 + $0x10] sm:$0xf]
    %v7037 = vld [vmem:[%s7031 + $0x14] sm:$0xf]
    %v7038 = vld [vmem:[%s7031 + $0x18] sm:$0xf]
    %v7039 = vld [vmem:[%s7031 + $0x1c] sm:$0xf]
    %v7048 = vunpack.c.l.b16 %v7032
    %v7049 = vunpack.c.l.b16 %v7033
    %v7050 = vunpack.c.l.b16 %v7034
    %v7051 = vunpack.c.l.b16 %v7035
    %v7052 = vunpack.c.l.b16 %v7036
    %v7053 = vunpack.c.l.b16 %v7037
    %v7054 = vunpack.c.l.b16 %v7038
    %v7055 = vunpack.c.l.b16 %v7039
    %v7056 = vpack.c.b16 %v7049, %v7048
    %v7057 = vpack.c.b16 %v7051, %v7050
    %v7058 = vpack.c.b16 %v7053, %v7052
    %v7059 = vpack.c.b16 %v7055, %v7054
    %v7065 = vsel %vm6452, %v6400, 0
    %7067 = vmatprep.subr.bf16.mxu0 0
    %7068 = vmatpush1.bf16.msra.mxu0 0
    %7069 = vmatprep.subr.bf16.mxu0 0
    %7070 = vmatpush1.bf16.msra.mxu0 0
    %7071 = vmatprep.subr.bf16.mxu0 0
    %7072 = vmatpush1.bf16.msra.mxu0 0
    %7073 = vmatprep.subr.bf16.mxu0 0
    %7074 = vmatpush1.bf16.msra.mxu0 0
    %7075 = vmatprep.subr.bf16.mxu0 0
    %7076 = vmatpush1.bf16.msra.mxu0 %v7059
    %7077 = vmatprep.subr.bf16.mxu0 0
    %7078 = vmatpush1.bf16.msra.mxu0 %v7058
    %7079 = vmatprep.subr.bf16.mxu0 0
    %7080 = vmatpush1.bf16.msra.mxu0 %v7057
    %7081 = vmatprep.subr.bf16.mxu0 0
    %7082 = vmatpush1.bf16.msra.mxu0 %v7056
    %7083 = vmatprep.subr.bf16.mxu0 0
    %7084 = vmatpush2.bf16.msra.mxu0 0
    %7085 = vmatprep.subr.bf16.mxu0 0
    %7086 = vmatpush2.bf16.msra.mxu0 0
    %7087 = vmatprep.subr.bf16.mxu0 0
    %7088 = vmatpush2.bf16.msra.mxu0 0
    %7089 = vmatprep.subr.bf16.mxu0 0
    %7090 = vmatpush2.bf16.msra.mxu0 0
    %7091 = vmatprep.subr.bf16.mxu0 0
    %7092 = vmatpush2.bf16.msra.mxu0 0
    %7093 = vmatprep.subr.bf16.mxu0 0
    %7094 = vmatpush2.bf16.msra.mxu0 0
    %7095 = vmatprep.subr.bf16.mxu0 0
    %7096 = vmatpush2.bf16.msra.mxu0 0
    %7097 = vmatprep.subr.bf16.mxu0 0
    %7098 = vmatpush2.bf16.msra.mxu0 0
    %7099 = vmatprep.mubr.bf16.mxu0 0
    %7100 = vmatmul.mubr.bf16.gmra.mxu0 %v7065
    %v7101 = vpop.f32.mrf.mxu0
    %v7102 = vadd.f32 0.0, %v7101
    %v7103 = vpop.f32.mrf.mxu0
    %v7104 = vpop.f32.mrf.mxu0
    %v7105 = vpop.f32.mrf.mxu0
    %7106 = vdwg.mxu0
    %v7107 = vadd.f32 %v7030, %v7102
    %s7108 = scalar_lea.vmem %s5, 288
    %v7109 = vld [vmem:[%s7108] sm:$0xf]
    %v7110 = vld [vmem:[%s7108 + $0x4] sm:$0xf]
    %v7111 = vld [vmem:[%s7108 + $0x8] sm:$0xf]
    %v7112 = vld [vmem:[%s7108 + $0xc] sm:$0xf]
    %v7113 = vld [vmem:[%s7108 + $0x10] sm:$0xf]
    %v7114 = vld [vmem:[%s7108 + $0x14] sm:$0xf]
    %v7115 = vld [vmem:[%s7108 + $0x18] sm:$0xf]
    %v7116 = vld [vmem:[%s7108 + $0x1c] sm:$0xf]
    %v7118 = vrot.slane %v6400, 4
    %v7127 = vunpack.c.l.b16 %v7109
    %v7128 = vunpack.c.l.b16 %v7110
    %v7129 = vunpack.c.l.b16 %v7111
    %v7130 = vunpack.c.l.b16 %v7112
    %v7131 = vunpack.c.l.b16 %v7113
    %v7132 = vunpack.c.l.b16 %v7114
    %v7133 = vunpack.c.l.b16 %v7115
    %v7134 = vunpack.c.l.b16 %v7116
    %v7135 = vpack.c.b16 %v7128, %v7127
    %v7136 = vpack.c.b16 %v7130, %v7129
    %v7137 = vpack.c.b16 %v7132, %v7131
    %v7138 = vpack.c.b16 %v7134, %v7133
    %v7144 = vsel %vm6452, %v7118, 0
    %7146 = vmatprep.subr.bf16.mxu0 0
    %7147 = vmatpush1.bf16.msra.mxu0 0
    %7148 = vmatprep.subr.bf16.mxu0 0
    %7149 = vmatpush1.bf16.msra.mxu0 0
    %7150 = vmatprep.subr.bf16.mxu0 0
    %7151 = vmatpush1.bf16.msra.mxu0 0
    %7152 = vmatprep.subr.bf16.mxu0 0
    %7153 = vmatpush1.bf16.msra.mxu0 0
    %7154 = vmatprep.subr.bf16.mxu0 0
    %7155 = vmatpush1.bf16.msra.mxu0 %v7138
    %7156 = vmatprep.subr.bf16.mxu0 0
    %7157 = vmatpush1.bf16.msra.mxu0 %v7137
    %7158 = vmatprep.subr.bf16.mxu0 0
    %7159 = vmatpush1.bf16.msra.mxu0 %v7136
    %7160 = vmatprep.subr.bf16.mxu0 0
    %7161 = vmatpush1.bf16.msra.mxu0 %v7135
    %7162 = vmatprep.subr.bf16.mxu0 0
    %7163 = vmatpush2.bf16.msra.mxu0 0
    %7164 = vmatprep.subr.bf16.mxu0 0
    %7165 = vmatpush2.bf16.msra.mxu0 0
    %7166 = vmatprep.subr.bf16.mxu0 0
    %7167 = vmatpush2.bf16.msra.mxu0 0
    %7168 = vmatprep.subr.bf16.mxu0 0
    %7169 = vmatpush2.bf16.msra.mxu0 0
    %7170 = vmatprep.subr.bf16.mxu0 0
    %7171 = vmatpush2.bf16.msra.mxu0 0
    %7172 = vmatprep.subr.bf16.mxu0 0
    %7173 = vmatpush2.bf16.msra.mxu0 0
    %7174 = vmatprep.subr.bf16.mxu0 0
    %7175 = vmatpush2.bf16.msra.mxu0 0
    %7176 = vmatprep.subr.bf16.mxu0 0
    %7177 = vmatpush2.bf16.msra.mxu0 0
    %7178 = vmatprep.mubr.bf16.mxu0 0
    %7179 = vmatmul.mubr.bf16.gmra.mxu0 %v7144
    %v7180 = vpop.f32.mrf.mxu0
    %v7181 = vadd.f32 0.0, %v7180
    %v7182 = vpop.f32.mrf.mxu0
    %v7183 = vpop.f32.mrf.mxu0
    %v7184 = vpop.f32.mrf.mxu0
    %7185 = vdwg.mxu0
    %v7186 = vadd.f32 %v7107, %v7181
    %s7187 = scalar_lea.vmem %s5, 320
    %v7188 = vld [vmem:[%s7187] sm:$0xf]
    %v7189 = vld [vmem:[%s7187 + $0x4] sm:$0xf]
    %v7190 = vld [vmem:[%s7187 + $0x8] sm:$0xf]
    %v7191 = vld [vmem:[%s7187 + $0xc] sm:$0xf]
    %v7192 = vld [vmem:[%s7187 + $0x10] sm:$0xf]
    %v7193 = vld [vmem:[%s7187 + $0x14] sm:$0xf]
    %v7194 = vld [vmem:[%s7187 + $0x18] sm:$0xf]
    %v7195 = vld [vmem:[%s7187 + $0x1c] sm:$0xf]
    %v7204 = vunpack.c.l.b16 %v7188
    %v7205 = vunpack.c.l.b16 %v7189
    %v7206 = vunpack.c.l.b16 %v7190
    %v7207 = vunpack.c.l.b16 %v7191
    %v7208 = vunpack.c.l.b16 %v7192
    %v7209 = vunpack.c.l.b16 %v7193
    %v7210 = vunpack.c.l.b16 %v7194
    %v7211 = vunpack.c.l.b16 %v7195
    %v7212 = vpack.c.b16 %v7205, %v7204
    %v7213 = vpack.c.b16 %v7207, %v7206
    %v7214 = vpack.c.b16 %v7209, %v7208
    %v7215 = vpack.c.b16 %v7211, %v7210
    %v7221 = vsel %vm6452, %v6401, 0
    %7223 = vmatprep.subr.bf16.mxu0 0
    %7224 = vmatpush1.bf16.msra.mxu0 0
    %7225 = vmatprep.subr.bf16.mxu0 0
    %7226 = vmatpush1.bf16.msra.mxu0 0
    %7227 = vmatprep.subr.bf16.mxu0 0
    %7228 = vmatpush1.bf16.msra.mxu0 0
    %7229 = vmatprep.subr.bf16.mxu0 0
    %7230 = vmatpush1.bf16.msra.mxu0 0
    %7231 = vmatprep.subr.bf16.mxu0 0
    %7232 = vmatpush1.bf16.msra.mxu0 %v7215
    %7233 = vmatprep.subr.bf16.mxu0 0
    %7234 = vmatpush1.bf16.msra.mxu0 %v7214
    %7235 = vmatprep.subr.bf16.mxu0 0
    %7236 = vmatpush1.bf16.msra.mxu0 %v7213
    %7237 = vmatprep.subr.bf16.mxu0 0
    %7238 = vmatpush1.bf16.msra.mxu0 %v7212
    %7239 = vmatprep.subr.bf16.mxu0 0
    %7240 = vmatpush2.bf16.msra.mxu0 0
    %7241 = vmatprep.subr.bf16.mxu0 0
    %7242 = vmatpush2.bf16.msra.mxu0 0
    %7243 = vmatprep.subr.bf16.mxu0 0
    %7244 = vmatpush2.bf16.msra.mxu0 0
    %7245 = vmatprep.subr.bf16.mxu0 0
    %7246 = vmatpush2.bf16.msra.mxu0 0
    %7247 = vmatprep.subr.bf16.mxu0 0
    %7248 = vmatpush2.bf16.msra.mxu0 0
    %7249 = vmatprep.subr.bf16.mxu0 0
    %7250 = vmatpush2.bf16.msra.mxu0 0
    %7251 = vmatprep.subr.bf16.mxu0 0
    %7252 = vmatpush2.bf16.msra.mxu0 0
    %7253 = vmatprep.subr.bf16.mxu0 0
    %7254 = vmatpush2.bf16.msra.mxu0 0
    %7255 = vmatprep.mubr.bf16.mxu0 0
    %7256 = vmatmul.mubr.bf16.gmra.mxu0 %v7221
    %v7257 = vpop.f32.mrf.mxu0
    %v7258 = vadd.f32 0.0, %v7257
    %v7259 = vpop.f32.mrf.mxu0
    %v7260 = vpop.f32.mrf.mxu0
    %v7261 = vpop.f32.mrf.mxu0
    %7262 = vdwg.mxu0
    %v7263 = vadd.f32 %v7186, %v7258
    %s7264 = scalar_lea.vmem %s5, 352
    %v7265 = vld [vmem:[%s7264] sm:$0xf]
    %v7266 = vld [vmem:[%s7264 + $0x4] sm:$0xf]
    %v7267 = vld [vmem:[%s7264 + $0x8] sm:$0xf]
    %v7268 = vld [vmem:[%s7264 + $0xc] sm:$0xf]
    %v7269 = vld [vmem:[%s7264 + $0x10] sm:$0xf]
    %v7270 = vld [vmem:[%s7264 + $0x14] sm:$0xf]
    %v7271 = vld [vmem:[%s7264 + $0x18] sm:$0xf]
    %v7272 = vld [vmem:[%s7264 + $0x1c] sm:$0xf]
    %v7274 = vrot.slane %v6401, 4
    %v7283 = vunpack.c.l.b16 %v7265
    %v7284 = vunpack.c.l.b16 %v7266
    %v7285 = vunpack.c.l.b16 %v7267
    %v7286 = vunpack.c.l.b16 %v7268
    %v7287 = vunpack.c.l.b16 %v7269
    %v7288 = vunpack.c.l.b16 %v7270
    %v7289 = vunpack.c.l.b16 %v7271
    %v7290 = vunpack.c.l.b16 %v7272
    %v7291 = vpack.c.b16 %v7284, %v7283
    %v7292 = vpack.c.b16 %v7286, %v7285
    %v7293 = vpack.c.b16 %v7288, %v7287
    %v7294 = vpack.c.b16 %v7290, %v7289
    %v7300 = vsel %vm6452, %v7274, 0
    %7302 = vmatprep.subr.bf16.mxu0 0
    %7303 = vmatpush1.bf16.msra.mxu0 0
    %7304 = vmatprep.subr.bf16.mxu0 0
    %7305 = vmatpush1.bf16.msra.mxu0 0
    %7306 = vmatprep.subr.bf16.mxu0 0
    %7307 = vmatpush1.bf16.msra.mxu0 0
    %7308 = vmatprep.subr.bf16.mxu0 0
    %7309 = vmatpush1.bf16.msra.mxu0 0
    %7310 = vmatprep.subr.bf16.mxu0 0
    %7311 = vmatpush1.bf16.msra.mxu0 %v7294
    %7312 = vmatprep.subr.bf16.mxu0 0
    %7313 = vmatpush1.bf16.msra.mxu0 %v7293
    %7314 = vmatprep.subr.bf16.mxu0 0
    %7315 = vmatpush1.bf16.msra.mxu0 %v7292
    %7316 = vmatprep.subr.bf16.mxu0 0
    %7317 = vmatpush1.bf16.msra.mxu0 %v7291
    %7318 = vmatprep.subr.bf16.mxu0 0
    %7319 = vmatpush2.bf16.msra.mxu0 0
    %7320 = vmatprep.subr.bf16.mxu0 0
    %7321 = vmatpush2.bf16.msra.mxu0 0
    %7322 = vmatprep.subr.bf16.mxu0 0
    %7323 = vmatpush2.bf16.msra.mxu0 0
    %7324 = vmatprep.subr.bf16.mxu0 0
    %7325 = vmatpush2.bf16.msra.mxu0 0
    %7326 = vmatprep.subr.bf16.mxu0 0
    %7327 = vmatpush2.bf16.msra.mxu0 0
    %7328 = vmatprep.subr.bf16.mxu0 0
    %7329 = vmatpush2.bf16.msra.mxu0 0
    %7330 = vmatprep.subr.bf16.mxu0 0
    %7331 = vmatpush2.bf16.msra.mxu0 0
    %7332 = vmatprep.subr.bf16.mxu0 0
    %7333 = vmatpush2.bf16.msra.mxu0 0
    %7334 = vmatprep.mubr.bf16.mxu0 0
    %7335 = vmatmul.mubr.bf16.gmra.mxu0 %v7300
    %v7336 = vpop.f32.mrf.mxu0
    %v7337 = vadd.f32 0.0, %v7336
    %v7338 = vpop.f32.mrf.mxu0
    %v7339 = vpop.f32.mrf.mxu0
    %v7340 = vpop.f32.mrf.mxu0
    %7341 = vdwg.mxu0
    %v7342 = vadd.f32 %v7263, %v7337
    %s7343 = scalar_lea.vmem %s5, 384
    %v7344 = vld [vmem:[%s7343] sm:$0xf]
    %v7345 = vld [vmem:[%s7343 + $0x4] sm:$0xf]
    %v7346 = vld [vmem:[%s7343 + $0x8] sm:$0xf]
    %v7347 = vld [vmem:[%s7343 + $0xc] sm:$0xf]
    %v7348 = vld [vmem:[%s7343 + $0x10] sm:$0xf]
    %v7349 = vld [vmem:[%s7343 + $0x14] sm:$0xf]
    %v7350 = vld [vmem:[%s7343 + $0x18] sm:$0xf]
    %v7351 = vld [vmem:[%s7343 + $0x1c] sm:$0xf]
    %v7360 = vunpack.c.l.b16 %v7344
    %v7361 = vunpack.c.l.b16 %v7345
    %v7362 = vunpack.c.l.b16 %v7346
    %v7363 = vunpack.c.l.b16 %v7347
    %v7364 = vunpack.c.l.b16 %v7348
    %v7365 = vunpack.c.l.b16 %v7349
    %v7366 = vunpack.c.l.b16 %v7350
    %v7367 = vunpack.c.l.b16 %v7351
    %v7368 = vpack.c.b16 %v7361, %v7360
    %v7369 = vpack.c.b16 %v7363, %v7362
    %v7370 = vpack.c.b16 %v7365, %v7364
    %v7371 = vpack.c.b16 %v7367, %v7366
    %v7377 = vsel %vm6452, %v6402, 0
    %7379 = vmatprep.subr.bf16.mxu0 0
    %7380 = vmatpush1.bf16.msra.mxu0 0
    %7381 = vmatprep.subr.bf16.mxu0 0
    %7382 = vmatpush1.bf16.msra.mxu0 0
    %7383 = vmatprep.subr.bf16.mxu0 0
    %7384 = vmatpush1.bf16.msra.mxu0 0
    %7385 = vmatprep.subr.bf16.mxu0 0
    %7386 = vmatpush1.bf16.msra.mxu0 0
    %7387 = vmatprep.subr.bf16.mxu0 0
    %7388 = vmatpush1.bf16.msra.mxu0 %v7371
    %7389 = vmatprep.subr.bf16.mxu0 0
    %7390 = vmatpush1.bf16.msra.mxu0 %v7370
    %7391 = vmatprep.subr.bf16.mxu0 0
    %7392 = vmatpush1.bf16.msra.mxu0 %v7369
    %7393 = vmatprep.subr.bf16.mxu0 0
    %7394 = vmatpush1.bf16.msra.mxu0 %v7368
    %7395 = vmatprep.subr.bf16.mxu0 0
    %7396 = vmatpush2.bf16.msra.mxu0 0
    %7397 = vmatprep.subr.bf16.mxu0 0
    %7398 = vmatpush2.bf16.msra.mxu0 0
    %7399 = vmatprep.subr.bf16.mxu0 0
    %7400 = vmatpush2.bf16.msra.mxu0 0
    %7401 = vmatprep.subr.bf16.mxu0 0
    %7402 = vmatpush2.bf16.msra.mxu0 0
    %7403 = vmatprep.subr.bf16.mxu0 0
    %7404 = vmatpush2.bf16.msra.mxu0 0
    %7405 = vmatprep.subr.bf16.mxu0 0
    %7406 = vmatpush2.bf16.msra.mxu0 0
    %7407 = vmatprep.subr.bf16.mxu0 0
    %7408 = vmatpush2.bf16.msra.mxu0 0
    %7409 = vmatprep.subr.bf16.mxu0 0
    %7410 = vmatpush2.bf16.msra.mxu0 0
    %7411 = vmatprep.mubr.bf16.mxu0 0
    %7412 = vmatmul.mubr.bf16.gmra.mxu0 %v7377
    %v7413 = vpop.f32.mrf.mxu0
    %v7414 = vadd.f32 0.0, %v7413
    %v7415 = vpop.f32.mrf.mxu0
    %v7416 = vpop.f32.mrf.mxu0
    %v7417 = vpop.f32.mrf.mxu0
    %7418 = vdwg.mxu0
    %v7419 = vadd.f32 %v7342, %v7414
    %s7420 = scalar_lea.vmem %s5, 416
    %v7421 = vld [vmem:[%s7420] sm:$0xf]
    %v7422 = vld [vmem:[%s7420 + $0x4] sm:$0xf]
    %v7423 = vld [vmem:[%s7420 + $0x8] sm:$0xf]
    %v7424 = vld [vmem:[%s7420 + $0xc] sm:$0xf]
    %v7425 = vld [vmem:[%s7420 + $0x10] sm:$0xf]
    %v7426 = vld [vmem:[%s7420 + $0x14] sm:$0xf]
    %v7427 = vld [vmem:[%s7420 + $0x18] sm:$0xf]
    %v7428 = vld [vmem:[%s7420 + $0x1c] sm:$0xf]
    %v7430 = vrot.slane %v6402, 4
    %v7439 = vunpack.c.l.b16 %v7421
    %v7440 = vunpack.c.l.b16 %v7422
    %v7441 = vunpack.c.l.b16 %v7423
    %v7442 = vunpack.c.l.b16 %v7424
    %v7443 = vunpack.c.l.b16 %v7425
    %v7444 = vunpack.c.l.b16 %v7426
    %v7445 = vunpack.c.l.b16 %v7427
    %v7446 = vunpack.c.l.b16 %v7428
    %v7447 = vpack.c.b16 %v7440, %v7439
    %v7448 = vpack.c.b16 %v7442, %v7441
    %v7449 = vpack.c.b16 %v7444, %v7443
    %v7450 = vpack.c.b16 %v7446, %v7445
    %v7456 = vsel %vm6452, %v7430, 0
    %7458 = vmatprep.subr.bf16.mxu0 0
    %7459 = vmatpush1.bf16.msra.mxu0 0
    %7460 = vmatprep.subr.bf16.mxu0 0
    %7461 = vmatpush1.bf16.msra.mxu0 0
    %7462 = vmatprep.subr.bf16.mxu0 0
    %7463 = vmatpush1.bf16.msra.mxu0 0
    %7464 = vmatprep.subr.bf16.mxu0 0
    %7465 = vmatpush1.bf16.msra.mxu0 0
    %7466 = vmatprep.subr.bf16.mxu0 0
    %7467 = vmatpush1.bf16.msra.mxu0 %v7450
    %7468 = vmatprep.subr.bf16.mxu0 0
    %7469 = vmatpush1.bf16.msra.mxu0 %v7449
    %7470 = vmatprep.subr.bf16.mxu0 0
    %7471 = vmatpush1.bf16.msra.mxu0 %v7448
    %7472 = vmatprep.subr.bf16.mxu0 0
    %7473 = vmatpush1.bf16.msra.mxu0 %v7447
    %7474 = vmatprep.subr.bf16.mxu0 0
    %7475 = vmatpush2.bf16.msra.mxu0 0
    %7476 = vmatprep.subr.bf16.mxu0 0
    %7477 = vmatpush2.bf16.msra.mxu0 0
    %7478 = vmatprep.subr.bf16.mxu0 0
    %7479 = vmatpush2.bf16.msra.mxu0 0
    %7480 = vmatprep.subr.bf16.mxu0 0
    %7481 = vmatpush2.bf16.msra.mxu0 0
    %7482 = vmatprep.subr.bf16.mxu0 0
    %7483 = vmatpush2.bf16.msra.mxu0 0
    %7484 = vmatprep.subr.bf16.mxu0 0
    %7485 = vmatpush2.bf16.msra.mxu0 0
    %7486 = vmatprep.subr.bf16.mxu0 0
    %7487 = vmatpush2.bf16.msra.mxu0 0
    %7488 = vmatprep.subr.bf16.mxu0 0
    %7489 = vmatpush2.bf16.msra.mxu0 0
    %7490 = vmatprep.mubr.bf16.mxu0 0
    %7491 = vmatmul.mubr.bf16.gmra.mxu0 %v7456
    %v7492 = vpop.f32.mrf.mxu0
    %v7493 = vadd.f32 0.0, %v7492
    %v7494 = vpop.f32.mrf.mxu0
    %v7495 = vpop.f32.mrf.mxu0
    %v7496 = vpop.f32.mrf.mxu0
    %7497 = vdwg.mxu0
    %v7498 = vadd.f32 %v7419, %v7493
    %s7499 = scalar_lea.vmem %s5, 448
    %v7500 = vld [vmem:[%s7499] sm:$0xf]
    %v7501 = vld [vmem:[%s7499 + $0x4] sm:$0xf]
    %v7502 = vld [vmem:[%s7499 + $0x8] sm:$0xf]
    %v7503 = vld [vmem:[%s7499 + $0xc] sm:$0xf]
    %v7504 = vld [vmem:[%s7499 + $0x10] sm:$0xf]
    %v7505 = vld [vmem:[%s7499 + $0x14] sm:$0xf]
    %v7506 = vld [vmem:[%s7499 + $0x18] sm:$0xf]
    %v7507 = vld [vmem:[%s7499 + $0x1c] sm:$0xf]
    %v7516 = vunpack.c.l.b16 %v7500
    %v7517 = vunpack.c.l.b16 %v7501
    %v7518 = vunpack.c.l.b16 %v7502
    %v7519 = vunpack.c.l.b16 %v7503
    %v7520 = vunpack.c.l.b16 %v7504
    %v7521 = vunpack.c.l.b16 %v7505
    %v7522 = vunpack.c.l.b16 %v7506
    %v7523 = vunpack.c.l.b16 %v7507
    %v7524 = vpack.c.b16 %v7517, %v7516
    %v7525 = vpack.c.b16 %v7519, %v7518
    %v7526 = vpack.c.b16 %v7521, %v7520
    %v7527 = vpack.c.b16 %v7523, %v7522
    %v7533 = vsel %vm6452, %v6403, 0
    %7535 = vmatprep.subr.bf16.mxu0 0
    %7536 = vmatpush1.bf16.msra.mxu0 0
    %7537 = vmatprep.subr.bf16.mxu0 0
    %7538 = vmatpush1.bf16.msra.mxu0 0
    %7539 = vmatprep.subr.bf16.mxu0 0
    %7540 = vmatpush1.bf16.msra.mxu0 0
    %7541 = vmatprep.subr.bf16.mxu0 0
    %7542 = vmatpush1.bf16.msra.mxu0 0
    %7543 = vmatprep.subr.bf16.mxu0 0
    %7544 = vmatpush1.bf16.msra.mxu0 %v7527
    %7545 = vmatprep.subr.bf16.mxu0 0
    %7546 = vmatpush1.bf16.msra.mxu0 %v7526
    %7547 = vmatprep.subr.bf16.mxu0 0
    %7548 = vmatpush1.bf16.msra.mxu0 %v7525
    %7549 = vmatprep.subr.bf16.mxu0 0
    %7550 = vmatpush1.bf16.msra.mxu0 %v7524
    %7551 = vmatprep.subr.bf16.mxu0 0
    %7552 = vmatpush2.bf16.msra.mxu0 0
    %7553 = vmatprep.subr.bf16.mxu0 0
    %7554 = vmatpush2.bf16.msra.mxu0 0
    %7555 = vmatprep.subr.bf16.mxu0 0
    %7556 = vmatpush2.bf16.msra.mxu0 0
    %7557 = vmatprep.subr.bf16.mxu0 0
    %7558 = vmatpush2.bf16.msra.mxu0 0
    %7559 = vmatprep.subr.bf16.mxu0 0
    %7560 = vmatpush2.bf16.msra.mxu0 0
    %7561 = vmatprep.subr.bf16.mxu0 0
    %7562 = vmatpush2.bf16.msra.mxu0 0
    %7563 = vmatprep.subr.bf16.mxu0 0
    %7564 = vmatpush2.bf16.msra.mxu0 0
    %7565 = vmatprep.subr.bf16.mxu0 0
    %7566 = vmatpush2.bf16.msra.mxu0 0
    %7567 = vmatprep.mubr.bf16.mxu0 0
    %7568 = vmatmul.mubr.bf16.gmra.mxu0 %v7533
    %v7569 = vpop.f32.mrf.mxu0
    %v7570 = vadd.f32 0.0, %v7569
    %v7571 = vpop.f32.mrf.mxu0
    %v7572 = vpop.f32.mrf.mxu0
    %v7573 = vpop.f32.mrf.mxu0
    %7574 = vdwg.mxu0
    %v7575 = vadd.f32 %v7498, %v7570
    %s7576 = scalar_lea.vmem %s5, 480
    %v7577 = vld [vmem:[%s7576] sm:$0xf]
    %v7578 = vld [vmem:[%s7576 + $0x4] sm:$0xf]
    %v7579 = vld [vmem:[%s7576 + $0x8] sm:$0xf]
    %v7580 = vld [vmem:[%s7576 + $0xc] sm:$0xf]
    %v7581 = vld [vmem:[%s7576 + $0x10] sm:$0xf]
    %v7582 = vld [vmem:[%s7576 + $0x14] sm:$0xf]
    %v7583 = vld [vmem:[%s7576 + $0x18] sm:$0xf]
    %v7584 = vld [vmem:[%s7576 + $0x1c] sm:$0xf]
    %v7586 = vrot.slane %v6403, 4
    %v7595 = vunpack.c.l.b16 %v7577
    %v7596 = vunpack.c.l.b16 %v7578
    %v7597 = vunpack.c.l.b16 %v7579
    %v7598 = vunpack.c.l.b16 %v7580
    %v7599 = vunpack.c.l.b16 %v7581
    %v7600 = vunpack.c.l.b16 %v7582
    %v7601 = vunpack.c.l.b16 %v7583
    %v7602 = vunpack.c.l.b16 %v7584
    %v7603 = vpack.c.b16 %v7596, %v7595
    %v7604 = vpack.c.b16 %v7598, %v7597
    %v7605 = vpack.c.b16 %v7600, %v7599
    %v7606 = vpack.c.b16 %v7602, %v7601
    %v7612 = vsel %vm6452, %v7586, 0
    %7614 = vmatprep.subr.bf16.mxu0 0
    %7615 = vmatpush1.bf16.msra.mxu0 0
    %7616 = vmatprep.subr.bf16.mxu0 0
    %7617 = vmatpush1.bf16.msra.mxu0 0
    %7618 = vmatprep.subr.bf16.mxu0 0
    %7619 = vmatpush1.bf16.msra.mxu0 0
    %7620 = vmatprep.subr.bf16.mxu0 0
    %7621 = vmatpush1.bf16.msra.mxu0 0
    %7622 = vmatprep.subr.bf16.mxu0 0
    %7623 = vmatpush1.bf16.msra.mxu0 %v7606
    %7624 = vmatprep.subr.bf16.mxu0 0
    %7625 = vmatpush1.bf16.msra.mxu0 %v7605
    %7626 = vmatprep.subr.bf16.mxu0 0
    %7627 = vmatpush1.bf16.msra.mxu0 %v7604
    %7628 = vmatprep.subr.bf16.mxu0 0
    %7629 = vmatpush1.bf16.msra.mxu0 %v7603
    %7630 = vmatprep.subr.bf16.mxu0 0
    %7631 = vmatpush2.bf16.msra.mxu0 0
    %7632 = vmatprep.subr.bf16.mxu0 0
    %7633 = vmatpush2.bf16.msra.mxu0 0
    %7634 = vmatprep.subr.bf16.mxu0 0
    %7635 = vmatpush2.bf16.msra.mxu0 0
    %7636 = vmatprep.subr.bf16.mxu0 0
    %7637 = vmatpush2.bf16.msra.mxu0 0
    %7638 = vmatprep.subr.bf16.mxu0 0
    %7639 = vmatpush2.bf16.msra.mxu0 0
    %7640 = vmatprep.subr.bf16.mxu0 0
    %7641 = vmatpush2.bf16.msra.mxu0 0
    %7642 = vmatprep.subr.bf16.mxu0 0
    %7643 = vmatpush2.bf16.msra.mxu0 0
    %7644 = vmatprep.subr.bf16.mxu0 0
    %7645 = vmatpush2.bf16.msra.mxu0 0
    %7646 = vmatprep.mubr.bf16.mxu0 0
    %7647 = vmatmul.mubr.bf16.gmra.mxu0 %v7612
    %v7648 = vpop.f32.mrf.mxu0
    %v7649 = vadd.f32 0.0, %v7648
    %v7650 = vpop.f32.mrf.mxu0
    %v7651 = vpop.f32.mrf.mxu0
    %v7652 = vpop.f32.mrf.mxu0
    %7653 = vdwg.mxu0
    %v7654 = vadd.f32 %v7575, %v7649
    %s7655 = scalar_lea.vmem %s5, 512
    %v7656 = vld [vmem:[%s7655] sm:$0xf]
    %v7657 = vld [vmem:[%s7655 + $0x4] sm:$0xf]
    %v7658 = vld [vmem:[%s7655 + $0x8] sm:$0xf]
    %v7659 = vld [vmem:[%s7655 + $0xc] sm:$0xf]
    %v7660 = vld [vmem:[%s7655 + $0x10] sm:$0xf]
    %v7661 = vld [vmem:[%s7655 + $0x14] sm:$0xf]
    %v7662 = vld [vmem:[%s7655 + $0x18] sm:$0xf]
    %v7663 = vld [vmem:[%s7655 + $0x1c] sm:$0xf]
    %v7672 = vunpack.c.l.b16 %v7656
    %v7673 = vunpack.c.l.b16 %v7657
    %v7674 = vunpack.c.l.b16 %v7658
    %v7675 = vunpack.c.l.b16 %v7659
    %v7676 = vunpack.c.l.b16 %v7660
    %v7677 = vunpack.c.l.b16 %v7661
    %v7678 = vunpack.c.l.b16 %v7662
    %v7679 = vunpack.c.l.b16 %v7663
    %v7680 = vpack.c.b16 %v7673, %v7672
    %v7681 = vpack.c.b16 %v7675, %v7674
    %v7682 = vpack.c.b16 %v7677, %v7676
    %v7683 = vpack.c.b16 %v7679, %v7678
    %v7689 = vsel %vm6452, %v6404, 0
    %7691 = vmatprep.subr.bf16.mxu0 0
    %7692 = vmatpush1.bf16.msra.mxu0 0
    %7693 = vmatprep.subr.bf16.mxu0 0
    %7694 = vmatpush1.bf16.msra.mxu0 0
    %7695 = vmatprep.subr.bf16.mxu0 0
    %7696 = vmatpush1.bf16.msra.mxu0 0
    %7697 = vmatprep.subr.bf16.mxu0 0
    %7698 = vmatpush1.bf16.msra.mxu0 0
    %7699 = vmatprep.subr.bf16.mxu0 0
    %7700 = vmatpush1.bf16.msra.mxu0 %v7683
    %7701 = vmatprep.subr.bf16.mxu0 0
    %7702 = vmatpush1.bf16.msra.mxu0 %v7682
    %7703 = vmatprep.subr.bf16.mxu0 0
    %7704 = vmatpush1.bf16.msra.mxu0 %v7681
    %7705 = vmatprep.subr.bf16.mxu0 0
    %7706 = vmatpush1.bf16.msra.mxu0 %v7680
    %7707 = vmatprep.subr.bf16.mxu0 0
    %7708 = vmatpush2.bf16.msra.mxu0 0
    %7709 = vmatprep.subr.bf16.mxu0 0
    %7710 = vmatpush2.bf16.msra.mxu0 0
    %7711 = vmatprep.subr.bf16.mxu0 0
    %7712 = vmatpush2.bf16.msra.mxu0 0
    %7713 = vmatprep.subr.bf16.mxu0 0
    %7714 = vmatpush2.bf16.msra.mxu0 0
    %7715 = vmatprep.subr.bf16.mxu0 0
    %7716 = vmatpush2.bf16.msra.mxu0 0
    %7717 = vmatprep.subr.bf16.mxu0 0
    %7718 = vmatpush2.bf16.msra.mxu0 0
    %7719 = vmatprep.subr.bf16.mxu0 0
    %7720 = vmatpush2.bf16.msra.mxu0 0
    %7721 = vmatprep.subr.bf16.mxu0 0
    %7722 = vmatpush2.bf16.msra.mxu0 0
    %7723 = vmatprep.mubr.bf16.mxu0 0
    %7724 = vmatmul.mubr.bf16.gmra.mxu0 %v7689
    %v7725 = vpop.f32.mrf.mxu0
    %v7726 = vadd.f32 0.0, %v7725
    %v7727 = vpop.f32.mrf.mxu0
    %v7728 = vpop.f32.mrf.mxu0
    %v7729 = vpop.f32.mrf.mxu0
    %7730 = vdwg.mxu0
    %v7731 = vadd.f32 %v7654, %v7726
    %s7732 = scalar_lea.vmem %s5, 544
    %v7733 = vld [vmem:[%s7732] sm:$0xf]
    %v7734 = vld [vmem:[%s7732 + $0x4] sm:$0xf]
    %v7735 = vld [vmem:[%s7732 + $0x8] sm:$0xf]
    %v7736 = vld [vmem:[%s7732 + $0xc] sm:$0xf]
    %v7737 = vld [vmem:[%s7732 + $0x10] sm:$0xf]
    %v7738 = vld [vmem:[%s7732 + $0x14] sm:$0xf]
    %v7739 = vld [vmem:[%s7732 + $0x18] sm:$0xf]
    %v7740 = vld [vmem:[%s7732 + $0x1c] sm:$0xf]
    %v7742 = vrot.slane %v6404, 4
    %v7751 = vunpack.c.l.b16 %v7733
    %v7752 = vunpack.c.l.b16 %v7734
    %v7753 = vunpack.c.l.b16 %v7735
    %v7754 = vunpack.c.l.b16 %v7736
    %v7755 = vunpack.c.l.b16 %v7737
    %v7756 = vunpack.c.l.b16 %v7738
    %v7757 = vunpack.c.l.b16 %v7739
    %v7758 = vunpack.c.l.b16 %v7740
    %v7759 = vpack.c.b16 %v7752, %v7751
    %v7760 = vpack.c.b16 %v7754, %v7753
    %v7761 = vpack.c.b16 %v7756, %v7755
    %v7762 = vpack.c.b16 %v7758, %v7757
    %v7768 = vsel %vm6452, %v7742, 0
    %7770 = vmatprep.subr.bf16.mxu0 0
    %7771 = vmatpush1.bf16.msra.mxu0 0
    %7772 = vmatprep.subr.bf16.mxu0 0
    %7773 = vmatpush1.bf16.msra.mxu0 0
    %7774 = vmatprep.subr.bf16.mxu0 0
    %7775 = vmatpush1.bf16.msra.mxu0 0
    %7776 = vmatprep.subr.bf16.mxu0 0
    %7777 = vmatpush1.bf16.msra.mxu0 0
    %7778 = vmatprep.subr.bf16.mxu0 0
    %7779 = vmatpush1.bf16.msra.mxu0 %v7762
    %7780 = vmatprep.subr.bf16.mxu0 0
    %7781 = vmatpush1.bf16.msra.mxu0 %v7761
    %7782 = vmatprep.subr.bf16.mxu0 0
    %7783 = vmatpush1.bf16.msra.mxu0 %v7760
    %7784 = vmatprep.subr.bf16.mxu0 0
    %7785 = vmatpush1.bf16.msra.mxu0 %v7759
    %7786 = vmatprep.subr.bf16.mxu0 0
    %7787 = vmatpush2.bf16.msra.mxu0 0
    %7788 = vmatprep.subr.bf16.mxu0 0
    %7789 = vmatpush2.bf16.msra.mxu0 0
    %7790 = vmatprep.subr.bf16.mxu0 0
    %7791 = vmatpush2.bf16.msra.mxu0 0
    %7792 = vmatprep.subr.bf16.mxu0 0
    %7793 = vmatpush2.bf16.msra.mxu0 0
    %7794 = vmatprep.subr.bf16.mxu0 0
    %7795 = vmatpush2.bf16.msra.mxu0 0
    %7796 = vmatprep.subr.bf16.mxu0 0
    %7797 = vmatpush2.bf16.msra.mxu0 0
    %7798 = vmatprep.subr.bf16.mxu0 0
    %7799 = vmatpush2.bf16.msra.mxu0 0
    %7800 = vmatprep.subr.bf16.mxu0 0
    %7801 = vmatpush2.bf16.msra.mxu0 0
    %7802 = vmatprep.mubr.bf16.mxu0 0
    %7803 = vmatmul.mubr.bf16.gmra.mxu0 %v7768
    %v7804 = vpop.f32.mrf.mxu0
    %v7805 = vadd.f32 0.0, %v7804
    %v7806 = vpop.f32.mrf.mxu0
    %v7807 = vpop.f32.mrf.mxu0
    %v7808 = vpop.f32.mrf.mxu0
    %7809 = vdwg.mxu0
    %v7810 = vadd.f32 %v7731, %v7805
    %s7811 = scalar_lea.vmem %s5, 576
    %v7812 = vld [vmem:[%s7811] sm:$0xf]
    %v7813 = vld [vmem:[%s7811 + $0x4] sm:$0xf]
    %v7814 = vld [vmem:[%s7811 + $0x8] sm:$0xf]
    %v7815 = vld [vmem:[%s7811 + $0xc] sm:$0xf]
    %v7816 = vld [vmem:[%s7811 + $0x10] sm:$0xf]
    %v7817 = vld [vmem:[%s7811 + $0x14] sm:$0xf]
    %v7818 = vld [vmem:[%s7811 + $0x18] sm:$0xf]
    %v7819 = vld [vmem:[%s7811 + $0x1c] sm:$0xf]
    %v7828 = vunpack.c.l.b16 %v7812
    %v7829 = vunpack.c.l.b16 %v7813
    %v7830 = vunpack.c.l.b16 %v7814
    %v7831 = vunpack.c.l.b16 %v7815
    %v7832 = vunpack.c.l.b16 %v7816
    %v7833 = vunpack.c.l.b16 %v7817
    %v7834 = vunpack.c.l.b16 %v7818
    %v7835 = vunpack.c.l.b16 %v7819
    %v7836 = vpack.c.b16 %v7829, %v7828
    %v7837 = vpack.c.b16 %v7831, %v7830
    %v7838 = vpack.c.b16 %v7833, %v7832
    %v7839 = vpack.c.b16 %v7835, %v7834
    %v7845 = vsel %vm6452, %v6405, 0
    %7847 = vmatprep.subr.bf16.mxu0 0
    %7848 = vmatpush1.bf16.msra.mxu0 0
    %7849 = vmatprep.subr.bf16.mxu0 0
    %7850 = vmatpush1.bf16.msra.mxu0 0
    %7851 = vmatprep.subr.bf16.mxu0 0
    %7852 = vmatpush1.bf16.msra.mxu0 0
    %7853 = vmatprep.subr.bf16.mxu0 0
    %7854 = vmatpush1.bf16.msra.mxu0 0
    %7855 = vmatprep.subr.bf16.mxu0 0
    %7856 = vmatpush1.bf16.msra.mxu0 %v7839
    %7857 = vmatprep.subr.bf16.mxu0 0
    %7858 = vmatpush1.bf16.msra.mxu0 %v7838
    %7859 = vmatprep.subr.bf16.mxu0 0
    %7860 = vmatpush1.bf16.msra.mxu0 %v7837
    %7861 = vmatprep.subr.bf16.mxu0 0
    %7862 = vmatpush1.bf16.msra.mxu0 %v7836
    %7863 = vmatprep.subr.bf16.mxu0 0
    %7864 = vmatpush2.bf16.msra.mxu0 0
    %7865 = vmatprep.subr.bf16.mxu0 0
    %7866 = vmatpush2.bf16.msra.mxu0 0
    %7867 = vmatprep.subr.bf16.mxu0 0
    %7868 = vmatpush2.bf16.msra.mxu0 0
    %7869 = vmatprep.subr.bf16.mxu0 0
    %7870 = vmatpush2.bf16.msra.mxu0 0
    %7871 = vmatprep.subr.bf16.mxu0 0
    %7872 = vmatpush2.bf16.msra.mxu0 0
    %7873 = vmatprep.subr.bf16.mxu0 0
    %7874 = vmatpush2.bf16.msra.mxu0 0
    %7875 = vmatprep.subr.bf16.mxu0 0
    %7876 = vmatpush2.bf16.msra.mxu0 0
    %7877 = vmatprep.subr.bf16.mxu0 0
    %7878 = vmatpush2.bf16.msra.mxu0 0
    %7879 = vmatprep.mubr.bf16.mxu0 0
    %7880 = vmatmul.mubr.bf16.gmra.mxu0 %v7845
    %v7881 = vpop.f32.mrf.mxu0
    %v7882 = vadd.f32 0.0, %v7881
    %v7883 = vpop.f32.mrf.mxu0
    %v7884 = vpop.f32.mrf.mxu0
    %v7885 = vpop.f32.mrf.mxu0
    %7886 = vdwg.mxu0
    %v7887 = vadd.f32 %v7810, %v7882
    %s7888 = scalar_lea.vmem %s5, 608
    %v7889 = vld [vmem:[%s7888] sm:$0xf]
    %v7890 = vld [vmem:[%s7888 + $0x4] sm:$0xf]
    %v7891 = vld [vmem:[%s7888 + $0x8] sm:$0xf]
    %v7892 = vld [vmem:[%s7888 + $0xc] sm:$0xf]
    %v7893 = vld [vmem:[%s7888 + $0x10] sm:$0xf]
    %v7894 = vld [vmem:[%s7888 + $0x14] sm:$0xf]
    %v7895 = vld [vmem:[%s7888 + $0x18] sm:$0xf]
    %v7896 = vld [vmem:[%s7888 + $0x1c] sm:$0xf]
    %v7898 = vrot.slane %v6405, 4
    %v7907 = vunpack.c.l.b16 %v7889
    %v7908 = vunpack.c.l.b16 %v7890
    %v7909 = vunpack.c.l.b16 %v7891
    %v7910 = vunpack.c.l.b16 %v7892
    %v7911 = vunpack.c.l.b16 %v7893
    %v7912 = vunpack.c.l.b16 %v7894
    %v7913 = vunpack.c.l.b16 %v7895
    %v7914 = vunpack.c.l.b16 %v7896
    %v7915 = vpack.c.b16 %v7908, %v7907
    %v7916 = vpack.c.b16 %v7910, %v7909
    %v7917 = vpack.c.b16 %v7912, %v7911
    %v7918 = vpack.c.b16 %v7914, %v7913
    %v7924 = vsel %vm6452, %v7898, 0
    %7926 = vmatprep.subr.bf16.mxu0 0
    %7927 = vmatpush1.bf16.msra.mxu0 0
    %7928 = vmatprep.subr.bf16.mxu0 0
    %7929 = vmatpush1.bf16.msra.mxu0 0
    %7930 = vmatprep.subr.bf16.mxu0 0
    %7931 = vmatpush1.bf16.msra.mxu0 0
    %7932 = vmatprep.subr.bf16.mxu0 0
    %7933 = vmatpush1.bf16.msra.mxu0 0
    %7934 = vmatprep.subr.bf16.mxu0 0
    %7935 = vmatpush1.bf16.msra.mxu0 %v7918
    %7936 = vmatprep.subr.bf16.mxu0 0
    %7937 = vmatpush1.bf16.msra.mxu0 %v7917
    %7938 = vmatprep.subr.bf16.mxu0 0
    %7939 = vmatpush1.bf16.msra.mxu0 %v7916
    %7940 = vmatprep.subr.bf16.mxu0 0
    %7941 = vmatpush1.bf16.msra.mxu0 %v7915
    %7942 = vmatprep.subr.bf16.mxu0 0
    %7943 = vmatpush2.bf16.msra.mxu0 0
    %7944 = vmatprep.subr.bf16.mxu0 0
    %7945 = vmatpush2.bf16.msra.mxu0 0
    %7946 = vmatprep.subr.bf16.mxu0 0
    %7947 = vmatpush2.bf16.msra.mxu0 0
    %7948 = vmatprep.subr.bf16.mxu0 0
    %7949 = vmatpush2.bf16.msra.mxu0 0
    %7950 = vmatprep.subr.bf16.mxu0 0
    %7951 = vmatpush2.bf16.msra.mxu0 0
    %7952 = vmatprep.subr.bf16.mxu0 0
    %7953 = vmatpush2.bf16.msra.mxu0 0
    %7954 = vmatprep.subr.bf16.mxu0 0
    %7955 = vmatpush2.bf16.msra.mxu0 0
    %7956 = vmatprep.subr.bf16.mxu0 0
    %7957 = vmatpush2.bf16.msra.mxu0 0
    %7958 = vmatprep.mubr.bf16.mxu0 0
    %7959 = vmatmul.mubr.bf16.gmra.mxu0 %v7924
    %v7960 = vpop.f32.mrf.mxu0
    %v7961 = vadd.f32 0.0, %v7960
    %v7962 = vpop.f32.mrf.mxu0
    %v7963 = vpop.f32.mrf.mxu0
    %v7964 = vpop.f32.mrf.mxu0
    %7965 = vdwg.mxu0
    %v7966 = vadd.f32 %v7887, %v7961
    %s7967 = scalar_lea.vmem %s5, 640
    %v7968 = vld [vmem:[%s7967] sm:$0xf]
    %v7969 = vld [vmem:[%s7967 + $0x4] sm:$0xf]
    %v7970 = vld [vmem:[%s7967 + $0x8] sm:$0xf]
    %v7971 = vld [vmem:[%s7967 + $0xc] sm:$0xf]
    %v7972 = vld [vmem:[%s7967 + $0x10] sm:$0xf]
    %v7973 = vld [vmem:[%s7967 + $0x14] sm:$0xf]
    %v7974 = vld [vmem:[%s7967 + $0x18] sm:$0xf]
    %v7975 = vld [vmem:[%s7967 + $0x1c] sm:$0xf]
    %v7984 = vunpack.c.l.b16 %v7968
    %v7985 = vunpack.c.l.b16 %v7969
    %v7986 = vunpack.c.l.b16 %v7970
    %v7987 = vunpack.c.l.b16 %v7971
    %v7988 = vunpack.c.l.b16 %v7972
    %v7989 = vunpack.c.l.b16 %v7973
    %v7990 = vunpack.c.l.b16 %v7974
    %v7991 = vunpack.c.l.b16 %v7975
    %v7992 = vpack.c.b16 %v7985, %v7984
    %v7993 = vpack.c.b16 %v7987, %v7986
    %v7994 = vpack.c.b16 %v7989, %v7988
    %v7995 = vpack.c.b16 %v7991, %v7990
    %v8001 = vsel %vm6452, %v6406, 0
    %8003 = vmatprep.subr.bf16.mxu0 0
    %8004 = vmatpush1.bf16.msra.mxu0 0
    %8005 = vmatprep.subr.bf16.mxu0 0
    %8006 = vmatpush1.bf16.msra.mxu0 0
    %8007 = vmatprep.subr.bf16.mxu0 0
    %8008 = vmatpush1.bf16.msra.mxu0 0
    %8009 = vmatprep.subr.bf16.mxu0 0
    %8010 = vmatpush1.bf16.msra.mxu0 0
    %8011 = vmatprep.subr.bf16.mxu0 0
    %8012 = vmatpush1.bf16.msra.mxu0 %v7995
    %8013 = vmatprep.subr.bf16.mxu0 0
    %8014 = vmatpush1.bf16.msra.mxu0 %v7994
    %8015 = vmatprep.subr.bf16.mxu0 0
    %8016 = vmatpush1.bf16.msra.mxu0 %v7993
    %8017 = vmatprep.subr.bf16.mxu0 0
    %8018 = vmatpush1.bf16.msra.mxu0 %v7992
    %8019 = vmatprep.subr.bf16.mxu0 0
    %8020 = vmatpush2.bf16.msra.mxu0 0
    %8021 = vmatprep.subr.bf16.mxu0 0
    %8022 = vmatpush2.bf16.msra.mxu0 0
    %8023 = vmatprep.subr.bf16.mxu0 0
    %8024 = vmatpush2.bf16.msra.mxu0 0
    %8025 = vmatprep.subr.bf16.mxu0 0
    %8026 = vmatpush2.bf16.msra.mxu0 0
    %8027 = vmatprep.subr.bf16.mxu0 0
    %8028 = vmatpush2.bf16.msra.mxu0 0
    %8029 = vmatprep.subr.bf16.mxu0 0
    %8030 = vmatpush2.bf16.msra.mxu0 0
    %8031 = vmatprep.subr.bf16.mxu0 0
    %8032 = vmatpush2.bf16.msra.mxu0 0
    %8033 = vmatprep.subr.bf16.mxu0 0
    %8034 = vmatpush2.bf16.msra.mxu0 0
    %8035 = vmatprep.mubr.bf16.mxu0 0
    %8036 = vmatmul.mubr.bf16.gmra.mxu0 %v8001
    %v8037 = vpop.f32.mrf.mxu0
    %v8038 = vadd.f32 0.0, %v8037
    %v8039 = vpop.f32.mrf.mxu0
    %v8040 = vpop.f32.mrf.mxu0
    %v8041 = vpop.f32.mrf.mxu0
    %8042 = vdwg.mxu0
    %v8043 = vadd.f32 %v7966, %v8038
    %s8044 = scalar_lea.vmem %s5, 672
    %v8045 = vld [vmem:[%s8044] sm:$0xf]
    %v8046 = vld [vmem:[%s8044 + $0x4] sm:$0xf]
    %v8047 = vld [vmem:[%s8044 + $0x8] sm:$0xf]
    %v8048 = vld [vmem:[%s8044 + $0xc] sm:$0xf]
    %v8049 = vld [vmem:[%s8044 + $0x10] sm:$0xf]
    %v8050 = vld [vmem:[%s8044 + $0x14] sm:$0xf]
    %v8051 = vld [vmem:[%s8044 + $0x18] sm:$0xf]
    %v8052 = vld [vmem:[%s8044 + $0x1c] sm:$0xf]
    %v8054 = vrot.slane %v6406, 4
    %v8063 = vunpack.c.l.b16 %v8045
    %v8064 = vunpack.c.l.b16 %v8046
    %v8065 = vunpack.c.l.b16 %v8047
    %v8066 = vunpack.c.l.b16 %v8048
    %v8067 = vunpack.c.l.b16 %v8049
    %v8068 = vunpack.c.l.b16 %v8050
    %v8069 = vunpack.c.l.b16 %v8051
    %v8070 = vunpack.c.l.b16 %v8052
    %v8071 = vpack.c.b16 %v8064, %v8063
    %v8072 = vpack.c.b16 %v8066, %v8065
    %v8073 = vpack.c.b16 %v8068, %v8067
    %v8074 = vpack.c.b16 %v8070, %v8069
    %v8080 = vsel %vm6452, %v8054, 0
    %8082 = vmatprep.subr.bf16.mxu0 0
    %8083 = vmatpush1.bf16.msra.mxu0 0
    %8084 = vmatprep.subr.bf16.mxu0 0
    %8085 = vmatpush1.bf16.msra.mxu0 0
    %8086 = vmatprep.subr.bf16.mxu0 0
    %8087 = vmatpush1.bf16.msra.mxu0 0
    %8088 = vmatprep.subr.bf16.mxu0 0
    %8089 = vmatpush1.bf16.msra.mxu0 0
    %8090 = vmatprep.subr.bf16.mxu0 0
    %8091 = vmatpush1.bf16.msra.mxu0 %v8074
    %8092 = vmatprep.subr.bf16.mxu0 0
    %8093 = vmatpush1.bf16.msra.mxu0 %v8073
    %8094 = vmatprep.subr.bf16.mxu0 0
    %8095 = vmatpush1.bf16.msra.mxu0 %v8072
    %8096 = vmatprep.subr.bf16.mxu0 0
    %8097 = vmatpush1.bf16.msra.mxu0 %v8071
    %8098 = vmatprep.subr.bf16.mxu0 0
    %8099 = vmatpush2.bf16.msra.mxu0 0
    %8100 = vmatprep.subr.bf16.mxu0 0
    %8101 = vmatpush2.bf16.msra.mxu0 0
    %8102 = vmatprep.subr.bf16.mxu0 0
    %8103 = vmatpush2.bf16.msra.mxu0 0
    %8104 = vmatprep.subr.bf16.mxu0 0
    %8105 = vmatpush2.bf16.msra.mxu0 0
    %8106 = vmatprep.subr.bf16.mxu0 0
    %8107 = vmatpush2.bf16.msra.mxu0 0
    %8108 = vmatprep.subr.bf16.mxu0 0
    %8109 = vmatpush2.bf16.msra.mxu0 0
    %8110 = vmatprep.subr.bf16.mxu0 0
    %8111 = vmatpush2.bf16.msra.mxu0 0
    %8112 = vmatprep.subr.bf16.mxu0 0
    %8113 = vmatpush2.bf16.msra.mxu0 0
    %8114 = vmatprep.mubr.bf16.mxu0 0
    %8115 = vmatmul.mubr.bf16.gmra.mxu0 %v8080
    %v8116 = vpop.f32.mrf.mxu0
    %v8117 = vadd.f32 0.0, %v8116
    %v8118 = vpop.f32.mrf.mxu0
    %v8119 = vpop.f32.mrf.mxu0
    %v8120 = vpop.f32.mrf.mxu0
    %8121 = vdwg.mxu0
    %v8122 = vadd.f32 %v8043, %v8117
    %s8123 = scalar_lea.vmem %s5, 704
    %v8124 = vld [vmem:[%s8123] sm:$0xf]
    %v8125 = vld [vmem:[%s8123 + $0x4] sm:$0xf]
    %v8126 = vld [vmem:[%s8123 + $0x8] sm:$0xf]
    %v8127 = vld [vmem:[%s8123 + $0xc] sm:$0xf]
    %v8128 = vld [vmem:[%s8123 + $0x10] sm:$0xf]
    %v8129 = vld [vmem:[%s8123 + $0x14] sm:$0xf]
    %v8130 = vld [vmem:[%s8123 + $0x18] sm:$0xf]
    %v8131 = vld [vmem:[%s8123 + $0x1c] sm:$0xf]
    %v8140 = vunpack.c.l.b16 %v8124
    %v8141 = vunpack.c.l.b16 %v8125
    %v8142 = vunpack.c.l.b16 %v8126
    %v8143 = vunpack.c.l.b16 %v8127
    %v8144 = vunpack.c.l.b16 %v8128
    %v8145 = vunpack.c.l.b16 %v8129
    %v8146 = vunpack.c.l.b16 %v8130
    %v8147 = vunpack.c.l.b16 %v8131
    %v8148 = vpack.c.b16 %v8141, %v8140
    %v8149 = vpack.c.b16 %v8143, %v8142
    %v8150 = vpack.c.b16 %v8145, %v8144
    %v8151 = vpack.c.b16 %v8147, %v8146
    %v8157 = vsel %vm6452, %v6407, 0
    %8159 = vmatprep.subr.bf16.mxu0 0
    %8160 = vmatpush1.bf16.msra.mxu0 0
    %8161 = vmatprep.subr.bf16.mxu0 0
    %8162 = vmatpush1.bf16.msra.mxu0 0
    %8163 = vmatprep.subr.bf16.mxu0 0
    %8164 = vmatpush1.bf16.msra.mxu0 0
    %8165 = vmatprep.subr.bf16.mxu0 0
    %8166 = vmatpush1.bf16.msra.mxu0 0
    %8167 = vmatprep.subr.bf16.mxu0 0
    %8168 = vmatpush1.bf16.msra.mxu0 %v8151
    %8169 = vmatprep.subr.bf16.mxu0 0
    %8170 = vmatpush1.bf16.msra.mxu0 %v8150
    %8171 = vmatprep.subr.bf16.mxu0 0
    %8172 = vmatpush1.bf16.msra.mxu0 %v8149
    %8173 = vmatprep.subr.bf16.mxu0 0
    %8174 = vmatpush1.bf16.msra.mxu0 %v8148
    %8175 = vmatprep.subr.bf16.mxu0 0
    %8176 = vmatpush2.bf16.msra.mxu0 0
    %8177 = vmatprep.subr.bf16.mxu0 0
    %8178 = vmatpush2.bf16.msra.mxu0 0
    %8179 = vmatprep.subr.bf16.mxu0 0
    %8180 = vmatpush2.bf16.msra.mxu0 0
    %8181 = vmatprep.subr.bf16.mxu0 0
    %8182 = vmatpush2.bf16.msra.mxu0 0
    %8183 = vmatprep.subr.bf16.mxu0 0
    %8184 = vmatpush2.bf16.msra.mxu0 0
    %8185 = vmatprep.subr.bf16.mxu0 0
    %8186 = vmatpush2.bf16.msra.mxu0 0
    %8187 = vmatprep.subr.bf16.mxu0 0
    %8188 = vmatpush2.bf16.msra.mxu0 0
    %8189 = vmatprep.subr.bf16.mxu0 0
    %8190 = vmatpush2.bf16.msra.mxu0 0
    %8191 = vmatprep.mubr.bf16.mxu0 0
    %8192 = vmatmul.mubr.bf16.gmra.mxu0 %v8157
    %v8193 = vpop.f32.mrf.mxu0
    %v8194 = vadd.f32 0.0, %v8193
    %v8195 = vpop.f32.mrf.mxu0
    %v8196 = vpop.f32.mrf.mxu0
    %v8197 = vpop.f32.mrf.mxu0
    %8198 = vdwg.mxu0
    %v8199 = vadd.f32 %v8122, %v8194
    %s8200 = scalar_lea.vmem %s5, 736
    %v8201 = vld [vmem:[%s8200] sm:$0xf]
    %v8202 = vld [vmem:[%s8200 + $0x4] sm:$0xf]
    %v8203 = vld [vmem:[%s8200 + $0x8] sm:$0xf]
    %v8204 = vld [vmem:[%s8200 + $0xc] sm:$0xf]
    %v8205 = vld [vmem:[%s8200 + $0x10] sm:$0xf]
    %v8206 = vld [vmem:[%s8200 + $0x14] sm:$0xf]
    %v8207 = vld [vmem:[%s8200 + $0x18] sm:$0xf]
    %v8208 = vld [vmem:[%s8200 + $0x1c] sm:$0xf]
    %v8210 = vrot.slane %v6407, 4
    %v8219 = vunpack.c.l.b16 %v8201
    %v8220 = vunpack.c.l.b16 %v8202
    %v8221 = vunpack.c.l.b16 %v8203
    %v8222 = vunpack.c.l.b16 %v8204
    %v8223 = vunpack.c.l.b16 %v8205
    %v8224 = vunpack.c.l.b16 %v8206
    %v8225 = vunpack.c.l.b16 %v8207
    %v8226 = vunpack.c.l.b16 %v8208
    %v8227 = vpack.c.b16 %v8220, %v8219
    %v8228 = vpack.c.b16 %v8222, %v8221
    %v8229 = vpack.c.b16 %v8224, %v8223
    %v8230 = vpack.c.b16 %v8226, %v8225
    %v8236 = vsel %vm6452, %v8210, 0
    %8238 = vmatprep.subr.bf16.mxu0 0
    %8239 = vmatpush1.bf16.msra.mxu0 0
    %8240 = vmatprep.subr.bf16.mxu0 0
    %8241 = vmatpush1.bf16.msra.mxu0 0
    %8242 = vmatprep.subr.bf16.mxu0 0
    %8243 = vmatpush1.bf16.msra.mxu0 0
    %8244 = vmatprep.subr.bf16.mxu0 0
    %8245 = vmatpush1.bf16.msra.mxu0 0
    %8246 = vmatprep.subr.bf16.mxu0 0
    %8247 = vmatpush1.bf16.msra.mxu0 %v8230
    %8248 = vmatprep.subr.bf16.mxu0 0
    %8249 = vmatpush1.bf16.msra.mxu0 %v8229
    %8250 = vmatprep.subr.bf16.mxu0 0
    %8251 = vmatpush1.bf16.msra.mxu0 %v8228
    %8252 = vmatprep.subr.bf16.mxu0 0
    %8253 = vmatpush1.bf16.msra.mxu0 %v8227
    %8254 = vmatprep.subr.bf16.mxu0 0
    %8255 = vmatpush2.bf16.msra.mxu0 0
    %8256 = vmatprep.subr.bf16.mxu0 0
    %8257 = vmatpush2.bf16.msra.mxu0 0
    %8258 = vmatprep.subr.bf16.mxu0 0
    %8259 = vmatpush2.bf16.msra.mxu0 0
    %8260 = vmatprep.subr.bf16.mxu0 0
    %8261 = vmatpush2.bf16.msra.mxu0 0
    %8262 = vmatprep.subr.bf16.mxu0 0
    %8263 = vmatpush2.bf16.msra.mxu0 0
    %8264 = vmatprep.subr.bf16.mxu0 0
    %8265 = vmatpush2.bf16.msra.mxu0 0
    %8266 = vmatprep.subr.bf16.mxu0 0
    %8267 = vmatpush2.bf16.msra.mxu0 0
    %8268 = vmatprep.subr.bf16.mxu0 0
    %8269 = vmatpush2.bf16.msra.mxu0 0
    %8270 = vmatprep.mubr.bf16.mxu0 0
    %8271 = vmatmul.mubr.bf16.gmra.mxu0 %v8236
    %v8272 = vpop.f32.mrf.mxu0
    %v8273 = vadd.f32 0.0, %v8272
    %v8274 = vpop.f32.mrf.mxu0
    %v8275 = vpop.f32.mrf.mxu0
    %v8276 = vpop.f32.mrf.mxu0
    %8277 = vdwg.mxu0
    %v8278 = vadd.f32 %v8199, %v8273
    %s8279 = scalar_lea.vmem %s5, 768
    %v8280 = vld [vmem:[%s8279] sm:$0xf]
    %v8281 = vld [vmem:[%s8279 + $0x4] sm:$0xf]
    %v8282 = vld [vmem:[%s8279 + $0x8] sm:$0xf]
    %v8283 = vld [vmem:[%s8279 + $0xc] sm:$0xf]
    %v8284 = vld [vmem:[%s8279 + $0x10] sm:$0xf]
    %v8285 = vld [vmem:[%s8279 + $0x14] sm:$0xf]
    %v8286 = vld [vmem:[%s8279 + $0x18] sm:$0xf]
    %v8287 = vld [vmem:[%s8279 + $0x1c] sm:$0xf]
    %v8296 = vunpack.c.l.b16 %v8280
    %v8297 = vunpack.c.l.b16 %v8281
    %v8298 = vunpack.c.l.b16 %v8282
    %v8299 = vunpack.c.l.b16 %v8283
    %v8300 = vunpack.c.l.b16 %v8284
    %v8301 = vunpack.c.l.b16 %v8285
    %v8302 = vunpack.c.l.b16 %v8286
    %v8303 = vunpack.c.l.b16 %v8287
    %v8304 = vpack.c.b16 %v8297, %v8296
    %v8305 = vpack.c.b16 %v8299, %v8298
    %v8306 = vpack.c.b16 %v8301, %v8300
    %v8307 = vpack.c.b16 %v8303, %v8302
    %v8313 = vsel %vm6452, %v6408, 0
    %8315 = vmatprep.subr.bf16.mxu0 0
    %8316 = vmatpush1.bf16.msra.mxu0 0
    %8317 = vmatprep.subr.bf16.mxu0 0
    %8318 = vmatpush1.bf16.msra.mxu0 0
    %8319 = vmatprep.subr.bf16.mxu0 0
    %8320 = vmatpush1.bf16.msra.mxu0 0
    %8321 = vmatprep.subr.bf16.mxu0 0
    %8322 = vmatpush1.bf16.msra.mxu0 0
    %8323 = vmatprep.subr.bf16.mxu0 0
    %8324 = vmatpush1.bf16.msra.mxu0 %v8307
    %8325 = vmatprep.subr.bf16.mxu0 0
    %8326 = vmatpush1.bf16.msra.mxu0 %v8306
    %8327 = vmatprep.subr.bf16.mxu0 0
    %8328 = vmatpush1.bf16.msra.mxu0 %v8305
    %8329 = vmatprep.subr.bf16.mxu0 0
    %8330 = vmatpush1.bf16.msra.mxu0 %v8304
    %8331 = vmatprep.subr.bf16.mxu0 0
    %8332 = vmatpush2.bf16.msra.mxu0 0
    %8333 = vmatprep.subr.bf16.mxu0 0
    %8334 = vmatpush2.bf16.msra.mxu0 0
    %8335 = vmatprep.subr.bf16.mxu0 0
    %8336 = vmatpush2.bf16.msra.mxu0 0
    %8337 = vmatprep.subr.bf16.mxu0 0
    %8338 = vmatpush2.bf16.msra.mxu0 0
    %8339 = vmatprep.subr.bf16.mxu0 0
    %8340 = vmatpush2.bf16.msra.mxu0 0
    %8341 = vmatprep.subr.bf16.mxu0 0
    %8342 = vmatpush2.bf16.msra.mxu0 0
    %8343 = vmatprep.subr.bf16.mxu0 0
    %8344 = vmatpush2.bf16.msra.mxu0 0
    %8345 = vmatprep.subr.bf16.mxu0 0
    %8346 = vmatpush2.bf16.msra.mxu0 0
    %8347 = vmatprep.mubr.bf16.mxu0 0
    %8348 = vmatmul.mubr.bf16.gmra.mxu0 %v8313
    %v8349 = vpop.f32.mrf.mxu0
    %v8350 = vadd.f32 0.0, %v8349
    %v8351 = vpop.f32.mrf.mxu0
    %v8352 = vpop.f32.mrf.mxu0
    %v8353 = vpop.f32.mrf.mxu0
    %8354 = vdwg.mxu0
    %v8355 = vadd.f32 %v8278, %v8350
    %v8356 = vld [vmem:[%s6] sm:$0x1]
    %v8358 = vlaneseq
    %v8359 = vshrl.u32 %v8358, 7
    %v8360 = vsub.s32 0, %v8359
    %v8361 = vrot.slane %v8356, %v8360
    %v8363 = vadd.f32 %v8355, %v8361
    %v8364 = vmax.f32 %v8363, 0.0
    %v8365 = vpack.c.bf16 %v8364, %v8364
    %v8366 = vld [vmem:[%s7] sm:$0xf]
    %v8367 = vld [vmem:[%s7 + $0x4] sm:$0xf]
    %v8368 = vld [vmem:[%s7 + $0x8] sm:$0xf]
    %v8369 = vld [vmem:[%s7 + $0xc] sm:$0xf]
    %v8370 = vld [vmem:[%s7 + $0x10] sm:$0xf]
    %v8371 = vld [vmem:[%s7 + $0x14] sm:$0xf]
    %v8372 = vld [vmem:[%s7 + $0x18] sm:$0xf]
    %v8373 = vld [vmem:[%s7 + $0x1c] sm:$0xf]
    %v8374 = vld [vmem:[%s7 + $0x20] sm:$0xf]
    %v8375 = vld [vmem:[%s7 + $0x24] sm:$0xf]
    %v8376 = vld [vmem:[%s7 + $0x28] sm:$0xf]
    %v8377 = vld [vmem:[%s7 + $0x2c] sm:$0xf]
    %v8378 = vld [vmem:[%s7 + $0x30] sm:$0xf]
    %v8379 = vld [vmem:[%s7 + $0x34] sm:$0xf]
    %v8380 = vld [vmem:[%s7 + $0x38] sm:$0xf]
    %v8381 = vld [vmem:[%s7 + $0x3c] sm:$0xf]
    %v8382 = vld [vmem:[%s8] sm:$0x1]
    %v8384 = vlaneseq
    %v8385 = vshrl.u32 %v8384, 7
    %v8386 = vsub.s32 0, %v8385
    %v8387 = vrot.slane %v8382, %v8386
    %v8405 = vunpack.c.l.b16 %v8366
    %v8406 = vunpack.c.l.b16 %v8367
    %v8407 = vunpack.c.l.b16 %v8368
    %v8408 = vunpack.c.l.b16 %v8369
    %v8409 = vunpack.c.l.b16 %v8370
    %v8410 = vunpack.c.l.b16 %v8371
    %v8411 = vunpack.c.l.b16 %v8372
    %v8412 = vunpack.c.l.b16 %v8373
    %v8413 = vunpack.c.l.b16 %v8374
    %v8414 = vunpack.c.l.b16 %v8375
    %v8415 = vunpack.c.l.b16 %v8376
    %v8416 = vunpack.c.l.b16 %v8377
    %v8417 = vunpack.c.l.b16 %v8378
    %v8418 = vunpack.c.l.b16 %v8379
    %v8419 = vunpack.c.l.b16 %v8380
    %v8420 = vunpack.c.l.b16 %v8381
    %v8421 = vpack.c.b16 %v8406, %v8405
    %v8422 = vpack.c.b16 %v8408, %v8407
    %v8423 = vpack.c.b16 %v8410, %v8409
    %v8424 = vpack.c.b16 %v8412, %v8411
    %v8425 = vpack.c.b16 %v8414, %v8413
    %v8426 = vpack.c.b16 %v8416, %v8415
    %v8427 = vpack.c.b16 %v8418, %v8417
    %v8428 = vpack.c.b16 %v8420, %v8419
    %8437 = vmatprep.subr.bf16.mxu0 0
    %8438 = vmatpush1.bf16.msra.mxu0 %v8428
    %8439 = vmatprep.subr.bf16.mxu0 0
    %8440 = vmatpush1.bf16.msra.mxu0 %v8427
    %8441 = vmatprep.subr.bf16.mxu0 0
    %8442 = vmatpush1.bf16.msra.mxu0 %v8426
    %8443 = vmatprep.subr.bf16.mxu0 0
    %8444 = vmatpush1.bf16.msra.mxu0 %v8425
    %8445 = vmatprep.subr.bf16.mxu0 0
    %8446 = vmatpush1.bf16.msra.mxu0 %v8424
    %8447 = vmatprep.subr.bf16.mxu0 0
    %8448 = vmatpush1.bf16.msra.mxu0 %v8423
    %8449 = vmatprep.subr.bf16.mxu0 0
    %8450 = vmatpush1.bf16.msra.mxu0 %v8422
    %8451 = vmatprep.subr.bf16.mxu0 0
    %8452 = vmatpush1.bf16.msra.mxu0 %v8421
    %8453 = vmatprep.subr.bf16.mxu0 0
    %8454 = vmatpush2.bf16.msra.mxu0 0
    %8455 = vmatprep.subr.bf16.mxu0 0
    %8456 = vmatpush2.bf16.msra.mxu0 0
    %8457 = vmatprep.subr.bf16.mxu0 0
    %8458 = vmatpush2.bf16.msra.mxu0 0
    %8459 = vmatprep.subr.bf16.mxu0 0
    %8460 = vmatpush2.bf16.msra.mxu0 0
    %8461 = vmatprep.subr.bf16.mxu0 0
    %8462 = vmatpush2.bf16.msra.mxu0 0
    %8463 = vmatprep.subr.bf16.mxu0 0
    %8464 = vmatpush2.bf16.msra.mxu0 0
    %8465 = vmatprep.subr.bf16.mxu0 0
    %8466 = vmatpush2.bf16.msra.mxu0 0
    %8467 = vmatprep.subr.bf16.mxu0 0
    %8468 = vmatpush2.bf16.msra.mxu0 0
    %8469 = vmatprep.mubr.bf16.mxu0 0
    %8470 = vmatmul.mubr.bf16.gmra.mxu0 %v8365
    %v8471 = vpop.f32.mrf.mxu0
    %v8472 = vadd.f32 %v8387, %v8471
    %v8473 = vpop.f32.mrf.mxu0
    %v8474 = vpop.f32.mrf.mxu0
    %v8475 = vpop.f32.mrf.mxu0
    %8476 = vdwg.mxu0
    %v8477 = vmax.f32 %v8472, 0.0
    %v8478 = vpack.c.bf16 %v8477, %v8477
    %v8479 = vld [vmem:[%s9] sm:$0xf]
    %v8480 = vld [vmem:[%s9 + $0x4] sm:$0xf]
    %v8481 = vld [vmem:[%s9 + $0x8] sm:$0xf]
    %v8482 = vld [vmem:[%s9 + $0xc] sm:$0xf]
    %v8483 = vld [vmem:[%s9 + $0x10] sm:$0xf]
    %v8484 = vld [vmem:[%s9 + $0x14] sm:$0xf]
    %v8485 = vld [vmem:[%s9 + $0x18] sm:$0xf]
    %v8486 = vld [vmem:[%s9 + $0x1c] sm:$0xf]
    %v8487 = vld [vmem:[%s9 + $0x20] sm:$0xf]
    %v8488 = vld [vmem:[%s9 + $0x24] sm:$0xf]
    %v8489 = vld [vmem:[%s9 + $0x28] sm:$0xf]
    %v8490 = vld [vmem:[%s9 + $0x2c] sm:$0xf]
    %v8491 = vld [vmem:[%s9 + $0x30] sm:$0xf]
    %v8492 = vld [vmem:[%s9 + $0x34] sm:$0xf]
    %v8493 = vld [vmem:[%s9 + $0x38] sm:$0xf]
    %v8494 = vld [vmem:[%s9 + $0x3c] sm:$0xf]
    %v8495 = vld [vmem:[%s10] sm:$0x1]
    %v8497 = vlaneseq
    %v8498 = vshrl.u32 %v8497, 7
    %v8499 = vsub.s32 0, %v8498
    %v8500 = vrot.slane %v8495, %v8499
    %v8518 = vunpack.c.l.b16 %v8479
    %v8519 = vunpack.c.l.b16 %v8480
    %v8520 = vunpack.c.l.b16 %v8481
    %v8521 = vunpack.c.l.b16 %v8482
    %v8522 = vunpack.c.l.b16 %v8483
    %v8523 = vunpack.c.l.b16 %v8484
    %v8524 = vunpack.c.l.b16 %v8485
    %v8525 = vunpack.c.l.b16 %v8486
    %v8526 = vunpack.c.l.b16 %v8487
    %v8527 = vunpack.c.l.b16 %v8488
    %v8528 = vunpack.c.l.b16 %v8489
    %v8529 = vunpack.c.l.b16 %v8490
    %v8530 = vunpack.c.l.b16 %v8491
    %v8531 = vunpack.c.l.b16 %v8492
    %v8532 = vunpack.c.l.b16 %v8493
    %v8533 = vunpack.c.l.b16 %v8494
    %v8534 = vpack.c.b16 %v8519, %v8518
    %v8535 = vpack.c.b16 %v8521, %v8520
    %v8536 = vpack.c.b16 %v8523, %v8522
    %v8537 = vpack.c.b16 %v8525, %v8524
    %v8538 = vpack.c.b16 %v8527, %v8526
    %v8539 = vpack.c.b16 %v8529, %v8528
    %v8540 = vpack.c.b16 %v8531, %v8530
    %v8541 = vpack.c.b16 %v8533, %v8532
    %8550 = vmatprep.subr.bf16.mxu0 0
    %8551 = vmatpush1.bf16.msra.mxu0 %v8541
    %8552 = vmatprep.subr.bf16.mxu0 0
    %8553 = vmatpush1.bf16.msra.mxu0 %v8540
    %8554 = vmatprep.subr.bf16.mxu0 0
    %8555 = vmatpush1.bf16.msra.mxu0 %v8539
    %8556 = vmatprep.subr.bf16.mxu0 0
    %8557 = vmatpush1.bf16.msra.mxu0 %v8538
    %8558 = vmatprep.subr.bf16.mxu0 0
    %8559 = vmatpush1.bf16.msra.mxu0 %v8537
    %8560 = vmatprep.subr.bf16.mxu0 0
    %8561 = vmatpush1.bf16.msra.mxu0 %v8536
    %8562 = vmatprep.subr.bf16.mxu0 0
    %8563 = vmatpush1.bf16.msra.mxu0 %v8535
    %8564 = vmatprep.subr.bf16.mxu0 0
    %8565 = vmatpush1.bf16.msra.mxu0 %v8534
    %8566 = vmatprep.subr.bf16.mxu0 0
    %8567 = vmatpush2.bf16.msra.mxu0 0
    %8568 = vmatprep.subr.bf16.mxu0 0
    %8569 = vmatpush2.bf16.msra.mxu0 0
    %8570 = vmatprep.subr.bf16.mxu0 0
    %8571 = vmatpush2.bf16.msra.mxu0 0
    %8572 = vmatprep.subr.bf16.mxu0 0
    %8573 = vmatpush2.bf16.msra.mxu0 0
    %8574 = vmatprep.subr.bf16.mxu0 0
    %8575 = vmatpush2.bf16.msra.mxu0 0
    %8576 = vmatprep.subr.bf16.mxu0 0
    %8577 = vmatpush2.bf16.msra.mxu0 0
    %8578 = vmatprep.subr.bf16.mxu0 0
    %8579 = vmatpush2.bf16.msra.mxu0 0
    %8580 = vmatprep.subr.bf16.mxu0 0
    %8581 = vmatpush2.bf16.msra.mxu0 0
    %8582 = vmatprep.mubr.bf16.mxu0 0
    %8583 = vmatmul.mubr.bf16.gmra.mxu0 %v8478
    %v8584 = vpop.f32.mrf.mxu0
    %v8585 = vadd.f32 %v8500, %v8584
    %v8586 = vpop.f32.mrf.mxu0
    %v8587 = vpop.f32.mrf.mxu0
    %v8588 = vpop.f32.mrf.mxu0
    %8589 = vdwg.mxu0
    %8590 = vmax.xlane.f32.xlu0 %v8585
    %v8591 = vpop.xlane.xlu0 %8590
    %v8592 = vsub.f32 %v8585, %v8591
    %v8593 = vmul.f32 %v8592, 1.442695
    %v8594 = vpow.pop %v8593
    %8595 = vadd.xlane.f32.xlu0 %v8594
    %v8596 = vpop.xlane.xlu0 %8595
    %v8597 = vlog2.pop %v8596
    %v8598 = vmul.f32 %v8597, 0.6931472
    %v8599 = vadd.f32 %v8598, %v8591
    %v8600 = vsub.f32 %v8585, %v8599
    %8601 = vst [vmem:[#allocation2] sm:$0xff] %v8600
    // Predicated region
    $region46: #{tpu_custom_call.1} parent=1 // pred_check
      _
    $region47: #{tpu_custom_call.1} parent=1 // pred_check_branch
      %8603 = sbr.rel (0) target = $region49
    $region48: #{tpu_custom_call.1} parent=1 // pred_region
      %s8605 = ssub.s32 128, 128
      %8606 = vsyncadd [#allocation3], %s8605
      %s8608 = sshll.u32 [#allocation2], 4
      %s8609 = int_to_ptr.vmem [resolvable:$true] %s8608
      %8611 = dma.vmem_to_hbm [thread:$0]  %s8609, 128, %s11, [#allocation3]
    $region49: #{tpu_custom_call.1} parent=1 // pred_fallthru
      _
    // Predicated region
    $region50: #{tpu_custom_call.1} parent=1 // pred_check
      _
    $region51: #{tpu_custom_call.1} parent=1 // pred_check_branch
      %8613 = sbr.rel (0) target = $region53
    $region52: #{tpu_custom_call.1} parent=1 // pred_region
      %8614 = dma.done [#allocation3], 128
    $region53: #{tpu_custom_call.1} parent=1 // pred_fallthru
      _
    %8615 = vsyncpa [#allocation3], 1

</llo_original>
